<compile_context>
chip_gen: v7x
topology: tpu7x:2x2x1
jax: 0.10.0
libtpu: 0.0.40
codegen_flags: <defaults>
</compile_context>

<pallas_src>
import jax
import jax.numpy as jnp
import numpy as np
from jax.experimental import pallas as pl
from jax.experimental.pallas import tpu as pltpu

# ----------------------------------------------------------------------------
# Fixed sizes of the module
# ----------------------------------------------------------------------------
H0, W0, C0 = 16, 16, 3        # input spatial size / channels
C1, C2, C3 = 32, 64, 64       # conv output channels
HP = 8                        # spatial size after the 2x2 max-pool
L1 = HP * C1                  # 256 lanes : pooled-conv1 packing (lane = w*32 + c)
L2 = HP * C2                  # 512 lanes : conv2/conv3 packing  (lane = w*64 + c)
K1 = 3 * W0 * C0              # 144 : conv1 im2row K (3 row taps x (W*Cin))


# ----------------------------------------------------------------------------
# One-time weight preprocessing (host, at init) — banded / folded matrices
# ----------------------------------------------------------------------------
def _banded(w_oihw, w_in, w_out, stride, phase):
    """K-folded banded conv matrix, shape (3*w_in*cin, w_out*cout):
       B[dy*(w_in*cin) + wi*cin + ci, wo*cout + co] = w[co, ci, dy, dx]
       with wi = stride*wo + phase + dx - 1 (missing taps == W zero padding)."""
    w = np.asarray(w_oihw, np.float32)
    cout, cin = w.shape[0], w.shape[1]
    B = np.zeros((3, w_in * cin, w_out * cout), np.float32)
    for dy in range(3):
        for wo in range(w_out):
            for dx in range(3):
                wi = stride * wo + phase + dx - 1
                if 0 <= wi < w_in:
                    B[dy, wi * cin:(wi + 1) * cin,
                      wo * cout:(wo + 1) * cout] = w[:, :, dy, dx].T
    return B.reshape(3 * w_in * cin, w_out * cout)


def _fc1_fold(fc1_w):
    """adaptive-avg-pool(4,4) + CHW flatten + fc1 folded into G: (8, 512, 64):
       G[h][w*64 + c, j] = 0.25 * fc1_w[j, c*16 + (h//2)*4 + (w//2)]."""
    fw = np.asarray(fc1_w, np.float32)                       # (64, 1024)
    G = np.zeros((HP, L2, 64), np.float32)
    for h in range(HP):
        for w in range(HP):
            col0 = (h // 2) * 4 + (w // 2)
            G[h, w * 64:(w + 1) * 64, :] = 0.25 * fw[:, col0::16].T
    return G


def pack_params(p):
    """PyTorch-layout params -> kernel-ready packed params (done once)."""
    bf16, f32 = jnp.bfloat16, jnp.float32
    kp = {}
    b1 = np.concatenate([_banded(p["conv1_w"], W0, HP, 2, 0),    # even pooled cols
                         _banded(p["conv1_w"], W0, HP, 2, 1)],   # odd  pooled cols
                        axis=1)                                  # (144, 512)
    kp["B1"] = jnp.asarray(b1, bf16)
    kp["BW2"] = jnp.asarray(_banded(p["conv2_w"], HP, HP, 1, 0), bf16)   # (768, 512)
    kp["BW3"] = jnp.asarray(_banded(p["conv3_w"], HP, HP, 1, 0), bf16)   # (1536, 512)
    kp["G"] = jnp.asarray(_fc1_fold(p["fc1_w"]), bf16)                   # (8, 512, 64)
    kp["b1t"] = jnp.asarray(np.tile(np.asarray(p["conv1_b"]), HP).reshape(1, L1), f32)
    kp["b2t"] = jnp.asarray(np.tile(np.asarray(p["conv2_b"]), HP).reshape(1, L2), f32)
    kp["b3t"] = jnp.asarray(np.tile(np.asarray(p["conv3_b"]), HP).reshape(1, L2), f32)
    kp["fb1"] = jnp.asarray(p["fc1_b"], f32).reshape(1, 64)
    kp["fw2"] = jnp.asarray(p["fc2_w"], f32).T                           # (64, 32)
    kp["fb2"] = jnp.asarray(p["fc2_b"], f32).reshape(1, 32)
    kp["fw3"] = jnp.asarray(p["fc3_w"], f32).T                           # (32, 16)
    kp["fb3"] = jnp.asarray(p["fc3_b"], f32).reshape(1, 16)
    kp["fw4"] = jnp.asarray(p["fc4_w"], f32)                             # (1, 16)
    kp["fb4"] = jnp.asarray(p["fc4_b"], f32).reshape(1, 1)
    return kp


# ----------------------------------------------------------------------------
# Generation-aware tile / VMEM-limit selection
# ----------------------------------------------------------------------------
def _tpu_vmem_capacity():
    try:
        return int(pltpu.get_tpu_info().vmem_capacity_bytes)
    except Exception:
        return 64 << 20               # conservative (v7x-sized) fallback


def _choose_tb(N, cap):
    tb_max = 512 if cap >= (96 << 20) else 256   # 128 MiB (v5e/v6e) vs 64 MiB (v7x)
    if N > tb_max:
        return tb_max
    if N >= 16:
        tb = -(-N // 2)               # >=2 grid steps -> both v7x TensorCores busy
        return min(-(-tb // 8) * 8, tb_max)
    return max(N, 1)


def _vmem_limit_bytes(TB, cap):
    per_sample = 168 * 1024           # scratch + pipelined input + dot temps
    need = TB * per_sample + (12 << 20)   # + resident (double-buffered) bf16 weights
    return int(min(max(need, 32 << 20), cap - (8 << 20)))


# ----------------------------------------------------------------------------
# The fused kernel (one grid step = TB samples, everything stays in VMEM)
# ----------------------------------------------------------------------------
def _make_kernel(TB):
    f32, bf16 = jnp.float32, jnp.bfloat16

    def rows(r):                      # row-block r of a (n_rows*TB, lanes) buffer
        return slice(r * TB, (r + 1) * TB)

    def kernel(x_ref, b1_ref, bw2_ref, bw3_ref, g_ref,
               b1t_ref, b2t_ref, b3t_ref,
               fb1_ref, fw2_ref, fb2_ref, fw3_ref, fb3_ref, fw4_ref, fb4_ref,
               o_ref,
               c1_s, p2c_s, c2_s, p3c_s, c3_s):

        # ---- conv1: one K=144 matmul (even & odd pooled columns side by side) --
        c1_s[...] = jnp.dot(x_ref[...], b1_ref[...], preferred_element_type=f32)

        # ---- halo lanes of the im2row operands == the H zero-padding -----------
        p2c_s[rows(0), 0:L1] = jnp.zeros((TB, L1), bf16)
        p2c_s[rows(HP - 1), 2 * L1:3 * L1] = jnp.zeros((TB, L1), bf16)
        p3c_s[rows(0), 0:L2] = jnp.zeros((TB, L2), bf16)
        p3c_s[rows(HP - 1), 2 * L2:3 * L2] = jnp.zeros((TB, L2), bf16)

        # ---- conv1 bias + ReLU + 2x2 max-pool, scattered into conv2's im2row ----
        # (bias and the monotone ReLU commute exactly with the max-pool)
        b1 = b1t_ref[...]
        for r in range(HP):
            top, bot = rows(2 * r), rows(2 * r + 1)
            m = jnp.maximum(jnp.maximum(c1_s[top, 0:L1], c1_s[top, L1:2 * L1]),
                            jnp.maximum(c1_s[bot, 0:L1], c1_s[bot, L1:2 * L1]))
            row = jnp.maximum(m + b1, 0.0).astype(bf16)          # (TB, 256)
            p2c_s[rows(r), L1:2 * L1] = row                      # dy=1 for out-row r
            if r + 1 < HP:
                p2c_s[rows(r + 1), 0:L1] = row                   # dy=0 for out-row r+1
            if r >= 1:
                p2c_s[rows(r - 1), 2 * L1:3 * L1] = row          # dy=2 for out-row r-1

        # ---- conv2: one K=768 matmul --------------------------------------------
        c2_s[...] = jnp.dot(p2c_s[...], bw2_ref[...], preferred_element_type=f32)

        b2 = b2t_ref[...]
        for r in range(HP):
            row = jnp.maximum(c2_s[rows(r), :] + b2, 0.0).astype(bf16)   # (TB, 512)
            p3c_s[rows(r), L2:2 * L2] = row
            if r + 1 < HP:
                p3c_s[rows(r + 1), 0:L2] = row
            if r >= 1:
                p3c_s[rows(r - 1), 2 * L2:3 * L2] = row

        # ---- conv3: one K=1536 matmul -------------------------------------------
        c3_s[...] = jnp.dot(p3c_s[...], bw3_ref[...], preferred_element_type=f32)

        # ---- bias + ReLU + avg-pool(4,4) + CHW flatten + fc1 (folded into G) -----
        b3 = b3t_ref[...]
        acc = jnp.zeros((TB, 64), f32)
        for r in range(HP):
            rrow = jnp.maximum(c3_s[rows(r), :] + b3, 0.0).astype(bf16)
            acc = acc + jnp.dot(rrow, g_ref[r], preferred_element_type=f32)
        h1 = jnp.maximum(acc + fb1_ref[...], 0.0)

        # ---- small MLP tail -------------------------------------------------------
        h2 = jnp.maximum(jnp.dot(h1, fw2_ref[...],
                                 preferred_element_type=f32) + fb2_ref[...], 0.0)
        h3 = jnp.maximum(jnp.dot(h2, fw3_ref[...],
                                 preferred_element_type=f32) + fb3_ref[...], 0.0)
        # fc4 (16 -> 1) as a lane reduce (avoids a degenerate N=1 matmul)
        o_ref[...] = jnp.sum(h3 * fw4_ref[...], axis=-1, keepdims=True) + fb4_ref[...]

    return kernel


# ----------------------------------------------------------------------------
# Public forward (same semantics as the PyTorch module, NCHW input)
# ----------------------------------------------------------------------------
def age_prediction_cnn_forward(x_nchw, kp):
    N = int(x_nchw.shape[0])
    cap = _tpu_vmem_capacity()
    TB = _choose_tb(N, cap)
    nb = -(-N // TB)
    Np = nb * TB

    # One-time tiny host glue: NCHW -> channels-last rows, H zero-pad, fold the
    # 3 row taps along K (im2row for conv1), pad the batch to a multiple of TB
    # and switch to the row-block-major 2-D layout the kernel uses.
    xp = jnp.pad(jnp.transpose(x_nchw, (0, 2, 3, 1)).reshape(N, H0, W0 * C0),
                 ((0, 0), (1, 1), (0, 0)))                                 # (N, 18, 48)
    xcat = jnp.concatenate([xp[:, dy:dy + H0, :] for dy in range(3)], axis=-1)
    if Np != N:
        xcat = jnp.pad(xcat, ((0, Np - N), (0, 0), (0, 0)))                # (Np, 16, 144)
    x2d = (xcat.reshape(nb, TB, H0, K1).transpose(0, 2, 1, 3)
               .reshape(nb * H0 * TB, K1).astype(jnp.bfloat16))            # (nb*16*TB, 144)

    weights = (kp["B1"], kp["BW2"], kp["BW3"], kp["G"],
               kp["b1t"], kp["b2t"], kp["b3t"],
               kp["fb1"], kp["fw2"], kp["fb2"], kp["fw3"], kp["fb3"],
               kp["fw4"], kp["fb4"])

    def _const_spec(a):
        return pl.BlockSpec(a.shape, lambda i, _nd=a.ndim: (0,) * _nd)

    in_specs = [pl.BlockSpec((H0 * TB, K1), lambda i: (i, 0))]
    in_specs += [_const_spec(w) for w in weights]

    scratch = [
        pltpu.VMEM((H0 * TB, 2 * L1), jnp.float32),   # conv1 output (even||odd cols)
        pltpu.VMEM((HP * TB, 3 * L1), jnp.bfloat16),  # conv2 im2row operand
        pltpu.VMEM((HP * TB, L2), jnp.float32),       # conv2 output
        pltpu.VMEM((HP * TB, 3 * L2), jnp.bfloat16),  # conv3 im2row operand
        pltpu.VMEM((HP * TB, L2), jnp.float32),       # conv3 output
    ]

    out = pl.pallas_call(
        _make_kernel(TB),
        out_shape=jax.ShapeDtypeStruct((Np, 1), jnp.float32),
        grid=(nb,),
        in_specs=in_specs,
        out_specs=pl.BlockSpec((TB, 1), lambda i: (i, 0)),
        scratch_shapes=scratch,
        compiler_params=pltpu.CompilerParams(
            dimension_semantics=("parallel",),
            vmem_limit_bytes=_vmem_limit_bytes(TB, cap)),
    )(x2d, *weights)
    return out[:N]


# ----------------------------------------------------------------------------
# Deterministic synthetic parameters (PyTorch layout, shapes from __init__)
# ----------------------------------------------------------------------------
def init_params(key):
    ks = jax.random.split(key, 14)

    def conv_wb(kw, kb, cin, cout):
        w = jax.random.normal(kw, (cout, cin, 3, 3), jnp.float32) / ((cin * 9) ** 0.5)
        b = jax.random.normal(kb, (cout,), jnp.float32) * 0.05
        return w, b

    def lin_wb(kw, kb, fin, fout):
        w = jax.random.normal(kw, (fout, fin), jnp.float32) / (fin ** 0.5)
        b = jax.random.normal(kb, (fout,), jnp.float32) * 0.05
        return w, b

    p = {}
    p["conv1_w"], p["conv1_b"] = conv_wb(ks[0], ks[1], C0, C1)
    p["conv2_w"], p["conv2_b"] = conv_wb(ks[2], ks[3], C1, C2)
    p["conv3_w"], p["conv3_b"] = conv_wb(ks[4], ks[5], C2, C3)
    p["fc1_w"], p["fc1_b"] = lin_wb(ks[6], ks[7], C3 * 4 * 4, 64)
    p["fc2_w"], p["fc2_b"] = lin_wb(ks[8], ks[9], 64, 32)
    p["fc3_w"], p["fc3_b"] = lin_wb(ks[10], ks[11], 32, 16)
    p["fc4_w"], p["fc4_b"] = lin_wb(ks[12], ks[13], 16, 1)
    return p


# ----------------------------------------------------------------------------
# Pure-JAX reference (PyTorch semantics, high precision) for the sanity check
# ----------------------------------------------------------------------------
def reference_forward(x, p):
    hi = jax.lax.Precision.HIGHEST

    def conv(x, w, b):
        y = jax.lax.conv_general_dilated(
            x, w, (1, 1), "SAME",
            dimension_numbers=("NCHW", "OIHW", "NCHW"), precision=hi)
        return jnp.maximum(y + b[None, :, None, None], 0.0)

    y = conv(x, p["conv1_w"], p["conv1_b"])
    N, C, H, W = y.shape
    y = y.reshape(N, C, H // 2, 2, W // 2, 2).max(axis=(3, 5))
    y = conv(y, p["conv2_w"], p["conv2_b"])
    y = conv(y, p["conv3_w"], p["conv3_b"])
    N, C, H, W = y.shape
    y = y.reshape(N, C, H // 2, 2, W // 2, 2).mean(axis=(3, 5))
    h = y.reshape(N, -1)                                   # CHW flatten (PyTorch order)
    h = jnp.maximum(h @ p["fc1_w"].T + p["fc1_b"], 0.0)
    h = jnp.maximum(h @ p["fc2_w"].T + p["fc2_b"], 0.0)
    h = jnp.maximum(h @ p["fc3_w"].T + p["fc3_b"], 0.0)
    return h @ p["fc4_w"].T + p["fc4_b"]


if __name__ == "__main__":
    key = jax.random.PRNGKey(0)
    pkey, xkey, xkey2 = jax.random.split(key, 3)
    params = init_params(pkey)
    kparams = pack_params(params)      # one-time packing of banded / folded weights

    fwd = jax.jit(age_prediction_cnn_forward)

    # Small batch, shapes consistent with the module (NCHW, 3x16x16).
    x = jax.random.normal(xkey, (2, 3, 16, 16), jnp.float32)
    out = jax.block_until_ready(fwd(x, kparams))
    assert out.shape == (2, 1) and out.dtype == jnp.float32
    ref = reference_forward(x, params)
    err = float(jnp.max(jnp.abs(out - ref)))
    # bf16 MXU passes (intentional): tolerance vs. the Precision.HIGHEST reference.
    assert err < 6e-2, f"mismatch vs reference (N=2): {err}"

    # Larger batch to exercise the tiled (multi-grid-step) path.
    xb = jax.random.normal(xkey2, (96, 3, 16, 16), jnp.float32)
    outb = jax.block_until_ready(fwd(xb, kparams))
    assert outb.shape == (96, 1)
    refb = reference_forward(xb, params)
    errb = float(jnp.max(jnp.abs(outb - refb)))
    assert errb < 6e-2, f"mismatch vs reference (N=96): {errb}"

    print("KERNEL_OK")
</pallas_src>

<mosaic_0001>
module attributes {stable_mosaic.version = 11 : i64} {
  func.func @kernel(%arg0: i32, %arg1: memref<32x144xbf16, #tpu.memory_space<vmem>>, %arg2: memref<144x512xbf16, #tpu.memory_space<vmem>>, %arg3: memref<768x512xbf16, #tpu.memory_space<vmem>>, %arg4: memref<1536x512xbf16, #tpu.memory_space<vmem>>, %arg5: memref<8x512x64xbf16, #tpu.memory_space<vmem>>, %arg6: memref<1x256xf32, #tpu.memory_space<vmem>>, %arg7: memref<1x512xf32, #tpu.memory_space<vmem>>, %arg8: memref<1x512xf32, #tpu.memory_space<vmem>>, %arg9: memref<1x64xf32, #tpu.memory_space<vmem>>, %arg10: memref<64x32xf32, #tpu.memory_space<vmem>>, %arg11: memref<1x32xf32, #tpu.memory_space<vmem>>, %arg12: memref<32x16xf32, #tpu.memory_space<vmem>>, %arg13: memref<1x16xf32, #tpu.memory_space<vmem>>, %arg14: memref<1x16xf32, #tpu.memory_space<vmem>>, %arg15: memref<1x1xf32, #tpu.memory_space<vmem>>, %arg16: memref<2x1xf32, #tpu.memory_space<vmem>>, %arg17: memref<32x512xf32, #tpu.memory_space<vmem>>, %arg18: memref<16x768xbf16, #tpu.memory_space<vmem>>, %arg19: memref<16x512xf32, #tpu.memory_space<vmem>>, %arg20: memref<16x1536xbf16, #tpu.memory_space<vmem>>, %arg21: memref<16x512xf32, #tpu.memory_space<vmem>>) attributes {dimension_semantics = [#tpu.dimension_semantics<parallel>], iteration_bounds = array<i64: 1>, scalar_prefetch = 0 : i64, scratch_operands = 5 : i64, tpu.core_type = #tpu.core_type<tc>, window_params = [{transform_indices = @transform_0, window_bounds = array<i64: 32, 144>}, {pipeline_mode = #tpu.pipeline_mode<synchronous>, transform_indices = @transform_1, window_bounds = array<i64: 144, 512>}, {pipeline_mode = #tpu.pipeline_mode<synchronous>, transform_indices = @transform_2, window_bounds = array<i64: 768, 512>}, {pipeline_mode = #tpu.pipeline_mode<synchronous>, transform_indices = @transform_3, window_bounds = array<i64: 1536, 512>}, {pipeline_mode = #tpu.pipeline_mode<synchronous>, transform_indices = @transform_4, window_bounds = array<i64: 8, 512, 64>}, {pipeline_mode = #tpu.pipeline_mode<synchronous>, transform_indices = @transform_5, window_bounds = array<i64: 1, 256>}, {pipeline_mode = #tpu.pipeline_mode<synchronous>, transform_indices = @transform_6, window_bounds = array<i64: 1, 512>}, {pipeline_mode = #tpu.pipeline_mode<synchronous>, transform_indices = @transform_7, window_bounds = array<i64: 1, 512>}, {pipeline_mode = #tpu.pipeline_mode<synchronous>, transform_indices = @transform_8, window_bounds = array<i64: 1, 64>}, {pipeline_mode = #tpu.pipeline_mode<synchronous>, transform_indices = @transform_9, window_bounds = array<i64: 64, 32>}, {pipeline_mode = #tpu.pipeline_mode<synchronous>, transform_indices = @transform_10, window_bounds = array<i64: 1, 32>}, {pipeline_mode = #tpu.pipeline_mode<synchronous>, transform_indices = @transform_11, window_bounds = array<i64: 32, 16>}, {pipeline_mode = #tpu.pipeline_mode<synchronous>, transform_indices = @transform_12, window_bounds = array<i64: 1, 16>}, {pipeline_mode = #tpu.pipeline_mode<synchronous>, transform_indices = @transform_13, window_bounds = array<i64: 1, 16>}, {pipeline_mode = #tpu.pipeline_mode<synchronous>, transform_indices = @transform_14, window_bounds = array<i64: 1, 1>}, {transform_indices = @transform_15, window_bounds = array<i64: 2, 1>}]} {
    %c0 = arith.constant 0 : index
    %c0_0 = arith.constant 0 : index
    %0 = vector.load %arg1[%c0, %c0_0] : memref<32x144xbf16, #tpu.memory_space<vmem>>, vector<32x144xbf16>
    %c0_1 = arith.constant 0 : index
    %c0_2 = arith.constant 0 : index
    %1 = vector.load %arg2[%c0_1, %c0_2] : memref<144x512xbf16, #tpu.memory_space<vmem>>, vector<144x512xbf16>
    %cst = arith.constant dense<0.000000e+00> : vector<32x512xf32>
    %2 = tpu.matmul %0, %1, %cst {dimension_numbers = #tpu.dot_dimension_numbers<[1], [0], [0], [1], [0, 0, 1, 1], [], []>} : vector<32x144xbf16>, vector<144x512xbf16>, vector<32x512xf32> -> vector<32x512xf32>
    %c0_3 = arith.constant 0 : index
    %c0_4 = arith.constant 0 : index
    %3 = vector.load %arg17[%c0_3, %c0_4] : memref<32x512xf32, #tpu.memory_space<vmem>>, vector<32x512xf32>
    tpu.vector_store %arg17[%c0_3, %c0_4], %2 {strides = array<i32>} : memref<32x512xf32, #tpu.memory_space<vmem>>, vector<32x512xf32>,
    %cst_5 = arith.constant 0.000000e+00 : bf16
    %4 = vector.broadcast %cst_5 : bf16 to vector<2x256xbf16>
    %c0_6 = arith.constant 0 : index
    %c0_7 = arith.constant 0 : index
    %5 = vector.load %arg18[%c0_6, %c0_7] : memref<16x768xbf16, #tpu.memory_space<vmem>>, vector<2x256xbf16>
    tpu.vector_store %arg18[%c0_6, %c0_7], %4 {strides = array<i32>} : memref<16x768xbf16, #tpu.memory_space<vmem>>, vector<2x256xbf16>,
    %cst_8 = arith.constant 0.000000e+00 : bf16
    %6 = vector.broadcast %cst_8 : bf16 to vector<2x256xbf16>
    %c14 = arith.constant 14 : index
    %c512 = arith.constant 512 : index
    %7 = vector.load %arg18[%c14, %c512] : memref<16x768xbf16, #tpu.memory_space<vmem>>, vector<2x256xbf16>
    tpu.vector_store %arg18[%c14, %c512], %6 {strides = array<i32>} : memref<16x768xbf16, #tpu.memory_space<vmem>>, vector<2x256xbf16>,
    %cst_9 = arith.constant 0.000000e+00 : bf16
    %8 = vector.broadcast %cst_9 : bf16 to vector<2x512xbf16>
    %c0_10 = arith.constant 0 : index
    %c0_11 = arith.constant 0 : index
    %9 = vector.load %arg20[%c0_10, %c0_11] : memref<16x1536xbf16, #tpu.memory_space<vmem>>, vector<2x512xbf16>
    tpu.vector_store %arg20[%c0_10, %c0_11], %8 {strides = array<i32>} : memref<16x1536xbf16, #tpu.memory_space<vmem>>, vector<2x512xbf16>,
    %cst_12 = arith.constant 0.000000e+00 : bf16
    %10 = vector.broadcast %cst_12 : bf16 to vector<2x512xbf16>
    %c14_13 = arith.constant 14 : index
    %c1024 = arith.constant 1024 : index
    %11 = vector.load %arg20[%c14_13, %c1024] : memref<16x1536xbf16, #tpu.memory_space<vmem>>, vector<2x512xbf16>
    tpu.vector_store %arg20[%c14_13, %c1024], %10 {strides = array<i32>} : memref<16x1536xbf16, #tpu.memory_space<vmem>>, vector<2x512xbf16>,
    %c0_14 = arith.constant 0 : index
    %c0_15 = arith.constant 0 : index
    %12 = vector.load %arg6[%c0_14, %c0_15] : memref<1x256xf32, #tpu.memory_space<vmem>>, vector<1x256xf32>
    %c0_16 = arith.constant 0 : index
    %c0_17 = arith.constant 0 : index
    %13 = vector.load %arg17[%c0_16, %c0_17] : memref<32x512xf32, #tpu.memory_space<vmem>>, vector<2x256xf32>
    %c0_18 = arith.constant 0 : index
    %c256 = arith.constant 256 : index
    %14 = vector.load %arg17[%c0_18, %c256] : memref<32x512xf32, #tpu.memory_space<vmem>>, vector<2x256xf32>
    %15 = arith.maximumf %13, %14 : vector<2x256xf32>
    %c2 = arith.constant 2 : index
    %c0_19 = arith.constant 0 : index
    %16 = vector.load %arg17[%c2, %c0_19] : memref<32x512xf32, #tpu.memory_space<vmem>>, vector<2x256xf32>
    %c2_20 = arith.constant 2 : index
    %c256_21 = arith.constant 256 : index
    %17 = vector.load %arg17[%c2_20, %c256_21] : memref<32x512xf32, #tpu.memory_space<vmem>>, vector<2x256xf32>
    %18 = arith.maximumf %16, %17 : vector<2x256xf32>
    %19 = arith.maximumf %15, %18 : vector<2x256xf32>
    %20 = vector.broadcast %12 : vector<1x256xf32> to vector<2x256xf32>
    %21 = arith.addf %19, %20 : vector<2x256xf32>
    %cst_22 = arith.constant 0.000000e+00 : f32
    %22 = vector.broadcast %cst_22 : f32 to vector<2x256xf32>
    %23 = arith.maximumf %21, %22 : vector<2x256xf32>
    %24 = arith.truncf %23 : vector<2x256xf32> to vector<2x256xbf16>
    %c0_23 = arith.constant 0 : index
    %c256_24 = arith.constant 256 : index
    %25 = vector.load %arg18[%c0_23, %c256_24] : memref<16x768xbf16, #tpu.memory_space<vmem>>, vector<2x256xbf16>
    tpu.vector_store %arg18[%c0_23, %c256_24], %24 {strides = array<i32>} : memref<16x768xbf16, #tpu.memory_space<vmem>>, vector<2x256xbf16>,
    %c2_25 = arith.constant 2 : index
    %c0_26 = arith.constant 0 : index
    %26 = vector.load %arg18[%c2_25, %c0_26] : memref<16x768xbf16, #tpu.memory_space<vmem>>, vector<2x256xbf16>
    tpu.vector_store %arg18[%c2_25, %c0_26], %24 {strides = array<i32>} : memref<16x768xbf16, #tpu.memory_space<vmem>>, vector<2x256xbf16>,
    %c4 = arith.constant 4 : index
    %c0_27 = arith.constant 0 : index
    %27 = vector.load %arg17[%c4, %c0_27] : memref<32x512xf32, #tpu.memory_space<vmem>>, vector<2x256xf32>
    %c4_28 = arith.constant 4 : index
    %c256_29 = arith.constant 256 : index
    %28 = vector.load %arg17[%c4_28, %c256_29] : memref<32x512xf32, #tpu.memory_space<vmem>>, vector<2x256xf32>
    %29 = arith.maximumf %27, %28 : vector<2x256xf32>
    %c6 = arith.constant 6 : index
    %c0_30 = arith.constant 0 : index
    %30 = vector.load %arg17[%c6, %c0_30] : memref<32x512xf32, #tpu.memory_space<vmem>>, vector<2x256xf32>
    %c6_31 = arith.constant 6 : index
    %c256_32 = arith.constant 256 : index
    %31 = vector.load %arg17[%c6_31, %c256_32] : memref<32x512xf32, #tpu.memory_space<vmem>>, vector<2x256xf32>
    %32 = arith.maximumf %30, %31 : vector<2x256xf32>
    %33 = arith.maximumf %29, %32 : vector<2x256xf32>
    %34 = vector.broadcast %12 : vector<1x256xf32> to vector<2x256xf32>
    %35 = arith.addf %33, %34 : vector<2x256xf32>
    %cst_33 = arith.constant 0.000000e+00 : f32
    %36 = vector.broadcast %cst_33 : f32 to vector<2x256xf32>
    %37 = arith.maximumf %35, %36 : vector<2x256xf32>
    %38 = arith.truncf %37 : vector<2x256xf32> to vector<2x256xbf16>
    %c2_34 = arith.constant 2 : index
    %c256_35 = arith.constant 256 : index
    %39 = vector.load %arg18[%c2_34, %c256_35] : memref<16x768xbf16, #tpu.memory_space<vmem>>, vector<2x256xbf16>
    tpu.vector_store %arg18[%c2_34, %c256_35], %38 {strides = array<i32>} : memref<16x768xbf16, #tpu.memory_space<vmem>>, vector<2x256xbf16>,
    %c4_36 = arith.constant 4 : index
    %c0_37 = arith.constant 0 : index
    %40 = vector.load %arg18[%c4_36, %c0_37] : memref<16x768xbf16, #tpu.memory_space<vmem>>, vector<2x256xbf16>
    tpu.vector_store %arg18[%c4_36, %c0_37], %38 {strides = array<i32>} : memref<16x768xbf16, #tpu.memory_space<vmem>>, vector<2x256xbf16>,
    %c0_38 = arith.constant 0 : index
    %c512_39 = arith.constant 512 : index
    %41 = vector.load %arg18[%c0_38, %c512_39] : memref<16x768xbf16, #tpu.memory_space<vmem>>, vector<2x256xbf16>
    tpu.vector_store %arg18[%c0_38, %c512_39], %38 {strides = array<i32>} : memref<16x768xbf16, #tpu.memory_space<vmem>>, vector<2x256xbf16>,
    %c8 = arith.constant 8 : index
    %c0_40 = arith.constant 0 : index
    %42 = vector.load %arg17[%c8, %c0_40] : memref<32x512xf32, #tpu.memory_space<vmem>>, vector<2x256xf32>
    %c8_41 = arith.constant 8 : index
    %c256_42 = arith.constant 256 : index
    %43 = vector.load %arg17[%c8_41, %c256_42] : memref<32x512xf32, #tpu.memory_space<vmem>>, vector<2x256xf32>
    %44 = arith.maximumf %42, %43 : vector<2x256xf32>
    %c10 = arith.constant 10 : index
    %c0_43 = arith.constant 0 : index
    %45 = vector.load %arg17[%c10, %c0_43] : memref<32x512xf32, #tpu.memory_space<vmem>>, vector<2x256xf32>
    %c10_44 = arith.constant 10 : index
    %c256_45 = arith.constant 256 : index
    %46 = vector.load %arg17[%c10_44, %c256_45] : memref<32x512xf32, #tpu.memory_space<vmem>>, vector<2x256xf32>
    %47 = arith.maximumf %45, %46 : vector<2x256xf32>
    %48 = arith.maximumf %44, %47 : vector<2x256xf32>
    %49 = vector.broadcast %12 : vector<1x256xf32> to vector<2x256xf32>
    %50 = arith.addf %48, %49 : vector<2x256xf32>
    %cst_46 = arith.constant 0.000000e+00 : f32
    %51 = vector.broadcast %cst_46 : f32 to vector<2x256xf32>
    %52 = arith.maximumf %50, %51 : vector<2x256xf32>
    %53 = arith.truncf %52 : vector<2x256xf32> to vector<2x256xbf16>
    %c4_47 = arith.constant 4 : index
    %c256_48 = arith.constant 256 : index
    %54 = vector.load %arg18[%c4_47, %c256_48] : memref<16x768xbf16, #tpu.memory_space<vmem>>, vector<2x256xbf16>
    tpu.vector_store %arg18[%c4_47, %c256_48], %53 {strides = array<i32>} : memref<16x768xbf16, #tpu.memory_space<vmem>>, vector<2x256xbf16>,
    %c6_49 = arith.constant 6 : index
    %c0_50 = arith.constant 0 : index
    %55 = vector.load %arg18[%c6_49, %c0_50] : memref<16x768xbf16, #tpu.memory_space<vmem>>, vector<2x256xbf16>
    tpu.vector_store %arg18[%c6_49, %c0_50], %53 {strides = array<i32>} : memref<16x768xbf16, #tpu.memory_space<vmem>>, vector<2x256xbf16>,
    %c2_51 = arith.constant 2 : index
    %c512_52 = arith.constant 512 : index
    %56 = vector.load %arg18[%c2_51, %c512_52] : memref<16x768xbf16, #tpu.memory_space<vmem>>, vector<2x256xbf16>
    tpu.vector_store %arg18[%c2_51, %c512_52], %53 {strides = array<i32>} : memref<16x768xbf16, #tpu.memory_space<vmem>>, vector<2x256xbf16>,
    %c12 = arith.constant 12 : index
    %c0_53 = arith.constant 0 : index
    %57 = vector.load %arg17[%c12, %c0_53] : memref<32x512xf32, #tpu.memory_space<vmem>>, vector<2x256xf32>
    %c12_54 = arith.constant 12 : index
    %c256_55 = arith.constant 256 : index
    %58 = vector.load %arg17[%c12_54, %c256_55] : memref<32x512xf32, #tpu.memory_space<vmem>>, vector<2x256xf32>
    %59 = arith.maximumf %57, %58 : vector<2x256xf32>
    %c14_56 = arith.constant 14 : index
    %c0_57 = arith.constant 0 : index
    %60 = vector.load %arg17[%c14_56, %c0_57] : memref<32x512xf32, #tpu.memory_space<vmem>>, vector<2x256xf32>
    %c14_58 = arith.constant 14 : index
    %c256_59 = arith.constant 256 : index
    %61 = vector.load %arg17[%c14_58, %c256_59] : memref<32x512xf32, #tpu.memory_space<vmem>>, vector<2x256xf32>
    %62 = arith.maximumf %60, %61 : vector<2x256xf32>
    %63 = arith.maximumf %59, %62 : vector<2x256xf32>
    %64 = vector.broadcast %12 : vector<1x256xf32> to vector<2x256xf32>
    %65 = arith.addf %63, %64 : vector<2x256xf32>
    %cst_60 = arith.constant 0.000000e+00 : f32
    %66 = vector.broadcast %cst_60 : f32 to vector<2x256xf32>
    %67 = arith.maximumf %65, %66 : vector<2x256xf32>
    %68 = arith.truncf %67 : vector<2x256xf32> to vector<2x256xbf16>
    %c6_61 = arith.constant 6 : index
    %c256_62 = arith.constant 256 : index
    %69 = vector.load %arg18[%c6_61, %c256_62] : memref<16x768xbf16, #tpu.memory_space<vmem>>, vector<2x256xbf16>
    tpu.vector_store %arg18[%c6_61, %c256_62], %68 {strides = array<i32>} : memref<16x768xbf16, #tpu.memory_space<vmem>>, vector<2x256xbf16>,
    %c8_63 = arith.constant 8 : index
    %c0_64 = arith.constant 0 : index
    %70 = vector.load %arg18[%c8_63, %c0_64] : memref<16x768xbf16, #tpu.memory_space<vmem>>, vector<2x256xbf16>
    tpu.vector_store %arg18[%c8_63, %c0_64], %68 {strides = array<i32>} : memref<16x768xbf16, #tpu.memory_space<vmem>>, vector<2x256xbf16>,
    %c4_65 = arith.constant 4 : index
    %c512_66 = arith.constant 512 : index
    %71 = vector.load %arg18[%c4_65, %c512_66] : memref<16x768xbf16, #tpu.memory_space<vmem>>, vector<2x256xbf16>
    tpu.vector_store %arg18[%c4_65, %c512_66], %68 {strides = array<i32>} : memref<16x768xbf16, #tpu.memory_space<vmem>>, vector<2x256xbf16>,
    %c16 = arith.constant 16 : index
    %c0_67 = arith.constant 0 : index
    %72 = vector.load %arg17[%c16, %c0_67] : memref<32x512xf32, #tpu.memory_space<vmem>>, vector<2x256xf32>
    %c16_68 = arith.constant 16 : index
    %c256_69 = arith.constant 256 : index
    %73 = vector.load %arg17[%c16_68, %c256_69] : memref<32x512xf32, #tpu.memory_space<vmem>>, vector<2x256xf32>
    %74 = arith.maximumf %72, %73 : vector<2x256xf32>
    %c18 = arith.constant 18 : index
    %c0_70 = arith.constant 0 : index
    %75 = vector.load %arg17[%c18, %c0_70] : memref<32x512xf32, #tpu.memory_space<vmem>>, vector<2x256xf32>
    %c18_71 = arith.constant 18 : index
    %c256_72 = arith.constant 256 : index
    %76 = vector.load %arg17[%c18_71, %c256_72] : memref<32x512xf32, #tpu.memory_space<vmem>>, vector<2x256xf32>
    %77 = arith.maximumf %75, %76 : vector<2x256xf32>
    %78 = arith.maximumf %74, %77 : vector<2x256xf32>
    %79 = vector.broadcast %12 : vector<1x256xf32> to vector<2x256xf32>
    %80 = arith.addf %78, %79 : vector<2x256xf32>
    %cst_73 = arith.constant 0.000000e+00 : f32
    %81 = vector.broadcast %cst_73 : f32 to vector<2x256xf32>
    %82 = arith.maximumf %80, %81 : vector<2x256xf32>
    %83 = arith.truncf %82 : vector<2x256xf32> to vector<2x256xbf16>
    %c8_74 = arith.constant 8 : index
    %c256_75 = arith.constant 256 : index
    %84 = vector.load %arg18[%c8_74, %c256_75] : memref<16x768xbf16, #tpu.memory_space<vmem>>, vector<2x256xbf16>
    tpu.vector_store %arg18[%c8_74, %c256_75], %83 {strides = array<i32>} : memref<16x768xbf16, #tpu.memory_space<vmem>>, vector<2x256xbf16>,
    %c10_76 = arith.constant 10 : index
    %c0_77 = arith.constant 0 : index
    %85 = vector.load %arg18[%c10_76, %c0_77] : memref<16x768xbf16, #tpu.memory_space<vmem>>, vector<2x256xbf16>
    tpu.vector_store %arg18[%c10_76, %c0_77], %83 {strides = array<i32>} : memref<16x768xbf16, #tpu.memory_space<vmem>>, vector<2x256xbf16>,
    %c6_78 = arith.constant 6 : index
    %c512_79 = arith.constant 512 : index
    %86 = vector.load %arg18[%c6_78, %c512_79] : memref<16x768xbf16, #tpu.memory_space<vmem>>, vector<2x256xbf16>
    tpu.vector_store %arg18[%c6_78, %c512_79], %83 {strides = array<i32>} : memref<16x768xbf16, #tpu.memory_space<vmem>>, vector<2x256xbf16>,
    %c20 = arith.constant 20 : index
    %c0_80 = arith.constant 0 : index
    %87 = vector.load %arg17[%c20, %c0_80] : memref<32x512xf32, #tpu.memory_space<vmem>>, vector<2x256xf32>
    %c20_81 = arith.constant 20 : index
    %c256_82 = arith.constant 256 : index
    %88 = vector.load %arg17[%c20_81, %c256_82] : memref<32x512xf32, #tpu.memory_space<vmem>>, vector<2x256xf32>
    %89 = arith.maximumf %87, %88 : vector<2x256xf32>
    %c22 = arith.constant 22 : index
    %c0_83 = arith.constant 0 : index
    %90 = vector.load %arg17[%c22, %c0_83] : memref<32x512xf32, #tpu.memory_space<vmem>>, vector<2x256xf32>
    %c22_84 = arith.constant 22 : index
    %c256_85 = arith.constant 256 : index
    %91 = vector.load %arg17[%c22_84, %c256_85] : memref<32x512xf32, #tpu.memory_space<vmem>>, vector<2x256xf32>
    %92 = arith.maximumf %90, %91 : vector<2x256xf32>
    %93 = arith.maximumf %89, %92 : vector<2x256xf32>
    %94 = vector.broadcast %12 : vector<1x256xf32> to vector<2x256xf32>
    %95 = arith.addf %93, %94 : vector<2x256xf32>
    %cst_86 = arith.constant 0.000000e+00 : f32
    %96 = vector.broadcast %cst_86 : f32 to vector<2x256xf32>
    %97 = arith.maximumf %95, %96 : vector<2x256xf32>
    %98 = arith.truncf %97 : vector<2x256xf32> to vector<2x256xbf16>
    %c10_87 = arith.constant 10 : index
    %c256_88 = arith.constant 256 : index
    %99 = vector.load %arg18[%c10_87, %c256_88] : memref<16x768xbf16, #tpu.memory_space<vmem>>, vector<2x256xbf16>
    tpu.vector_store %arg18[%c10_87, %c256_88], %98 {strides = array<i32>} : memref<16x768xbf16, #tpu.memory_space<vmem>>, vector<2x256xbf16>,
    %c12_89 = arith.constant 12 : index
    %c0_90 = arith.constant 0 : index
    %100 = vector.load %arg18[%c12_89, %c0_90] : memref<16x768xbf16, #tpu.memory_space<vmem>>, vector<2x256xbf16>
    tpu.vector_store %arg18[%c12_89, %c0_90], %98 {strides = array<i32>} : memref<16x768xbf16, #tpu.memory_space<vmem>>, vector<2x256xbf16>,
    %c8_91 = arith.constant 8 : index
    %c512_92 = arith.constant 512 : index
    %101 = vector.load %arg18[%c8_91, %c512_92] : memref<16x768xbf16, #tpu.memory_space<vmem>>, vector<2x256xbf16>
    tpu.vector_store %arg18[%c8_91, %c512_92], %98 {strides = array<i32>} : memref<16x768xbf16, #tpu.memory_space<vmem>>, vector<2x256xbf16>,
    %c24 = arith.constant 24 : index
    %c0_93 = arith.constant 0 : index
    %102 = vector.load %arg17[%c24, %c0_93] : memref<32x512xf32, #tpu.memory_space<vmem>>, vector<2x256xf32>
    %c24_94 = arith.constant 24 : index
    %c256_95 = arith.constant 256 : index
    %103 = vector.load %arg17[%c24_94, %c256_95] : memref<32x512xf32, #tpu.memory_space<vmem>>, vector<2x256xf32>
    %104 = arith.maximumf %102, %103 : vector<2x256xf32>
    %c26 = arith.constant 26 : index
    %c0_96 = arith.constant 0 : index
    %105 = vector.load %arg17[%c26, %c0_96] : memref<32x512xf32, #tpu.memory_space<vmem>>, vector<2x256xf32>
    %c26_97 = arith.constant 26 : index
    %c256_98 = arith.constant 256 : index
    %106 = vector.load %arg17[%c26_97, %c256_98] : memref<32x512xf32, #tpu.memory_space<vmem>>, vector<2x256xf32>
    %107 = arith.maximumf %105, %106 : vector<2x256xf32>
    %108 = arith.maximumf %104, %107 : vector<2x256xf32>
    %109 = vector.broadcast %12 : vector<1x256xf32> to vector<2x256xf32>
    %110 = arith.addf %108, %109 : vector<2x256xf32>
    %cst_99 = arith.constant 0.000000e+00 : f32
    %111 = vector.broadcast %cst_99 : f32 to vector<2x256xf32>
    %112 = arith.maximumf %110, %111 : vector<2x256xf32>
    %113 = arith.truncf %112 : vector<2x256xf32> to vector<2x256xbf16>
    %c12_100 = arith.constant 12 : index
    %c256_101 = arith.constant 256 : index
    %114 = vector.load %arg18[%c12_100, %c256_101] : memref<16x768xbf16, #tpu.memory_space<vmem>>, vector<2x256xbf16>
    tpu.vector_store %arg18[%c12_100, %c256_101], %113 {strides = array<i32>} : memref<16x768xbf16, #tpu.memory_space<vmem>>, vector<2x256xbf16>,
    %c14_102 = arith.constant 14 : index
    %c0_103 = arith.constant 0 : index
    %115 = vector.load %arg18[%c14_102, %c0_103] : memref<16x768xbf16, #tpu.memory_space<vmem>>, vector<2x256xbf16>
    tpu.vector_store %arg18[%c14_102, %c0_103], %113 {strides = array<i32>} : memref<16x768xbf16, #tpu.memory_space<vmem>>, vector<2x256xbf16>,
    %c10_104 = arith.constant 10 : index
    %c512_105 = arith.constant 512 : index
    %116 = vector.load %arg18[%c10_104, %c512_105] : memref<16x768xbf16, #tpu.memory_space<vmem>>, vector<2x256xbf16>
    tpu.vector_store %arg18[%c10_104, %c512_105], %113 {strides = array<i32>} : memref<16x768xbf16, #tpu.memory_space<vmem>>, vector<2x256xbf16>,
    %c28 = arith.constant 28 : index
    %c0_106 = arith.constant 0 : index
    %117 = vector.load %arg17[%c28, %c0_106] : memref<32x512xf32, #tpu.memory_space<vmem>>, vector<2x256xf32>
    %c28_107 = arith.constant 28 : index
    %c256_108 = arith.constant 256 : index
    %118 = vector.load %arg17[%c28_107, %c256_108] : memref<32x512xf32, #tpu.memory_space<vmem>>, vector<2x256xf32>
    %119 = arith.maximumf %117, %118 : vector<2x256xf32>
    %c30 = arith.constant 30 : index
    %c0_109 = arith.constant 0 : index
    %120 = vector.load %arg17[%c30, %c0_109] : memref<32x512xf32, #tpu.memory_space<vmem>>, vector<2x256xf32>
    %c30_110 = arith.constant 30 : index
    %c256_111 = arith.constant 256 : index
    %121 = vector.load %arg17[%c30_110, %c256_111] : memref<32x512xf32, #tpu.memory_space<vmem>>, vector<2x256xf32>
    %122 = arith.maximumf %120, %121 : vector<2x256xf32>
    %123 = arith.maximumf %119, %122 : vector<2x256xf32>
    %124 = vector.broadcast %12 : vector<1x256xf32> to vector<2x256xf32>
    %125 = arith.addf %123, %124 : vector<2x256xf32>
    %cst_112 = arith.constant 0.000000e+00 : f32
    %126 = vector.broadcast %cst_112 : f32 to vector<2x256xf32>
    %127 = arith.maximumf %125, %126 : vector<2x256xf32>
    %128 = arith.truncf %127 : vector<2x256xf32> to vector<2x256xbf16>
    %c14_113 = arith.constant 14 : index
    %c256_114 = arith.constant 256 : index
    %129 = vector.load %arg18[%c14_113, %c256_114] : memref<16x768xbf16, #tpu.memory_space<vmem>>, vector<2x256xbf16>
    tpu.vector_store %arg18[%c14_113, %c256_114], %128 {strides = array<i32>} : memref<16x768xbf16, #tpu.memory_space<vmem>>, vector<2x256xbf16>,
    %c12_115 = arith.constant 12 : index
    %c512_116 = arith.constant 512 : index
    %130 = vector.load %arg18[%c12_115, %c512_116] : memref<16x768xbf16, #tpu.memory_space<vmem>>, vector<2x256xbf16>
    tpu.vector_store %arg18[%c12_115, %c512_116], %128 {strides = array<i32>} : memref<16x768xbf16, #tpu.memory_space<vmem>>, vector<2x256xbf16>,
    %c0_117 = arith.constant 0 : index
    %c0_118 = arith.constant 0 : index
    %131 = vector.load %arg18[%c0_117, %c0_118] : memref<16x768xbf16, #tpu.memory_space<vmem>>, vector<16x768xbf16>
    %c0_119 = arith.constant 0 : index
    %c0_120 = arith.constant 0 : index
    %132 = vector.load %arg3[%c0_119, %c0_120] : memref<768x512xbf16, #tpu.memory_space<vmem>>, vector<768x512xbf16>
    %cst_121 = arith.constant dense<0.000000e+00> : vector<16x512xf32>
    %133 = tpu.matmul %131, %132, %cst_121 {dimension_numbers = #tpu.dot_dimension_numbers<[1], [0], [0], [1], [0, 0, 1, 1], [], []>} : vector<16x768xbf16>, vector<768x512xbf16>, vector<16x512xf32> -> vector<16x512xf32>
    %c0_122 = arith.constant 0 : index
    %c0_123 = arith.constant 0 : index
    %134 = vector.load %arg19[%c0_122, %c0_123] : memref<16x512xf32, #tpu.memory_space<vmem>>, vector<16x512xf32>
    tpu.vector_store %arg19[%c0_122, %c0_123], %133 {strides = array<i32>} : memref<16x512xf32, #tpu.memory_space<vmem>>, vector<16x512xf32>,
    %c0_124 = arith.constant 0 : index
    %c0_125 = arith.constant 0 : index
    %135 = vector.load %arg7[%c0_124, %c0_125] : memref<1x512xf32, #tpu.memory_space<vmem>>, vector<1x512xf32>
    %c0_126 = arith.constant 0 : index
    %c0_127 = arith.constant 0 : index
    %136 = vector.load %arg19[%c0_126, %c0_127] : memref<16x512xf32, #tpu.memory_space<vmem>>, vector<2x512xf32>
    %137 = vector.broadcast %135 : vector<1x512xf32> to vector<2x512xf32>
    %138 = arith.addf %136, %137 : vector<2x512xf32>
    %cst_128 = arith.constant 0.000000e+00 : f32
    %139 = vector.broadcast %cst_128 : f32 to vector<2x512xf32>
    %140 = arith.maximumf %138, %139 : vector<2x512xf32>
    %141 = arith.truncf %140 : vector<2x512xf32> to vector<2x512xbf16>
    %c0_129 = arith.constant 0 : index
    %c512_130 = arith.constant 512 : index
    %142 = vector.load %arg20[%c0_129, %c512_130] : memref<16x1536xbf16, #tpu.memory_space<vmem>>, vector<2x512xbf16>
    tpu.vector_store %arg20[%c0_129, %c512_130], %141 {strides = array<i32>} : memref<16x1536xbf16, #tpu.memory_space<vmem>>, vector<2x512xbf16>,
    %c2_131 = arith.constant 2 : index
    %c0_132 = arith.constant 0 : index
    %143 = vector.load %arg20[%c2_131, %c0_132] : memref<16x1536xbf16, #tpu.memory_space<vmem>>, vector<2x512xbf16>
    tpu.vector_store %arg20[%c2_131, %c0_132], %141 {strides = array<i32>} : memref<16x1536xbf16, #tpu.memory_space<vmem>>, vector<2x512xbf16>,
    %c2_133 = arith.constant 2 : index
    %c0_134 = arith.constant 0 : index
    %144 = vector.load %arg19[%c2_133, %c0_134] : memref<16x512xf32, #tpu.memory_space<vmem>>, vector<2x512xf32>
    %145 = vector.broadcast %135 : vector<1x512xf32> to vector<2x512xf32>
    %146 = arith.addf %144, %145 : vector<2x512xf32>
    %cst_135 = arith.constant 0.000000e+00 : f32
    %147 = vector.broadcast %cst_135 : f32 to vector<2x512xf32>
    %148 = arith.maximumf %146, %147 : vector<2x512xf32>
    %149 = arith.truncf %148 : vector<2x512xf32> to vector<2x512xbf16>
    %c2_136 = arith.constant 2 : index
    %c512_137 = arith.constant 512 : index
    %150 = vector.load %arg20[%c2_136, %c512_137] : memref<16x1536xbf16, #tpu.memory_space<vmem>>, vector<2x512xbf16>
    tpu.vector_store %arg20[%c2_136, %c512_137], %149 {strides = array<i32>} : memref<16x1536xbf16, #tpu.memory_space<vmem>>, vector<2x512xbf16>,
    %c4_138 = arith.constant 4 : index
    %c0_139 = arith.constant 0 : index
    %151 = vector.load %arg20[%c4_138, %c0_139] : memref<16x1536xbf16, #tpu.memory_space<vmem>>, vector<2x512xbf16>
    tpu.vector_store %arg20[%c4_138, %c0_139], %149 {strides = array<i32>} : memref<16x1536xbf16, #tpu.memory_space<vmem>>, vector<2x512xbf16>,
    %c0_140 = arith.constant 0 : index
    %c1024_141 = arith.constant 1024 : index
    %152 = vector.load %arg20[%c0_140, %c1024_141] : memref<16x1536xbf16, #tpu.memory_space<vmem>>, vector<2x512xbf16>
    tpu.vector_store %arg20[%c0_140, %c1024_141], %149 {strides = array<i32>} : memref<16x1536xbf16, #tpu.memory_space<vmem>>, vector<2x512xbf16>,
    %c4_142 = arith.constant 4 : index
    %c0_143 = arith.constant 0 : index
    %153 = vector.load %arg19[%c4_142, %c0_143] : memref<16x512xf32, #tpu.memory_space<vmem>>, vector<2x512xf32>
    %154 = vector.broadcast %135 : vector<1x512xf32> to vector<2x512xf32>
    %155 = arith.addf %153, %154 : vector<2x512xf32>
    %cst_144 = arith.constant 0.000000e+00 : f32
    %156 = vector.broadcast %cst_144 : f32 to vector<2x512xf32>
    %157 = arith.maximumf %155, %156 : vector<2x512xf32>
    %158 = arith.truncf %157 : vector<2x512xf32> to vector<2x512xbf16>
    %c4_145 = arith.constant 4 : index
    %c512_146 = arith.constant 512 : index
    %159 = vector.load %arg20[%c4_145, %c512_146] : memref<16x1536xbf16, #tpu.memory_space<vmem>>, vector<2x512xbf16>
    tpu.vector_store %arg20[%c4_145, %c512_146], %158 {strides = array<i32>} : memref<16x1536xbf16, #tpu.memory_space<vmem>>, vector<2x512xbf16>,
    %c6_147 = arith.constant 6 : index
    %c0_148 = arith.constant 0 : index
    %160 = vector.load %arg20[%c6_147, %c0_148] : memref<16x1536xbf16, #tpu.memory_space<vmem>>, vector<2x512xbf16>
    tpu.vector_store %arg20[%c6_147, %c0_148], %158 {strides = array<i32>} : memref<16x1536xbf16, #tpu.memory_space<vmem>>, vector<2x512xbf16>,
    %c2_149 = arith.constant 2 : index
    %c1024_150 = arith.constant 1024 : index
    %161 = vector.load %arg20[%c2_149, %c1024_150] : memref<16x1536xbf16, #tpu.memory_space<vmem>>, vector<2x512xbf16>
    tpu.vector_store %arg20[%c2_149, %c1024_150], %158 {strides = array<i32>} : memref<16x1536xbf16, #tpu.memory_space<vmem>>, vector<2x512xbf16>,
    %c6_151 = arith.constant 6 : index
    %c0_152 = arith.constant 0 : index
    %162 = vector.load %arg19[%c6_151, %c0_152] : memref<16x512xf32, #tpu.memory_space<vmem>>, vector<2x512xf32>
    %163 = vector.broadcast %135 : vector<1x512xf32> to vector<2x512xf32>
    %164 = arith.addf %162, %163 : vector<2x512xf32>
    %cst_153 = arith.constant 0.000000e+00 : f32
    %165 = vector.broadcast %cst_153 : f32 to vector<2x512xf32>
    %166 = arith.maximumf %164, %165 : vector<2x512xf32>
    %167 = arith.truncf %166 : vector<2x512xf32> to vector<2x512xbf16>
    %c6_154 = arith.constant 6 : index
    %c512_155 = arith.constant 512 : index
    %168 = vector.load %arg20[%c6_154, %c512_155] : memref<16x1536xbf16, #tpu.memory_space<vmem>>, vector<2x512xbf16>
    tpu.vector_store %arg20[%c6_154, %c512_155], %167 {strides = array<i32>} : memref<16x1536xbf16, #tpu.memory_space<vmem>>, vector<2x512xbf16>,
    %c8_156 = arith.constant 8 : index
    %c0_157 = arith.constant 0 : index
    %169 = vector.load %arg20[%c8_156, %c0_157] : memref<16x1536xbf16, #tpu.memory_space<vmem>>, vector<2x512xbf16>
    tpu.vector_store %arg20[%c8_156, %c0_157], %167 {strides = array<i32>} : memref<16x1536xbf16, #tpu.memory_space<vmem>>, vector<2x512xbf16>,
    %c4_158 = arith.constant 4 : index
    %c1024_159 = arith.constant 1024 : index
    %170 = vector.load %arg20[%c4_158, %c1024_159] : memref<16x1536xbf16, #tpu.memory_space<vmem>>, vector<2x512xbf16>
    tpu.vector_store %arg20[%c4_158, %c1024_159], %167 {strides = array<i32>} : memref<16x1536xbf16, #tpu.memory_space<vmem>>, vector<2x512xbf16>,
    %c8_160 = arith.constant 8 : index
    %c0_161 = arith.constant 0 : index
    %171 = vector.load %arg19[%c8_160, %c0_161] : memref<16x512xf32, #tpu.memory_space<vmem>>, vector<2x512xf32>
    %172 = vector.broadcast %135 : vector<1x512xf32> to vector<2x512xf32>
    %173 = arith.addf %171, %172 : vector<2x512xf32>
    %cst_162 = arith.constant 0.000000e+00 : f32
    %174 = vector.broadcast %cst_162 : f32 to vector<2x512xf32>
    %175 = arith.maximumf %173, %174 : vector<2x512xf32>
    %176 = arith.truncf %175 : vector<2x512xf32> to vector<2x512xbf16>
    %c8_163 = arith.constant 8 : index
    %c512_164 = arith.constant 512 : index
    %177 = vector.load %arg20[%c8_163, %c512_164] : memref<16x1536xbf16, #tpu.memory_space<vmem>>, vector<2x512xbf16>
    tpu.vector_store %arg20[%c8_163, %c512_164], %176 {strides = array<i32>} : memref<16x1536xbf16, #tpu.memory_space<vmem>>, vector<2x512xbf16>,
    %c10_165 = arith.constant 10 : index
    %c0_166 = arith.constant 0 : index
    %178 = vector.load %arg20[%c10_165, %c0_166] : memref<16x1536xbf16, #tpu.memory_space<vmem>>, vector<2x512xbf16>
    tpu.vector_store %arg20[%c10_165, %c0_166], %176 {strides = array<i32>} : memref<16x1536xbf16, #tpu.memory_space<vmem>>, vector<2x512xbf16>,
    %c6_167 = arith.constant 6 : index
    %c1024_168 = arith.constant 1024 : index
    %179 = vector.load %arg20[%c6_167, %c1024_168] : memref<16x1536xbf16, #tpu.memory_space<vmem>>, vector<2x512xbf16>
    tpu.vector_store %arg20[%c6_167, %c1024_168], %176 {strides = array<i32>} : memref<16x1536xbf16, #tpu.memory_space<vmem>>, vector<2x512xbf16>,
    %c10_169 = arith.constant 10 : index
    %c0_170 = arith.constant 0 : index
    %180 = vector.load %arg19[%c10_169, %c0_170] : memref<16x512xf32, #tpu.memory_space<vmem>>, vector<2x512xf32>
    %181 = vector.broadcast %135 : vector<1x512xf32> to vector<2x512xf32>
    %182 = arith.addf %180, %181 : vector<2x512xf32>
    %cst_171 = arith.constant 0.000000e+00 : f32
    %183 = vector.broadcast %cst_171 : f32 to vector<2x512xf32>
    %184 = arith.maximumf %182, %183 : vector<2x512xf32>
    %185 = arith.truncf %184 : vector<2x512xf32> to vector<2x512xbf16>
    %c10_172 = arith.constant 10 : index
    %c512_173 = arith.constant 512 : index
    %186 = vector.load %arg20[%c10_172, %c512_173] : memref<16x1536xbf16, #tpu.memory_space<vmem>>, vector<2x512xbf16>
    tpu.vector_store %arg20[%c10_172, %c512_173], %185 {strides = array<i32>} : memref<16x1536xbf16, #tpu.memory_space<vmem>>, vector<2x512xbf16>,
    %c12_174 = arith.constant 12 : index
    %c0_175 = arith.constant 0 : index
    %187 = vector.load %arg20[%c12_174, %c0_175] : memref<16x1536xbf16, #tpu.memory_space<vmem>>, vector<2x512xbf16>
    tpu.vector_store %arg20[%c12_174, %c0_175], %185 {strides = array<i32>} : memref<16x1536xbf16, #tpu.memory_space<vmem>>, vector<2x512xbf16>,
    %c8_176 = arith.constant 8 : index
    %c1024_177 = arith.constant 1024 : index
    %188 = vector.load %arg20[%c8_176, %c1024_177] : memref<16x1536xbf16, #tpu.memory_space<vmem>>, vector<2x512xbf16>
    tpu.vector_store %arg20[%c8_176, %c1024_177], %185 {strides = array<i32>} : memref<16x1536xbf16, #tpu.memory_space<vmem>>, vector<2x512xbf16>,
    %c12_178 = arith.constant 12 : index
    %c0_179 = arith.constant 0 : index
    %189 = vector.load %arg19[%c12_178, %c0_179] : memref<16x512xf32, #tpu.memory_space<vmem>>, vector<2x512xf32>
    %190 = vector.broadcast %135 : vector<1x512xf32> to vector<2x512xf32>
    %191 = arith.addf %189, %190 : vector<2x512xf32>
    %cst_180 = arith.constant 0.000000e+00 : f32
    %192 = vector.broadcast %cst_180 : f32 to vector<2x512xf32>
    %193 = arith.maximumf %191, %192 : vector<2x512xf32>
    %194 = arith.truncf %193 : vector<2x512xf32> to vector<2x512xbf16>
    %c12_181 = arith.constant 12 : index
    %c512_182 = arith.constant 512 : index
    %195 = vector.load %arg20[%c12_181, %c512_182] : memref<16x1536xbf16, #tpu.memory_space<vmem>>, vector<2x512xbf16>
    tpu.vector_store %arg20[%c12_181, %c512_182], %194 {strides = array<i32>} : memref<16x1536xbf16, #tpu.memory_space<vmem>>, vector<2x512xbf16>,
    %c14_183 = arith.constant 14 : index
    %c0_184 = arith.constant 0 : index
    %196 = vector.load %arg20[%c14_183, %c0_184] : memref<16x1536xbf16, #tpu.memory_space<vmem>>, vector<2x512xbf16>
    tpu.vector_store %arg20[%c14_183, %c0_184], %194 {strides = array<i32>} : memref<16x1536xbf16, #tpu.memory_space<vmem>>, vector<2x512xbf16>,
    %c10_185 = arith.constant 10 : index
    %c1024_186 = arith.constant 1024 : index
    %197 = vector.load %arg20[%c10_185, %c1024_186] : memref<16x1536xbf16, #tpu.memory_space<vmem>>, vector<2x512xbf16>
    tpu.vector_store %arg20[%c10_185, %c1024_186], %194 {strides = array<i32>} : memref<16x1536xbf16, #tpu.memory_space<vmem>>, vector<2x512xbf16>,
    %c14_187 = arith.constant 14 : index
    %c0_188 = arith.constant 0 : index
    %198 = vector.load %arg19[%c14_187, %c0_188] : memref<16x512xf32, #tpu.memory_space<vmem>>, vector<2x512xf32>
    %199 = vector.broadcast %135 : vector<1x512xf32> to vector<2x512xf32>
    %200 = arith.addf %198, %199 : vector<2x512xf32>
    %cst_189 = arith.constant 0.000000e+00 : f32
    %201 = vector.broadcast %cst_189 : f32 to vector<2x512xf32>
    %202 = arith.maximumf %200, %201 : vector<2x512xf32>
    %203 = arith.truncf %202 : vector<2x512xf32> to vector<2x512xbf16>
    %c14_190 = arith.constant 14 : index
    %c512_191 = arith.constant 512 : index
    %204 = vector.load %arg20[%c14_190, %c512_191] : memref<16x1536xbf16, #tpu.memory_space<vmem>>, vector<2x512xbf16>
    tpu.vector_store %arg20[%c14_190, %c512_191], %203 {strides = array<i32>} : memref<16x1536xbf16, #tpu.memory_space<vmem>>, vector<2x512xbf16>,
    %c12_192 = arith.constant 12 : index
    %c1024_193 = arith.constant 1024 : index
    %205 = vector.load %arg20[%c12_192, %c1024_193] : memref<16x1536xbf16, #tpu.memory_space<vmem>>, vector<2x512xbf16>
    tpu.vector_store %arg20[%c12_192, %c1024_193], %203 {strides = array<i32>} : memref<16x1536xbf16, #tpu.memory_space<vmem>>, vector<2x512xbf16>,
    %c0_194 = arith.constant 0 : index
    %c0_195 = arith.constant 0 : index
    %206 = vector.load %arg20[%c0_194, %c0_195] : memref<16x1536xbf16, #tpu.memory_space<vmem>>, vector<16x1536xbf16>
    %c0_196 = arith.constant 0 : index
    %c0_197 = arith.constant 0 : index
    %207 = vector.load %arg4[%c0_196, %c0_197] : memref<1536x512xbf16, #tpu.memory_space<vmem>>, vector<1536x512xbf16>
    %cst_198 = arith.constant dense<0.000000e+00> : vector<16x512xf32>
    %208 = tpu.matmul %206, %207, %cst_198 {dimension_numbers = #tpu.dot_dimension_numbers<[1], [0], [0], [1], [0, 0, 1, 1], [], []>} : vector<16x1536xbf16>, vector<1536x512xbf16>, vector<16x512xf32> -> vector<16x512xf32>
    %c0_199 = arith.constant 0 : index
    %c0_200 = arith.constant 0 : index
    %209 = vector.load %arg21[%c0_199, %c0_200] : memref<16x512xf32, #tpu.memory_space<vmem>>, vector<16x512xf32>
    tpu.vector_store %arg21[%c0_199, %c0_200], %208 {strides = array<i32>} : memref<16x512xf32, #tpu.memory_space<vmem>>, vector<16x512xf32>,
    %c0_201 = arith.constant 0 : index
    %c0_202 = arith.constant 0 : index
    %210 = vector.load %arg8[%c0_201, %c0_202] : memref<1x512xf32, #tpu.memory_space<vmem>>, vector<1x512xf32>
    %cst_203 = arith.constant 0.000000e+00 : f32
    %211 = vector.broadcast %cst_203 : f32 to vector<2x64xf32>
    %c0_204 = arith.constant 0 : index
    %c0_205 = arith.constant 0 : index
    %212 = vector.load %arg21[%c0_204, %c0_205] : memref<16x512xf32, #tpu.memory_space<vmem>>, vector<2x512xf32>
    %213 = vector.broadcast %210 : vector<1x512xf32> to vector<2x512xf32>
    %214 = arith.addf %212, %213 : vector<2x512xf32>
    %cst_206 = arith.constant 0.000000e+00 : f32
    %215 = vector.broadcast %cst_206 : f32 to vector<2x512xf32>
    %216 = arith.maximumf %214, %215 : vector<2x512xf32>
    %217 = arith.truncf %216 : vector<2x512xf32> to vector<2x512xbf16>
    %c0_207 = arith.constant 0 : index
    %c0_208 = arith.constant 0 : index
    %c0_209 = arith.constant 0 : index
    %218 = vector.load %arg5[%c0_207, %c0_208, %c0_209] : memref<8x512x64xbf16, #tpu.memory_space<vmem>>, vector<1x512x64xbf16>
    %219 = vector.shape_cast %218 : vector<1x512x64xbf16> to vector<512x64xbf16>
    %cst_210 = arith.constant dense<0.000000e+00> : vector<2x64xf32>
    %220 = tpu.matmul %217, %219, %cst_210 {dimension_numbers = #tpu.dot_dimension_numbers<[1], [0], [0], [1], [0, 0, 1, 1], [], []>} : vector<2x512xbf16>, vector<512x64xbf16>, vector<2x64xf32> -> vector<2x64xf32>
    %221 = arith.addf %211, %220 : vector<2x64xf32>
    %c2_211 = arith.constant 2 : index
    %c0_212 = arith.constant 0 : index
    %222 = vector.load %arg21[%c2_211, %c0_212] : memref<16x512xf32, #tpu.memory_space<vmem>>, vector<2x512xf32>
    %223 = vector.broadcast %210 : vector<1x512xf32> to vector<2x512xf32>
    %224 = arith.addf %222, %223 : vector<2x512xf32>
    %cst_213 = arith.constant 0.000000e+00 : f32
    %225 = vector.broadcast %cst_213 : f32 to vector<2x512xf32>
    %226 = arith.maximumf %224, %225 : vector<2x512xf32>
    %227 = arith.truncf %226 : vector<2x512xf32> to vector<2x512xbf16>
    %c1 = arith.constant 1 : index
    %c0_214 = arith.constant 0 : index
    %c0_215 = arith.constant 0 : index
    %228 = vector.load %arg5[%c1, %c0_214, %c0_215] : memref<8x512x64xbf16, #tpu.memory_space<vmem>>, vector<1x512x64xbf16>
    %229 = vector.shape_cast %228 : vector<1x512x64xbf16> to vector<512x64xbf16>
    %cst_216 = arith.constant dense<0.000000e+00> : vector<2x64xf32>
    %230 = tpu.matmul %227, %229, %cst_216 {dimension_numbers = #tpu.dot_dimension_numbers<[1], [0], [0], [1], [0, 0, 1, 1], [], []>} : vector<2x512xbf16>, vector<512x64xbf16>, vector<2x64xf32> -> vector<2x64xf32>
    %231 = arith.addf %221, %230 : vector<2x64xf32>
    %c4_217 = arith.constant 4 : index
    %c0_218 = arith.constant 0 : index
    %232 = vector.load %arg21[%c4_217, %c0_218] : memref<16x512xf32, #tpu.memory_space<vmem>>, vector<2x512xf32>
    %233 = vector.broadcast %210 : vector<1x512xf32> to vector<2x512xf32>
    %234 = arith.addf %232, %233 : vector<2x512xf32>
    %cst_219 = arith.constant 0.000000e+00 : f32
    %235 = vector.broadcast %cst_219 : f32 to vector<2x512xf32>
    %236 = arith.maximumf %234, %235 : vector<2x512xf32>
    %237 = arith.truncf %236 : vector<2x512xf32> to vector<2x512xbf16>
    %c2_220 = arith.constant 2 : index
    %c0_221 = arith.constant 0 : index
    %c0_222 = arith.constant 0 : index
    %238 = vector.load %arg5[%c2_220, %c0_221, %c0_222] : memref<8x512x64xbf16, #tpu.memory_space<vmem>>, vector<1x512x64xbf16>
    %239 = vector.shape_cast %238 : vector<1x512x64xbf16> to vector<512x64xbf16>
    %cst_223 = arith.constant dense<0.000000e+00> : vector<2x64xf32>
    %240 = tpu.matmul %237, %239, %cst_223 {dimension_numbers = #tpu.dot_dimension_numbers<[1], [0], [0], [1], [0, 0, 1, 1], [], []>} : vector<2x512xbf16>, vector<512x64xbf16>, vector<2x64xf32> -> vector<2x64xf32>
    %241 = arith.addf %231, %240 : vector<2x64xf32>
    %c6_224 = arith.constant 6 : index
    %c0_225 = arith.constant 0 : index
    %242 = vector.load %arg21[%c6_224, %c0_225] : memref<16x512xf32, #tpu.memory_space<vmem>>, vector<2x512xf32>
    %243 = vector.broadcast %210 : vector<1x512xf32> to vector<2x512xf32>
    %244 = arith.addf %242, %243 : vector<2x512xf32>
    %cst_226 = arith.constant 0.000000e+00 : f32
    %245 = vector.broadcast %cst_226 : f32 to vector<2x512xf32>
    %246 = arith.maximumf %244, %245 : vector<2x512xf32>
    %247 = arith.truncf %246 : vector<2x512xf32> to vector<2x512xbf16>
    %c3 = arith.constant 3 : index
    %c0_227 = arith.constant 0 : index
    %c0_228 = arith.constant 0 : index
    %248 = vector.load %arg5[%c3, %c0_227, %c0_228] : memref<8x512x64xbf16, #tpu.memory_space<vmem>>, vector<1x512x64xbf16>
    %249 = vector.shape_cast %248 : vector<1x512x64xbf16> to vector<512x64xbf16>
    %cst_229 = arith.constant dense<0.000000e+00> : vector<2x64xf32>
    %250 = tpu.matmul %247, %249, %cst_229 {dimension_numbers = #tpu.dot_dimension_numbers<[1], [0], [0], [1], [0, 0, 1, 1], [], []>} : vector<2x512xbf16>, vector<512x64xbf16>, vector<2x64xf32> -> vector<2x64xf32>
    %251 = arith.addf %241, %250 : vector<2x64xf32>
    %c8_230 = arith.constant 8 : index
    %c0_231 = arith.constant 0 : index
    %252 = vector.load %arg21[%c8_230, %c0_231] : memref<16x512xf32, #tpu.memory_space<vmem>>, vector<2x512xf32>
    %253 = vector.broadcast %210 : vector<1x512xf32> to vector<2x512xf32>
    %254 = arith.addf %252, %253 : vector<2x512xf32>
    %cst_232 = arith.constant 0.000000e+00 : f32
    %255 = vector.broadcast %cst_232 : f32 to vector<2x512xf32>
    %256 = arith.maximumf %254, %255 : vector<2x512xf32>
    %257 = arith.truncf %256 : vector<2x512xf32> to vector<2x512xbf16>
    %c4_233 = arith.constant 4 : index
    %c0_234 = arith.constant 0 : index
    %c0_235 = arith.constant 0 : index
    %258 = vector.load %arg5[%c4_233, %c0_234, %c0_235] : memref<8x512x64xbf16, #tpu.memory_space<vmem>>, vector<1x512x64xbf16>
    %259 = vector.shape_cast %258 : vector<1x512x64xbf16> to vector<512x64xbf16>
    %cst_236 = arith.constant dense<0.000000e+00> : vector<2x64xf32>
    %260 = tpu.matmul %257, %259, %cst_236 {dimension_numbers = #tpu.dot_dimension_numbers<[1], [0], [0], [1], [0, 0, 1, 1], [], []>} : vector<2x512xbf16>, vector<512x64xbf16>, vector<2x64xf32> -> vector<2x64xf32>
    %261 = arith.addf %251, %260 : vector<2x64xf32>
    %c10_237 = arith.constant 10 : index
    %c0_238 = arith.constant 0 : index
    %262 = vector.load %arg21[%c10_237, %c0_238] : memref<16x512xf32, #tpu.memory_space<vmem>>, vector<2x512xf32>
    %263 = vector.broadcast %210 : vector<1x512xf32> to vector<2x512xf32>
    %264 = arith.addf %262, %263 : vector<2x512xf32>
    %cst_239 = arith.constant 0.000000e+00 : f32
    %265 = vector.broadcast %cst_239 : f32 to vector<2x512xf32>
    %266 = arith.maximumf %264, %265 : vector<2x512xf32>
    %267 = arith.truncf %266 : vector<2x512xf32> to vector<2x512xbf16>
    %c5 = arith.constant 5 : index
    %c0_240 = arith.constant 0 : index
    %c0_241 = arith.constant 0 : index
    %268 = vector.load %arg5[%c5, %c0_240, %c0_241] : memref<8x512x64xbf16, #tpu.memory_space<vmem>>, vector<1x512x64xbf16>
    %269 = vector.shape_cast %268 : vector<1x512x64xbf16> to vector<512x64xbf16>
    %cst_242 = arith.constant dense<0.000000e+00> : vector<2x64xf32>
    %270 = tpu.matmul %267, %269, %cst_242 {dimension_numbers = #tpu.dot_dimension_numbers<[1], [0], [0], [1], [0, 0, 1, 1], [], []>} : vector<2x512xbf16>, vector<512x64xbf16>, vector<2x64xf32> -> vector<2x64xf32>
    %271 = arith.addf %261, %270 : vector<2x64xf32>
    %c12_243 = arith.constant 12 : index
    %c0_244 = arith.constant 0 : index
    %272 = vector.load %arg21[%c12_243, %c0_244] : memref<16x512xf32, #tpu.memory_space<vmem>>, vector<2x512xf32>
    %273 = vector.broadcast %210 : vector<1x512xf32> to vector<2x512xf32>
    %274 = arith.addf %272, %273 : vector<2x512xf32>
    %cst_245 = arith.constant 0.000000e+00 : f32
    %275 = vector.broadcast %cst_245 : f32 to vector<2x512xf32>
    %276 = arith.maximumf %274, %275 : vector<2x512xf32>
    %277 = arith.truncf %276 : vector<2x512xf32> to vector<2x512xbf16>
    %c6_246 = arith.constant 6 : index
    %c0_247 = arith.constant 0 : index
    %c0_248 = arith.constant 0 : index
    %278 = vector.load %arg5[%c6_246, %c0_247, %c0_248] : memref<8x512x64xbf16, #tpu.memory_space<vmem>>, vector<1x512x64xbf16>
    %279 = vector.shape_cast %278 : vector<1x512x64xbf16> to vector<512x64xbf16>
    %cst_249 = arith.constant dense<0.000000e+00> : vector<2x64xf32>
    %280 = tpu.matmul %277, %279, %cst_249 {dimension_numbers = #tpu.dot_dimension_numbers<[1], [0], [0], [1], [0, 0, 1, 1], [], []>} : vector<2x512xbf16>, vector<512x64xbf16>, vector<2x64xf32> -> vector<2x64xf32>
    %281 = arith.addf %271, %280 : vector<2x64xf32>
    %c14_250 = arith.constant 14 : index
    %c0_251 = arith.constant 0 : index
    %282 = vector.load %arg21[%c14_250, %c0_251] : memref<16x512xf32, #tpu.memory_space<vmem>>, vector<2x512xf32>
    %283 = vector.broadcast %210 : vector<1x512xf32> to vector<2x512xf32>
    %284 = arith.addf %282, %283 : vector<2x512xf32>
    %cst_252 = arith.constant 0.000000e+00 : f32
    %285 = vector.broadcast %cst_252 : f32 to vector<2x512xf32>
    %286 = arith.maximumf %284, %285 : vector<2x512xf32>
    %287 = arith.truncf %286 : vector<2x512xf32> to vector<2x512xbf16>
    %c7 = arith.constant 7 : index
    %c0_253 = arith.constant 0 : index
    %c0_254 = arith.constant 0 : index
    %288 = vector.load %arg5[%c7, %c0_253, %c0_254] : memref<8x512x64xbf16, #tpu.memory_space<vmem>>, vector<1x512x64xbf16>
    %289 = vector.shape_cast %288 : vector<1x512x64xbf16> to vector<512x64xbf16>
    %cst_255 = arith.constant dense<0.000000e+00> : vector<2x64xf32>
    %290 = tpu.matmul %287, %289, %cst_255 {dimension_numbers = #tpu.dot_dimension_numbers<[1], [0], [0], [1], [0, 0, 1, 1], [], []>} : vector<2x512xbf16>, vector<512x64xbf16>, vector<2x64xf32> -> vector<2x64xf32>
    %291 = arith.addf %281, %290 : vector<2x64xf32>
    %c0_256 = arith.constant 0 : index
    %c0_257 = arith.constant 0 : index
    %292 = vector.load %arg9[%c0_256, %c0_257] : memref<1x64xf32, #tpu.memory_space<vmem>>, vector<1x64xf32>
    %293 = vector.broadcast %292 : vector<1x64xf32> to vector<2x64xf32>
    %294 = arith.addf %291, %293 : vector<2x64xf32>
    %cst_258 = arith.constant 0.000000e+00 : f32
    %295 = vector.broadcast %cst_258 : f32 to vector<2x64xf32>
    %296 = arith.maximumf %294, %295 : vector<2x64xf32>
    %c0_259 = arith.constant 0 : index
    %c0_260 = arith.constant 0 : index
    %297 = vector.load %arg10[%c0_259, %c0_260] : memref<64x32xf32, #tpu.memory_space<vmem>>, vector<64x32xf32>
    %cst_261 = arith.constant dense<0.000000e+00> : vector<2x32xf32>
    %298 = tpu.matmul %296, %297, %cst_261 {dimension_numbers = #tpu.dot_dimension_numbers<[1], [0], [0], [1], [0, 0, 1, 1], [], []>} : vector<2x64xf32>, vector<64x32xf32>, vector<2x32xf32> -> vector<2x32xf32>
    %c0_262 = arith.constant 0 : index
    %c0_263 = arith.constant 0 : index
    %299 = vector.load %arg11[%c0_262, %c0_263] : memref<1x32xf32, #tpu.memory_space<vmem>>, vector<1x32xf32>
    %300 = vector.broadcast %299 : vector<1x32xf32> to vector<2x32xf32>
    %301 = arith.addf %298, %300 : vector<2x32xf32>
    %cst_264 = arith.constant 0.000000e+00 : f32
    %302 = vector.broadcast %cst_264 : f32 to vector<2x32xf32>
    %303 = arith.maximumf %301, %302 : vector<2x32xf32>
    %c0_265 = arith.constant 0 : index
    %c0_266 = arith.constant 0 : index
    %304 = vector.load %arg12[%c0_265, %c0_266] : memref<32x16xf32, #tpu.memory_space<vmem>>, vector<32x16xf32>
    %cst_267 = arith.constant dense<0.000000e+00> : vector<2x16xf32>
    %305 = tpu.matmul %303, %304, %cst_267 {dimension_numbers = #tpu.dot_dimension_numbers<[1], [0], [0], [1], [0, 0, 1, 1], [], []>} : vector<2x32xf32>, vector<32x16xf32>, vector<2x16xf32> -> vector<2x16xf32>
    %c0_268 = arith.constant 0 : index
    %c0_269 = arith.constant 0 : index
    %306 = vector.load %arg13[%c0_268, %c0_269] : memref<1x16xf32, #tpu.memory_space<vmem>>, vector<1x16xf32>
    %307 = vector.broadcast %306 : vector<1x16xf32> to vector<2x16xf32>
    %308 = arith.addf %305, %307 : vector<2x16xf32>
    %cst_270 = arith.constant 0.000000e+00 : f32
    %309 = vector.broadcast %cst_270 : f32 to vector<2x16xf32>
    %310 = arith.maximumf %308, %309 : vector<2x16xf32>
    %c0_271 = arith.constant 0 : index
    %c0_272 = arith.constant 0 : index
    %311 = vector.load %arg14[%c0_271, %c0_272] : memref<1x16xf32, #tpu.memory_space<vmem>>, vector<1x16xf32>
    %312 = vector.broadcast %311 : vector<1x16xf32> to vector<2x16xf32>
    %313 = arith.mulf %310, %312 : vector<2x16xf32>
    %cst_273 = arith.constant dense<0.000000e+00> : vector<2xf32>
    %314 = vector.multi_reduction <add>, %313, %cst_273 [1] : vector<2x16xf32> to vector<2xf32>
    %315 = vector.shape_cast %314 : vector<2xf32> to vector<2x1xf32>
    %c0_274 = arith.constant 0 : index
    %c0_275 = arith.constant 0 : index
    %316 = vector.load %arg15[%c0_274, %c0_275] : memref<1x1xf32, #tpu.memory_space<vmem>>, vector<1x1xf32>
    %317 = vector.broadcast %316 : vector<1x1xf32> to vector<2x1xf32>
    %318 = arith.addf %315, %317 : vector<2x1xf32>
    %c0_276 = arith.constant 0 : index
    %c0_277 = arith.constant 0 : index
    %319 = vector.load %arg16[%c0_276, %c0_277] : memref<2x1xf32, #tpu.memory_space<vmem>>, vector<2x1xf32>
    tpu.vector_store %arg16[%c0_276, %c0_277], %318 {strides = array<i32>} : memref<2x1xf32, #tpu.memory_space<vmem>>, vector<2x1xf32>,
    return
  }
  func.func @transform_0(%arg0: i32) -> (i32, i32) {
    %c0_i32 = arith.constant 0 : i32
    %c0_i32_0 = arith.constant 0 : i32
    return %arg0, %c0_i32 : i32, i32
  }
  func.func @transform_1(%arg0: i32) -> (i32, i32) {
    %c0_i32 = arith.constant 0 : i32
    %c0_i32_0 = arith.constant 0 : i32
    %c0_i32_1 = arith.constant 0 : i32
    return %c0_i32, %c0_i32_0 : i32, i32
  }
  func.func @transform_2(%arg0: i32) -> (i32, i32) {
    %c0_i32 = arith.constant 0 : i32
    %c0_i32_0 = arith.constant 0 : i32
    %c0_i32_1 = arith.constant 0 : i32
    return %c0_i32, %c0_i32_0 : i32, i32
  }
  func.func @transform_3(%arg0: i32) -> (i32, i32) {
    %c0_i32 = arith.constant 0 : i32
    %c0_i32_0 = arith.constant 0 : i32
    %c0_i32_1 = arith.constant 0 : i32
    return %c0_i32, %c0_i32_0 : i32, i32
  }
  func.func @transform_4(%arg0: i32) -> (i32, i32, i32) {
    %c0_i32 = arith.constant 0 : i32
    %c0_i32_0 = arith.constant 0 : i32
    %c0_i32_1 = arith.constant 0 : i32
    %c0_i32_2 = arith.constant 0 : i32
    return %c0_i32, %c0_i32_0, %c0_i32_1 : i32, i32, i32
  }
  func.func @transform_5(%arg0: i32) -> (i32, i32) {
    %c0_i32 = arith.constant 0 : i32
    %c0_i32_0 = arith.constant 0 : i32
    %c0_i32_1 = arith.constant 0 : i32
    return %c0_i32, %c0_i32_0 : i32, i32
  }
  func.func @transform_6(%arg0: i32) -> (i32, i32) {
    %c0_i32 = arith.constant 0 : i32
    %c0_i32_0 = arith.constant 0 : i32
    %c0_i32_1 = arith.constant 0 : i32
    return %c0_i32, %c0_i32_0 : i32, i32
  }
  func.func @transform_7(%arg0: i32) -> (i32, i32) {
    %c0_i32 = arith.constant 0 : i32
    %c0_i32_0 = arith.constant 0 : i32
    %c0_i32_1 = arith.constant 0 : i32
    return %c0_i32, %c0_i32_0 : i32, i32
  }
  func.func @transform_8(%arg0: i32) -> (i32, i32) {
    %c0_i32 = arith.constant 0 : i32
    %c0_i32_0 = arith.constant 0 : i32
    %c0_i32_1 = arith.constant 0 : i32
    return %c0_i32, %c0_i32_0 : i32, i32
  }
  func.func @transform_9(%arg0: i32) -> (i32, i32) {
    %c0_i32 = arith.constant 0 : i32
    %c0_i32_0 = arith.constant 0 : i32
    %c0_i32_1 = arith.constant 0 : i32
    return %c0_i32, %c0_i32_0 : i32, i32
  }
  func.func @transform_10(%arg0: i32) -> (i32, i32) {
    %c0_i32 = arith.constant 0 : i32
    %c0_i32_0 = arith.constant 0 : i32
    %c0_i32_1 = arith.constant 0 : i32
    return %c0_i32, %c0_i32_0 : i32, i32
  }
  func.func @transform_11(%arg0: i32) -> (i32, i32) {
    %c0_i32 = arith.constant 0 : i32
    %c0_i32_0 = arith.constant 0 : i32
    %c0_i32_1 = arith.constant 0 : i32
    return %c0_i32, %c0_i32_0 : i32, i32
  }
  func.func @transform_12(%arg0: i32) -> (i32, i32) {
    %c0_i32 = arith.constant 0 : i32
    %c0_i32_0 = arith.constant 0 : i32
    %c0_i32_1 = arith.constant 0 : i32
    return %c0_i32, %c0_i32_0 : i32, i32
  }
  func.func @transform_13(%arg0: i32) -> (i32, i32) {
    %c0_i32 = arith.constant 0 : i32
    %c0_i32_0 = arith.constant 0 : i32
    %c0_i32_1 = arith.constant 0 : i32
    return %c0_i32, %c0_i32_0 : i32, i32
  }
  func.func @transform_14(%arg0: i32) -> (i32, i32) {
    %c0_i32 = arith.constant 0 : i32
    %c0_i32_0 = arith.constant 0 : i32
    %c0_i32_1 = arith.constant 0 : i32
    return %c0_i32, %c0_i32_0 : i32, i32
  }
  func.func @transform_15(%arg0: i32) -> (i32, i32) {
    %c0_i32 = arith.constant 0 : i32
    %c0_i32_0 = arith.constant 0 : i32
    return %arg0, %c0_i32 : i32, i32
  }
}

</mosaic_0001>

<llo_original>
// kernel: age_prediction_cnn_forward.1
$region0: #{age_prediction_cnn_forward.1}
  #allocation0 [shape = 'u32[]', space=smem, size = 0x4, offset = 0x4, fixed_abs, tag = 'smem constant byte address 0x4 - core index']
  #allocation1 [shape = 'u32[144,128]{1,0:T(1,128)}', space=vmem, size = 0x12000, scoped, tag = 'internal scratch']
  #allocation2 [shape = 'f32[32,512]{1,0:T(8,128)}', space=vmem, size = 0x10000, scoped, tag = 'scratch operand']
  #allocation3 [shape = 'bf16[16,768]{1,0:T(16,128)(2,1)}', space=vmem, size = 0x6000, scoped, tag = 'scratch operand']
  #allocation4 [shape = 'f32[16,512]{1,0:T(8,128)}', space=vmem, size = 0x8000, scoped, tag = 'scratch operand']
  #allocation5 [shape = 'bf16[16,1536]{1,0:T(16,128)(2,1)}', space=vmem, size = 0xc000, scoped, tag = 'scratch operand']
  #allocation6 [shape = 'f32[16,512]{1,0:T(8,128)}', space=vmem, size = 0x8000, scoped, tag = 'scratch operand']
  #allocation7 [shape = 'f32[1,1]{1,0:T(1,128)S(1)}', space=vmem, size = 0x200, scoped, tag = 'scoped memory for age_prediction_cnn_forward.1']
  %s0 = inlined_call_operand.vmem [shape: bf16[32,144], index: 0, kind: input, shape index: {}]
  %s1 = inlined_call_operand.vmem [shape: bf16[144,512], index: 1, kind: input, shape index: {}]
  %s2 = inlined_call_operand.hbm [shape: bf16[768,512], index: 2, kind: input, shape index: {}]
  %s3 = inlined_call_operand.vmem [shape: bf16[1536,512], index: 3, kind: input, shape index: {}]
  %s4 = inlined_call_operand.vmem [shape: bf16[8,512,64], index: 4, kind: input, shape index: {}]
  %s5 = inlined_call_operand.vmem [shape: f32[1,256], index: 5, kind: input, shape index: {}]
  %s6 = inlined_call_operand.vmem [shape: f32[1,512], index: 6, kind: input, shape index: {}]
  %s7 = inlined_call_operand.vmem [shape: f32[1,512], index: 7, kind: input, shape index: {}]
  %s8 = inlined_call_operand.vmem [shape: f32[1,64], index: 8, kind: input, shape index: {}]
  %s9 = inlined_call_operand.vmem [shape: f32[64,32], index: 9, kind: input, shape index: {}]
  %s10 = inlined_call_operand.vmem [shape: f32[1,32], index: 10, kind: input, shape index: {}]
  %s11 = inlined_call_operand.vmem [shape: f32[32,16], index: 11, kind: input, shape index: {}]
  %s12 = inlined_call_operand.vmem [shape: f32[1,16], index: 12, kind: input, shape index: {}]
  %s13 = inlined_call_operand.vmem [shape: f32[1,16], index: 13, kind: input, shape index: {}]
  %s14 = inlined_call_operand.<no memory space> [shape: f32[1,1], index: 14, kind: input, shape index: {}]
  %s15 = inlined_call_operand.vmem [shape: f32[2,1], index: 15, kind: output, shape index: {}]
  %s16 = sld [smem:[#allocation0]]
  $region74: #{age_prediction_cnn_forward.1} parent=0
    _
  %s18 = ssub.s32 1, %s16
  %s19 = scalar_select 0, %s18, %s16
  %v20 = vstv %s14
  %21 = vst [vmem:[#allocation7] sm:$0x1] %v20
  $region1: #{age_prediction_cnn_forward.1} parent=0
    #allocation8 [shape = 'u8[786432]{0}', space=vmem, size = 0xc0000, scoped, tag = 'input window, operand 2, single buffered']
    #allocation9 [shape = 's32[1]{0}', space=sflag, size = 0x4, scoped, tag = 'scoped memory for age_prediction_cnn_forward.1']
    %22 = vsyncpa [#allocation9], 0
    // Predicated region
    $region2: #{age_prediction_cnn_forward.1} parent=1 // pred_check
      _
    $region3: #{age_prediction_cnn_forward.1} parent=1 // pred_check_branch
      %24 = sbr.rel (0) target = $region5
    $region4: #{age_prediction_cnn_forward.1} parent=1 // pred_region
      _
    $region5: #{age_prediction_cnn_forward.1} parent=1 // pred_fallthru
      _
    // Predicated region
    $region6: #{age_prediction_cnn_forward.1} parent=1 // pred_check
      _
    $region7: #{age_prediction_cnn_forward.1} parent=1 // pred_check_branch
      %26 = sbr.rel (0) target = $region9
    $region8: #{age_prediction_cnn_forward.1} parent=1 // pred_region
      _
    $region9: #{age_prediction_cnn_forward.1} parent=1 // pred_fallthru
      _
    // Predicated region
    $region10: #{age_prediction_cnn_forward.1} parent=1 // pred_check
      _
    $region11: #{age_prediction_cnn_forward.1} parent=1 // pred_check_branch
      %28 = sbr.rel (0) target = $region13
    $region12: #{age_prediction_cnn_forward.1} parent=1 // pred_region
      %s30 = ssub.s32 24576, 24576
      %31 = vsyncadd [#allocation9], %s30
      %s32 = sshll.u32 [#allocation8], 4
      %s33 = int_to_ptr.vmem [resolvable:$true] %s32
      %38 = dma.hbm_to_vmem [thread:$0]  %s2, 24576, %s33, [#allocation9], 256, 256, 16
    $region13: #{age_prediction_cnn_forward.1} parent=1 // pred_fallthru
      _
    // Predicated region
    $region14: #{age_prediction_cnn_forward.1} parent=1 // pred_check
      _
    $region15: #{age_prediction_cnn_forward.1} parent=1 // pred_check_branch
      %40 = sbr.rel (0) target = $region17
    $region16: #{age_prediction_cnn_forward.1} parent=1 // pred_region
      _
    $region17: #{age_prediction_cnn_forward.1} parent=1 // pred_fallthru
      _
    // Predicated region
    $region18: #{age_prediction_cnn_forward.1} parent=1 // pred_check
      _
    $region19: #{age_prediction_cnn_forward.1} parent=1 // pred_check_branch
      %42 = sbr.rel (0) target = $region21
    $region20: #{age_prediction_cnn_forward.1} parent=1 // pred_region
      _
    $region21: #{age_prediction_cnn_forward.1} parent=1 // pred_fallthru
      _
    // Predicated region
    $region22: #{age_prediction_cnn_forward.1} parent=1 // pred_check
      _
    $region23: #{age_prediction_cnn_forward.1} parent=1 // pred_check_branch
      %44 = sbr.rel (0) target = $region25
    $region24: #{age_prediction_cnn_forward.1} parent=1 // pred_region
      _
    $region25: #{age_prediction_cnn_forward.1} parent=1 // pred_fallthru
      _
    // Predicated region
    $region26: #{age_prediction_cnn_forward.1} parent=1 // pred_check
      _
    $region27: #{age_prediction_cnn_forward.1} parent=1 // pred_check_branch
      %46 = sbr.rel (0) target = $region29
    $region28: #{age_prediction_cnn_forward.1} parent=1 // pred_region
      _
    $region29: #{age_prediction_cnn_forward.1} parent=1 // pred_fallthru
      _
    // Predicated region
    $region30: #{age_prediction_cnn_forward.1} parent=1 // pred_check
      _
    $region31: #{age_prediction_cnn_forward.1} parent=1 // pred_check_branch
      %48 = sbr.rel (0) target = $region33
    $region32: #{age_prediction_cnn_forward.1} parent=1 // pred_region
      _
    $region33: #{age_prediction_cnn_forward.1} parent=1 // pred_fallthru
      _
    // Predicated region
    $region34: #{age_prediction_cnn_forward.1} parent=1 // pred_check
      _
    $region35: #{age_prediction_cnn_forward.1} parent=1 // pred_check_branch
      %50 = sbr.rel (0) target = $region37
    $region36: #{age_prediction_cnn_forward.1} parent=1 // pred_region
      _
    $region37: #{age_prediction_cnn_forward.1} parent=1 // pred_fallthru
      _
    // Predicated region
    $region38: #{age_prediction_cnn_forward.1} parent=1 // pred_check
      _
    $region39: #{age_prediction_cnn_forward.1} parent=1 // pred_check_branch
      %52 = sbr.rel (0) target = $region41
    $region40: #{age_prediction_cnn_forward.1} parent=1 // pred_region
      _
    $region41: #{age_prediction_cnn_forward.1} parent=1 // pred_fallthru
      _
    // Predicated region
    $region42: #{age_prediction_cnn_forward.1} parent=1 // pred_check
      _
    $region43: #{age_prediction_cnn_forward.1} parent=1 // pred_check_branch
      %54 = sbr.rel (0) target = $region45
    $region44: #{age_prediction_cnn_forward.1} parent=1 // pred_region
      _
    $region45: #{age_prediction_cnn_forward.1} parent=1 // pred_fallthru
      _
    // Predicated region
    $region46: #{age_prediction_cnn_forward.1} parent=1 // pred_check
      _
    $region47: #{age_prediction_cnn_forward.1} parent=1 // pred_check_branch
      %56 = sbr.rel (0) target = $region49
    $region48: #{age_prediction_cnn_forward.1} parent=1 // pred_region
      _
    $region49: #{age_prediction_cnn_forward.1} parent=1 // pred_fallthru
      _
    // Predicated region
    $region50: #{age_prediction_cnn_forward.1} parent=1 // pred_check
      _
    $region51: #{age_prediction_cnn_forward.1} parent=1 // pred_check_branch
      %58 = sbr.rel (0) target = $region53
    $region52: #{age_prediction_cnn_forward.1} parent=1 // pred_region
      _
    $region53: #{age_prediction_cnn_forward.1} parent=1 // pred_fallthru
      _
    // Predicated region
    $region54: #{age_prediction_cnn_forward.1} parent=1 // pred_check
      _
    $region55: #{age_prediction_cnn_forward.1} parent=1 // pred_check_branch
      %60 = sbr.rel (0) target = $region57
    $region56: #{age_prediction_cnn_forward.1} parent=1 // pred_region
      _
    $region57: #{age_prediction_cnn_forward.1} parent=1 // pred_fallthru
      _
    // Predicated region
    $region58: #{age_prediction_cnn_forward.1} parent=1 // pred_check
      _
    $region59: #{age_prediction_cnn_forward.1} parent=1 // pred_check_branch
      %62 = sbr.rel (0) target = $region61
    $region60: #{age_prediction_cnn_forward.1} parent=1 // pred_region
      _
    $region61: #{age_prediction_cnn_forward.1} parent=1 // pred_fallthru
      _
    // Predicated region
    $region62: #{age_prediction_cnn_forward.1} parent=1 // pred_check
      _
    $region63: #{age_prediction_cnn_forward.1} parent=1 // pred_check_branch
      %64 = sbr.rel (0) target = $region65
    $region64: #{age_prediction_cnn_forward.1} parent=1 // pred_region
      %65 = dma.done [#allocation9], 24576
    $region65: #{age_prediction_cnn_forward.1} parent=1 // pred_fallthru
      _
    %v67 = vld [vmem:[%s0] sm:$0xff]
    %v68 = vld [vmem:[%s0 + $0x8] sm:$0xff]
    %v69 = vld [vmem:[%s0 + $0x10] sm:$0xff]
    %v70 = vld [vmem:[%s0 + $0x18] sm:$0xff]
    %v71 = vld [vmem:[%s1] sm:$0xff]
    %v72 = vld [vmem:[%s1 + $0x8] sm:$0xff]
    %v73 = vld [vmem:[%s1 + $0x10] sm:$0xff]
    %v74 = vld [vmem:[%s1 + $0x18] sm:$0xff]
    %v75 = vld [vmem:[%s1 + $0x20] sm:$0xff]
    %v76 = vld [vmem:[%s1 + $0x28] sm:$0xff]
    %v77 = vld [vmem:[%s1 + $0x30] sm:$0xff]
    %v78 = vld [vmem:[%s1 + $0x38] sm:$0xff]
    %v79 = vld [vmem:[%s1 + $0x40] sm:$0xff]
    %v80 = vld [vmem:[%s1 + $0x48] sm:$0xff]
    %v81 = vld [vmem:[%s1 + $0x50] sm:$0xff]
    %v82 = vld [vmem:[%s1 + $0x58] sm:$0xff]
    %v83 = vld [vmem:[%s1 + $0x60] sm:$0xff]
    %v84 = vld [vmem:[%s1 + $0x68] sm:$0xff]
    %v85 = vld [vmem:[%s1 + $0x70] sm:$0xff]
    %v86 = vld [vmem:[%s1 + $0x78] sm:$0xff]
    %v87 = vld [vmem:[%s1 + $0x80] sm:$0xff]
    %v88 = vld [vmem:[%s1 + $0x88] sm:$0xff]
    %v89 = vld [vmem:[%s1 + $0x90] sm:$0xff]
    %v90 = vld [vmem:[%s1 + $0x98] sm:$0xff]
    %v91 = vld [vmem:[%s1 + $0xa0] sm:$0xff]
    %v92 = vld [vmem:[%s1 + $0xa8] sm:$0xff]
    %v93 = vld [vmem:[%s1 + $0xb0] sm:$0xff]
    %v94 = vld [vmem:[%s1 + $0xb8] sm:$0xff]
    %v95 = vld [vmem:[%s1 + $0xc0] sm:$0xff]
    %v96 = vld [vmem:[%s1 + $0xc8] sm:$0xff]
    %v97 = vld [vmem:[%s1 + $0xd0] sm:$0xff]
    %v98 = vld [vmem:[%s1 + $0xd8] sm:$0xff]
    %v99 = vld [vmem:[%s1 + $0xe0] sm:$0xff]
    %v100 = vld [vmem:[%s1 + $0xe8] sm:$0xff]
    %v101 = vld [vmem:[%s1 + $0xf0] sm:$0xff]
    %v102 = vld [vmem:[%s1 + $0xf8] sm:$0xff]
    %v103 = vld [vmem:[%s1 + $0x100] sm:$0xff]
    %v104 = vld [vmem:[%s1 + $0x108] sm:$0xff]
    %v105 = vld [vmem:[%s1 + $0x110] sm:$0xff]
    %v106 = vld [vmem:[%s1 + $0x118] sm:$0xff]
    %v111 = vunpack.c.l.b16 %v67
    %v112 = vunpack.c.h.b16 %v67
    %v113 = vunpack.c.l.b16 %v68
    %v114 = vunpack.c.h.b16 %v68
    %v115 = vunpack.c.l.b16 %v69
    %v116 = vunpack.c.h.b16 %v69
    %v117 = vunpack.c.l.b16 %v70
    %v118 = vunpack.c.h.b16 %v70
    %v119 = vpack.c.b16 %v113, %v111
    %v120 = vpack.c.b16 %v114, %v112
    %v121 = vpack.c.b16 %v117, %v115
    %v122 = vpack.c.b16 %v118, %v116
    %v161 = vunpack.c.l.b16 %v71
    %v162 = vunpack.c.h.b16 %v71
    %v163 = vunpack.c.l.b16 %v72
    %v164 = vunpack.c.h.b16 %v72
    %v165 = vunpack.c.l.b16 %v73
    %v166 = vunpack.c.h.b16 %v73
    %v167 = vunpack.c.l.b16 %v74
    %v168 = vunpack.c.h.b16 %v74
    %v169 = vunpack.c.l.b16 %v75
    %v170 = vunpack.c.h.b16 %v75
    %v171 = vunpack.c.l.b16 %v76
    %v172 = vunpack.c.h.b16 %v76
    %v173 = vunpack.c.l.b16 %v77
    %v174 = vunpack.c.h.b16 %v77
    %v175 = vunpack.c.l.b16 %v78
    %v176 = vunpack.c.h.b16 %v78
    %v177 = vunpack.c.l.b16 %v79
    %v178 = vunpack.c.h.b16 %v79
    %v179 = vunpack.c.l.b16 %v80
    %v180 = vunpack.c.h.b16 %v80
    %v181 = vunpack.c.l.b16 %v81
    %v182 = vunpack.c.h.b16 %v81
    %v183 = vunpack.c.l.b16 %v82
    %v184 = vunpack.c.h.b16 %v82
    %v185 = vunpack.c.l.b16 %v83
    %v186 = vunpack.c.h.b16 %v83
    %v187 = vunpack.c.l.b16 %v84
    %v188 = vunpack.c.h.b16 %v84
    %v189 = vunpack.c.l.b16 %v85
    %v190 = vunpack.c.h.b16 %v85
    %v191 = vunpack.c.l.b16 %v86
    %v192 = vunpack.c.h.b16 %v86
    %v193 = vunpack.c.l.b16 %v87
    %v194 = vunpack.c.h.b16 %v87
    %v195 = vunpack.c.l.b16 %v88
    %v196 = vunpack.c.h.b16 %v88
    %v197 = vunpack.c.l.b16 %v89
    %v198 = vunpack.c.h.b16 %v89
    %v199 = vunpack.c.l.b16 %v90
    %v200 = vunpack.c.h.b16 %v90
    %v201 = vunpack.c.l.b16 %v91
    %v202 = vunpack.c.h.b16 %v91
    %v203 = vunpack.c.l.b16 %v92
    %v204 = vunpack.c.h.b16 %v92
    %v205 = vunpack.c.l.b16 %v93
    %v206 = vunpack.c.h.b16 %v93
    %v207 = vunpack.c.l.b16 %v94
    %v208 = vunpack.c.h.b16 %v94
    %v209 = vunpack.c.l.b16 %v95
    %v210 = vunpack.c.h.b16 %v95
    %v211 = vunpack.c.l.b16 %v96
    %v212 = vunpack.c.h.b16 %v96
    %v213 = vunpack.c.l.b16 %v97
    %v214 = vunpack.c.h.b16 %v97
    %v215 = vunpack.c.l.b16 %v98
    %v216 = vunpack.c.h.b16 %v98
    %v217 = vunpack.c.l.b16 %v99
    %v218 = vunpack.c.h.b16 %v99
    %v219 = vunpack.c.l.b16 %v100
    %v220 = vunpack.c.h.b16 %v100
    %v221 = vunpack.c.l.b16 %v101
    %v222 = vunpack.c.h.b16 %v101
    %v223 = vunpack.c.l.b16 %v102
    %v224 = vunpack.c.h.b16 %v102
    %v225 = vunpack.c.l.b16 %v103
    %v226 = vunpack.c.h.b16 %v103
    %v227 = vunpack.c.l.b16 %v104
    %v228 = vunpack.c.h.b16 %v104
    %v229 = vunpack.c.l.b16 %v105
    %v230 = vunpack.c.h.b16 %v105
    %v231 = vunpack.c.l.b16 %v106
    %v232 = vunpack.c.h.b16 %v106
    %v233 = vpack.c.b16 %v165, %v161
    %v234 = vpack.c.b16 %v166, %v162
    %v235 = vpack.c.b16 %v167, %v163
    %v236 = vpack.c.b16 %v168, %v164
    %v237 = vpack.c.b16 %v173, %v169
    %v238 = vpack.c.b16 %v174, %v170
    %v239 = vpack.c.b16 %v175, %v171
    %v240 = vpack.c.b16 %v176, %v172
    %v241 = vpack.c.b16 %v181, %v177
    %v242 = vpack.c.b16 %v182, %v178
    %v243 = vpack.c.b16 %v183, %v179
    %v244 = vpack.c.b16 %v184, %v180
    %v245 = vpack.c.b16 %v189, %v185
    %v246 = vpack.c.b16 %v190, %v186
    %v247 = vpack.c.b16 %v191, %v187
    %v248 = vpack.c.b16 %v192, %v188
    %v249 = vpack.c.b16 %v197, %v193
    %v250 = vpack.c.b16 %v198, %v194
    %v251 = vpack.c.b16 %v199, %v195
    %v252 = vpack.c.b16 %v200, %v196
    %v253 = vpack.c.b16 %v205, %v201
    %v254 = vpack.c.b16 %v206, %v202
    %v255 = vpack.c.b16 %v207, %v203
    %v256 = vpack.c.b16 %v208, %v204
    %v257 = vpack.c.b16 %v213, %v209
    %v258 = vpack.c.b16 %v214, %v210
    %v259 = vpack.c.b16 %v215, %v211
    %v260 = vpack.c.b16 %v216, %v212
    %v261 = vpack.c.b16 %v221, %v217
    %v262 = vpack.c.b16 %v222, %v218
    %v263 = vpack.c.b16 %v223, %v219
    %v264 = vpack.c.b16 %v224, %v220
    %v265 = vpack.c.b16 %v229, %v225
    %v266 = vpack.c.b16 %v230, %v226
    %v267 = vpack.c.b16 %v231, %v227
    %v268 = vpack.c.b16 %v232, %v228
    %vm305 = vcmask 130048
    %v307 = vsel %vm305, %v120, 0
    %v310 = vsel %vm305, %v122, 0
    %312 = vmatprep.subr.bf16.mxu0 %v234
    %313 = vmatpush1.bf16.msra.mxu0 %v233
    %314 = vmatprep.subr.bf16.mxu0 %v238
    %315 = vmatpush1.bf16.msra.mxu0 %v237
    %316 = vmatprep.subr.bf16.mxu0 %v242
    %317 = vmatpush1.bf16.msra.mxu0 %v241
    %318 = vmatprep.subr.bf16.mxu0 %v246
    %319 = vmatpush1.bf16.msra.mxu0 %v245
    %320 = vmatprep.subr.bf16.mxu0 %v250
    %321 = vmatpush1.bf16.msra.mxu0 %v249
    %322 = vmatprep.subr.bf16.mxu0 %v254
    %323 = vmatpush1.bf16.msra.mxu0 %v253
    %324 = vmatprep.subr.bf16.mxu0 %v258
    %325 = vmatpush1.bf16.msra.mxu0 %v257
    %326 = vmatprep.subr.bf16.mxu0 %v262
    %327 = vmatpush1.bf16.msra.mxu0 %v261
    %328 = vmatprep.subr.bf16.mxu0 %v266
    %329 = vmatpush1.bf16.msra.mxu0 %v265
    %330 = vmatprep.subr.bf16.mxu0 0
    %331 = vmatpush1.bf16.msra.mxu0 0
    %332 = vmatprep.subr.bf16.mxu0 0
    %333 = vmatpush1.bf16.msra.mxu0 0
    %334 = vmatprep.subr.bf16.mxu0 0
    %335 = vmatpush1.bf16.msra.mxu0 0
    %336 = vmatprep.subr.bf16.mxu0 0
    %337 = vmatpush1.bf16.msra.mxu0 0
    %338 = vmatprep.subr.bf16.mxu0 0
    %339 = vmatpush1.bf16.msra.mxu0 0
    %340 = vmatprep.subr.bf16.mxu0 0
    %341 = vmatpush1.bf16.msra.mxu0 0
    %342 = vmatprep.subr.bf16.mxu0 0
    %343 = vmatpush1.bf16.msra.mxu0 0
    %344 = vmatprep.mubr.bf16.mxu0 %v307
    %345 = vmatmul.mubr.bf16.gmra.mrb[0].mxu0 %v119
    %v346 = vpop.f32.mrb[0].mxu0
    %v347 = vadd.f32 0.0, %v346
    %v348 = vpop.f32.mrb[0].mxu0
    %v349 = vadd.f32 0.0, %v348
    %v350 = vpop.f32.mrb[0].mxu0
    %v351 = vadd.f32 0.0, %v350
    %v352 = vpop.f32.mrb[0].mxu0
    %v353 = vadd.f32 0.0, %v352
    %354 = vmatprep.mubr.bf16.mxu0 %v310
    %355 = vmatmul.mubr.bf16.gmra.mrb[0].mxu0 %v121
    %v356 = vpop.f32.mrb[0].mxu0
    %v357 = vadd.f32 0.0, %v356
    %v358 = vpop.f32.mrb[0].mxu0
    %v359 = vadd.f32 0.0, %v358
    %v360 = vpop.f32.mrb[0].mxu0
    %v361 = vadd.f32 0.0, %v360
    %v362 = vpop.f32.mrb[0].mxu0
    %v363 = vadd.f32 0.0, %v362
    %364 = vdwg.mxu0
    %365 = vmatprep.subr.bf16.mxu0 %v236
    %366 = vmatpush1.bf16.msra.mxu0 %v235
    %367 = vmatprep.subr.bf16.mxu0 %v240
    %368 = vmatpush1.bf16.msra.mxu0 %v239
    %369 = vmatprep.subr.bf16.mxu0 %v244
    %370 = vmatpush1.bf16.msra.mxu0 %v243
    %371 = vmatprep.subr.bf16.mxu0 %v248
    %372 = vmatpush1.bf16.msra.mxu0 %v247
    %373 = vmatprep.subr.bf16.mxu0 %v252
    %374 = vmatpush1.bf16.msra.mxu0 %v251
    %375 = vmatprep.subr.bf16.mxu0 %v256
    %376 = vmatpush1.bf16.msra.mxu0 %v255
    %377 = vmatprep.subr.bf16.mxu0 %v260
    %378 = vmatpush1.bf16.msra.mxu0 %v259
    %379 = vmatprep.subr.bf16.mxu0 %v264
    %380 = vmatpush1.bf16.msra.mxu0 %v263
    %381 = vmatprep.subr.bf16.mxu0 %v268
    %382 = vmatpush1.bf16.msra.mxu0 %v267
    %383 = vmatprep.subr.bf16.mxu0 0
    %384 = vmatpush1.bf16.msra.mxu0 0
    %385 = vmatprep.subr.bf16.mxu0 0
    %386 = vmatpush1.bf16.msra.mxu0 0
    %387 = vmatprep.subr.bf16.mxu0 0
    %388 = vmatpush1.bf16.msra.mxu0 0
    %389 = vmatprep.subr.bf16.mxu0 0
    %390 = vmatpush1.bf16.msra.mxu0 0
    %391 = vmatprep.subr.bf16.mxu0 0
    %392 = vmatpush1.bf16.msra.mxu0 0
    %393 = vmatprep.subr.bf16.mxu0 0
    %394 = vmatpush1.bf16.msra.mxu0 0
    %395 = vmatprep.subr.bf16.mxu0 0
    %396 = vmatpush1.bf16.msra.mxu0 0
    %397 = vmatprep.mubr.bf16.mxu0 %v307
    %398 = vmatmul.mubr.bf16.gmra.mrb[0].mxu0 %v119
    %v399 = vpop.f32.mrb[0].mxu0
    %v400 = vadd.f32 0.0, %v399
    %v401 = vpop.f32.mrb[0].mxu0
    %v402 = vadd.f32 0.0, %v401
    %v403 = vpop.f32.mrb[0].mxu0
    %v404 = vadd.f32 0.0, %v403
    %v405 = vpop.f32.mrb[0].mxu0
    %v406 = vadd.f32 0.0, %v405
    %407 = vmatprep.mubr.bf16.mxu0 %v310
    %408 = vmatmul.mubr.bf16.gmra.mrb[0].mxu0 %v121
    %v409 = vpop.f32.mrb[0].mxu0
    %v410 = vadd.f32 0.0, %v409
    %v411 = vpop.f32.mrb[0].mxu0
    %v412 = vadd.f32 0.0, %v411
    %v413 = vpop.f32.mrb[0].mxu0
    %v414 = vadd.f32 0.0, %v413
    %v415 = vpop.f32.mrb[0].mxu0
    %v416 = vadd.f32 0.0, %v415
    %417 = vdwg.mxu0
    %418 = vst [vmem:[#allocation2] sm:$0xff] %v347
    %419 = vst [vmem:[#allocation2 + $0x8] sm:$0xff] %v349
    %420 = vst [vmem:[#allocation2 + $0x10] sm:$0xff] %v400
    %421 = vst [vmem:[#allocation2 + $0x18] sm:$0xff] %v402
    %422 = vst [vmem:[#allocation2 + $0x20] sm:$0xff] %v351
    %423 = vst [vmem:[#allocation2 + $0x28] sm:$0xff] %v353
    %424 = vst [vmem:[#allocation2 + $0x30] sm:$0xff] %v404
    %425 = vst [vmem:[#allocation2 + $0x38] sm:$0xff] %v406
    %426 = vst [vmem:[#allocation2 + $0x40] sm:$0xff] %v357
    %427 = vst [vmem:[#allocation2 + $0x48] sm:$0xff] %v359
    %428 = vst [vmem:[#allocation2 + $0x50] sm:$0xff] %v410
    %429 = vst [vmem:[#allocation2 + $0x58] sm:$0xff] %v412
    %430 = vst [vmem:[#allocation2 + $0x60] sm:$0xff] %v361
    %431 = vst [vmem:[#allocation2 + $0x68] sm:$0xff] %v363
    %432 = vst [vmem:[#allocation2 + $0x70] sm:$0xff] %v414
    %433 = vst [vmem:[#allocation2 + $0x78] sm:$0xff] %v416
    %434 = vst [vmem:[#allocation3] sm:$0x1] 0
    %435 = vst [vmem:[#allocation3 + $0x8] sm:$0x1] 0
    %436 = vst [vmem:[#allocation3 + $0x20] sm:$0x80] 0
    %437 = vst [vmem:[#allocation3 + $0x28] sm:$0x80] 0
    %438 = vst [vmem:[#allocation5] sm:$0x1] 0
    %439 = vst [vmem:[#allocation5 + $0x8] sm:$0x1] 0
    %440 = vst [vmem:[#allocation5 + $0x10] sm:$0x1] 0
    %441 = vst [vmem:[#allocation5 + $0x18] sm:$0x1] 0
    %442 = vst [vmem:[#allocation5 + $0x40] sm:$0x80] 0
    %443 = vst [vmem:[#allocation5 + $0x48] sm:$0x80] 0
    %444 = vst [vmem:[#allocation5 + $0x50] sm:$0x80] 0
    %445 = vst [vmem:[#allocation5 + $0x58] sm:$0x80] 0
    %v446 = vld [vmem:[%s5] sm:$0x3]
    %v447 = vld [vmem:[#allocation2] sm:$0x3]
    %v448 = vld [vmem:[#allocation2 + $0x8] sm:$0x3]
    %v449 = vld [vmem:[#allocation2 + $0x10] sm:$0x3]
    %v450 = vld [vmem:[#allocation2 + $0x18] sm:$0x3]
    %v451 = vmax.f32 %v447, %v449
    %v452 = vmax.f32 %v448, %v450
    %v453 = vld [vmem:[#allocation2] sm:$0xc]
    %v454 = vld [vmem:[#allocation2 + $0x8] sm:$0xc]
    %v455 = vld [vmem:[#allocation2 + $0x10] sm:$0xc]
    %v456 = vld [vmem:[#allocation2 + $0x18] sm:$0xc]
    %v457 = vmax.f32 %v453, %v455
    %v458 = vmax.f32 %v454, %v456
    %v461 = vrot.slane %v457, 2
    %v462 = vrot.slane %v458, 2
    %v465 = vmax.f32 %v451, %v461
    %v466 = vmax.f32 %v452, %v462
    %v468 = vlaneseq
    %v469 = vshrl.u32 %v468, 7
    %v470 = vsub.s32 0, %v469
    %v471 = vrot.slane %v446, %v470
    %v472 = vlaneseq
    %v473 = vshrl.u32 %v472, 7
    %v474 = vsub.s32 1, %v473
    %v475 = vrot.slane %v446, %v474
    %v478 = vadd.f32 %v465, %v471
    %v479 = vadd.f32 %v466, %v475
    %v480 = vmax.f32 %v478, 0.0
    %v481 = vmax.f32 %v479, 0.0
    %v482 = vpack.c.bf16 %v480, %v480
    %v483 = vpack.c.bf16 %v481, %v481
    %484 = vst [vmem:[#allocation3 + $0x10] sm:$0x1] %v482
    %485 = vst [vmem:[#allocation3 + $0x18] sm:$0x1] %v483
    %v488 = vrot.slane %v482, 7
    %v489 = vrot.slane %v483, 7
    %492 = vst [vmem:[#allocation3] sm:$0x2] %v488
    %493 = vst [vmem:[#allocation3 + $0x8] sm:$0x2] %v489
    %v494 = vld [vmem:[#allocation2] sm:$0x30]
    %v495 = vld [vmem:[#allocation2 + $0x8] sm:$0x30]
    %v496 = vld [vmem:[#allocation2 + $0x10] sm:$0x30]
    %v497 = vld [vmem:[#allocation2 + $0x18] sm:$0x30]
    %v498 = vmax.f32 %v494, %v496
    %v499 = vmax.f32 %v495, %v497
    %v500 = vld [vmem:[#allocation2] sm:$0xc0]
    %v501 = vld [vmem:[#allocation2 + $0x8] sm:$0xc0]
    %v502 = vld [vmem:[#allocation2 + $0x10] sm:$0xc0]
    %v503 = vld [vmem:[#allocation2 + $0x18] sm:$0xc0]
    %v504 = vmax.f32 %v500, %v502
    %v505 = vmax.f32 %v501, %v503
    %v508 = vrot.slane %v504, 2
    %v509 = vrot.slane %v505, 2
    %v512 = vmax.f32 %v498, %v508
    %v513 = vmax.f32 %v499, %v509
    %v514 = vadd.f32 %v512, %v471
    %v515 = vadd.f32 %v513, %v475
    %v516 = vmax.f32 %v514, 0.0
    %v517 = vmax.f32 %v515, 0.0
    %v518 = vpack.c.bf16 %v516, %v516
    %v519 = vpack.c.bf16 %v517, %v517
    %v522 = vrot.slane %v518, 1
    %v523 = vrot.slane %v519, 1
    %526 = vst [vmem:[#allocation3 + $0x10] sm:$0x2] %v522
    %527 = vst [vmem:[#allocation3 + $0x18] sm:$0x2] %v523
    %528 = vst [vmem:[#allocation3] sm:$0x4] %v518
    %529 = vst [vmem:[#allocation3 + $0x8] sm:$0x4] %v519
    %v530 = vrot.slane %v518, 2
    %v531 = vrot.slane %v519, 2
    %534 = vst [vmem:[#allocation3 + $0x20] sm:$0x1] %v530
    %535 = vst [vmem:[#allocation3 + $0x28] sm:$0x1] %v531
    %v536 = vld [vmem:[#allocation2 + $0x20] sm:$0x3]
    %v537 = vld [vmem:[#allocation2 + $0x28] sm:$0x3]
    %v538 = vld [vmem:[#allocation2 + $0x30] sm:$0x3]
    %v539 = vld [vmem:[#allocation2 + $0x38] sm:$0x3]
    %v540 = vmax.f32 %v536, %v538
    %v541 = vmax.f32 %v537, %v539
    %v542 = vld [vmem:[#allocation2 + $0x20] sm:$0xc]
    %v543 = vld [vmem:[#allocation2 + $0x28] sm:$0xc]
    %v544 = vld [vmem:[#allocation2 + $0x30] sm:$0xc]
    %v545 = vld [vmem:[#allocation2 + $0x38] sm:$0xc]
    %v546 = vmax.f32 %v542, %v544
    %v547 = vmax.f32 %v543, %v545
    %v550 = vrot.slane %v546, 2
    %v551 = vrot.slane %v547, 2
    %v554 = vmax.f32 %v540, %v550
    %v555 = vmax.f32 %v541, %v551
    %v556 = vadd.f32 %v554, %v471
    %v557 = vadd.f32 %v555, %v475
    %v558 = vmax.f32 %v556, 0.0
    %v559 = vmax.f32 %v557, 0.0
    %v560 = vpack.c.bf16 %v558, %v558
    %v561 = vpack.c.bf16 %v559, %v559
    %v564 = vrot.slane %v560, 6
    %v565 = vrot.slane %v561, 6
    %568 = vst [vmem:[#allocation3 + $0x10] sm:$0x4] %v564
    %569 = vst [vmem:[#allocation3 + $0x18] sm:$0x4] %v565
    %v570 = vrot.slane %v560, 5
    %v571 = vrot.slane %v561, 5
    %574 = vst [vmem:[#allocation3] sm:$0x8] %v570
    %575 = vst [vmem:[#allocation3 + $0x8] sm:$0x8] %v571
    %v576 = vrot.slane %v560, 7
    %v577 = vrot.slane %v561, 7
    %580 = vst [vmem:[#allocation3 + $0x20] sm:$0x2] %v576
    %581 = vst [vmem:[#allocation3 + $0x28] sm:$0x2] %v577
    %v582 = vld [vmem:[#allocation2 + $0x20] sm:$0x30]
    %v583 = vld [vmem:[#allocation2 + $0x28] sm:$0x30]
    %v584 = vld [vmem:[#allocation2 + $0x30] sm:$0x30]
    %v585 = vld [vmem:[#allocation2 + $0x38] sm:$0x30]
    %v586 = vmax.f32 %v582, %v584
    %v587 = vmax.f32 %v583, %v585
    %v588 = vld [vmem:[#allocation2 + $0x20] sm:$0xc0]
    %v589 = vld [vmem:[#allocation2 + $0x28] sm:$0xc0]
    %v590 = vld [vmem:[#allocation2 + $0x30] sm:$0xc0]
    %v591 = vld [vmem:[#allocation2 + $0x38] sm:$0xc0]
    %v592 = vmax.f32 %v588, %v590
    %v593 = vmax.f32 %v589, %v591
    %v596 = vrot.slane %v592, 2
    %v597 = vrot.slane %v593, 2
    %v600 = vmax.f32 %v586, %v596
    %v601 = vmax.f32 %v587, %v597
    %v602 = vadd.f32 %v600, %v471
    %v603 = vadd.f32 %v601, %v475
    %v604 = vmax.f32 %v602, 0.0
    %v605 = vmax.f32 %v603, 0.0
    %v606 = vpack.c.bf16 %v604, %v604
    %v607 = vpack.c.bf16 %v605, %v605
    %v610 = vrot.slane %v606, 7
    %v611 = vrot.slane %v607, 7
    %614 = vst [vmem:[#allocation3 + $0x10] sm:$0x8] %v610
    %615 = vst [vmem:[#allocation3 + $0x18] sm:$0x8] %v611
    %v616 = vrot.slane %v606, 6
    %v617 = vrot.slane %v607, 6
    %620 = vst [vmem:[#allocation3] sm:$0x10] %v616
    %621 = vst [vmem:[#allocation3 + $0x8] sm:$0x10] %v617
    %622 = vst [vmem:[#allocation3 + $0x20] sm:$0x4] %v606
    %623 = vst [vmem:[#allocation3 + $0x28] sm:$0x4] %v607
    %v624 = vld [vmem:[#allocation2 + $0x40] sm:$0x3]
    %v625 = vld [vmem:[#allocation2 + $0x48] sm:$0x3]
    %v626 = vld [vmem:[#allocation2 + $0x50] sm:$0x3]
    %v627 = vld [vmem:[#allocation2 + $0x58] sm:$0x3]
    %v628 = vmax.f32 %v624, %v626
    %v629 = vmax.f32 %v625, %v627
    %v630 = vld [vmem:[#allocation2 + $0x40] sm:$0xc]
    %v631 = vld [vmem:[#allocation2 + $0x48] sm:$0xc]
    %v632 = vld [vmem:[#allocation2 + $0x50] sm:$0xc]
    %v633 = vld [vmem:[#allocation2 + $0x58] sm:$0xc]
    %v634 = vmax.f32 %v630, %v632
    %v635 = vmax.f32 %v631, %v633
    %v638 = vrot.slane %v634, 2
    %v639 = vrot.slane %v635, 2
    %v642 = vmax.f32 %v628, %v638
    %v643 = vmax.f32 %v629, %v639
    %v644 = vadd.f32 %v642, %v471
    %v645 = vadd.f32 %v643, %v475
    %v646 = vmax.f32 %v644, 0.0
    %v647 = vmax.f32 %v645, 0.0
    %v648 = vpack.c.bf16 %v646, %v646
    %v649 = vpack.c.bf16 %v647, %v647
    %v652 = vrot.slane %v648, 4
    %v653 = vrot.slane %v649, 4
    %656 = vst [vmem:[#allocation3 + $0x10] sm:$0x10] %v652
    %657 = vst [vmem:[#allocation3 + $0x18] sm:$0x10] %v653
    %v658 = vrot.slane %v648, 3
    %v659 = vrot.slane %v649, 3
    %662 = vst [vmem:[#allocation3] sm:$0x20] %v658
    %663 = vst [vmem:[#allocation3 + $0x8] sm:$0x20] %v659
    %v664 = vrot.slane %v648, 5
    %v665 = vrot.slane %v649, 5
    %668 = vst [vmem:[#allocation3 + $0x20] sm:$0x8] %v664
    %669 = vst [vmem:[#allocation3 + $0x28] sm:$0x8] %v665
    %v670 = vld [vmem:[#allocation2 + $0x40] sm:$0x30]
    %v671 = vld [vmem:[#allocation2 + $0x48] sm:$0x30]
    %v672 = vld [vmem:[#allocation2 + $0x50] sm:$0x30]
    %v673 = vld [vmem:[#allocation2 + $0x58] sm:$0x30]
    %v674 = vmax.f32 %v670, %v672
    %v675 = vmax.f32 %v671, %v673
    %v676 = vld [vmem:[#allocation2 + $0x40] sm:$0xc0]
    %v677 = vld [vmem:[#allocation2 + $0x48] sm:$0xc0]
    %v678 = vld [vmem:[#allocation2 + $0x50] sm:$0xc0]
    %v679 = vld [vmem:[#allocation2 + $0x58] sm:$0xc0]
    %v680 = vmax.f32 %v676, %v678
    %v681 = vmax.f32 %v677, %v679
    %v684 = vrot.slane %v680, 2
    %v685 = vrot.slane %v681, 2
    %v688 = vmax.f32 %v674, %v684
    %v689 = vmax.f32 %v675, %v685
    %v690 = vadd.f32 %v688, %v471
    %v691 = vadd.f32 %v689, %v475
    %v692 = vmax.f32 %v690, 0.0
    %v693 = vmax.f32 %v691, 0.0
    %v694 = vpack.c.bf16 %v692, %v692
    %v695 = vpack.c.bf16 %v693, %v693
    %v698 = vrot.slane %v694, 5
    %v699 = vrot.slane %v695, 5
    %702 = vst [vmem:[#allocation3 + $0x10] sm:$0x20] %v698
    %703 = vst [vmem:[#allocation3 + $0x18] sm:$0x20] %v699
    %v704 = vrot.slane %v694, 4
    %v705 = vrot.slane %v695, 4
    %708 = vst [vmem:[#allocation3] sm:$0x40] %v704
    %709 = vst [vmem:[#allocation3 + $0x8] sm:$0x40] %v705
    %v710 = vrot.slane %v694, 6
    %v711 = vrot.slane %v695, 6
    %714 = vst [vmem:[#allocation3 + $0x20] sm:$0x10] %v710
    %715 = vst [vmem:[#allocation3 + $0x28] sm:$0x10] %v711
    %v716 = vld [vmem:[#allocation2 + $0x60] sm:$0x3]
    %v717 = vld [vmem:[#allocation2 + $0x68] sm:$0x3]
    %v718 = vld [vmem:[#allocation2 + $0x70] sm:$0x3]
    %v719 = vld [vmem:[#allocation2 + $0x78] sm:$0x3]
    %v720 = vmax.f32 %v716, %v718
    %v721 = vmax.f32 %v717, %v719
    %v722 = vld [vmem:[#allocation2 + $0x60] sm:$0xc]
    %v723 = vld [vmem:[#allocation2 + $0x68] sm:$0xc]
    %v724 = vld [vmem:[#allocation2 + $0x70] sm:$0xc]
    %v725 = vld [vmem:[#allocation2 + $0x78] sm:$0xc]
    %v726 = vmax.f32 %v722, %v724
    %v727 = vmax.f32 %v723, %v725
    %v730 = vrot.slane %v726, 2
    %v731 = vrot.slane %v727, 2
    %v734 = vmax.f32 %v720, %v730
    %v735 = vmax.f32 %v721, %v731
    %v736 = vadd.f32 %v734, %v471
    %v737 = vadd.f32 %v735, %v475
    %v738 = vmax.f32 %v736, 0.0
    %v739 = vmax.f32 %v737, 0.0
    %v740 = vpack.c.bf16 %v738, %v738
    %v741 = vpack.c.bf16 %v739, %v739
    %v744 = vrot.slane %v740, 2
    %v745 = vrot.slane %v741, 2
    %748 = vst [vmem:[#allocation3 + $0x10] sm:$0x40] %v744
    %749 = vst [vmem:[#allocation3 + $0x18] sm:$0x40] %v745
    %v750 = vrot.slane %v740, 1
    %v751 = vrot.slane %v741, 1
    %754 = vst [vmem:[#allocation3] sm:$0x80] %v750
    %755 = vst [vmem:[#allocation3 + $0x8] sm:$0x80] %v751
    %v756 = vrot.slane %v740, 3
    %v757 = vrot.slane %v741, 3
    %760 = vst [vmem:[#allocation3 + $0x20] sm:$0x20] %v756
    %761 = vst [vmem:[#allocation3 + $0x28] sm:$0x20] %v757
    %v762 = vld [vmem:[#allocation2 + $0x60] sm:$0x30]
    %v763 = vld [vmem:[#allocation2 + $0x68] sm:$0x30]
    %v764 = vld [vmem:[#allocation2 + $0x70] sm:$0x30]
    %v765 = vld [vmem:[#allocation2 + $0x78] sm:$0x30]
    %v766 = vmax.f32 %v762, %v764
    %v767 = vmax.f32 %v763, %v765
    %v768 = vld [vmem:[#allocation2 + $0x60] sm:$0xc0]
    %v769 = vld [vmem:[#allocation2 + $0x68] sm:$0xc0]
    %v770 = vld [vmem:[#allocation2 + $0x70] sm:$0xc0]
    %v771 = vld [vmem:[#allocation2 + $0x78] sm:$0xc0]
    %v772 = vmax.f32 %v768, %v770
    %v773 = vmax.f32 %v769, %v771
    %v776 = vrot.slane %v772, 2
    %v777 = vrot.slane %v773, 2
    %v780 = vmax.f32 %v766, %v776
    %v781 = vmax.f32 %v767, %v777
    %v782 = vadd.f32 %v780, %v471
    %v783 = vadd.f32 %v781, %v475
    %v784 = vmax.f32 %v782, 0.0
    %v785 = vmax.f32 %v783, 0.0
    %v786 = vpack.c.bf16 %v784, %v784
    %v787 = vpack.c.bf16 %v785, %v785
    %v790 = vrot.slane %v786, 3
    %v791 = vrot.slane %v787, 3
    %794 = vst [vmem:[#allocation3 + $0x10] sm:$0x80] %v790
    %795 = vst [vmem:[#allocation3 + $0x18] sm:$0x80] %v791
    %v796 = vrot.slane %v786, 4
    %v797 = vrot.slane %v787, 4
    %800 = vst [vmem:[#allocation3 + $0x20] sm:$0x40] %v796
    %801 = vst [vmem:[#allocation3 + $0x28] sm:$0x40] %v797
    %v802 = vld [vmem:[#allocation3] sm:$0xff]
    %v803 = vld [vmem:[#allocation3 + $0x8] sm:$0xff]
    %v804 = vld [vmem:[#allocation3 + $0x10] sm:$0xff]
    %v805 = vld [vmem:[#allocation3 + $0x18] sm:$0xff]
    %v806 = vld [vmem:[#allocation3 + $0x20] sm:$0xff]
    %v807 = vld [vmem:[#allocation3 + $0x28] sm:$0xff]
    %v808 = vld [vmem:[#allocation8] sm:$0xff]
    %v809 = vld [vmem:[#allocation8 + $0x8] sm:$0xff]
    %v810 = vld [vmem:[#allocation8 + $0x10] sm:$0xff]
    %v811 = vld [vmem:[#allocation8 + $0x18] sm:$0xff]
    %v812 = vld [vmem:[#allocation8 + $0x20] sm:$0xff]
    %v813 = vld [vmem:[#allocation8 + $0x28] sm:$0xff]
    %v814 = vld [vmem:[#allocation8 + $0x30] sm:$0xff]
    %v815 = vld [vmem:[#allocation8 + $0x38] sm:$0xff]
    %v816 = vld [vmem:[#allocation8 + $0x40] sm:$0xff]
    %v817 = vld [vmem:[#allocation8 + $0x48] sm:$0xff]
    %v818 = vld [vmem:[#allocation8 + $0x50] sm:$0xff]
    %v819 = vld [vmem:[#allocation8 + $0x58] sm:$0xff]
    %v820 = vld [vmem:[#allocation8 + $0x60] sm:$0xff]
    %v821 = vld [vmem:[#allocation8 + $0x68] sm:$0xff]
    %v822 = vld [vmem:[#allocation8 + $0x70] sm:$0xff]
    %v823 = vld [vmem:[#allocation8 + $0x78] sm:$0xff]
    %v824 = vld [vmem:[#allocation8 + $0x80] sm:$0xff]
    %v825 = vld [vmem:[#allocation8 + $0x88] sm:$0xff]
    %v826 = vld [vmem:[#allocation8 + $0x90] sm:$0xff]
    %v827 = vld [vmem:[#allocation8 + $0x98] sm:$0xff]
    %v828 = vld [vmem:[#allocation8 + $0xa0] sm:$0xff]
    %v829 = vld [vmem:[#allocation8 + $0xa8] sm:$0xff]
    %v830 = vld [vmem:[#allocation8 + $0xb0] sm:$0xff]
    %v831 = vld [vmem:[#allocation8 + $0xb8] sm:$0xff]
    %v832 = vld [vmem:[#allocation8 + $0xc0] sm:$0xff]
    %v833 = vld [vmem:[#allocation8 + $0xc8] sm:$0xff]
    %v834 = vld [vmem:[#allocation8 + $0xd0] sm:$0xff]
    %v835 = vld [vmem:[#allocation8 + $0xd8] sm:$0xff]
    %v836 = vld [vmem:[#allocation8 + $0xe0] sm:$0xff]
    %v837 = vld [vmem:[#allocation8 + $0xe8] sm:$0xff]
    %v838 = vld [vmem:[#allocation8 + $0xf0] sm:$0xff]
    %v839 = vld [vmem:[#allocation8 + $0xf8] sm:$0xff]
    %v840 = vld [vmem:[#allocation8 + $0x100] sm:$0xff]
    %v841 = vld [vmem:[#allocation8 + $0x108] sm:$0xff]
    %v842 = vld [vmem:[#allocation8 + $0x110] sm:$0xff]
    %v843 = vld [vmem:[#allocation8 + $0x118] sm:$0xff]
    %v844 = vld [vmem:[#allocation8 + $0x120] sm:$0xff]
    %v845 = vld [vmem:[#allocation8 + $0x128] sm:$0xff]
    %v846 = vld [vmem:[#allocation8 + $0x130] sm:$0xff]
    %v847 = vld [vmem:[#allocation8 + $0x138] sm:$0xff]
    %v848 = vld [vmem:[#allocation8 + $0x140] sm:$0xff]
    %v849 = vld [vmem:[#allocation8 + $0x148] sm:$0xff]
    %v850 = vld [vmem:[#allocation8 + $0x150] sm:$0xff]
    %v851 = vld [vmem:[#allocation8 + $0x158] sm:$0xff]
    %v852 = vld [vmem:[#allocation8 + $0x160] sm:$0xff]
    %v853 = vld [vmem:[#allocation8 + $0x168] sm:$0xff]
    %v854 = vld [vmem:[#allocation8 + $0x170] sm:$0xff]
    %v855 = vld [vmem:[#allocation8 + $0x178] sm:$0xff]
    %v856 = vld [vmem:[#allocation8 + $0x180] sm:$0xff]
    %v857 = vld [vmem:[#allocation8 + $0x188] sm:$0xff]
    %v858 = vld [vmem:[#allocation8 + $0x190] sm:$0xff]
    %v859 = vld [vmem:[#allocation8 + $0x198] sm:$0xff]
    %v860 = vld [vmem:[#allocation8 + $0x1a0] sm:$0xff]
    %v861 = vld [vmem:[#allocation8 + $0x1a8] sm:$0xff]
    %v862 = vld [vmem:[#allocation8 + $0x1b0] sm:$0xff]
    %v863 = vld [vmem:[#allocation8 + $0x1b8] sm:$0xff]
    %v864 = vld [vmem:[#allocation8 + $0x1c0] sm:$0xff]
    %v865 = vld [vmem:[#allocation8 + $0x1c8] sm:$0xff]
    %v866 = vld [vmem:[#allocation8 + $0x1d0] sm:$0xff]
    %v867 = vld [vmem:[#allocation8 + $0x1d8] sm:$0xff]
    %v868 = vld [vmem:[#allocation8 + $0x1e0] sm:$0xff]
    %v869 = vld [vmem:[#allocation8 + $0x1e8] sm:$0xff]
    %v870 = vld [vmem:[#allocation8 + $0x1f0] sm:$0xff]
    %v871 = vld [vmem:[#allocation8 + $0x1f8] sm:$0xff]
    %v872 = vld [vmem:[#allocation8 + $0x200] sm:$0xff]
    %v873 = vld [vmem:[#allocation8 + $0x208] sm:$0xff]
    %v874 = vld [vmem:[#allocation8 + $0x210] sm:$0xff]
    %v875 = vld [vmem:[#allocation8 + $0x218] sm:$0xff]
    %v876 = vld [vmem:[#allocation8 + $0x220] sm:$0xff]
    %v877 = vld [vmem:[#allocation8 + $0x228] sm:$0xff]
    %v878 = vld [vmem:[#allocation8 + $0x230] sm:$0xff]
    %v879 = vld [vmem:[#allocation8 + $0x238] sm:$0xff]
    %v880 = vld [vmem:[#allocation8 + $0x240] sm:$0xff]
    %v881 = vld [vmem:[#allocation8 + $0x248] sm:$0xff]
    %v882 = vld [vmem:[#allocation8 + $0x250] sm:$0xff]
    %v883 = vld [vmem:[#allocation8 + $0x258] sm:$0xff]
    %v884 = vld [vmem:[#allocation8 + $0x260] sm:$0xff]
    %v885 = vld [vmem:[#allocation8 + $0x268] sm:$0xff]
    %v886 = vld [vmem:[#allocation8 + $0x270] sm:$0xff]
    %v887 = vld [vmem:[#allocation8 + $0x278] sm:$0xff]
    %v888 = vld [vmem:[#allocation8 + $0x280] sm:$0xff]
    %v889 = vld [vmem:[#allocation8 + $0x288] sm:$0xff]
    %v890 = vld [vmem:[#allocation8 + $0x290] sm:$0xff]
    %v891 = vld [vmem:[#allocation8 + $0x298] sm:$0xff]
    %v892 = vld [vmem:[#allocation8 + $0x2a0] sm:$0xff]
    %v893 = vld [vmem:[#allocation8 + $0x2a8] sm:$0xff]
    %v894 = vld [vmem:[#allocation8 + $0x2b0] sm:$0xff]
    %v895 = vld [vmem:[#allocation8 + $0x2b8] sm:$0xff]
    %v896 = vld [vmem:[#allocation8 + $0x2c0] sm:$0xff]
    %v897 = vld [vmem:[#allocation8 + $0x2c8] sm:$0xff]
    %v898 = vld [vmem:[#allocation8 + $0x2d0] sm:$0xff]
    %v899 = vld [vmem:[#allocation8 + $0x2d8] sm:$0xff]
    %v900 = vld [vmem:[#allocation8 + $0x2e0] sm:$0xff]
    %v901 = vld [vmem:[#allocation8 + $0x2e8] sm:$0xff]
    %v902 = vld [vmem:[#allocation8 + $0x2f0] sm:$0xff]
    %v903 = vld [vmem:[#allocation8 + $0x2f8] sm:$0xff]
    %v904 = vld [vmem:[#allocation8 + $0x300] sm:$0xff]
    %v905 = vld [vmem:[#allocation8 + $0x308] sm:$0xff]
    %v906 = vld [vmem:[#allocation8 + $0x310] sm:$0xff]
    %v907 = vld [vmem:[#allocation8 + $0x318] sm:$0xff]
    %v908 = vld [vmem:[#allocation8 + $0x320] sm:$0xff]
    %v909 = vld [vmem:[#allocation8 + $0x328] sm:$0xff]
    %v910 = vld [vmem:[#allocation8 + $0x330] sm:$0xff]
    %v911 = vld [vmem:[#allocation8 + $0x338] sm:$0xff]
    %v912 = vld [vmem:[#allocation8 + $0x340] sm:$0xff]
    %v913 = vld [vmem:[#allocation8 + $0x348] sm:$0xff]
    %v914 = vld [vmem:[#allocation8 + $0x350] sm:$0xff]
    %v915 = vld [vmem:[#allocation8 + $0x358] sm:$0xff]
    %v916 = vld [vmem:[#allocation8 + $0x360] sm:$0xff]
    %v917 = vld [vmem:[#allocation8 + $0x368] sm:$0xff]
    %v918 = vld [vmem:[#allocation8 + $0x370] sm:$0xff]
    %v919 = vld [vmem:[#allocation8 + $0x378] sm:$0xff]
    %v920 = vld [vmem:[#allocation8 + $0x380] sm:$0xff]
    %v921 = vld [vmem:[#allocation8 + $0x388] sm:$0xff]
    %v922 = vld [vmem:[#allocation8 + $0x390] sm:$0xff]
    %v923 = vld [vmem:[#allocation8 + $0x398] sm:$0xff]
    %v924 = vld [vmem:[#allocation8 + $0x3a0] sm:$0xff]
    %v925 = vld [vmem:[#allocation8 + $0x3a8] sm:$0xff]
    %v926 = vld [vmem:[#allocation8 + $0x3b0] sm:$0xff]
    %v927 = vld [vmem:[#allocation8 + $0x3b8] sm:$0xff]
    %v928 = vld [vmem:[#allocation8 + $0x3c0] sm:$0xff]
    %v929 = vld [vmem:[#allocation8 + $0x3c8] sm:$0xff]
    %v930 = vld [vmem:[#allocation8 + $0x3d0] sm:$0xff]
    %v931 = vld [vmem:[#allocation8 + $0x3d8] sm:$0xff]
    %v932 = vld [vmem:[#allocation8 + $0x3e0] sm:$0xff]
    %v933 = vld [vmem:[#allocation8 + $0x3e8] sm:$0xff]
    %v934 = vld [vmem:[#allocation8 + $0x3f0] sm:$0xff]
    %v935 = vld [vmem:[#allocation8 + $0x3f8] sm:$0xff]
    %v936 = vld [vmem:[#allocation8 + $0x400] sm:$0xff]
    %v937 = vld [vmem:[#allocation8 + $0x408] sm:$0xff]
    %v938 = vld [vmem:[#allocation8 + $0x410] sm:$0xff]
    %v939 = vld [vmem:[#allocation8 + $0x418] sm:$0xff]
    %v940 = vld [vmem:[#allocation8 + $0x420] sm:$0xff]
    %v941 = vld [vmem:[#allocation8 + $0x428] sm:$0xff]
    %v942 = vld [vmem:[#allocation8 + $0x430] sm:$0xff]
    %v943 = vld [vmem:[#allocation8 + $0x438] sm:$0xff]
    %v944 = vld [vmem:[#allocation8 + $0x440] sm:$0xff]
    %v945 = vld [vmem:[#allocation8 + $0x448] sm:$0xff]
    %v946 = vld [vmem:[#allocation8 + $0x450] sm:$0xff]
    %v947 = vld [vmem:[#allocation8 + $0x458] sm:$0xff]
    %v948 = vld [vmem:[#allocation8 + $0x460] sm:$0xff]
    %v949 = vld [vmem:[#allocation8 + $0x468] sm:$0xff]
    %v950 = vld [vmem:[#allocation8 + $0x470] sm:$0xff]
    %v951 = vld [vmem:[#allocation8 + $0x478] sm:$0xff]
    %v952 = vld [vmem:[#allocation8 + $0x480] sm:$0xff]
    %v953 = vld [vmem:[#allocation8 + $0x488] sm:$0xff]
    %v954 = vld [vmem:[#allocation8 + $0x490] sm:$0xff]
    %v955 = vld [vmem:[#allocation8 + $0x498] sm:$0xff]
    %v956 = vld [vmem:[#allocation8 + $0x4a0] sm:$0xff]
    %v957 = vld [vmem:[#allocation8 + $0x4a8] sm:$0xff]
    %v958 = vld [vmem:[#allocation8 + $0x4b0] sm:$0xff]
    %v959 = vld [vmem:[#allocation8 + $0x4b8] sm:$0xff]
    %v960 = vld [vmem:[#allocation8 + $0x4c0] sm:$0xff]
    %v961 = vld [vmem:[#allocation8 + $0x4c8] sm:$0xff]
    %v962 = vld [vmem:[#allocation8 + $0x4d0] sm:$0xff]
    %v963 = vld [vmem:[#allocation8 + $0x4d8] sm:$0xff]
    %v964 = vld [vmem:[#allocation8 + $0x4e0] sm:$0xff]
    %v965 = vld [vmem:[#allocation8 + $0x4e8] sm:$0xff]
    %v966 = vld [vmem:[#allocation8 + $0x4f0] sm:$0xff]
    %v967 = vld [vmem:[#allocation8 + $0x4f8] sm:$0xff]
    %v968 = vld [vmem:[#allocation8 + $0x500] sm:$0xff]
    %v969 = vld [vmem:[#allocation8 + $0x508] sm:$0xff]
    %v970 = vld [vmem:[#allocation8 + $0x510] sm:$0xff]
    %v971 = vld [vmem:[#allocation8 + $0x518] sm:$0xff]
    %v972 = vld [vmem:[#allocation8 + $0x520] sm:$0xff]
    %v973 = vld [vmem:[#allocation8 + $0x528] sm:$0xff]
    %v974 = vld [vmem:[#allocation8 + $0x530] sm:$0xff]
    %v975 = vld [vmem:[#allocation8 + $0x538] sm:$0xff]
    %v976 = vld [vmem:[#allocation8 + $0x540] sm:$0xff]
    %v977 = vld [vmem:[#allocation8 + $0x548] sm:$0xff]
    %v978 = vld [vmem:[#allocation8 + $0x550] sm:$0xff]
    %v979 = vld [vmem:[#allocation8 + $0x558] sm:$0xff]
    %v980 = vld [vmem:[#allocation8 + $0x560] sm:$0xff]
    %v981 = vld [vmem:[#allocation8 + $0x568] sm:$0xff]
    %v982 = vld [vmem:[#allocation8 + $0x570] sm:$0xff]
    %v983 = vld [vmem:[#allocation8 + $0x578] sm:$0xff]
    %v984 = vld [vmem:[#allocation8 + $0x580] sm:$0xff]
    %v985 = vld [vmem:[#allocation8 + $0x588] sm:$0xff]
    %v986 = vld [vmem:[#allocation8 + $0x590] sm:$0xff]
    %v987 = vld [vmem:[#allocation8 + $0x598] sm:$0xff]
    %v988 = vld [vmem:[#allocation8 + $0x5a0] sm:$0xff]
    %v989 = vld [vmem:[#allocation8 + $0x5a8] sm:$0xff]
    %v990 = vld [vmem:[#allocation8 + $0x5b0] sm:$0xff]
    %v991 = vld [vmem:[#allocation8 + $0x5b8] sm:$0xff]
    %v992 = vld [vmem:[#allocation8 + $0x5c0] sm:$0xff]
    %v993 = vld [vmem:[#allocation8 + $0x5c8] sm:$0xff]
    %v994 = vld [vmem:[#allocation8 + $0x5d0] sm:$0xff]
    %v995 = vld [vmem:[#allocation8 + $0x5d8] sm:$0xff]
    %v996 = vld [vmem:[#allocation8 + $0x5e0] sm:$0xff]
    %v997 = vld [vmem:[#allocation8 + $0x5e8] sm:$0xff]
    %v998 = vld [vmem:[#allocation8 + $0x5f0] sm:$0xff]
    %v999 = vld [vmem:[#allocation8 + $0x5f8] sm:$0xff]
    %v1192 = vunpack.c.l.b16 %v808
    %v1193 = vunpack.c.h.b16 %v808
    %v1194 = vunpack.c.l.b16 %v809
    %v1195 = vunpack.c.h.b16 %v809
    %v1196 = vunpack.c.l.b16 %v810
    %v1197 = vunpack.c.h.b16 %v810
    %v1198 = vunpack.c.l.b16 %v811
    %v1199 = vunpack.c.h.b16 %v811
    %v1200 = vunpack.c.l.b16 %v812
    %v1201 = vunpack.c.h.b16 %v812
    %v1202 = vunpack.c.l.b16 %v813
    %v1203 = vunpack.c.h.b16 %v813
    %v1204 = vunpack.c.l.b16 %v814
    %v1205 = vunpack.c.h.b16 %v814
    %v1206 = vunpack.c.l.b16 %v815
    %v1207 = vunpack.c.h.b16 %v815
    %v1208 = vunpack.c.l.b16 %v816
    %v1209 = vunpack.c.h.b16 %v816
    %v1210 = vunpack.c.l.b16 %v817
    %v1211 = vunpack.c.h.b16 %v817
    %v1212 = vunpack.c.l.b16 %v818
    %v1213 = vunpack.c.h.b16 %v818
    %v1214 = vunpack.c.l.b16 %v819
    %v1215 = vunpack.c.h.b16 %v819
    %v1216 = vunpack.c.l.b16 %v820
    %v1217 = vunpack.c.h.b16 %v820
    %v1218 = vunpack.c.l.b16 %v821
    %v1219 = vunpack.c.h.b16 %v821
    %v1220 = vunpack.c.l.b16 %v822
    %v1221 = vunpack.c.h.b16 %v822
    %v1222 = vunpack.c.l.b16 %v823
    %v1223 = vunpack.c.h.b16 %v823
    %v1224 = vunpack.c.l.b16 %v824
    %v1225 = vunpack.c.h.b16 %v824
    %v1226 = vunpack.c.l.b16 %v825
    %v1227 = vunpack.c.h.b16 %v825
    %v1228 = vunpack.c.l.b16 %v826
    %v1229 = vunpack.c.h.b16 %v826
    %v1230 = vunpack.c.l.b16 %v827
    %v1231 = vunpack.c.h.b16 %v827
    %v1232 = vunpack.c.l.b16 %v828
    %v1233 = vunpack.c.h.b16 %v828
    %v1234 = vunpack.c.l.b16 %v829
    %v1235 = vunpack.c.h.b16 %v829
    %v1236 = vunpack.c.l.b16 %v830
    %v1237 = vunpack.c.h.b16 %v830
    %v1238 = vunpack.c.l.b16 %v831
    %v1239 = vunpack.c.h.b16 %v831
    %v1240 = vunpack.c.l.b16 %v832
    %v1241 = vunpack.c.h.b16 %v832
    %v1242 = vunpack.c.l.b16 %v833
    %v1243 = vunpack.c.h.b16 %v833
    %v1244 = vunpack.c.l.b16 %v834
    %v1245 = vunpack.c.h.b16 %v834
    %v1246 = vunpack.c.l.b16 %v835
    %v1247 = vunpack.c.h.b16 %v835
    %v1248 = vunpack.c.l.b16 %v836
    %v1249 = vunpack.c.h.b16 %v836
    %v1250 = vunpack.c.l.b16 %v837
    %v1251 = vunpack.c.h.b16 %v837
    %v1252 = vunpack.c.l.b16 %v838
    %v1253 = vunpack.c.h.b16 %v838
    %v1254 = vunpack.c.l.b16 %v839
    %v1255 = vunpack.c.h.b16 %v839
    %v1256 = vunpack.c.l.b16 %v840
    %v1257 = vunpack.c.h.b16 %v840
    %v1258 = vunpack.c.l.b16 %v841
    %v1259 = vunpack.c.h.b16 %v841
    %v1260 = vunpack.c.l.b16 %v842
    %v1261 = vunpack.c.h.b16 %v842
    %v1262 = vunpack.c.l.b16 %v843
    %v1263 = vunpack.c.h.b16 %v843
    %v1264 = vunpack.c.l.b16 %v844
    %v1265 = vunpack.c.h.b16 %v844
    %v1266 = vunpack.c.l.b16 %v845
    %v1267 = vunpack.c.h.b16 %v845
    %v1268 = vunpack.c.l.b16 %v846
    %v1269 = vunpack.c.h.b16 %v846
    %v1270 = vunpack.c.l.b16 %v847
    %v1271 = vunpack.c.h.b16 %v847
    %v1272 = vunpack.c.l.b16 %v848
    %v1273 = vunpack.c.h.b16 %v848
    %v1274 = vunpack.c.l.b16 %v849
    %v1275 = vunpack.c.h.b16 %v849
    %v1276 = vunpack.c.l.b16 %v850
    %v1277 = vunpack.c.h.b16 %v850
    %v1278 = vunpack.c.l.b16 %v851
    %v1279 = vunpack.c.h.b16 %v851
    %v1280 = vunpack.c.l.b16 %v852
    %v1281 = vunpack.c.h.b16 %v852
    %v1282 = vunpack.c.l.b16 %v853
    %v1283 = vunpack.c.h.b16 %v853
    %v1284 = vunpack.c.l.b16 %v854
    %v1285 = vunpack.c.h.b16 %v854
    %v1286 = vunpack.c.l.b16 %v855
    %v1287 = vunpack.c.h.b16 %v855
    %v1288 = vunpack.c.l.b16 %v856
    %v1289 = vunpack.c.h.b16 %v856
    %v1290 = vunpack.c.l.b16 %v857
    %v1291 = vunpack.c.h.b16 %v857
    %v1292 = vunpack.c.l.b16 %v858
    %v1293 = vunpack.c.h.b16 %v858
    %v1294 = vunpack.c.l.b16 %v859
    %v1295 = vunpack.c.h.b16 %v859
    %v1296 = vunpack.c.l.b16 %v860
    %v1297 = vunpack.c.h.b16 %v860
    %v1298 = vunpack.c.l.b16 %v861
    %v1299 = vunpack.c.h.b16 %v861
    %v1300 = vunpack.c.l.b16 %v862
    %v1301 = vunpack.c.h.b16 %v862
    %v1302 = vunpack.c.l.b16 %v863
    %v1303 = vunpack.c.h.b16 %v863
    %v1304 = vunpack.c.l.b16 %v864
    %v1305 = vunpack.c.h.b16 %v864
    %v1306 = vunpack.c.l.b16 %v865
    %v1307 = vunpack.c.h.b16 %v865
    %v1308 = vunpack.c.l.b16 %v866
    %v1309 = vunpack.c.h.b16 %v866
    %v1310 = vunpack.c.l.b16 %v867
    %v1311 = vunpack.c.h.b16 %v867
    %v1312 = vunpack.c.l.b16 %v868
    %v1313 = vunpack.c.h.b16 %v868
    %v1314 = vunpack.c.l.b16 %v869
    %v1315 = vunpack.c.h.b16 %v869
    %v1316 = vunpack.c.l.b16 %v870
    %v1317 = vunpack.c.h.b16 %v870
    %v1318 = vunpack.c.l.b16 %v871
    %v1319 = vunpack.c.h.b16 %v871
    %v1320 = vunpack.c.l.b16 %v872
    %v1321 = vunpack.c.h.b16 %v872
    %v1322 = vunpack.c.l.b16 %v873
    %v1323 = vunpack.c.h.b16 %v873
    %v1324 = vunpack.c.l.b16 %v874
    %v1325 = vunpack.c.h.b16 %v874
    %v1326 = vunpack.c.l.b16 %v875
    %v1327 = vunpack.c.h.b16 %v875
    %v1328 = vunpack.c.l.b16 %v876
    %v1329 = vunpack.c.h.b16 %v876
    %v1330 = vunpack.c.l.b16 %v877
    %v1331 = vunpack.c.h.b16 %v877
    %v1332 = vunpack.c.l.b16 %v878
    %v1333 = vunpack.c.h.b16 %v878
    %v1334 = vunpack.c.l.b16 %v879
    %v1335 = vunpack.c.h.b16 %v879
    %v1336 = vunpack.c.l.b16 %v880
    %v1337 = vunpack.c.h.b16 %v880
    %v1338 = vunpack.c.l.b16 %v881
    %v1339 = vunpack.c.h.b16 %v881
    %v1340 = vunpack.c.l.b16 %v882
    %v1341 = vunpack.c.h.b16 %v882
    %v1342 = vunpack.c.l.b16 %v883
    %v1343 = vunpack.c.h.b16 %v883
    %v1344 = vunpack.c.l.b16 %v884
    %v1345 = vunpack.c.h.b16 %v884
    %v1346 = vunpack.c.l.b16 %v885
    %v1347 = vunpack.c.h.b16 %v885
    %v1348 = vunpack.c.l.b16 %v886
    %v1349 = vunpack.c.h.b16 %v886
    %v1350 = vunpack.c.l.b16 %v887
    %v1351 = vunpack.c.h.b16 %v887
    %v1352 = vunpack.c.l.b16 %v888
    %v1353 = vunpack.c.h.b16 %v888
    %v1354 = vunpack.c.l.b16 %v889
    %v1355 = vunpack.c.h.b16 %v889
    %v1356 = vunpack.c.l.b16 %v890
    %v1357 = vunpack.c.h.b16 %v890
    %v1358 = vunpack.c.l.b16 %v891
    %v1359 = vunpack.c.h.b16 %v891
    %v1360 = vunpack.c.l.b16 %v892
    %v1361 = vunpack.c.h.b16 %v892
    %v1362 = vunpack.c.l.b16 %v893
    %v1363 = vunpack.c.h.b16 %v893
    %v1364 = vunpack.c.l.b16 %v894
    %v1365 = vunpack.c.h.b16 %v894
    %v1366 = vunpack.c.l.b16 %v895
    %v1367 = vunpack.c.h.b16 %v895
    %v1368 = vunpack.c.l.b16 %v896
    %v1369 = vunpack.c.h.b16 %v896
    %v1370 = vunpack.c.l.b16 %v897
    %v1371 = vunpack.c.h.b16 %v897
    %v1372 = vunpack.c.l.b16 %v898
    %v1373 = vunpack.c.h.b16 %v898
    %v1374 = vunpack.c.l.b16 %v899
    %v1375 = vunpack.c.h.b16 %v899
    %v1376 = vunpack.c.l.b16 %v900
    %v1377 = vunpack.c.h.b16 %v900
    %v1378 = vunpack.c.l.b16 %v901
    %v1379 = vunpack.c.h.b16 %v901
    %v1380 = vunpack.c.l.b16 %v902
    %v1381 = vunpack.c.h.b16 %v902
    %v1382 = vunpack.c.l.b16 %v903
    %v1383 = vunpack.c.h.b16 %v903
    %v1384 = vunpack.c.l.b16 %v904
    %v1385 = vunpack.c.h.b16 %v904
    %v1386 = vunpack.c.l.b16 %v905
    %v1387 = vunpack.c.h.b16 %v905
    %v1388 = vunpack.c.l.b16 %v906
    %v1389 = vunpack.c.h.b16 %v906
    %v1390 = vunpack.c.l.b16 %v907
    %v1391 = vunpack.c.h.b16 %v907
    %v1392 = vunpack.c.l.b16 %v908
    %v1393 = vunpack.c.h.b16 %v908
    %v1394 = vunpack.c.l.b16 %v909
    %v1395 = vunpack.c.h.b16 %v909
    %v1396 = vunpack.c.l.b16 %v910
    %v1397 = vunpack.c.h.b16 %v910
    %v1398 = vunpack.c.l.b16 %v911
    %v1399 = vunpack.c.h.b16 %v911
    %v1400 = vunpack.c.l.b16 %v912
    %v1401 = vunpack.c.h.b16 %v912
    %v1402 = vunpack.c.l.b16 %v913
    %v1403 = vunpack.c.h.b16 %v913
    %v1404 = vunpack.c.l.b16 %v914
    %v1405 = vunpack.c.h.b16 %v914
    %v1406 = vunpack.c.l.b16 %v915
    %v1407 = vunpack.c.h.b16 %v915
    %v1408 = vunpack.c.l.b16 %v916
    %v1409 = vunpack.c.h.b16 %v916
    %v1410 = vunpack.c.l.b16 %v917
    %v1411 = vunpack.c.h.b16 %v917
    %v1412 = vunpack.c.l.b16 %v918
    %v1413 = vunpack.c.h.b16 %v918
    %v1414 = vunpack.c.l.b16 %v919
    %v1415 = vunpack.c.h.b16 %v919
    %v1416 = vunpack.c.l.b16 %v920
    %v1417 = vunpack.c.h.b16 %v920
    %v1418 = vunpack.c.l.b16 %v921
    %v1419 = vunpack.c.h.b16 %v921
    %v1420 = vunpack.c.l.b16 %v922
    %v1421 = vunpack.c.h.b16 %v922
    %v1422 = vunpack.c.l.b16 %v923
    %v1423 = vunpack.c.h.b16 %v923
    %v1424 = vunpack.c.l.b16 %v924
    %v1425 = vunpack.c.h.b16 %v924
    %v1426 = vunpack.c.l.b16 %v925
    %v1427 = vunpack.c.h.b16 %v925
    %v1428 = vunpack.c.l.b16 %v926
    %v1429 = vunpack.c.h.b16 %v926
    %v1430 = vunpack.c.l.b16 %v927
    %v1431 = vunpack.c.h.b16 %v927
    %v1432 = vunpack.c.l.b16 %v928
    %v1433 = vunpack.c.h.b16 %v928
    %v1434 = vunpack.c.l.b16 %v929
    %v1435 = vunpack.c.h.b16 %v929
    %v1436 = vunpack.c.l.b16 %v930
    %v1437 = vunpack.c.h.b16 %v930
    %v1438 = vunpack.c.l.b16 %v931
    %v1439 = vunpack.c.h.b16 %v931
    %v1440 = vunpack.c.l.b16 %v932
    %v1441 = vunpack.c.h.b16 %v932
    %v1442 = vunpack.c.l.b16 %v933
    %v1443 = vunpack.c.h.b16 %v933
    %v1444 = vunpack.c.l.b16 %v934
    %v1445 = vunpack.c.h.b16 %v934
    %v1446 = vunpack.c.l.b16 %v935
    %v1447 = vunpack.c.h.b16 %v935
    %v1448 = vunpack.c.l.b16 %v936
    %v1449 = vunpack.c.h.b16 %v936
    %v1450 = vunpack.c.l.b16 %v937
    %v1451 = vunpack.c.h.b16 %v937
    %v1452 = vunpack.c.l.b16 %v938
    %v1453 = vunpack.c.h.b16 %v938
    %v1454 = vunpack.c.l.b16 %v939
    %v1455 = vunpack.c.h.b16 %v939
    %v1456 = vunpack.c.l.b16 %v940
    %v1457 = vunpack.c.h.b16 %v940
    %v1458 = vunpack.c.l.b16 %v941
    %v1459 = vunpack.c.h.b16 %v941
    %v1460 = vunpack.c.l.b16 %v942
    %v1461 = vunpack.c.h.b16 %v942
    %v1462 = vunpack.c.l.b16 %v943
    %v1463 = vunpack.c.h.b16 %v943
    %v1464 = vunpack.c.l.b16 %v944
    %v1465 = vunpack.c.h.b16 %v944
    %v1466 = vunpack.c.l.b16 %v945
    %v1467 = vunpack.c.h.b16 %v945
    %v1468 = vunpack.c.l.b16 %v946
    %v1469 = vunpack.c.h.b16 %v946
    %v1470 = vunpack.c.l.b16 %v947
    %v1471 = vunpack.c.h.b16 %v947
    %v1472 = vunpack.c.l.b16 %v948
    %v1473 = vunpack.c.h.b16 %v948
    %v1474 = vunpack.c.l.b16 %v949
    %v1475 = vunpack.c.h.b16 %v949
    %v1476 = vunpack.c.l.b16 %v950
    %v1477 = vunpack.c.h.b16 %v950
    %v1478 = vunpack.c.l.b16 %v951
    %v1479 = vunpack.c.h.b16 %v951
    %v1480 = vunpack.c.l.b16 %v952
    %v1481 = vunpack.c.h.b16 %v952
    %v1482 = vunpack.c.l.b16 %v953
    %v1483 = vunpack.c.h.b16 %v953
    %v1484 = vunpack.c.l.b16 %v954
    %v1485 = vunpack.c.h.b16 %v954
    %v1486 = vunpack.c.l.b16 %v955
    %v1487 = vunpack.c.h.b16 %v955
    %v1488 = vunpack.c.l.b16 %v956
    %v1489 = vunpack.c.h.b16 %v956
    %v1490 = vunpack.c.l.b16 %v957
    %v1491 = vunpack.c.h.b16 %v957
    %v1492 = vunpack.c.l.b16 %v958
    %v1493 = vunpack.c.h.b16 %v958
    %v1494 = vunpack.c.l.b16 %v959
    %v1495 = vunpack.c.h.b16 %v959
    %v1496 = vunpack.c.l.b16 %v960
    %v1497 = vunpack.c.h.b16 %v960
    %v1498 = vunpack.c.l.b16 %v961
    %v1499 = vunpack.c.h.b16 %v961
    %v1500 = vunpack.c.l.b16 %v962
    %v1501 = vunpack.c.h.b16 %v962
    %v1502 = vunpack.c.l.b16 %v963
    %v1503 = vunpack.c.h.b16 %v963
    %v1504 = vunpack.c.l.b16 %v964
    %v1505 = vunpack.c.h.b16 %v964
    %v1506 = vunpack.c.l.b16 %v965
    %v1507 = vunpack.c.h.b16 %v965
    %v1508 = vunpack.c.l.b16 %v966
    %v1509 = vunpack.c.h.b16 %v966
    %v1510 = vunpack.c.l.b16 %v967
    %v1511 = vunpack.c.h.b16 %v967
    %v1512 = vunpack.c.l.b16 %v968
    %v1513 = vunpack.c.h.b16 %v968
    %v1514 = vunpack.c.l.b16 %v969
    %v1515 = vunpack.c.h.b16 %v969
    %v1516 = vunpack.c.l.b16 %v970
    %v1517 = vunpack.c.h.b16 %v970
    %v1518 = vunpack.c.l.b16 %v971
    %v1519 = vunpack.c.h.b16 %v971
    %v1520 = vunpack.c.l.b16 %v972
    %v1521 = vunpack.c.h.b16 %v972
    %v1522 = vunpack.c.l.b16 %v973
    %v1523 = vunpack.c.h.b16 %v973
    %v1524 = vunpack.c.l.b16 %v974
    %v1525 = vunpack.c.h.b16 %v974
    %v1526 = vunpack.c.l.b16 %v975
    %v1527 = vunpack.c.h.b16 %v975
    %v1528 = vunpack.c.l.b16 %v976
    %v1529 = vunpack.c.h.b16 %v976
    %v1530 = vunpack.c.l.b16 %v977
    %v1531 = vunpack.c.h.b16 %v977
    %v1532 = vunpack.c.l.b16 %v978
    %v1533 = vunpack.c.h.b16 %v978
    %v1534 = vunpack.c.l.b16 %v979
    %v1535 = vunpack.c.h.b16 %v979
    %v1536 = vunpack.c.l.b16 %v980
    %v1537 = vunpack.c.h.b16 %v980
    %v1538 = vunpack.c.l.b16 %v981
    %v1539 = vunpack.c.h.b16 %v981
    %v1540 = vunpack.c.l.b16 %v982
    %v1541 = vunpack.c.h.b16 %v982
    %v1542 = vunpack.c.l.b16 %v983
    %v1543 = vunpack.c.h.b16 %v983
    %v1544 = vunpack.c.l.b16 %v984
    %v1545 = vunpack.c.h.b16 %v984
    %v1546 = vunpack.c.l.b16 %v985
    %v1547 = vunpack.c.h.b16 %v985
    %v1548 = vunpack.c.l.b16 %v986
    %v1549 = vunpack.c.h.b16 %v986
    %v1550 = vunpack.c.l.b16 %v987
    %v1551 = vunpack.c.h.b16 %v987
    %v1552 = vunpack.c.l.b16 %v988
    %v1553 = vunpack.c.h.b16 %v988
    %v1554 = vunpack.c.l.b16 %v989
    %v1555 = vunpack.c.h.b16 %v989
    %v1556 = vunpack.c.l.b16 %v990
    %v1557 = vunpack.c.h.b16 %v990
    %v1558 = vunpack.c.l.b16 %v991
    %v1559 = vunpack.c.h.b16 %v991
    %v1560 = vunpack.c.l.b16 %v992
    %v1561 = vunpack.c.h.b16 %v992
    %v1562 = vunpack.c.l.b16 %v993
    %v1563 = vunpack.c.h.b16 %v993
    %v1564 = vunpack.c.l.b16 %v994
    %v1565 = vunpack.c.h.b16 %v994
    %v1566 = vunpack.c.l.b16 %v995
    %v1567 = vunpack.c.h.b16 %v995
    %v1568 = vunpack.c.l.b16 %v996
    %v1569 = vunpack.c.h.b16 %v996
    %v1570 = vunpack.c.l.b16 %v997
    %v1571 = vunpack.c.h.b16 %v997
    %v1572 = vunpack.c.l.b16 %v998
    %v1573 = vunpack.c.h.b16 %v998
    %v1574 = vunpack.c.l.b16 %v999
    %v1575 = vunpack.c.h.b16 %v999
    %v1576 = vpack.c.b16 %v1196, %v1192
    %v1577 = vpack.c.b16 %v1197, %v1193
    %v1578 = vpack.c.b16 %v1198, %v1194
    %v1579 = vpack.c.b16 %v1199, %v1195
    %v1580 = vpack.c.b16 %v1204, %v1200
    %v1581 = vpack.c.b16 %v1205, %v1201
    %v1582 = vpack.c.b16 %v1206, %v1202
    %v1583 = vpack.c.b16 %v1207, %v1203
    %v1584 = vpack.c.b16 %v1212, %v1208
    %v1585 = vpack.c.b16 %v1213, %v1209
    %v1586 = vpack.c.b16 %v1214, %v1210
    %v1587 = vpack.c.b16 %v1215, %v1211
    %v1588 = vpack.c.b16 %v1220, %v1216
    %v1589 = vpack.c.b16 %v1221, %v1217
    %v1590 = vpack.c.b16 %v1222, %v1218
    %v1591 = vpack.c.b16 %v1223, %v1219
    %v1592 = vpack.c.b16 %v1228, %v1224
    %v1593 = vpack.c.b16 %v1229, %v1225
    %v1594 = vpack.c.b16 %v1230, %v1226
    %v1595 = vpack.c.b16 %v1231, %v1227
    %v1596 = vpack.c.b16 %v1236, %v1232
    %v1597 = vpack.c.b16 %v1237, %v1233
    %v1598 = vpack.c.b16 %v1238, %v1234
    %v1599 = vpack.c.b16 %v1239, %v1235
    %v1600 = vpack.c.b16 %v1244, %v1240
    %v1601 = vpack.c.b16 %v1245, %v1241
    %v1602 = vpack.c.b16 %v1246, %v1242
    %v1603 = vpack.c.b16 %v1247, %v1243
    %v1604 = vpack.c.b16 %v1252, %v1248
    %v1605 = vpack.c.b16 %v1253, %v1249
    %v1606 = vpack.c.b16 %v1254, %v1250
    %v1607 = vpack.c.b16 %v1255, %v1251
    %v1608 = vpack.c.b16 %v1260, %v1256
    %v1609 = vpack.c.b16 %v1261, %v1257
    %v1610 = vpack.c.b16 %v1262, %v1258
    %v1611 = vpack.c.b16 %v1263, %v1259
    %v1612 = vpack.c.b16 %v1268, %v1264
    %v1613 = vpack.c.b16 %v1269, %v1265
    %v1614 = vpack.c.b16 %v1270, %v1266
    %v1615 = vpack.c.b16 %v1271, %v1267
    %v1616 = vpack.c.b16 %v1276, %v1272
    %v1617 = vpack.c.b16 %v1277, %v1273
    %v1618 = vpack.c.b16 %v1278, %v1274
    %v1619 = vpack.c.b16 %v1279, %v1275
    %v1620 = vpack.c.b16 %v1284, %v1280
    %v1621 = vpack.c.b16 %v1285, %v1281
    %v1622 = vpack.c.b16 %v1286, %v1282
    %v1623 = vpack.c.b16 %v1287, %v1283
    %v1624 = vpack.c.b16 %v1292, %v1288
    %v1625 = vpack.c.b16 %v1293, %v1289
    %v1626 = vpack.c.b16 %v1294, %v1290
    %v1627 = vpack.c.b16 %v1295, %v1291
    %v1628 = vpack.c.b16 %v1300, %v1296
    %v1629 = vpack.c.b16 %v1301, %v1297
    %v1630 = vpack.c.b16 %v1302, %v1298
    %v1631 = vpack.c.b16 %v1303, %v1299
    %v1632 = vpack.c.b16 %v1308, %v1304
    %v1633 = vpack.c.b16 %v1309, %v1305
    %v1634 = vpack.c.b16 %v1310, %v1306
    %v1635 = vpack.c.b16 %v1311, %v1307
    %v1636 = vpack.c.b16 %v1316, %v1312
    %v1637 = vpack.c.b16 %v1317, %v1313
    %v1638 = vpack.c.b16 %v1318, %v1314
    %v1639 = vpack.c.b16 %v1319, %v1315
    %v1640 = vpack.c.b16 %v1324, %v1320
    %v1641 = vpack.c.b16 %v1325, %v1321
    %v1642 = vpack.c.b16 %v1326, %v1322
    %v1643 = vpack.c.b16 %v1327, %v1323
    %v1644 = vpack.c.b16 %v1332, %v1328
    %v1645 = vpack.c.b16 %v1333, %v1329
    %v1646 = vpack.c.b16 %v1334, %v1330
    %v1647 = vpack.c.b16 %v1335, %v1331
    %v1648 = vpack.c.b16 %v1340, %v1336
    %v1649 = vpack.c.b16 %v1341, %v1337
    %v1650 = vpack.c.b16 %v1342, %v1338
    %v1651 = vpack.c.b16 %v1343, %v1339
    %v1652 = vpack.c.b16 %v1348, %v1344
    %v1653 = vpack.c.b16 %v1349, %v1345
    %v1654 = vpack.c.b16 %v1350, %v1346
    %v1655 = vpack.c.b16 %v1351, %v1347
    %v1656 = vpack.c.b16 %v1356, %v1352
    %v1657 = vpack.c.b16 %v1357, %v1353
    %v1658 = vpack.c.b16 %v1358, %v1354
    %v1659 = vpack.c.b16 %v1359, %v1355
    %v1660 = vpack.c.b16 %v1364, %v1360
    %v1661 = vpack.c.b16 %v1365, %v1361
    %v1662 = vpack.c.b16 %v1366, %v1362
    %v1663 = vpack.c.b16 %v1367, %v1363
    %v1664 = vpack.c.b16 %v1372, %v1368
    %v1665 = vpack.c.b16 %v1373, %v1369
    %v1666 = vpack.c.b16 %v1374, %v1370
    %v1667 = vpack.c.b16 %v1375, %v1371
    %v1668 = vpack.c.b16 %v1380, %v1376
    %v1669 = vpack.c.b16 %v1381, %v1377
    %v1670 = vpack.c.b16 %v1382, %v1378
    %v1671 = vpack.c.b16 %v1383, %v1379
    %v1672 = vpack.c.b16 %v1388, %v1384
    %v1673 = vpack.c.b16 %v1389, %v1385
    %v1674 = vpack.c.b16 %v1390, %v1386
    %v1675 = vpack.c.b16 %v1391, %v1387
    %v1676 = vpack.c.b16 %v1396, %v1392
    %v1677 = vpack.c.b16 %v1397, %v1393
    %v1678 = vpack.c.b16 %v1398, %v1394
    %v1679 = vpack.c.b16 %v1399, %v1395
    %v1680 = vpack.c.b16 %v1404, %v1400
    %v1681 = vpack.c.b16 %v1405, %v1401
    %v1682 = vpack.c.b16 %v1406, %v1402
    %v1683 = vpack.c.b16 %v1407, %v1403
    %v1684 = vpack.c.b16 %v1412, %v1408
    %v1685 = vpack.c.b16 %v1413, %v1409
    %v1686 = vpack.c.b16 %v1414, %v1410
    %v1687 = vpack.c.b16 %v1415, %v1411
    %v1688 = vpack.c.b16 %v1420, %v1416
    %v1689 = vpack.c.b16 %v1421, %v1417
    %v1690 = vpack.c.b16 %v1422, %v1418
    %v1691 = vpack.c.b16 %v1423, %v1419
    %v1692 = vpack.c.b16 %v1428, %v1424
    %v1693 = vpack.c.b16 %v1429, %v1425
    %v1694 = vpack.c.b16 %v1430, %v1426
    %v1695 = vpack.c.b16 %v1431, %v1427
    %v1696 = vpack.c.b16 %v1436, %v1432
    %v1697 = vpack.c.b16 %v1437, %v1433
    %v1698 = vpack.c.b16 %v1438, %v1434
    %v1699 = vpack.c.b16 %v1439, %v1435
    %v1700 = vpack.c.b16 %v1444, %v1440
    %v1701 = vpack.c.b16 %v1445, %v1441
    %v1702 = vpack.c.b16 %v1446, %v1442
    %v1703 = vpack.c.b16 %v1447, %v1443
    %v1704 = vpack.c.b16 %v1452, %v1448
    %v1705 = vpack.c.b16 %v1453, %v1449
    %v1706 = vpack.c.b16 %v1454, %v1450
    %v1707 = vpack.c.b16 %v1455, %v1451
    %v1708 = vpack.c.b16 %v1460, %v1456
    %v1709 = vpack.c.b16 %v1461, %v1457
    %v1710 = vpack.c.b16 %v1462, %v1458
    %v1711 = vpack.c.b16 %v1463, %v1459
    %v1712 = vpack.c.b16 %v1468, %v1464
    %v1713 = vpack.c.b16 %v1469, %v1465
    %v1714 = vpack.c.b16 %v1470, %v1466
    %v1715 = vpack.c.b16 %v1471, %v1467
    %v1716 = vpack.c.b16 %v1476, %v1472
    %v1717 = vpack.c.b16 %v1477, %v1473
    %v1718 = vpack.c.b16 %v1478, %v1474
    %v1719 = vpack.c.b16 %v1479, %v1475
    %v1720 = vpack.c.b16 %v1484, %v1480
    %v1721 = vpack.c.b16 %v1485, %v1481
    %v1722 = vpack.c.b16 %v1486, %v1482
    %v1723 = vpack.c.b16 %v1487, %v1483
    %v1724 = vpack.c.b16 %v1492, %v1488
    %v1725 = vpack.c.b16 %v1493, %v1489
    %v1726 = vpack.c.b16 %v1494, %v1490
    %v1727 = vpack.c.b16 %v1495, %v1491
    %v1728 = vpack.c.b16 %v1500, %v1496
    %v1729 = vpack.c.b16 %v1501, %v1497
    %v1730 = vpack.c.b16 %v1502, %v1498
    %v1731 = vpack.c.b16 %v1503, %v1499
    %v1732 = vpack.c.b16 %v1508, %v1504
    %v1733 = vpack.c.b16 %v1509, %v1505
    %v1734 = vpack.c.b16 %v1510, %v1506
    %v1735 = vpack.c.b16 %v1511, %v1507
    %v1736 = vpack.c.b16 %v1516, %v1512
    %v1737 = vpack.c.b16 %v1517, %v1513
    %v1738 = vpack.c.b16 %v1518, %v1514
    %v1739 = vpack.c.b16 %v1519, %v1515
    %v1740 = vpack.c.b16 %v1524, %v1520
    %v1741 = vpack.c.b16 %v1525, %v1521
    %v1742 = vpack.c.b16 %v1526, %v1522
    %v1743 = vpack.c.b16 %v1527, %v1523
    %v1744 = vpack.c.b16 %v1532, %v1528
    %v1745 = vpack.c.b16 %v1533, %v1529
    %v1746 = vpack.c.b16 %v1534, %v1530
    %v1747 = vpack.c.b16 %v1535, %v1531
    %v1748 = vpack.c.b16 %v1540, %v1536
    %v1749 = vpack.c.b16 %v1541, %v1537
    %v1750 = vpack.c.b16 %v1542, %v1538
    %v1751 = vpack.c.b16 %v1543, %v1539
    %v1752 = vpack.c.b16 %v1548, %v1544
    %v1753 = vpack.c.b16 %v1549, %v1545
    %v1754 = vpack.c.b16 %v1550, %v1546
    %v1755 = vpack.c.b16 %v1551, %v1547
    %v1756 = vpack.c.b16 %v1556, %v1552
    %v1757 = vpack.c.b16 %v1557, %v1553
    %v1758 = vpack.c.b16 %v1558, %v1554
    %v1759 = vpack.c.b16 %v1559, %v1555
    %v1760 = vpack.c.b16 %v1564, %v1560
    %v1761 = vpack.c.b16 %v1565, %v1561
    %v1762 = vpack.c.b16 %v1566, %v1562
    %v1763 = vpack.c.b16 %v1567, %v1563
    %v1764 = vpack.c.b16 %v1572, %v1568
    %v1765 = vpack.c.b16 %v1573, %v1569
    %v1766 = vpack.c.b16 %v1574, %v1570
    %v1767 = vpack.c.b16 %v1575, %v1571
    %1960 = vmatprep.subr.bf16.mxu0 %v1577
    %1961 = vmatpush1.bf16.msra.mxu0 %v1576
    %1962 = vmatprep.subr.bf16.mxu0 %v1581
    %1963 = vmatpush1.bf16.msra.mxu0 %v1580
    %1964 = vmatprep.subr.bf16.mxu0 %v1585
    %1965 = vmatpush1.bf16.msra.mxu0 %v1584
    %1966 = vmatprep.subr.bf16.mxu0 %v1589
    %1967 = vmatpush1.bf16.msra.mxu0 %v1588
    %1968 = vmatprep.subr.bf16.mxu0 %v1593
    %1969 = vmatpush1.bf16.msra.mxu0 %v1592
    %1970 = vmatprep.subr.bf16.mxu0 %v1597
    %1971 = vmatpush1.bf16.msra.mxu0 %v1596
    %1972 = vmatprep.subr.bf16.mxu0 %v1601
    %1973 = vmatpush1.bf16.msra.mxu0 %v1600
    %1974 = vmatprep.subr.bf16.mxu0 %v1605
    %1975 = vmatpush1.bf16.msra.mxu0 %v1604
    %1976 = vmatprep.subr.bf16.mxu0 %v1609
    %1977 = vmatpush1.bf16.msra.mxu0 %v1608
    %1978 = vmatprep.subr.bf16.mxu0 %v1613
    %1979 = vmatpush1.bf16.msra.mxu0 %v1612
    %1980 = vmatprep.subr.bf16.mxu0 %v1617
    %1981 = vmatpush1.bf16.msra.mxu0 %v1616
    %1982 = vmatprep.subr.bf16.mxu0 %v1621
    %1983 = vmatpush1.bf16.msra.mxu0 %v1620
    %1984 = vmatprep.subr.bf16.mxu0 %v1625
    %1985 = vmatpush1.bf16.msra.mxu0 %v1624
    %1986 = vmatprep.subr.bf16.mxu0 %v1629
    %1987 = vmatpush1.bf16.msra.mxu0 %v1628
    %1988 = vmatprep.subr.bf16.mxu0 %v1633
    %1989 = vmatpush1.bf16.msra.mxu0 %v1632
    %1990 = vmatprep.subr.bf16.mxu0 %v1637
    %1991 = vmatpush1.bf16.msra.mxu0 %v1636
    %1992 = vmatprep.mubr.bf16.mxu0 %v803
    %1993 = vmatmul.mubr.bf16.gmra.mrb[0].mxu0 %v802
    %v1994 = vpop.f32.mrb[0].mxu0
    %v1995 = vadd.f32 0.0, %v1994
    %v1996 = vpop.f32.mrb[0].mxu0
    %v1997 = vadd.f32 0.0, %v1996
    %v1998 = vpop.f32.mrb[0].mxu0
    %v1999 = vadd.f32 0.0, %v1998
    %v2000 = vpop.f32.mrb[0].mxu0
    %v2001 = vadd.f32 0.0, %v2000
    %2002 = vdwg.mxu0
    %2003 = vmatprep.subr.bf16.mxu0 %v1641
    %2004 = vmatpush1.bf16.msra.mxu0 %v1640
    %2005 = vmatprep.subr.bf16.mxu0 %v1645
    %2006 = vmatpush1.bf16.msra.mxu0 %v1644
    %2007 = vmatprep.subr.bf16.mxu0 %v1649
    %2008 = vmatpush1.bf16.msra.mxu0 %v1648
    %2009 = vmatprep.subr.bf16.mxu0 %v1653
    %2010 = vmatpush1.bf16.msra.mxu0 %v1652
    %2011 = vmatprep.subr.bf16.mxu0 %v1657
    %2012 = vmatpush1.bf16.msra.mxu0 %v1656
    %2013 = vmatprep.subr.bf16.mxu0 %v1661
    %2014 = vmatpush1.bf16.msra.mxu0 %v1660
    %2015 = vmatprep.subr.bf16.mxu0 %v1665
    %2016 = vmatpush1.bf16.msra.mxu0 %v1664
    %2017 = vmatprep.subr.bf16.mxu0 %v1669
    %2018 = vmatpush1.bf16.msra.mxu0 %v1668
    %2019 = vmatprep.subr.bf16.mxu0 %v1673
    %2020 = vmatpush1.bf16.msra.mxu0 %v1672
    %2021 = vmatprep.subr.bf16.mxu0 %v1677
    %2022 = vmatpush1.bf16.msra.mxu0 %v1676
    %2023 = vmatprep.subr.bf16.mxu0 %v1681
    %2024 = vmatpush1.bf16.msra.mxu0 %v1680
    %2025 = vmatprep.subr.bf16.mxu0 %v1685
    %2026 = vmatpush1.bf16.msra.mxu0 %v1684
    %2027 = vmatprep.subr.bf16.mxu0 %v1689
    %2028 = vmatpush1.bf16.msra.mxu0 %v1688
    %2029 = vmatprep.subr.bf16.mxu0 %v1693
    %2030 = vmatpush1.bf16.msra.mxu0 %v1692
    %2031 = vmatprep.subr.bf16.mxu0 %v1697
    %2032 = vmatpush1.bf16.msra.mxu0 %v1696
    %2033 = vmatprep.subr.bf16.mxu0 %v1701
    %2034 = vmatpush1.bf16.msra.mxu0 %v1700
    %2035 = vmatprep.mubr.bf16.mxu0 %v805
    %2036 = vmatmul.mubr.bf16.gmra.mrb[0].mxu0 %v804
    %v2037 = vpop.f32.mrb[0].mxu0
    %v2038 = vadd.f32 %v1995, %v2037
    %v2039 = vpop.f32.mrb[0].mxu0
    %v2040 = vadd.f32 %v1997, %v2039
    %v2041 = vpop.f32.mrb[0].mxu0
    %v2042 = vadd.f32 %v1999, %v2041
    %v2043 = vpop.f32.mrb[0].mxu0
    %v2044 = vadd.f32 %v2001, %v2043
    %2045 = vdwg.mxu0
    %2046 = vmatprep.subr.bf16.mxu0 %v1705
    %2047 = vmatpush1.bf16.msra.mxu0 %v1704
    %2048 = vmatprep.subr.bf16.mxu0 %v1709
    %2049 = vmatpush1.bf16.msra.mxu0 %v1708
    %2050 = vmatprep.subr.bf16.mxu0 %v1713
    %2051 = vmatpush1.bf16.msra.mxu0 %v1712
    %2052 = vmatprep.subr.bf16.mxu0 %v1717
    %2053 = vmatpush1.bf16.msra.mxu0 %v1716
    %2054 = vmatprep.subr.bf16.mxu0 %v1721
    %2055 = vmatpush1.bf16.msra.mxu0 %v1720
    %2056 = vmatprep.subr.bf16.mxu0 %v1725
    %2057 = vmatpush1.bf16.msra.mxu0 %v1724
    %2058 = vmatprep.subr.bf16.mxu0 %v1729
    %2059 = vmatpush1.bf16.msra.mxu0 %v1728
    %2060 = vmatprep.subr.bf16.mxu0 %v1733
    %2061 = vmatpush1.bf16.msra.mxu0 %v1732
    %2062 = vmatprep.subr.bf16.mxu0 %v1737
    %2063 = vmatpush1.bf16.msra.mxu0 %v1736
    %2064 = vmatprep.subr.bf16.mxu0 %v1741
    %2065 = vmatpush1.bf16.msra.mxu0 %v1740
    %2066 = vmatprep.subr.bf16.mxu0 %v1745
    %2067 = vmatpush1.bf16.msra.mxu0 %v1744
    %2068 = vmatprep.subr.bf16.mxu0 %v1749
    %2069 = vmatpush1.bf16.msra.mxu0 %v1748
    %2070 = vmatprep.subr.bf16.mxu0 %v1753
    %2071 = vmatpush1.bf16.msra.mxu0 %v1752
    %2072 = vmatprep.subr.bf16.mxu0 %v1757
    %2073 = vmatpush1.bf16.msra.mxu0 %v1756
    %2074 = vmatprep.subr.bf16.mxu0 %v1761
    %2075 = vmatpush1.bf16.msra.mxu0 %v1760
    %2076 = vmatprep.subr.bf16.mxu0 %v1765
    %2077 = vmatpush1.bf16.msra.mxu0 %v1764
    %2078 = vmatprep.mubr.bf16.mxu0 %v807
    %2079 = vmatmul.mubr.bf16.gmra.mrb[0].mxu0 %v806
    %v2080 = vpop.f32.mrb[0].mxu0
    %v2081 = vadd.f32 %v2038, %v2080
    %v2082 = vpop.f32.mrb[0].mxu0
    %v2083 = vadd.f32 %v2040, %v2082
    %v2084 = vpop.f32.mrb[0].mxu0
    %v2085 = vadd.f32 %v2042, %v2084
    %v2086 = vpop.f32.mrb[0].mxu0
    %v2087 = vadd.f32 %v2044, %v2086
    %2088 = vdwg.mxu0
    %2089 = vmatprep.subr.bf16.mxu0 %v1579
    %2090 = vmatpush1.bf16.msra.mxu0 %v1578
    %2091 = vmatprep.subr.bf16.mxu0 %v1583
    %2092 = vmatpush1.bf16.msra.mxu0 %v1582
    %2093 = vmatprep.subr.bf16.mxu0 %v1587
    %2094 = vmatpush1.bf16.msra.mxu0 %v1586
    %2095 = vmatprep.subr.bf16.mxu0 %v1591
    %2096 = vmatpush1.bf16.msra.mxu0 %v1590
    %2097 = vmatprep.subr.bf16.mxu0 %v1595
    %2098 = vmatpush1.bf16.msra.mxu0 %v1594
    %2099 = vmatprep.subr.bf16.mxu0 %v1599
    %2100 = vmatpush1.bf16.msra.mxu0 %v1598
    %2101 = vmatprep.subr.bf16.mxu0 %v1603
    %2102 = vmatpush1.bf16.msra.mxu0 %v1602
    %2103 = vmatprep.subr.bf16.mxu0 %v1607
    %2104 = vmatpush1.bf16.msra.mxu0 %v1606
    %2105 = vmatprep.subr.bf16.mxu0 %v1611
    %2106 = vmatpush1.bf16.msra.mxu0 %v1610
    %2107 = vmatprep.subr.bf16.mxu0 %v1615
    %2108 = vmatpush1.bf16.msra.mxu0 %v1614
    %2109 = vmatprep.subr.bf16.mxu0 %v1619
    %2110 = vmatpush1.bf16.msra.mxu0 %v1618
    %2111 = vmatprep.subr.bf16.mxu0 %v1623
    %2112 = vmatpush1.bf16.msra.mxu0 %v1622
    %2113 = vmatprep.subr.bf16.mxu0 %v1627
    %2114 = vmatpush1.bf16.msra.mxu0 %v1626
    %2115 = vmatprep.subr.bf16.mxu0 %v1631
    %2116 = vmatpush1.bf16.msra.mxu0 %v1630
    %2117 = vmatprep.subr.bf16.mxu0 %v1635
    %2118 = vmatpush1.bf16.msra.mxu0 %v1634
    %2119 = vmatprep.subr.bf16.mxu0 %v1639
    %2120 = vmatpush1.bf16.msra.mxu0 %v1638
    %2121 = vmatprep.mubr.bf16.mxu0 %v803
    %2122 = vmatmul.mubr.bf16.gmra.mrb[0].mxu0 %v802
    %v2123 = vpop.f32.mrb[0].mxu0
    %v2124 = vadd.f32 0.0, %v2123
    %v2125 = vpop.f32.mrb[0].mxu0
    %v2126 = vadd.f32 0.0, %v2125
    %v2127 = vpop.f32.mrb[0].mxu0
    %v2128 = vadd.f32 0.0, %v2127
    %v2129 = vpop.f32.mrb[0].mxu0
    %v2130 = vadd.f32 0.0, %v2129
    %2131 = vdwg.mxu0
    %2132 = vmatprep.subr.bf16.mxu0 %v1643
    %2133 = vmatpush1.bf16.msra.mxu0 %v1642
    %2134 = vmatprep.subr.bf16.mxu0 %v1647
    %2135 = vmatpush1.bf16.msra.mxu0 %v1646
    %2136 = vmatprep.subr.bf16.mxu0 %v1651
    %2137 = vmatpush1.bf16.msra.mxu0 %v1650
    %2138 = vmatprep.subr.bf16.mxu0 %v1655
    %2139 = vmatpush1.bf16.msra.mxu0 %v1654
    %2140 = vmatprep.subr.bf16.mxu0 %v1659
    %2141 = vmatpush1.bf16.msra.mxu0 %v1658
    %2142 = vmatprep.subr.bf16.mxu0 %v1663
    %2143 = vmatpush1.bf16.msra.mxu0 %v1662
    %2144 = vmatprep.subr.bf16.mxu0 %v1667
    %2145 = vmatpush1.bf16.msra.mxu0 %v1666
    %2146 = vmatprep.subr.bf16.mxu0 %v1671
    %2147 = vmatpush1.bf16.msra.mxu0 %v1670
    %2148 = vmatprep.subr.bf16.mxu0 %v1675
    %2149 = vmatpush1.bf16.msra.mxu0 %v1674
    %2150 = vmatprep.subr.bf16.mxu0 %v1679
    %2151 = vmatpush1.bf16.msra.mxu0 %v1678
    %2152 = vmatprep.subr.bf16.mxu0 %v1683
    %2153 = vmatpush1.bf16.msra.mxu0 %v1682
    %2154 = vmatprep.subr.bf16.mxu0 %v1687
    %2155 = vmatpush1.bf16.msra.mxu0 %v1686
    %2156 = vmatprep.subr.bf16.mxu0 %v1691
    %2157 = vmatpush1.bf16.msra.mxu0 %v1690
    %2158 = vmatprep.subr.bf16.mxu0 %v1695
    %2159 = vmatpush1.bf16.msra.mxu0 %v1694
    %2160 = vmatprep.subr.bf16.mxu0 %v1699
    %2161 = vmatpush1.bf16.msra.mxu0 %v1698
    %2162 = vmatprep.subr.bf16.mxu0 %v1703
    %2163 = vmatpush1.bf16.msra.mxu0 %v1702
    %2164 = vmatprep.mubr.bf16.mxu0 %v805
    %2165 = vmatmul.mubr.bf16.gmra.mrb[0].mxu0 %v804
    %v2166 = vpop.f32.mrb[0].mxu0
    %v2167 = vadd.f32 %v2124, %v2166
    %v2168 = vpop.f32.mrb[0].mxu0
    %v2169 = vadd.f32 %v2126, %v2168
    %v2170 = vpop.f32.mrb[0].mxu0
    %v2171 = vadd.f32 %v2128, %v2170
    %v2172 = vpop.f32.mrb[0].mxu0
    %v2173 = vadd.f32 %v2130, %v2172
    %2174 = vdwg.mxu0
    %2175 = vmatprep.subr.bf16.mxu0 %v1707
    %2176 = vmatpush1.bf16.msra.mxu0 %v1706
    %2177 = vmatprep.subr.bf16.mxu0 %v1711
    %2178 = vmatpush1.bf16.msra.mxu0 %v1710
    %2179 = vmatprep.subr.bf16.mxu0 %v1715
    %2180 = vmatpush1.bf16.msra.mxu0 %v1714
    %2181 = vmatprep.subr.bf16.mxu0 %v1719
    %2182 = vmatpush1.bf16.msra.mxu0 %v1718
    %2183 = vmatprep.subr.bf16.mxu0 %v1723
    %2184 = vmatpush1.bf16.msra.mxu0 %v1722
    %2185 = vmatprep.subr.bf16.mxu0 %v1727
    %2186 = vmatpush1.bf16.msra.mxu0 %v1726
    %2187 = vmatprep.subr.bf16.mxu0 %v1731
    %2188 = vmatpush1.bf16.msra.mxu0 %v1730
    %2189 = vmatprep.subr.bf16.mxu0 %v1735
    %2190 = vmatpush1.bf16.msra.mxu0 %v1734
    %2191 = vmatprep.subr.bf16.mxu0 %v1739
    %2192 = vmatpush1.bf16.msra.mxu0 %v1738
    %2193 = vmatprep.subr.bf16.mxu0 %v1743
    %2194 = vmatpush1.bf16.msra.mxu0 %v1742
    %2195 = vmatprep.subr.bf16.mxu0 %v1747
    %2196 = vmatpush1.bf16.msra.mxu0 %v1746
    %2197 = vmatprep.subr.bf16.mxu0 %v1751
    %2198 = vmatpush1.bf16.msra.mxu0 %v1750
    %2199 = vmatprep.subr.bf16.mxu0 %v1755
    %2200 = vmatpush1.bf16.msra.mxu0 %v1754
    %2201 = vmatprep.subr.bf16.mxu0 %v1759
    %2202 = vmatpush1.bf16.msra.mxu0 %v1758
    %2203 = vmatprep.subr.bf16.mxu0 %v1763
    %2204 = vmatpush1.bf16.msra.mxu0 %v1762
    %2205 = vmatprep.subr.bf16.mxu0 %v1767
    %2206 = vmatpush1.bf16.msra.mxu0 %v1766
    %2207 = vmatprep.mubr.bf16.mxu0 %v807
    %2208 = vmatmul.mubr.bf16.gmra.mrb[0].mxu0 %v806
    %v2209 = vpop.f32.mrb[0].mxu0
    %v2210 = vadd.f32 %v2167, %v2209
    %v2211 = vpop.f32.mrb[0].mxu0
    %v2212 = vadd.f32 %v2169, %v2211
    %v2213 = vpop.f32.mrb[0].mxu0
    %v2214 = vadd.f32 %v2171, %v2213
    %v2215 = vpop.f32.mrb[0].mxu0
    %v2216 = vadd.f32 %v2173, %v2215
    %2217 = vdwg.mxu0
    %2218 = vst [vmem:[#allocation4] sm:$0xff] %v2081
    %2219 = vst [vmem:[#allocation4 + $0x8] sm:$0xff] %v2083
    %2220 = vst [vmem:[#allocation4 + $0x10] sm:$0xff] %v2210
    %2221 = vst [vmem:[#allocation4 + $0x18] sm:$0xff] %v2212
    %2222 = vst [vmem:[#allocation4 + $0x20] sm:$0xff] %v2085
    %2223 = vst [vmem:[#allocation4 + $0x28] sm:$0xff] %v2087
    %2224 = vst [vmem:[#allocation4 + $0x30] sm:$0xff] %v2214
    %2225 = vst [vmem:[#allocation4 + $0x38] sm:$0xff] %v2216
    %v2226 = vld [vmem:[%s6] sm:$0xf]
    %v2227 = vld [vmem:[#allocation4] sm:$0x3]
    %v2228 = vld [vmem:[#allocation4 + $0x8] sm:$0x3]
    %v2229 = vld [vmem:[#allocation4 + $0x10] sm:$0x3]
    %v2230 = vld [vmem:[#allocation4 + $0x18] sm:$0x3]
    %v2232 = vlaneseq
    %v2233 = vshrl.u32 %v2232, 7
    %v2234 = vsub.s32 0, %v2233
    %v2235 = vrot.slane %v2226, %v2234
    %v2236 = vlaneseq
    %v2237 = vshrl.u32 %v2236, 7
    %v2238 = vsub.s32 1, %v2237
    %v2239 = vrot.slane %v2226, %v2238
    %v2240 = vlaneseq
    %v2241 = vshrl.u32 %v2240, 7
    %v2242 = vsub.s32 2, %v2241
    %v2243 = vrot.slane %v2226, %v2242
    %v2244 = vlaneseq
    %v2245 = vshrl.u32 %v2244, 7
    %v2246 = vsub.s32 3, %v2245
    %v2247 = vrot.slane %v2226, %v2246
    %v2252 = vadd.f32 %v2227, %v2235
    %v2253 = vadd.f32 %v2228, %v2239
    %v2254 = vadd.f32 %v2229, %v2243
    %v2255 = vadd.f32 %v2230, %v2247
    %v2256 = vmax.f32 %v2252, 0.0
    %v2257 = vmax.f32 %v2253, 0.0
    %v2258 = vmax.f32 %v2254, 0.0
    %v2259 = vmax.f32 %v2255, 0.0
    %v2260 = vpack.c.bf16 %v2256, %v2256
    %v2261 = vpack.c.bf16 %v2257, %v2257
    %v2262 = vpack.c.bf16 %v2258, %v2258
    %v2263 = vpack.c.bf16 %v2259, %v2259
    %2264 = vst [vmem:[#allocation5 + $0x20] sm:$0x1] %v2260
    %2265 = vst [vmem:[#allocation5 + $0x28] sm:$0x1] %v2261
    %2266 = vst [vmem:[#allocation5 + $0x30] sm:$0x1] %v2262
    %2267 = vst [vmem:[#allocation5 + $0x38] sm:$0x1] %v2263
    %v2272 = vrot.slane %v2260, 7
    %v2273 = vrot.slane %v2261, 7
    %v2274 = vrot.slane %v2262, 7
    %v2275 = vrot.slane %v2263, 7
    %2280 = vst [vmem:[#allocation5] sm:$0x2] %v2272
    %2281 = vst [vmem:[#allocation5 + $0x8] sm:$0x2] %v2273
    %2282 = vst [vmem:[#allocation5 + $0x10] sm:$0x2] %v2274
    %2283 = vst [vmem:[#allocation5 + $0x18] sm:$0x2] %v2275
    %v2284 = vld [vmem:[#allocation4] sm:$0xc]
    %v2285 = vld [vmem:[#allocation4 + $0x8] sm:$0xc]
    %v2286 = vld [vmem:[#allocation4 + $0x10] sm:$0xc]
    %v2287 = vld [vmem:[#allocation4 + $0x18] sm:$0xc]
    %v2288 = vadd.f32 %v2284, %v2235
    %v2289 = vadd.f32 %v2285, %v2239
    %v2290 = vadd.f32 %v2286, %v2243
    %v2291 = vadd.f32 %v2287, %v2247
    %v2292 = vmax.f32 %v2288, 0.0
    %v2293 = vmax.f32 %v2289, 0.0
    %v2294 = vmax.f32 %v2290, 0.0
    %v2295 = vmax.f32 %v2291, 0.0
    %v2296 = vpack.c.bf16 %v2292, %v2292
    %v2297 = vpack.c.bf16 %v2293, %v2293
    %v2298 = vpack.c.bf16 %v2294, %v2294
    %v2299 = vpack.c.bf16 %v2295, %v2295
    %2300 = vst [vmem:[#allocation5 + $0x20] sm:$0x2] %v2296
    %2301 = vst [vmem:[#allocation5 + $0x28] sm:$0x2] %v2297
    %2302 = vst [vmem:[#allocation5 + $0x30] sm:$0x2] %v2298
    %2303 = vst [vmem:[#allocation5 + $0x38] sm:$0x2] %v2299
    %v2308 = vrot.slane %v2296, 7
    %v2309 = vrot.slane %v2297, 7
    %v2310 = vrot.slane %v2298, 7
    %v2311 = vrot.slane %v2299, 7
    %2316 = vst [vmem:[#allocation5] sm:$0x4] %v2308
    %2317 = vst [vmem:[#allocation5 + $0x8] sm:$0x4] %v2309
    %2318 = vst [vmem:[#allocation5 + $0x10] sm:$0x4] %v2310
    %2319 = vst [vmem:[#allocation5 + $0x18] sm:$0x4] %v2311
    %v2320 = vrot.slane %v2296, 1
    %v2321 = vrot.slane %v2297, 1
    %v2322 = vrot.slane %v2298, 1
    %v2323 = vrot.slane %v2299, 1
    %2328 = vst [vmem:[#allocation5 + $0x40] sm:$0x1] %v2320
    %2329 = vst [vmem:[#allocation5 + $0x48] sm:$0x1] %v2321
    %2330 = vst [vmem:[#allocation5 + $0x50] sm:$0x1] %v2322
    %2331 = vst [vmem:[#allocation5 + $0x58] sm:$0x1] %v2323
    %v2332 = vld [vmem:[#allocation4] sm:$0x30]
    %v2333 = vld [vmem:[#allocation4 + $0x8] sm:$0x30]
    %v2334 = vld [vmem:[#allocation4 + $0x10] sm:$0x30]
    %v2335 = vld [vmem:[#allocation4 + $0x18] sm:$0x30]
    %v2336 = vadd.f32 %v2332, %v2235
    %v2337 = vadd.f32 %v2333, %v2239
    %v2338 = vadd.f32 %v2334, %v2243
    %v2339 = vadd.f32 %v2335, %v2247
    %v2340 = vmax.f32 %v2336, 0.0
    %v2341 = vmax.f32 %v2337, 0.0
    %v2342 = vmax.f32 %v2338, 0.0
    %v2343 = vmax.f32 %v2339, 0.0
    %v2344 = vpack.c.bf16 %v2340, %v2340
    %v2345 = vpack.c.bf16 %v2341, %v2341
    %v2346 = vpack.c.bf16 %v2342, %v2342
    %v2347 = vpack.c.bf16 %v2343, %v2343
    %2348 = vst [vmem:[#allocation5 + $0x20] sm:$0x4] %v2344
    %2349 = vst [vmem:[#allocation5 + $0x28] sm:$0x4] %v2345
    %2350 = vst [vmem:[#allocation5 + $0x30] sm:$0x4] %v2346
    %2351 = vst [vmem:[#allocation5 + $0x38] sm:$0x4] %v2347
    %v2356 = vrot.slane %v2344, 7
    %v2357 = vrot.slane %v2345, 7
    %v2358 = vrot.slane %v2346, 7
    %v2359 = vrot.slane %v2347, 7
    %2364 = vst [vmem:[#allocation5] sm:$0x8] %v2356
    %2365 = vst [vmem:[#allocation5 + $0x8] sm:$0x8] %v2357
    %2366 = vst [vmem:[#allocation5 + $0x10] sm:$0x8] %v2358
    %2367 = vst [vmem:[#allocation5 + $0x18] sm:$0x8] %v2359
    %v2368 = vrot.slane %v2344, 1
    %v2369 = vrot.slane %v2345, 1
    %v2370 = vrot.slane %v2346, 1
    %v2371 = vrot.slane %v2347, 1
    %2376 = vst [vmem:[#allocation5 + $0x40] sm:$0x2] %v2368
    %2377 = vst [vmem:[#allocation5 + $0x48] sm:$0x2] %v2369
    %2378 = vst [vmem:[#allocation5 + $0x50] sm:$0x2] %v2370
    %2379 = vst [vmem:[#allocation5 + $0x58] sm:$0x2] %v2371
    %v2380 = vld [vmem:[#allocation4] sm:$0xc0]
    %v2381 = vld [vmem:[#allocation4 + $0x8] sm:$0xc0]
    %v2382 = vld [vmem:[#allocation4 + $0x10] sm:$0xc0]
    %v2383 = vld [vmem:[#allocation4 + $0x18] sm:$0xc0]
    %v2384 = vadd.f32 %v2380, %v2235
    %v2385 = vadd.f32 %v2381, %v2239
    %v2386 = vadd.f32 %v2382, %v2243
    %v2387 = vadd.f32 %v2383, %v2247
    %v2388 = vmax.f32 %v2384, 0.0
    %v2389 = vmax.f32 %v2385, 0.0
    %v2390 = vmax.f32 %v2386, 0.0
    %v2391 = vmax.f32 %v2387, 0.0
    %v2392 = vpack.c.bf16 %v2388, %v2388
    %v2393 = vpack.c.bf16 %v2389, %v2389
    %v2394 = vpack.c.bf16 %v2390, %v2390
    %v2395 = vpack.c.bf16 %v2391, %v2391
    %2396 = vst [vmem:[#allocation5 + $0x20] sm:$0x8] %v2392
    %2397 = vst [vmem:[#allocation5 + $0x28] sm:$0x8] %v2393
    %2398 = vst [vmem:[#allocation5 + $0x30] sm:$0x8] %v2394
    %2399 = vst [vmem:[#allocation5 + $0x38] sm:$0x8] %v2395
    %v2404 = vrot.slane %v2392, 7
    %v2405 = vrot.slane %v2393, 7
    %v2406 = vrot.slane %v2394, 7
    %v2407 = vrot.slane %v2395, 7
    %2412 = vst [vmem:[#allocation5] sm:$0x10] %v2404
    %2413 = vst [vmem:[#allocation5 + $0x8] sm:$0x10] %v2405
    %2414 = vst [vmem:[#allocation5 + $0x10] sm:$0x10] %v2406
    %2415 = vst [vmem:[#allocation5 + $0x18] sm:$0x10] %v2407
    %v2416 = vrot.slane %v2392, 1
    %v2417 = vrot.slane %v2393, 1
    %v2418 = vrot.slane %v2394, 1
    %v2419 = vrot.slane %v2395, 1
    %2424 = vst [vmem:[#allocation5 + $0x40] sm:$0x4] %v2416
    %2425 = vst [vmem:[#allocation5 + $0x48] sm:$0x4] %v2417
    %2426 = vst [vmem:[#allocation5 + $0x50] sm:$0x4] %v2418
    %2427 = vst [vmem:[#allocation5 + $0x58] sm:$0x4] %v2419
    %v2428 = vld [vmem:[#allocation4 + $0x20] sm:$0x3]
    %v2429 = vld [vmem:[#allocation4 + $0x28] sm:$0x3]
    %v2430 = vld [vmem:[#allocation4 + $0x30] sm:$0x3]
    %v2431 = vld [vmem:[#allocation4 + $0x38] sm:$0x3]
    %v2432 = vadd.f32 %v2428, %v2235
    %v2433 = vadd.f32 %v2429, %v2239
    %v2434 = vadd.f32 %v2430, %v2243
    %v2435 = vadd.f32 %v2431, %v2247
    %v2436 = vmax.f32 %v2432, 0.0
    %v2437 = vmax.f32 %v2433, 0.0
    %v2438 = vmax.f32 %v2434, 0.0
    %v2439 = vmax.f32 %v2435, 0.0
    %v2440 = vpack.c.bf16 %v2436, %v2436
    %v2441 = vpack.c.bf16 %v2437, %v2437
    %v2442 = vpack.c.bf16 %v2438, %v2438
    %v2443 = vpack.c.bf16 %v2439, %v2439
    %v2448 = vrot.slane %v2440, 4
    %v2449 = vrot.slane %v2441, 4
    %v2450 = vrot.slane %v2442, 4
    %v2451 = vrot.slane %v2443, 4
    %2456 = vst [vmem:[#allocation5 + $0x20] sm:$0x10] %v2448
    %2457 = vst [vmem:[#allocation5 + $0x28] sm:$0x10] %v2449
    %2458 = vst [vmem:[#allocation5 + $0x30] sm:$0x10] %v2450
    %2459 = vst [vmem:[#allocation5 + $0x38] sm:$0x10] %v2451
    %v2460 = vrot.slane %v2440, 3
    %v2461 = vrot.slane %v2441, 3
    %v2462 = vrot.slane %v2442, 3
    %v2463 = vrot.slane %v2443, 3
    %2468 = vst [vmem:[#allocation5] sm:$0x20] %v2460
    %2469 = vst [vmem:[#allocation5 + $0x8] sm:$0x20] %v2461
    %2470 = vst [vmem:[#allocation5 + $0x10] sm:$0x20] %v2462
    %2471 = vst [vmem:[#allocation5 + $0x18] sm:$0x20] %v2463
    %v2472 = vrot.slane %v2440, 5
    %v2473 = vrot.slane %v2441, 5
    %v2474 = vrot.slane %v2442, 5
    %v2475 = vrot.slane %v2443, 5
    %2480 = vst [vmem:[#allocation5 + $0x40] sm:$0x8] %v2472
    %2481 = vst [vmem:[#allocation5 + $0x48] sm:$0x8] %v2473
    %2482 = vst [vmem:[#allocation5 + $0x50] sm:$0x8] %v2474
    %2483 = vst [vmem:[#allocation5 + $0x58] sm:$0x8] %v2475
    %v2484 = vld [vmem:[#allocation4 + $0x20] sm:$0xc]
    %v2485 = vld [vmem:[#allocation4 + $0x28] sm:$0xc]
    %v2486 = vld [vmem:[#allocation4 + $0x30] sm:$0xc]
    %v2487 = vld [vmem:[#allocation4 + $0x38] sm:$0xc]
    %v2488 = vadd.f32 %v2484, %v2235
    %v2489 = vadd.f32 %v2485, %v2239
    %v2490 = vadd.f32 %v2486, %v2243
    %v2491 = vadd.f32 %v2487, %v2247
    %v2492 = vmax.f32 %v2488, 0.0
    %v2493 = vmax.f32 %v2489, 0.0
    %v2494 = vmax.f32 %v2490, 0.0
    %v2495 = vmax.f32 %v2491, 0.0
    %v2496 = vpack.c.bf16 %v2492, %v2492
    %v2497 = vpack.c.bf16 %v2493, %v2493
    %v2498 = vpack.c.bf16 %v2494, %v2494
    %v2499 = vpack.c.bf16 %v2495, %v2495
    %v2504 = vrot.slane %v2496, 4
    %v2505 = vrot.slane %v2497, 4
    %v2506 = vrot.slane %v2498, 4
    %v2507 = vrot.slane %v2499, 4
    %2512 = vst [vmem:[#allocation5 + $0x20] sm:$0x20] %v2504
    %2513 = vst [vmem:[#allocation5 + $0x28] sm:$0x20] %v2505
    %2514 = vst [vmem:[#allocation5 + $0x30] sm:$0x20] %v2506
    %2515 = vst [vmem:[#allocation5 + $0x38] sm:$0x20] %v2507
    %v2516 = vrot.slane %v2496, 3
    %v2517 = vrot.slane %v2497, 3
    %v2518 = vrot.slane %v2498, 3
    %v2519 = vrot.slane %v2499, 3
    %2524 = vst [vmem:[#allocation5] sm:$0x40] %v2516
    %2525 = vst [vmem:[#allocation5 + $0x8] sm:$0x40] %v2517
    %2526 = vst [vmem:[#allocation5 + $0x10] sm:$0x40] %v2518
    %2527 = vst [vmem:[#allocation5 + $0x18] sm:$0x40] %v2519
    %v2528 = vrot.slane %v2496, 5
    %v2529 = vrot.slane %v2497, 5
    %v2530 = vrot.slane %v2498, 5
    %v2531 = vrot.slane %v2499, 5
    %2536 = vst [vmem:[#allocation5 + $0x40] sm:$0x10] %v2528
    %2537 = vst [vmem:[#allocation5 + $0x48] sm:$0x10] %v2529
    %2538 = vst [vmem:[#allocation5 + $0x50] sm:$0x10] %v2530
    %2539 = vst [vmem:[#allocation5 + $0x58] sm:$0x10] %v2531
    %v2540 = vld [vmem:[#allocation4 + $0x20] sm:$0x30]
    %v2541 = vld [vmem:[#allocation4 + $0x28] sm:$0x30]
    %v2542 = vld [vmem:[#allocation4 + $0x30] sm:$0x30]
    %v2543 = vld [vmem:[#allocation4 + $0x38] sm:$0x30]
    %v2544 = vadd.f32 %v2540, %v2235
    %v2545 = vadd.f32 %v2541, %v2239
    %v2546 = vadd.f32 %v2542, %v2243
    %v2547 = vadd.f32 %v2543, %v2247
    %v2548 = vmax.f32 %v2544, 0.0
    %v2549 = vmax.f32 %v2545, 0.0
    %v2550 = vmax.f32 %v2546, 0.0
    %v2551 = vmax.f32 %v2547, 0.0
    %v2552 = vpack.c.bf16 %v2548, %v2548
    %v2553 = vpack.c.bf16 %v2549, %v2549
    %v2554 = vpack.c.bf16 %v2550, %v2550
    %v2555 = vpack.c.bf16 %v2551, %v2551
    %v2560 = vrot.slane %v2552, 4
    %v2561 = vrot.slane %v2553, 4
    %v2562 = vrot.slane %v2554, 4
    %v2563 = vrot.slane %v2555, 4
    %2568 = vst [vmem:[#allocation5 + $0x20] sm:$0x40] %v2560
    %2569 = vst [vmem:[#allocation5 + $0x28] sm:$0x40] %v2561
    %2570 = vst [vmem:[#allocation5 + $0x30] sm:$0x40] %v2562
    %2571 = vst [vmem:[#allocation5 + $0x38] sm:$0x40] %v2563
    %v2572 = vrot.slane %v2552, 3
    %v2573 = vrot.slane %v2553, 3
    %v2574 = vrot.slane %v2554, 3
    %v2575 = vrot.slane %v2555, 3
    %2580 = vst [vmem:[#allocation5] sm:$0x80] %v2572
    %2581 = vst [vmem:[#allocation5 + $0x8] sm:$0x80] %v2573
    %2582 = vst [vmem:[#allocation5 + $0x10] sm:$0x80] %v2574
    %2583 = vst [vmem:[#allocation5 + $0x18] sm:$0x80] %v2575
    %v2584 = vrot.slane %v2552, 5
    %v2585 = vrot.slane %v2553, 5
    %v2586 = vrot.slane %v2554, 5
    %v2587 = vrot.slane %v2555, 5
    %2592 = vst [vmem:[#allocation5 + $0x40] sm:$0x20] %v2584
    %2593 = vst [vmem:[#allocation5 + $0x48] sm:$0x20] %v2585
    %2594 = vst [vmem:[#allocation5 + $0x50] sm:$0x20] %v2586
    %2595 = vst [vmem:[#allocation5 + $0x58] sm:$0x20] %v2587
    %v2596 = vld [vmem:[#allocation4 + $0x20] sm:$0xc0]
    %v2597 = vld [vmem:[#allocation4 + $0x28] sm:$0xc0]
    %v2598 = vld [vmem:[#allocation4 + $0x30] sm:$0xc0]
    %v2599 = vld [vmem:[#allocation4 + $0x38] sm:$0xc0]
    %v2600 = vadd.f32 %v2596, %v2235
    %v2601 = vadd.f32 %v2597, %v2239
    %v2602 = vadd.f32 %v2598, %v2243
    %v2603 = vadd.f32 %v2599, %v2247
    %v2604 = vmax.f32 %v2600, 0.0
    %v2605 = vmax.f32 %v2601, 0.0
    %v2606 = vmax.f32 %v2602, 0.0
    %v2607 = vmax.f32 %v2603, 0.0
    %v2608 = vpack.c.bf16 %v2604, %v2604
    %v2609 = vpack.c.bf16 %v2605, %v2605
    %v2610 = vpack.c.bf16 %v2606, %v2606
    %v2611 = vpack.c.bf16 %v2607, %v2607
    %v2616 = vrot.slane %v2608, 4
    %v2617 = vrot.slane %v2609, 4
    %v2618 = vrot.slane %v2610, 4
    %v2619 = vrot.slane %v2611, 4
    %2624 = vst [vmem:[#allocation5 + $0x20] sm:$0x80] %v2616
    %2625 = vst [vmem:[#allocation5 + $0x28] sm:$0x80] %v2617
    %2626 = vst [vmem:[#allocation5 + $0x30] sm:$0x80] %v2618
    %2627 = vst [vmem:[#allocation5 + $0x38] sm:$0x80] %v2619
    %v2628 = vrot.slane %v2608, 5
    %v2629 = vrot.slane %v2609, 5
    %v2630 = vrot.slane %v2610, 5
    %v2631 = vrot.slane %v2611, 5
    %2636 = vst [vmem:[#allocation5 + $0x40] sm:$0x40] %v2628
    %2637 = vst [vmem:[#allocation5 + $0x48] sm:$0x40] %v2629
    %2638 = vst [vmem:[#allocation5 + $0x50] sm:$0x40] %v2630
    %2639 = vst [vmem:[#allocation5 + $0x58] sm:$0x40] %v2631
    %v2640 = vld [vmem:[#allocation5] sm:$0xff]
    %v2641 = vld [vmem:[#allocation5 + $0x8] sm:$0xff]
    %v2642 = vld [vmem:[#allocation5 + $0x10] sm:$0xff]
    %v2643 = vld [vmem:[#allocation5 + $0x18] sm:$0xff]
    %v2644 = vld [vmem:[#allocation5 + $0x20] sm:$0xff]
    %v2645 = vld [vmem:[#allocation5 + $0x28] sm:$0xff]
    %v2646 = vld [vmem:[#allocation5 + $0x30] sm:$0xff]
    %v2647 = vld [vmem:[#allocation5 + $0x38] sm:$0xff]
    %v2648 = vld [vmem:[#allocation5 + $0x40] sm:$0xff]
    %v2649 = vld [vmem:[#allocation5 + $0x48] sm:$0xff]
    %v2650 = vld [vmem:[#allocation5 + $0x50] sm:$0xff]
    %v2651 = vld [vmem:[#allocation5 + $0x58] sm:$0xff]
    %v2652 = vld [vmem:[%s3] sm:$0xff]
    %v2653 = vld [vmem:[%s3 + $0x8] sm:$0xff]
    %v2654 = vld [vmem:[%s3 + $0x10] sm:$0xff]
    %v2655 = vld [vmem:[%s3 + $0x18] sm:$0xff]
    %v2656 = vld [vmem:[%s3 + $0x20] sm:$0xff]
    %v2657 = vld [vmem:[%s3 + $0x28] sm:$0xff]
    %v2658 = vld [vmem:[%s3 + $0x30] sm:$0xff]
    %v2659 = vld [vmem:[%s3 + $0x38] sm:$0xff]
    %v2660 = vld [vmem:[%s3 + $0x40] sm:$0xff]
    %v2661 = vld [vmem:[%s3 + $0x48] sm:$0xff]
    %v2662 = vld [vmem:[%s3 + $0x50] sm:$0xff]
    %v2663 = vld [vmem:[%s3 + $0x58] sm:$0xff]
    %v2664 = vld [vmem:[%s3 + $0x60] sm:$0xff]
    %v2665 = vld [vmem:[%s3 + $0x68] sm:$0xff]
    %v2666 = vld [vmem:[%s3 + $0x70] sm:$0xff]
    %v2667 = vld [vmem:[%s3 + $0x78] sm:$0xff]
    %v2668 = vld [vmem:[%s3 + $0x80] sm:$0xff]
    %v2669 = vld [vmem:[%s3 + $0x88] sm:$0xff]
    %v2670 = vld [vmem:[%s3 + $0x90] sm:$0xff]
    %v2671 = vld [vmem:[%s3 + $0x98] sm:$0xff]
    %v2672 = vld [vmem:[%s3 + $0xa0] sm:$0xff]
    %v2673 = vld [vmem:[%s3 + $0xa8] sm:$0xff]
    %v2674 = vld [vmem:[%s3 + $0xb0] sm:$0xff]
    %v2675 = vld [vmem:[%s3 + $0xb8] sm:$0xff]
    %v2676 = vld [vmem:[%s3 + $0xc0] sm:$0xff]
    %v2677 = vld [vmem:[%s3 + $0xc8] sm:$0xff]
    %v2678 = vld [vmem:[%s3 + $0xd0] sm:$0xff]
    %v2679 = vld [vmem:[%s3 + $0xd8] sm:$0xff]
    %v2680 = vld [vmem:[%s3 + $0xe0] sm:$0xff]
    %v2681 = vld [vmem:[%s3 + $0xe8] sm:$0xff]
    %v2682 = vld [vmem:[%s3 + $0xf0] sm:$0xff]
    %v2683 = vld [vmem:[%s3 + $0xf8] sm:$0xff]
    %v2684 = vld [vmem:[%s3 + $0x100] sm:$0xff]
    %v2685 = vld [vmem:[%s3 + $0x108] sm:$0xff]
    %v2686 = vld [vmem:[%s3 + $0x110] sm:$0xff]
    %v2687 = vld [vmem:[%s3 + $0x118] sm:$0xff]
    %v2688 = vld [vmem:[%s3 + $0x120] sm:$0xff]
    %v2689 = vld [vmem:[%s3 + $0x128] sm:$0xff]
    %v2690 = vld [vmem:[%s3 + $0x130] sm:$0xff]
    %v2691 = vld [vmem:[%s3 + $0x138] sm:$0xff]
    %v2692 = vld [vmem:[%s3 + $0x140] sm:$0xff]
    %v2693 = vld [vmem:[%s3 + $0x148] sm:$0xff]
    %v2694 = vld [vmem:[%s3 + $0x150] sm:$0xff]
    %v2695 = vld [vmem:[%s3 + $0x158] sm:$0xff]
    %v2696 = vld [vmem:[%s3 + $0x160] sm:$0xff]
    %v2697 = vld [vmem:[%s3 + $0x168] sm:$0xff]
    %v2698 = vld [vmem:[%s3 + $0x170] sm:$0xff]
    %v2699 = vld [vmem:[%s3 + $0x178] sm:$0xff]
    %v2700 = vld [vmem:[%s3 + $0x180] sm:$0xff]
    %v2701 = vld [vmem:[%s3 + $0x188] sm:$0xff]
    %v2702 = vld [vmem:[%s3 + $0x190] sm:$0xff]
    %v2703 = vld [vmem:[%s3 + $0x198] sm:$0xff]
    %v2704 = vld [vmem:[%s3 + $0x1a0] sm:$0xff]
    %v2705 = vld [vmem:[%s3 + $0x1a8] sm:$0xff]
    %v2706 = vld [vmem:[%s3 + $0x1b0] sm:$0xff]
    %v2707 = vld [vmem:[%s3 + $0x1b8] sm:$0xff]
    %v2708 = vld [vmem:[%s3 + $0x1c0] sm:$0xff]
    %v2709 = vld [vmem:[%s3 + $0x1c8] sm:$0xff]
    %v2710 = vld [vmem:[%s3 + $0x1d0] sm:$0xff]
    %v2711 = vld [vmem:[%s3 + $0x1d8] sm:$0xff]
    %v2712 = vld [vmem:[%s3 + $0x1e0] sm:$0xff]
    %v2713 = vld [vmem:[%s3 + $0x1e8] sm:$0xff]
    %v2714 = vld [vmem:[%s3 + $0x1f0] sm:$0xff]
    %v2715 = vld [vmem:[%s3 + $0x1f8] sm:$0xff]
    %v2716 = vld [vmem:[%s3 + $0x200] sm:$0xff]
    %v2717 = vld [vmem:[%s3 + $0x208] sm:$0xff]
    %v2718 = vld [vmem:[%s3 + $0x210] sm:$0xff]
    %v2719 = vld [vmem:[%s3 + $0x218] sm:$0xff]
    %v2720 = vld [vmem:[%s3 + $0x220] sm:$0xff]
    %v2721 = vld [vmem:[%s3 + $0x228] sm:$0xff]
    %v2722 = vld [vmem:[%s3 + $0x230] sm:$0xff]
    %v2723 = vld [vmem:[%s3 + $0x238] sm:$0xff]
    %v2724 = vld [vmem:[%s3 + $0x240] sm:$0xff]
    %v2725 = vld [vmem:[%s3 + $0x248] sm:$0xff]
    %v2726 = vld [vmem:[%s3 + $0x250] sm:$0xff]
    %v2727 = vld [vmem:[%s3 + $0x258] sm:$0xff]
    %v2728 = vld [vmem:[%s3 + $0x260] sm:$0xff]
    %v2729 = vld [vmem:[%s3 + $0x268] sm:$0xff]
    %v2730 = vld [vmem:[%s3 + $0x270] sm:$0xff]
    %v2731 = vld [vmem:[%s3 + $0x278] sm:$0xff]
    %v2732 = vld [vmem:[%s3 + $0x280] sm:$0xff]
    %v2733 = vld [vmem:[%s3 + $0x288] sm:$0xff]
    %v2734 = vld [vmem:[%s3 + $0x290] sm:$0xff]
    %v2735 = vld [vmem:[%s3 + $0x298] sm:$0xff]
    %v2736 = vld [vmem:[%s3 + $0x2a0] sm:$0xff]
    %v2737 = vld [vmem:[%s3 + $0x2a8] sm:$0xff]
    %v2738 = vld [vmem:[%s3 + $0x2b0] sm:$0xff]
    %v2739 = vld [vmem:[%s3 + $0x2b8] sm:$0xff]
    %v2740 = vld [vmem:[%s3 + $0x2c0] sm:$0xff]
    %v2741 = vld [vmem:[%s3 + $0x2c8] sm:$0xff]
    %v2742 = vld [vmem:[%s3 + $0x2d0] sm:$0xff]
    %v2743 = vld [vmem:[%s3 + $0x2d8] sm:$0xff]
    %v2744 = vld [vmem:[%s3 + $0x2e0] sm:$0xff]
    %v2745 = vld [vmem:[%s3 + $0x2e8] sm:$0xff]
    %v2746 = vld [vmem:[%s3 + $0x2f0] sm:$0xff]
    %v2747 = vld [vmem:[%s3 + $0x2f8] sm:$0xff]
    %v2748 = vld [vmem:[%s3 + $0x300] sm:$0xff]
    %v2749 = vld [vmem:[%s3 + $0x308] sm:$0xff]
    %v2750 = vld [vmem:[%s3 + $0x310] sm:$0xff]
    %v2751 = vld [vmem:[%s3 + $0x318] sm:$0xff]
    %v2752 = vld [vmem:[%s3 + $0x320] sm:$0xff]
    %v2753 = vld [vmem:[%s3 + $0x328] sm:$0xff]
    %v2754 = vld [vmem:[%s3 + $0x330] sm:$0xff]
    %v2755 = vld [vmem:[%s3 + $0x338] sm:$0xff]
    %v2756 = vld [vmem:[%s3 + $0x340] sm:$0xff]
    %v2757 = vld [vmem:[%s3 + $0x348] sm:$0xff]
    %v2758 = vld [vmem:[%s3 + $0x350] sm:$0xff]
    %v2759 = vld [vmem:[%s3 + $0x358] sm:$0xff]
    %v2760 = vld [vmem:[%s3 + $0x360] sm:$0xff]
    %v2761 = vld [vmem:[%s3 + $0x368] sm:$0xff]
    %v2762 = vld [vmem:[%s3 + $0x370] sm:$0xff]
    %v2763 = vld [vmem:[%s3 + $0x378] sm:$0xff]
    %v2764 = vld [vmem:[%s3 + $0x380] sm:$0xff]
    %v2765 = vld [vmem:[%s3 + $0x388] sm:$0xff]
    %v2766 = vld [vmem:[%s3 + $0x390] sm:$0xff]
    %v2767 = vld [vmem:[%s3 + $0x398] sm:$0xff]
    %v2768 = vld [vmem:[%s3 + $0x3a0] sm:$0xff]
    %v2769 = vld [vmem:[%s3 + $0x3a8] sm:$0xff]
    %v2770 = vld [vmem:[%s3 + $0x3b0] sm:$0xff]
    %v2771 = vld [vmem:[%s3 + $0x3b8] sm:$0xff]
    %v2772 = vld [vmem:[%s3 + $0x3c0] sm:$0xff]
    %v2773 = vld [vmem:[%s3 + $0x3c8] sm:$0xff]
    %v2774 = vld [vmem:[%s3 + $0x3d0] sm:$0xff]
    %v2775 = vld [vmem:[%s3 + $0x3d8] sm:$0xff]
    %v2776 = vld [vmem:[%s3 + $0x3e0] sm:$0xff]
    %v2777 = vld [vmem:[%s3 + $0x3e8] sm:$0xff]
    %v2778 = vld [vmem:[%s3 + $0x3f0] sm:$0xff]
    %v2779 = vld [vmem:[%s3 + $0x3f8] sm:$0xff]
    %v2780 = vld [vmem:[%s3 + $0x400] sm:$0xff]
    %v2781 = vld [vmem:[%s3 + $0x408] sm:$0xff]
    %v2782 = vld [vmem:[%s3 + $0x410] sm:$0xff]
    %v2783 = vld [vmem:[%s3 + $0x418] sm:$0xff]
    %v2784 = vld [vmem:[%s3 + $0x420] sm:$0xff]
    %v2785 = vld [vmem:[%s3 + $0x428] sm:$0xff]
    %v2786 = vld [vmem:[%s3 + $0x430] sm:$0xff]
    %v2787 = vld [vmem:[%s3 + $0x438] sm:$0xff]
    %v2788 = vld [vmem:[%s3 + $0x440] sm:$0xff]
    %v2789 = vld [vmem:[%s3 + $0x448] sm:$0xff]
    %v2790 = vld [vmem:[%s3 + $0x450] sm:$0xff]
    %v2791 = vld [vmem:[%s3 + $0x458] sm:$0xff]
    %v2792 = vld [vmem:[%s3 + $0x460] sm:$0xff]
    %v2793 = vld [vmem:[%s3 + $0x468] sm:$0xff]
    %v2794 = vld [vmem:[%s3 + $0x470] sm:$0xff]
    %v2795 = vld [vmem:[%s3 + $0x478] sm:$0xff]
    %v2796 = vld [vmem:[%s3 + $0x480] sm:$0xff]
    %v2797 = vld [vmem:[%s3 + $0x488] sm:$0xff]
    %v2798 = vld [vmem:[%s3 + $0x490] sm:$0xff]
    %v2799 = vld [vmem:[%s3 + $0x498] sm:$0xff]
    %v2800 = vld [vmem:[%s3 + $0x4a0] sm:$0xff]
    %v2801 = vld [vmem:[%s3 + $0x4a8] sm:$0xff]
    %v2802 = vld [vmem:[%s3 + $0x4b0] sm:$0xff]
    %v2803 = vld [vmem:[%s3 + $0x4b8] sm:$0xff]
    %v2804 = vld [vmem:[%s3 + $0x4c0] sm:$0xff]
    %v2805 = vld [vmem:[%s3 + $0x4c8] sm:$0xff]
    %v2806 = vld [vmem:[%s3 + $0x4d0] sm:$0xff]
    %v2807 = vld [vmem:[%s3 + $0x4d8] sm:$0xff]
    %v2808 = vld [vmem:[%s3 + $0x4e0] sm:$0xff]
    %v2809 = vld [vmem:[%s3 + $0x4e8] sm:$0xff]
    %v2810 = vld [vmem:[%s3 + $0x4f0] sm:$0xff]
    %v2811 = vld [vmem:[%s3 + $0x4f8] sm:$0xff]
    %v2812 = vld [vmem:[%s3 + $0x500] sm:$0xff]
    %v2813 = vld [vmem:[%s3 + $0x508] sm:$0xff]
    %v2814 = vld [vmem:[%s3 + $0x510] sm:$0xff]
    %v2815 = vld [vmem:[%s3 + $0x518] sm:$0xff]
    %v2816 = vld [vmem:[%s3 + $0x520] sm:$0xff]
    %v2817 = vld [vmem:[%s3 + $0x528] sm:$0xff]
    %v2818 = vld [vmem:[%s3 + $0x530] sm:$0xff]
    %v2819 = vld [vmem:[%s3 + $0x538] sm:$0xff]
    %v2820 = vld [vmem:[%s3 + $0x540] sm:$0xff]
    %v2821 = vld [vmem:[%s3 + $0x548] sm:$0xff]
    %v2822 = vld [vmem:[%s3 + $0x550] sm:$0xff]
    %v2823 = vld [vmem:[%s3 + $0x558] sm:$0xff]
    %v2824 = vld [vmem:[%s3 + $0x560] sm:$0xff]
    %v2825 = vld [vmem:[%s3 + $0x568] sm:$0xff]
    %v2826 = vld [vmem:[%s3 + $0x570] sm:$0xff]
    %v2827 = vld [vmem:[%s3 + $0x578] sm:$0xff]
    %v2828 = vld [vmem:[%s3 + $0x580] sm:$0xff]
    %v2829 = vld [vmem:[%s3 + $0x588] sm:$0xff]
    %v2830 = vld [vmem:[%s3 + $0x590] sm:$0xff]
    %v2831 = vld [vmem:[%s3 + $0x598] sm:$0xff]
    %v2832 = vld [vmem:[%s3 + $0x5a0] sm:$0xff]
    %v2833 = vld [vmem:[%s3 + $0x5a8] sm:$0xff]
    %v2834 = vld [vmem:[%s3 + $0x5b0] sm:$0xff]
    %v2835 = vld [vmem:[%s3 + $0x5b8] sm:$0xff]
    %v2836 = vld [vmem:[%s3 + $0x5c0] sm:$0xff]
    %v2837 = vld [vmem:[%s3 + $0x5c8] sm:$0xff]
    %v2838 = vld [vmem:[%s3 + $0x5d0] sm:$0xff]
    %v2839 = vld [vmem:[%s3 + $0x5d8] sm:$0xff]
    %v2840 = vld [vmem:[%s3 + $0x5e0] sm:$0xff]
    %v2841 = vld [vmem:[%s3 + $0x5e8] sm:$0xff]
    %v2842 = vld [vmem:[%s3 + $0x5f0] sm:$0xff]
    %v2843 = vld [vmem:[%s3 + $0x5f8] sm:$0xff]
    %v2844 = vld [vmem:[%s3 + $0x600] sm:$0xff]
    %v2845 = vld [vmem:[%s3 + $0x608] sm:$0xff]
    %v2846 = vld [vmem:[%s3 + $0x610] sm:$0xff]
    %v2847 = vld [vmem:[%s3 + $0x618] sm:$0xff]
    %v2848 = vld [vmem:[%s3 + $0x620] sm:$0xff]
    %v2849 = vld [vmem:[%s3 + $0x628] sm:$0xff]
    %v2850 = vld [vmem:[%s3 + $0x630] sm:$0xff]
    %v2851 = vld [vmem:[%s3 + $0x638] sm:$0xff]
    %v2852 = vld [vmem:[%s3 + $0x640] sm:$0xff]
    %v2853 = vld [vmem:[%s3 + $0x648] sm:$0xff]
    %v2854 = vld [vmem:[%s3 + $0x650] sm:$0xff]
    %v2855 = vld [vmem:[%s3 + $0x658] sm:$0xff]
    %v2856 = vld [vmem:[%s3 + $0x660] sm:$0xff]
    %v2857 = vld [vmem:[%s3 + $0x668] sm:$0xff]
    %v2858 = vld [vmem:[%s3 + $0x670] sm:$0xff]
    %v2859 = vld [vmem:[%s3 + $0x678] sm:$0xff]
    %v2860 = vld [vmem:[%s3 + $0x680] sm:$0xff]
    %v2861 = vld [vmem:[%s3 + $0x688] sm:$0xff]
    %v2862 = vld [vmem:[%s3 + $0x690] sm:$0xff]
    %v2863 = vld [vmem:[%s3 + $0x698] sm:$0xff]
    %v2864 = vld [vmem:[%s3 + $0x6a0] sm:$0xff]
    %v2865 = vld [vmem:[%s3 + $0x6a8] sm:$0xff]
    %v2866 = vld [vmem:[%s3 + $0x6b0] sm:$0xff]
    %v2867 = vld [vmem:[%s3 + $0x6b8] sm:$0xff]
    %v2868 = vld [vmem:[%s3 + $0x6c0] sm:$0xff]
    %v2869 = vld [vmem:[%s3 + $0x6c8] sm:$0xff]
    %v2870 = vld [vmem:[%s3 + $0x6d0] sm:$0xff]
    %v2871 = vld [vmem:[%s3 + $0x6d8] sm:$0xff]
    %v2872 = vld [vmem:[%s3 + $0x6e0] sm:$0xff]
    %v2873 = vld [vmem:[%s3 + $0x6e8] sm:$0xff]
    %v2874 = vld [vmem:[%s3 + $0x6f0] sm:$0xff]
    %v2875 = vld [vmem:[%s3 + $0x6f8] sm:$0xff]
    %v2876 = vld [vmem:[%s3 + $0x700] sm:$0xff]
    %v2877 = vld [vmem:[%s3 + $0x708] sm:$0xff]
    %v2878 = vld [vmem:[%s3 + $0x710] sm:$0xff]
    %v2879 = vld [vmem:[%s3 + $0x718] sm:$0xff]
    %v2880 = vld [vmem:[%s3 + $0x720] sm:$0xff]
    %v2881 = vld [vmem:[%s3 + $0x728] sm:$0xff]
    %v2882 = vld [vmem:[%s3 + $0x730] sm:$0xff]
    %v2883 = vld [vmem:[%s3 + $0x738] sm:$0xff]
    %v2884 = vld [vmem:[%s3 + $0x740] sm:$0xff]
    %v2885 = vld [vmem:[%s3 + $0x748] sm:$0xff]
    %v2886 = vld [vmem:[%s3 + $0x750] sm:$0xff]
    %v2887 = vld [vmem:[%s3 + $0x758] sm:$0xff]
    %v2888 = vld [vmem:[%s3 + $0x760] sm:$0xff]
    %v2889 = vld [vmem:[%s3 + $0x768] sm:$0xff]
    %v2890 = vld [vmem:[%s3 + $0x770] sm:$0xff]
    %v2891 = vld [vmem:[%s3 + $0x778] sm:$0xff]
    %v2892 = vld [vmem:[%s3 + $0x780] sm:$0xff]
    %v2893 = vld [vmem:[%s3 + $0x788] sm:$0xff]
    %v2894 = vld [vmem:[%s3 + $0x790] sm:$0xff]
    %v2895 = vld [vmem:[%s3 + $0x798] sm:$0xff]
    %v2896 = vld [vmem:[%s3 + $0x7a0] sm:$0xff]
    %v2897 = vld [vmem:[%s3 + $0x7a8] sm:$0xff]
    %v2898 = vld [vmem:[%s3 + $0x7b0] sm:$0xff]
    %v2899 = vld [vmem:[%s3 + $0x7b8] sm:$0xff]
    %v2900 = vld [vmem:[%s3 + $0x7c0] sm:$0xff]
    %v2901 = vld [vmem:[%s3 + $0x7c8] sm:$0xff]
    %v2902 = vld [vmem:[%s3 + $0x7d0] sm:$0xff]
    %v2903 = vld [vmem:[%s3 + $0x7d8] sm:$0xff]
    %v2904 = vld [vmem:[%s3 + $0x7e0] sm:$0xff]
    %v2905 = vld [vmem:[%s3 + $0x7e8] sm:$0xff]
    %v2906 = vld [vmem:[%s3 + $0x7f0] sm:$0xff]
    %v2907 = vld [vmem:[%s3 + $0x7f8] sm:$0xff]
    %v2908 = vld [vmem:[%s3 + $0x800] sm:$0xff]
    %v2909 = vld [vmem:[%s3 + $0x808] sm:$0xff]
    %v2910 = vld [vmem:[%s3 + $0x810] sm:$0xff]
    %v2911 = vld [vmem:[%s3 + $0x818] sm:$0xff]
    %v2912 = vld [vmem:[%s3 + $0x820] sm:$0xff]
    %v2913 = vld [vmem:[%s3 + $0x828] sm:$0xff]
    %v2914 = vld [vmem:[%s3 + $0x830] sm:$0xff]
    %v2915 = vld [vmem:[%s3 + $0x838] sm:$0xff]
    %v2916 = vld [vmem:[%s3 + $0x840] sm:$0xff]
    %v2917 = vld [vmem:[%s3 + $0x848] sm:$0xff]
    %v2918 = vld [vmem:[%s3 + $0x850] sm:$0xff]
    %v2919 = vld [vmem:[%s3 + $0x858] sm:$0xff]
    %v2920 = vld [vmem:[%s3 + $0x860] sm:$0xff]
    %v2921 = vld [vmem:[%s3 + $0x868] sm:$0xff]
    %v2922 = vld [vmem:[%s3 + $0x870] sm:$0xff]
    %v2923 = vld [vmem:[%s3 + $0x878] sm:$0xff]
    %v2924 = vld [vmem:[%s3 + $0x880] sm:$0xff]
    %v2925 = vld [vmem:[%s3 + $0x888] sm:$0xff]
    %v2926 = vld [vmem:[%s3 + $0x890] sm:$0xff]
    %v2927 = vld [vmem:[%s3 + $0x898] sm:$0xff]
    %v2928 = vld [vmem:[%s3 + $0x8a0] sm:$0xff]
    %v2929 = vld [vmem:[%s3 + $0x8a8] sm:$0xff]
    %v2930 = vld [vmem:[%s3 + $0x8b0] sm:$0xff]
    %v2931 = vld [vmem:[%s3 + $0x8b8] sm:$0xff]
    %v2932 = vld [vmem:[%s3 + $0x8c0] sm:$0xff]
    %v2933 = vld [vmem:[%s3 + $0x8c8] sm:$0xff]
    %v2934 = vld [vmem:[%s3 + $0x8d0] sm:$0xff]
    %v2935 = vld [vmem:[%s3 + $0x8d8] sm:$0xff]
    %v2936 = vld [vmem:[%s3 + $0x8e0] sm:$0xff]
    %v2937 = vld [vmem:[%s3 + $0x8e8] sm:$0xff]
    %v2938 = vld [vmem:[%s3 + $0x8f0] sm:$0xff]
    %v2939 = vld [vmem:[%s3 + $0x8f8] sm:$0xff]
    %v2940 = vld [vmem:[%s3 + $0x900] sm:$0xff]
    %v2941 = vld [vmem:[%s3 + $0x908] sm:$0xff]
    %v2942 = vld [vmem:[%s3 + $0x910] sm:$0xff]
    %v2943 = vld [vmem:[%s3 + $0x918] sm:$0xff]
    %v2944 = vld [vmem:[%s3 + $0x920] sm:$0xff]
    %v2945 = vld [vmem:[%s3 + $0x928] sm:$0xff]
    %v2946 = vld [vmem:[%s3 + $0x930] sm:$0xff]
    %v2947 = vld [vmem:[%s3 + $0x938] sm:$0xff]
    %v2948 = vld [vmem:[%s3 + $0x940] sm:$0xff]
    %v2949 = vld [vmem:[%s3 + $0x948] sm:$0xff]
    %v2950 = vld [vmem:[%s3 + $0x950] sm:$0xff]
    %v2951 = vld [vmem:[%s3 + $0x958] sm:$0xff]
    %v2952 = vld [vmem:[%s3 + $0x960] sm:$0xff]
    %v2953 = vld [vmem:[%s3 + $0x968] sm:$0xff]
    %v2954 = vld [vmem:[%s3 + $0x970] sm:$0xff]
    %v2955 = vld [vmem:[%s3 + $0x978] sm:$0xff]
    %v2956 = vld [vmem:[%s3 + $0x980] sm:$0xff]
    %v2957 = vld [vmem:[%s3 + $0x988] sm:$0xff]
    %v2958 = vld [vmem:[%s3 + $0x990] sm:$0xff]
    %v2959 = vld [vmem:[%s3 + $0x998] sm:$0xff]
    %v2960 = vld [vmem:[%s3 + $0x9a0] sm:$0xff]
    %v2961 = vld [vmem:[%s3 + $0x9a8] sm:$0xff]
    %v2962 = vld [vmem:[%s3 + $0x9b0] sm:$0xff]
    %v2963 = vld [vmem:[%s3 + $0x9b8] sm:$0xff]
    %v2964 = vld [vmem:[%s3 + $0x9c0] sm:$0xff]
    %v2965 = vld [vmem:[%s3 + $0x9c8] sm:$0xff]
    %v2966 = vld [vmem:[%s3 + $0x9d0] sm:$0xff]
    %v2967 = vld [vmem:[%s3 + $0x9d8] sm:$0xff]
    %v2968 = vld [vmem:[%s3 + $0x9e0] sm:$0xff]
    %v2969 = vld [vmem:[%s3 + $0x9e8] sm:$0xff]
    %v2970 = vld [vmem:[%s3 + $0x9f0] sm:$0xff]
    %v2971 = vld [vmem:[%s3 + $0x9f8] sm:$0xff]
    %v2972 = vld [vmem:[%s3 + $0xa00] sm:$0xff]
    %v2973 = vld [vmem:[%s3 + $0xa08] sm:$0xff]
    %v2974 = vld [vmem:[%s3 + $0xa10] sm:$0xff]
    %v2975 = vld [vmem:[%s3 + $0xa18] sm:$0xff]
    %v2976 = vld [vmem:[%s3 + $0xa20] sm:$0xff]
    %v2977 = vld [vmem:[%s3 + $0xa28] sm:$0xff]
    %v2978 = vld [vmem:[%s3 + $0xa30] sm:$0xff]
    %v2979 = vld [vmem:[%s3 + $0xa38] sm:$0xff]
    %v2980 = vld [vmem:[%s3 + $0xa40] sm:$0xff]
    %v2981 = vld [vmem:[%s3 + $0xa48] sm:$0xff]
    %v2982 = vld [vmem:[%s3 + $0xa50] sm:$0xff]
    %v2983 = vld [vmem:[%s3 + $0xa58] sm:$0xff]
    %v2984 = vld [vmem:[%s3 + $0xa60] sm:$0xff]
    %v2985 = vld [vmem:[%s3 + $0xa68] sm:$0xff]
    %v2986 = vld [vmem:[%s3 + $0xa70] sm:$0xff]
    %v2987 = vld [vmem:[%s3 + $0xa78] sm:$0xff]
    %v2988 = vld [vmem:[%s3 + $0xa80] sm:$0xff]
    %v2989 = vld [vmem:[%s3 + $0xa88] sm:$0xff]
    %v2990 = vld [vmem:[%s3 + $0xa90] sm:$0xff]
    %v2991 = vld [vmem:[%s3 + $0xa98] sm:$0xff]
    %v2992 = vld [vmem:[%s3 + $0xaa0] sm:$0xff]
    %v2993 = vld [vmem:[%s3 + $0xaa8] sm:$0xff]
    %v2994 = vld [vmem:[%s3 + $0xab0] sm:$0xff]
    %v2995 = vld [vmem:[%s3 + $0xab8] sm:$0xff]
    %v2996 = vld [vmem:[%s3 + $0xac0] sm:$0xff]
    %v2997 = vld [vmem:[%s3 + $0xac8] sm:$0xff]
    %v2998 = vld [vmem:[%s3 + $0xad0] sm:$0xff]
    %v2999 = vld [vmem:[%s3 + $0xad8] sm:$0xff]
    %v3000 = vld [vmem:[%s3 + $0xae0] sm:$0xff]
    %v3001 = vld [vmem:[%s3 + $0xae8] sm:$0xff]
    %v3002 = vld [vmem:[%s3 + $0xaf0] sm:$0xff]
    %v3003 = vld [vmem:[%s3 + $0xaf8] sm:$0xff]
    %v3004 = vld [vmem:[%s3 + $0xb00] sm:$0xff]
    %v3005 = vld [vmem:[%s3 + $0xb08] sm:$0xff]
    %v3006 = vld [vmem:[%s3 + $0xb10] sm:$0xff]
    %v3007 = vld [vmem:[%s3 + $0xb18] sm:$0xff]
    %v3008 = vld [vmem:[%s3 + $0xb20] sm:$0xff]
    %v3009 = vld [vmem:[%s3 + $0xb28] sm:$0xff]
    %v3010 = vld [vmem:[%s3 + $0xb30] sm:$0xff]
    %v3011 = vld [vmem:[%s3 + $0xb38] sm:$0xff]
    %v3012 = vld [vmem:[%s3 + $0xb40] sm:$0xff]
    %v3013 = vld [vmem:[%s3 + $0xb48] sm:$0xff]
    %v3014 = vld [vmem:[%s3 + $0xb50] sm:$0xff]
    %v3015 = vld [vmem:[%s3 + $0xb58] sm:$0xff]
    %v3016 = vld [vmem:[%s3 + $0xb60] sm:$0xff]
    %v3017 = vld [vmem:[%s3 + $0xb68] sm:$0xff]
    %v3018 = vld [vmem:[%s3 + $0xb70] sm:$0xff]
    %v3019 = vld [vmem:[%s3 + $0xb78] sm:$0xff]
    %v3020 = vld [vmem:[%s3 + $0xb80] sm:$0xff]
    %v3021 = vld [vmem:[%s3 + $0xb88] sm:$0xff]
    %v3022 = vld [vmem:[%s3 + $0xb90] sm:$0xff]
    %v3023 = vld [vmem:[%s3 + $0xb98] sm:$0xff]
    %v3024 = vld [vmem:[%s3 + $0xba0] sm:$0xff]
    %v3025 = vld [vmem:[%s3 + $0xba8] sm:$0xff]
    %v3026 = vld [vmem:[%s3 + $0xbb0] sm:$0xff]
    %v3027 = vld [vmem:[%s3 + $0xbb8] sm:$0xff]
    %v3028 = vld [vmem:[%s3 + $0xbc0] sm:$0xff]
    %v3029 = vld [vmem:[%s3 + $0xbc8] sm:$0xff]
    %v3030 = vld [vmem:[%s3 + $0xbd0] sm:$0xff]
    %v3031 = vld [vmem:[%s3 + $0xbd8] sm:$0xff]
    %v3032 = vld [vmem:[%s3 + $0xbe0] sm:$0xff]
    %v3033 = vld [vmem:[%s3 + $0xbe8] sm:$0xff]
    %v3034 = vld [vmem:[%s3 + $0xbf0] sm:$0xff]
    %v3035 = vld [vmem:[%s3 + $0xbf8] sm:$0xff]
    %v3420 = vunpack.c.l.b16 %v2652
    %v3421 = vunpack.c.h.b16 %v2652
    %v3422 = vunpack.c.l.b16 %v2653
    %v3423 = vunpack.c.h.b16 %v2653
    %v3424 = vunpack.c.l.b16 %v2654
    %v3425 = vunpack.c.h.b16 %v2654
    %v3426 = vunpack.c.l.b16 %v2655
    %v3427 = vunpack.c.h.b16 %v2655
    %v3428 = vunpack.c.l.b16 %v2656
    %v3429 = vunpack.c.h.b16 %v2656
    %v3430 = vunpack.c.l.b16 %v2657
    %v3431 = vunpack.c.h.b16 %v2657
    %v3432 = vunpack.c.l.b16 %v2658
    %v3433 = vunpack.c.h.b16 %v2658
    %v3434 = vunpack.c.l.b16 %v2659
    %v3435 = vunpack.c.h.b16 %v2659
    %v3436 = vunpack.c.l.b16 %v2660
    %v3437 = vunpack.c.h.b16 %v2660
    %v3438 = vunpack.c.l.b16 %v2661
    %v3439 = vunpack.c.h.b16 %v2661
    %v3440 = vunpack.c.l.b16 %v2662
    %v3441 = vunpack.c.h.b16 %v2662
    %v3442 = vunpack.c.l.b16 %v2663
    %v3443 = vunpack.c.h.b16 %v2663
    %v3444 = vunpack.c.l.b16 %v2664
    %v3445 = vunpack.c.h.b16 %v2664
    %v3446 = vunpack.c.l.b16 %v2665
    %v3447 = vunpack.c.h.b16 %v2665
    %v3448 = vunpack.c.l.b16 %v2666
    %v3449 = vunpack.c.h.b16 %v2666
    %v3450 = vunpack.c.l.b16 %v2667
    %v3451 = vunpack.c.h.b16 %v2667
    %v3452 = vunpack.c.l.b16 %v2668
    %v3453 = vunpack.c.h.b16 %v2668
    %v3454 = vunpack.c.l.b16 %v2669
    %v3455 = vunpack.c.h.b16 %v2669
    %v3456 = vunpack.c.l.b16 %v2670
    %v3457 = vunpack.c.h.b16 %v2670
    %v3458 = vunpack.c.l.b16 %v2671
    %v3459 = vunpack.c.h.b16 %v2671
    %v3460 = vunpack.c.l.b16 %v2672
    %v3461 = vunpack.c.h.b16 %v2672
    %v3462 = vunpack.c.l.b16 %v2673
    %v3463 = vunpack.c.h.b16 %v2673
    %v3464 = vunpack.c.l.b16 %v2674
    %v3465 = vunpack.c.h.b16 %v2674
    %v3466 = vunpack.c.l.b16 %v2675
    %v3467 = vunpack.c.h.b16 %v2675
    %v3468 = vunpack.c.l.b16 %v2676
    %v3469 = vunpack.c.h.b16 %v2676
    %v3470 = vunpack.c.l.b16 %v2677
    %v3471 = vunpack.c.h.b16 %v2677
    %v3472 = vunpack.c.l.b16 %v2678
    %v3473 = vunpack.c.h.b16 %v2678
    %v3474 = vunpack.c.l.b16 %v2679
    %v3475 = vunpack.c.h.b16 %v2679
    %v3476 = vunpack.c.l.b16 %v2680
    %v3477 = vunpack.c.h.b16 %v2680
    %v3478 = vunpack.c.l.b16 %v2681
    %v3479 = vunpack.c.h.b16 %v2681
    %v3480 = vunpack.c.l.b16 %v2682
    %v3481 = vunpack.c.h.b16 %v2682
    %v3482 = vunpack.c.l.b16 %v2683
    %v3483 = vunpack.c.h.b16 %v2683
    %v3484 = vunpack.c.l.b16 %v2684
    %v3485 = vunpack.c.h.b16 %v2684
    %v3486 = vunpack.c.l.b16 %v2685
    %v3487 = vunpack.c.h.b16 %v2685
    %v3488 = vunpack.c.l.b16 %v2686
    %v3489 = vunpack.c.h.b16 %v2686
    %v3490 = vunpack.c.l.b16 %v2687
    %v3491 = vunpack.c.h.b16 %v2687
    %v3492 = vunpack.c.l.b16 %v2688
    %v3493 = vunpack.c.h.b16 %v2688
    %v3494 = vunpack.c.l.b16 %v2689
    %v3495 = vunpack.c.h.b16 %v2689
    %v3496 = vunpack.c.l.b16 %v2690
    %v3497 = vunpack.c.h.b16 %v2690
    %v3498 = vunpack.c.l.b16 %v2691
    %v3499 = vunpack.c.h.b16 %v2691
    %v3500 = vunpack.c.l.b16 %v2692
    %v3501 = vunpack.c.h.b16 %v2692
    %v3502 = vunpack.c.l.b16 %v2693
    %v3503 = vunpack.c.h.b16 %v2693
    %v3504 = vunpack.c.l.b16 %v2694
    %v3505 = vunpack.c.h.b16 %v2694
    %v3506 = vunpack.c.l.b16 %v2695
    %v3507 = vunpack.c.h.b16 %v2695
    %v3508 = vunpack.c.l.b16 %v2696
    %v3509 = vunpack.c.h.b16 %v2696
    %v3510 = vunpack.c.l.b16 %v2697
    %v3511 = vunpack.c.h.b16 %v2697
    %v3512 = vunpack.c.l.b16 %v2698
    %v3513 = vunpack.c.h.b16 %v2698
    %v3514 = vunpack.c.l.b16 %v2699
    %v3515 = vunpack.c.h.b16 %v2699
    %v3516 = vunpack.c.l.b16 %v2700
    %v3517 = vunpack.c.h.b16 %v2700
    %v3518 = vunpack.c.l.b16 %v2701
    %v3519 = vunpack.c.h.b16 %v2701
    %v3520 = vunpack.c.l.b16 %v2702
    %v3521 = vunpack.c.h.b16 %v2702
    %v3522 = vunpack.c.l.b16 %v2703
    %v3523 = vunpack.c.h.b16 %v2703
    %v3524 = vunpack.c.l.b16 %v2704
    %v3525 = vunpack.c.h.b16 %v2704
    %v3526 = vunpack.c.l.b16 %v2705
    %v3527 = vunpack.c.h.b16 %v2705
    %v3528 = vunpack.c.l.b16 %v2706
    %v3529 = vunpack.c.h.b16 %v2706
    %v3530 = vunpack.c.l.b16 %v2707
    %v3531 = vunpack.c.h.b16 %v2707
    %v3532 = vunpack.c.l.b16 %v2708
    %v3533 = vunpack.c.h.b16 %v2708
    %v3534 = vunpack.c.l.b16 %v2709
    %v3535 = vunpack.c.h.b16 %v2709
    %v3536 = vunpack.c.l.b16 %v2710
    %v3537 = vunpack.c.h.b16 %v2710
    %v3538 = vunpack.c.l.b16 %v2711
    %v3539 = vunpack.c.h.b16 %v2711
    %v3540 = vunpack.c.l.b16 %v2712
    %v3541 = vunpack.c.h.b16 %v2712
    %v3542 = vunpack.c.l.b16 %v2713
    %v3543 = vunpack.c.h.b16 %v2713
    %v3544 = vunpack.c.l.b16 %v2714
    %v3545 = vunpack.c.h.b16 %v2714
    %v3546 = vunpack.c.l.b16 %v2715
    %v3547 = vunpack.c.h.b16 %v2715
    %v3548 = vunpack.c.l.b16 %v2716
    %v3549 = vunpack.c.h.b16 %v2716
    %v3550 = vunpack.c.l.b16 %v2717
    %v3551 = vunpack.c.h.b16 %v2717
    %v3552 = vunpack.c.l.b16 %v2718
    %v3553 = vunpack.c.h.b16 %v2718
    %v3554 = vunpack.c.l.b16 %v2719
    %v3555 = vunpack.c.h.b16 %v2719
    %v3556 = vunpack.c.l.b16 %v2720
    %v3557 = vunpack.c.h.b16 %v2720
    %v3558 = vunpack.c.l.b16 %v2721
    %v3559 = vunpack.c.h.b16 %v2721
    %v3560 = vunpack.c.l.b16 %v2722
    %v3561 = vunpack.c.h.b16 %v2722
    %v3562 = vunpack.c.l.b16 %v2723
    %v3563 = vunpack.c.h.b16 %v2723
    %v3564 = vunpack.c.l.b16 %v2724
    %v3565 = vunpack.c.h.b16 %v2724
    %v3566 = vunpack.c.l.b16 %v2725
    %v3567 = vunpack.c.h.b16 %v2725
    %v3568 = vunpack.c.l.b16 %v2726
    %v3569 = vunpack.c.h.b16 %v2726
    %v3570 = vunpack.c.l.b16 %v2727
    %v3571 = vunpack.c.h.b16 %v2727
    %v3572 = vunpack.c.l.b16 %v2728
    %v3573 = vunpack.c.h.b16 %v2728
    %v3574 = vunpack.c.l.b16 %v2729
    %v3575 = vunpack.c.h.b16 %v2729
    %v3576 = vunpack.c.l.b16 %v2730
    %v3577 = vunpack.c.h.b16 %v2730
    %v3578 = vunpack.c.l.b16 %v2731
    %v3579 = vunpack.c.h.b16 %v2731
    %v3580 = vunpack.c.l.b16 %v2732
    %v3581 = vunpack.c.h.b16 %v2732
    %v3582 = vunpack.c.l.b16 %v2733
    %v3583 = vunpack.c.h.b16 %v2733
    %v3584 = vunpack.c.l.b16 %v2734
    %v3585 = vunpack.c.h.b16 %v2734
    %v3586 = vunpack.c.l.b16 %v2735
    %v3587 = vunpack.c.h.b16 %v2735
    %v3588 = vunpack.c.l.b16 %v2736
    %v3589 = vunpack.c.h.b16 %v2736
    %v3590 = vunpack.c.l.b16 %v2737
    %v3591 = vunpack.c.h.b16 %v2737
    %v3592 = vunpack.c.l.b16 %v2738
    %v3593 = vunpack.c.h.b16 %v2738
    %v3594 = vunpack.c.l.b16 %v2739
    %v3595 = vunpack.c.h.b16 %v2739
    %v3596 = vunpack.c.l.b16 %v2740
    %v3597 = vunpack.c.h.b16 %v2740
    %v3598 = vunpack.c.l.b16 %v2741
    %v3599 = vunpack.c.h.b16 %v2741
    %v3600 = vunpack.c.l.b16 %v2742
    %v3601 = vunpack.c.h.b16 %v2742
    %v3602 = vunpack.c.l.b16 %v2743
    %v3603 = vunpack.c.h.b16 %v2743
    %v3604 = vunpack.c.l.b16 %v2744
    %v3605 = vunpack.c.h.b16 %v2744
    %v3606 = vunpack.c.l.b16 %v2745
    %v3607 = vunpack.c.h.b16 %v2745
    %v3608 = vunpack.c.l.b16 %v2746
    %v3609 = vunpack.c.h.b16 %v2746
    %v3610 = vunpack.c.l.b16 %v2747
    %v3611 = vunpack.c.h.b16 %v2747
    %v3612 = vunpack.c.l.b16 %v2748
    %v3613 = vunpack.c.h.b16 %v2748
    %v3614 = vunpack.c.l.b16 %v2749
    %v3615 = vunpack.c.h.b16 %v2749
    %v3616 = vunpack.c.l.b16 %v2750
    %v3617 = vunpack.c.h.b16 %v2750
    %v3618 = vunpack.c.l.b16 %v2751
    %v3619 = vunpack.c.h.b16 %v2751
    %v3620 = vunpack.c.l.b16 %v2752
    %v3621 = vunpack.c.h.b16 %v2752
    %v3622 = vunpack.c.l.b16 %v2753
    %v3623 = vunpack.c.h.b16 %v2753
    %v3624 = vunpack.c.l.b16 %v2754
    %v3625 = vunpack.c.h.b16 %v2754
    %v3626 = vunpack.c.l.b16 %v2755
    %v3627 = vunpack.c.h.b16 %v2755
    %v3628 = vunpack.c.l.b16 %v2756
    %v3629 = vunpack.c.h.b16 %v2756
    %v3630 = vunpack.c.l.b16 %v2757
    %v3631 = vunpack.c.h.b16 %v2757
    %v3632 = vunpack.c.l.b16 %v2758
    %v3633 = vunpack.c.h.b16 %v2758
    %v3634 = vunpack.c.l.b16 %v2759
    %v3635 = vunpack.c.h.b16 %v2759
    %v3636 = vunpack.c.l.b16 %v2760
    %v3637 = vunpack.c.h.b16 %v2760
    %v3638 = vunpack.c.l.b16 %v2761
    %v3639 = vunpack.c.h.b16 %v2761
    %v3640 = vunpack.c.l.b16 %v2762
    %v3641 = vunpack.c.h.b16 %v2762
    %v3642 = vunpack.c.l.b16 %v2763
    %v3643 = vunpack.c.h.b16 %v2763
    %v3644 = vunpack.c.l.b16 %v2764
    %v3645 = vunpack.c.h.b16 %v2764
    %v3646 = vunpack.c.l.b16 %v2765
    %v3647 = vunpack.c.h.b16 %v2765
    %v3648 = vunpack.c.l.b16 %v2766
    %v3649 = vunpack.c.h.b16 %v2766
    %v3650 = vunpack.c.l.b16 %v2767
    %v3651 = vunpack.c.h.b16 %v2767
    %v3652 = vunpack.c.l.b16 %v2768
    %v3653 = vunpack.c.h.b16 %v2768
    %v3654 = vunpack.c.l.b16 %v2769
    %v3655 = vunpack.c.h.b16 %v2769
    %v3656 = vunpack.c.l.b16 %v2770
    %v3657 = vunpack.c.h.b16 %v2770
    %v3658 = vunpack.c.l.b16 %v2771
    %v3659 = vunpack.c.h.b16 %v2771
    %v3660 = vunpack.c.l.b16 %v2772
    %v3661 = vunpack.c.h.b16 %v2772
    %v3662 = vunpack.c.l.b16 %v2773
    %v3663 = vunpack.c.h.b16 %v2773
    %v3664 = vunpack.c.l.b16 %v2774
    %v3665 = vunpack.c.h.b16 %v2774
    %v3666 = vunpack.c.l.b16 %v2775
    %v3667 = vunpack.c.h.b16 %v2775
    %v3668 = vunpack.c.l.b16 %v2776
    %v3669 = vunpack.c.h.b16 %v2776
    %v3670 = vunpack.c.l.b16 %v2777
    %v3671 = vunpack.c.h.b16 %v2777
    %v3672 = vunpack.c.l.b16 %v2778
    %v3673 = vunpack.c.h.b16 %v2778
    %v3674 = vunpack.c.l.b16 %v2779
    %v3675 = vunpack.c.h.b16 %v2779
    %v3676 = vunpack.c.l.b16 %v2780
    %v3677 = vunpack.c.h.b16 %v2780
    %v3678 = vunpack.c.l.b16 %v2781
    %v3679 = vunpack.c.h.b16 %v2781
    %v3680 = vunpack.c.l.b16 %v2782
    %v3681 = vunpack.c.h.b16 %v2782
    %v3682 = vunpack.c.l.b16 %v2783
    %v3683 = vunpack.c.h.b16 %v2783
    %v3684 = vunpack.c.l.b16 %v2784
    %v3685 = vunpack.c.h.b16 %v2784
    %v3686 = vunpack.c.l.b16 %v2785
    %v3687 = vunpack.c.h.b16 %v2785
    %v3688 = vunpack.c.l.b16 %v2786
    %v3689 = vunpack.c.h.b16 %v2786
    %v3690 = vunpack.c.l.b16 %v2787
    %v3691 = vunpack.c.h.b16 %v2787
    %v3692 = vunpack.c.l.b16 %v2788
    %v3693 = vunpack.c.h.b16 %v2788
    %v3694 = vunpack.c.l.b16 %v2789
    %v3695 = vunpack.c.h.b16 %v2789
    %v3696 = vunpack.c.l.b16 %v2790
    %v3697 = vunpack.c.h.b16 %v2790
    %v3698 = vunpack.c.l.b16 %v2791
    %v3699 = vunpack.c.h.b16 %v2791
    %v3700 = vunpack.c.l.b16 %v2792
    %v3701 = vunpack.c.h.b16 %v2792
    %v3702 = vunpack.c.l.b16 %v2793
    %v3703 = vunpack.c.h.b16 %v2793
    %v3704 = vunpack.c.l.b16 %v2794
    %v3705 = vunpack.c.h.b16 %v2794
    %v3706 = vunpack.c.l.b16 %v2795
    %v3707 = vunpack.c.h.b16 %v2795
    %v3708 = vunpack.c.l.b16 %v2796
    %v3709 = vunpack.c.h.b16 %v2796
    %v3710 = vunpack.c.l.b16 %v2797
    %v3711 = vunpack.c.h.b16 %v2797
    %v3712 = vunpack.c.l.b16 %v2798
    %v3713 = vunpack.c.h.b16 %v2798
    %v3714 = vunpack.c.l.b16 %v2799
    %v3715 = vunpack.c.h.b16 %v2799
    %v3716 = vunpack.c.l.b16 %v2800
    %v3717 = vunpack.c.h.b16 %v2800
    %v3718 = vunpack.c.l.b16 %v2801
    %v3719 = vunpack.c.h.b16 %v2801
    %v3720 = vunpack.c.l.b16 %v2802
    %v3721 = vunpack.c.h.b16 %v2802
    %v3722 = vunpack.c.l.b16 %v2803
    %v3723 = vunpack.c.h.b16 %v2803
    %v3724 = vunpack.c.l.b16 %v2804
    %v3725 = vunpack.c.h.b16 %v2804
    %v3726 = vunpack.c.l.b16 %v2805
    %v3727 = vunpack.c.h.b16 %v2805
    %v3728 = vunpack.c.l.b16 %v2806
    %v3729 = vunpack.c.h.b16 %v2806
    %v3730 = vunpack.c.l.b16 %v2807
    %v3731 = vunpack.c.h.b16 %v2807
    %v3732 = vunpack.c.l.b16 %v2808
    %v3733 = vunpack.c.h.b16 %v2808
    %v3734 = vunpack.c.l.b16 %v2809
    %v3735 = vunpack.c.h.b16 %v2809
    %v3736 = vunpack.c.l.b16 %v2810
    %v3737 = vunpack.c.h.b16 %v2810
    %v3738 = vunpack.c.l.b16 %v2811
    %v3739 = vunpack.c.h.b16 %v2811
    %v3740 = vunpack.c.l.b16 %v2812
    %v3741 = vunpack.c.h.b16 %v2812
    %v3742 = vunpack.c.l.b16 %v2813
    %v3743 = vunpack.c.h.b16 %v2813
    %v3744 = vunpack.c.l.b16 %v2814
    %v3745 = vunpack.c.h.b16 %v2814
    %v3746 = vunpack.c.l.b16 %v2815
    %v3747 = vunpack.c.h.b16 %v2815
    %v3748 = vunpack.c.l.b16 %v2816
    %v3749 = vunpack.c.h.b16 %v2816
    %v3750 = vunpack.c.l.b16 %v2817
    %v3751 = vunpack.c.h.b16 %v2817
    %v3752 = vunpack.c.l.b16 %v2818
    %v3753 = vunpack.c.h.b16 %v2818
    %v3754 = vunpack.c.l.b16 %v2819
    %v3755 = vunpack.c.h.b16 %v2819
    %v3756 = vunpack.c.l.b16 %v2820
    %v3757 = vunpack.c.h.b16 %v2820
    %v3758 = vunpack.c.l.b16 %v2821
    %v3759 = vunpack.c.h.b16 %v2821
    %v3760 = vunpack.c.l.b16 %v2822
    %v3761 = vunpack.c.h.b16 %v2822
    %v3762 = vunpack.c.l.b16 %v2823
    %v3763 = vunpack.c.h.b16 %v2823
    %v3764 = vunpack.c.l.b16 %v2824
    %v3765 = vunpack.c.h.b16 %v2824
    %v3766 = vunpack.c.l.b16 %v2825
    %v3767 = vunpack.c.h.b16 %v2825
    %v3768 = vunpack.c.l.b16 %v2826
    %v3769 = vunpack.c.h.b16 %v2826
    %v3770 = vunpack.c.l.b16 %v2827
    %v3771 = vunpack.c.h.b16 %v2827
    %v3772 = vunpack.c.l.b16 %v2828
    %v3773 = vunpack.c.h.b16 %v2828
    %v3774 = vunpack.c.l.b16 %v2829
    %v3775 = vunpack.c.h.b16 %v2829
    %v3776 = vunpack.c.l.b16 %v2830
    %v3777 = vunpack.c.h.b16 %v2830
    %v3778 = vunpack.c.l.b16 %v2831
    %v3779 = vunpack.c.h.b16 %v2831
    %v3780 = vunpack.c.l.b16 %v2832
    %v3781 = vunpack.c.h.b16 %v2832
    %v3782 = vunpack.c.l.b16 %v2833
    %v3783 = vunpack.c.h.b16 %v2833
    %v3784 = vunpack.c.l.b16 %v2834
    %v3785 = vunpack.c.h.b16 %v2834
    %v3786 = vunpack.c.l.b16 %v2835
    %v3787 = vunpack.c.h.b16 %v2835
    %v3788 = vunpack.c.l.b16 %v2836
    %v3789 = vunpack.c.h.b16 %v2836
    %v3790 = vunpack.c.l.b16 %v2837
    %v3791 = vunpack.c.h.b16 %v2837
    %v3792 = vunpack.c.l.b16 %v2838
    %v3793 = vunpack.c.h.b16 %v2838
    %v3794 = vunpack.c.l.b16 %v2839
    %v3795 = vunpack.c.h.b16 %v2839
    %v3796 = vunpack.c.l.b16 %v2840
    %v3797 = vunpack.c.h.b16 %v2840
    %v3798 = vunpack.c.l.b16 %v2841
    %v3799 = vunpack.c.h.b16 %v2841
    %v3800 = vunpack.c.l.b16 %v2842
    %v3801 = vunpack.c.h.b16 %v2842
    %v3802 = vunpack.c.l.b16 %v2843
    %v3803 = vunpack.c.h.b16 %v2843
    %v3804 = vunpack.c.l.b16 %v2844
    %v3805 = vunpack.c.h.b16 %v2844
    %v3806 = vunpack.c.l.b16 %v2845
    %v3807 = vunpack.c.h.b16 %v2845
    %v3808 = vunpack.c.l.b16 %v2846
    %v3809 = vunpack.c.h.b16 %v2846
    %v3810 = vunpack.c.l.b16 %v2847
    %v3811 = vunpack.c.h.b16 %v2847
    %v3812 = vunpack.c.l.b16 %v2848
    %v3813 = vunpack.c.h.b16 %v2848
    %v3814 = vunpack.c.l.b16 %v2849
    %v3815 = vunpack.c.h.b16 %v2849
    %v3816 = vunpack.c.l.b16 %v2850
    %v3817 = vunpack.c.h.b16 %v2850
    %v3818 = vunpack.c.l.b16 %v2851
    %v3819 = vunpack.c.h.b16 %v2851
    %v3820 = vunpack.c.l.b16 %v2852
    %v3821 = vunpack.c.h.b16 %v2852
    %v3822 = vunpack.c.l.b16 %v2853
    %v3823 = vunpack.c.h.b16 %v2853
    %v3824 = vunpack.c.l.b16 %v2854
    %v3825 = vunpack.c.h.b16 %v2854
    %v3826 = vunpack.c.l.b16 %v2855
    %v3827 = vunpack.c.h.b16 %v2855
    %v3828 = vunpack.c.l.b16 %v2856
    %v3829 = vunpack.c.h.b16 %v2856
    %v3830 = vunpack.c.l.b16 %v2857
    %v3831 = vunpack.c.h.b16 %v2857
    %v3832 = vunpack.c.l.b16 %v2858
    %v3833 = vunpack.c.h.b16 %v2858
    %v3834 = vunpack.c.l.b16 %v2859
    %v3835 = vunpack.c.h.b16 %v2859
    %v3836 = vunpack.c.l.b16 %v2860
    %v3837 = vunpack.c.h.b16 %v2860
    %v3838 = vunpack.c.l.b16 %v2861
    %v3839 = vunpack.c.h.b16 %v2861
    %v3840 = vunpack.c.l.b16 %v2862
    %v3841 = vunpack.c.h.b16 %v2862
    %v3842 = vunpack.c.l.b16 %v2863
    %v3843 = vunpack.c.h.b16 %v2863
    %v3844 = vunpack.c.l.b16 %v2864
    %v3845 = vunpack.c.h.b16 %v2864
    %v3846 = vunpack.c.l.b16 %v2865
    %v3847 = vunpack.c.h.b16 %v2865
    %v3848 = vunpack.c.l.b16 %v2866
    %v3849 = vunpack.c.h.b16 %v2866
    %v3850 = vunpack.c.l.b16 %v2867
    %v3851 = vunpack.c.h.b16 %v2867
    %v3852 = vunpack.c.l.b16 %v2868
    %v3853 = vunpack.c.h.b16 %v2868
    %v3854 = vunpack.c.l.b16 %v2869
    %v3855 = vunpack.c.h.b16 %v2869
    %v3856 = vunpack.c.l.b16 %v2870
    %v3857 = vunpack.c.h.b16 %v2870
    %v3858 = vunpack.c.l.b16 %v2871
    %v3859 = vunpack.c.h.b16 %v2871
    %v3860 = vunpack.c.l.b16 %v2872
    %v3861 = vunpack.c.h.b16 %v2872
    %v3862 = vunpack.c.l.b16 %v2873
    %v3863 = vunpack.c.h.b16 %v2873
    %v3864 = vunpack.c.l.b16 %v2874
    %v3865 = vunpack.c.h.b16 %v2874
    %v3866 = vunpack.c.l.b16 %v2875
    %v3867 = vunpack.c.h.b16 %v2875
    %v3868 = vunpack.c.l.b16 %v2876
    %v3869 = vunpack.c.h.b16 %v2876
    %v3870 = vunpack.c.l.b16 %v2877
    %v3871 = vunpack.c.h.b16 %v2877
    %v3872 = vunpack.c.l.b16 %v2878
    %v3873 = vunpack.c.h.b16 %v2878
    %v3874 = vunpack.c.l.b16 %v2879
    %v3875 = vunpack.c.h.b16 %v2879
    %v3876 = vunpack.c.l.b16 %v2880
    %v3877 = vunpack.c.h.b16 %v2880
    %v3878 = vunpack.c.l.b16 %v2881
    %v3879 = vunpack.c.h.b16 %v2881
    %v3880 = vunpack.c.l.b16 %v2882
    %v3881 = vunpack.c.h.b16 %v2882
    %v3882 = vunpack.c.l.b16 %v2883
    %v3883 = vunpack.c.h.b16 %v2883
    %v3884 = vunpack.c.l.b16 %v2884
    %v3885 = vunpack.c.h.b16 %v2884
    %v3886 = vunpack.c.l.b16 %v2885
    %v3887 = vunpack.c.h.b16 %v2885
    %v3888 = vunpack.c.l.b16 %v2886
    %v3889 = vunpack.c.h.b16 %v2886
    %v3890 = vunpack.c.l.b16 %v2887
    %v3891 = vunpack.c.h.b16 %v2887
    %v3892 = vunpack.c.l.b16 %v2888
    %v3893 = vunpack.c.h.b16 %v2888
    %v3894 = vunpack.c.l.b16 %v2889
    %v3895 = vunpack.c.h.b16 %v2889
    %v3896 = vunpack.c.l.b16 %v2890
    %v3897 = vunpack.c.h.b16 %v2890
    %v3898 = vunpack.c.l.b16 %v2891
    %v3899 = vunpack.c.h.b16 %v2891
    %v3900 = vunpack.c.l.b16 %v2892
    %v3901 = vunpack.c.h.b16 %v2892
    %v3902 = vunpack.c.l.b16 %v2893
    %v3903 = vunpack.c.h.b16 %v2893
    %v3904 = vunpack.c.l.b16 %v2894
    %v3905 = vunpack.c.h.b16 %v2894
    %v3906 = vunpack.c.l.b16 %v2895
    %v3907 = vunpack.c.h.b16 %v2895
    %v3908 = vunpack.c.l.b16 %v2896
    %v3909 = vunpack.c.h.b16 %v2896
    %v3910 = vunpack.c.l.b16 %v2897
    %v3911 = vunpack.c.h.b16 %v2897
    %v3912 = vunpack.c.l.b16 %v2898
    %v3913 = vunpack.c.h.b16 %v2898
    %v3914 = vunpack.c.l.b16 %v2899
    %v3915 = vunpack.c.h.b16 %v2899
    %v3916 = vunpack.c.l.b16 %v2900
    %v3917 = vunpack.c.h.b16 %v2900
    %v3918 = vunpack.c.l.b16 %v2901
    %v3919 = vunpack.c.h.b16 %v2901
    %v3920 = vunpack.c.l.b16 %v2902
    %v3921 = vunpack.c.h.b16 %v2902
    %v3922 = vunpack.c.l.b16 %v2903
    %v3923 = vunpack.c.h.b16 %v2903
    %v3924 = vunpack.c.l.b16 %v2904
    %v3925 = vunpack.c.h.b16 %v2904
    %v3926 = vunpack.c.l.b16 %v2905
    %v3927 = vunpack.c.h.b16 %v2905
    %v3928 = vunpack.c.l.b16 %v2906
    %v3929 = vunpack.c.h.b16 %v2906
    %v3930 = vunpack.c.l.b16 %v2907
    %v3931 = vunpack.c.h.b16 %v2907
    %v3932 = vunpack.c.l.b16 %v2908
    %v3933 = vunpack.c.h.b16 %v2908
    %v3934 = vunpack.c.l.b16 %v2909
    %v3935 = vunpack.c.h.b16 %v2909
    %v3936 = vunpack.c.l.b16 %v2910
    %v3937 = vunpack.c.h.b16 %v2910
    %v3938 = vunpack.c.l.b16 %v2911
    %v3939 = vunpack.c.h.b16 %v2911
    %v3940 = vunpack.c.l.b16 %v2912
    %v3941 = vunpack.c.h.b16 %v2912
    %v3942 = vunpack.c.l.b16 %v2913
    %v3943 = vunpack.c.h.b16 %v2913
    %v3944 = vunpack.c.l.b16 %v2914
    %v3945 = vunpack.c.h.b16 %v2914
    %v3946 = vunpack.c.l.b16 %v2915
    %v3947 = vunpack.c.h.b16 %v2915
    %v3948 = vunpack.c.l.b16 %v2916
    %v3949 = vunpack.c.h.b16 %v2916
    %v3950 = vunpack.c.l.b16 %v2917
    %v3951 = vunpack.c.h.b16 %v2917
    %v3952 = vunpack.c.l.b16 %v2918
    %v3953 = vunpack.c.h.b16 %v2918
    %v3954 = vunpack.c.l.b16 %v2919
    %v3955 = vunpack.c.h.b16 %v2919
    %v3956 = vunpack.c.l.b16 %v2920
    %v3957 = vunpack.c.h.b16 %v2920
    %v3958 = vunpack.c.l.b16 %v2921
    %v3959 = vunpack.c.h.b16 %v2921
    %v3960 = vunpack.c.l.b16 %v2922
    %v3961 = vunpack.c.h.b16 %v2922
    %v3962 = vunpack.c.l.b16 %v2923
    %v3963 = vunpack.c.h.b16 %v2923
    %v3964 = vunpack.c.l.b16 %v2924
    %v3965 = vunpack.c.h.b16 %v2924
    %v3966 = vunpack.c.l.b16 %v2925
    %v3967 = vunpack.c.h.b16 %v2925
    %v3968 = vunpack.c.l.b16 %v2926
    %v3969 = vunpack.c.h.b16 %v2926
    %v3970 = vunpack.c.l.b16 %v2927
    %v3971 = vunpack.c.h.b16 %v2927
    %v3972 = vunpack.c.l.b16 %v2928
    %v3973 = vunpack.c.h.b16 %v2928
    %v3974 = vunpack.c.l.b16 %v2929
    %v3975 = vunpack.c.h.b16 %v2929
    %v3976 = vunpack.c.l.b16 %v2930
    %v3977 = vunpack.c.h.b16 %v2930
    %v3978 = vunpack.c.l.b16 %v2931
    %v3979 = vunpack.c.h.b16 %v2931
    %v3980 = vunpack.c.l.b16 %v2932
    %v3981 = vunpack.c.h.b16 %v2932
    %v3982 = vunpack.c.l.b16 %v2933
    %v3983 = vunpack.c.h.b16 %v2933
    %v3984 = vunpack.c.l.b16 %v2934
    %v3985 = vunpack.c.h.b16 %v2934
    %v3986 = vunpack.c.l.b16 %v2935
    %v3987 = vunpack.c.h.b16 %v2935
    %v3988 = vunpack.c.l.b16 %v2936
    %v3989 = vunpack.c.h.b16 %v2936
    %v3990 = vunpack.c.l.b16 %v2937
    %v3991 = vunpack.c.h.b16 %v2937
    %v3992 = vunpack.c.l.b16 %v2938
    %v3993 = vunpack.c.h.b16 %v2938
    %v3994 = vunpack.c.l.b16 %v2939
    %v3995 = vunpack.c.h.b16 %v2939
    %v3996 = vunpack.c.l.b16 %v2940
    %v3997 = vunpack.c.h.b16 %v2940
    %v3998 = vunpack.c.l.b16 %v2941
    %v3999 = vunpack.c.h.b16 %v2941
    %v4000 = vunpack.c.l.b16 %v2942
    %v4001 = vunpack.c.h.b16 %v2942
    %v4002 = vunpack.c.l.b16 %v2943
    %v4003 = vunpack.c.h.b16 %v2943
    %v4004 = vunpack.c.l.b16 %v2944
    %v4005 = vunpack.c.h.b16 %v2944
    %v4006 = vunpack.c.l.b16 %v2945
    %v4007 = vunpack.c.h.b16 %v2945
    %v4008 = vunpack.c.l.b16 %v2946
    %v4009 = vunpack.c.h.b16 %v2946
    %v4010 = vunpack.c.l.b16 %v2947
    %v4011 = vunpack.c.h.b16 %v2947
    %v4012 = vunpack.c.l.b16 %v2948
    %v4013 = vunpack.c.h.b16 %v2948
    %v4014 = vunpack.c.l.b16 %v2949
    %v4015 = vunpack.c.h.b16 %v2949
    %v4016 = vunpack.c.l.b16 %v2950
    %v4017 = vunpack.c.h.b16 %v2950
    %v4018 = vunpack.c.l.b16 %v2951
    %v4019 = vunpack.c.h.b16 %v2951
    %v4020 = vunpack.c.l.b16 %v2952
    %v4021 = vunpack.c.h.b16 %v2952
    %v4022 = vunpack.c.l.b16 %v2953
    %v4023 = vunpack.c.h.b16 %v2953
    %v4024 = vunpack.c.l.b16 %v2954
    %v4025 = vunpack.c.h.b16 %v2954
    %v4026 = vunpack.c.l.b16 %v2955
    %v4027 = vunpack.c.h.b16 %v2955
    %v4028 = vunpack.c.l.b16 %v2956
    %v4029 = vunpack.c.h.b16 %v2956
    %v4030 = vunpack.c.l.b16 %v2957
    %v4031 = vunpack.c.h.b16 %v2957
    %v4032 = vunpack.c.l.b16 %v2958
    %v4033 = vunpack.c.h.b16 %v2958
    %v4034 = vunpack.c.l.b16 %v2959
    %v4035 = vunpack.c.h.b16 %v2959
    %v4036 = vunpack.c.l.b16 %v2960
    %v4037 = vunpack.c.h.b16 %v2960
    %v4038 = vunpack.c.l.b16 %v2961
    %v4039 = vunpack.c.h.b16 %v2961
    %v4040 = vunpack.c.l.b16 %v2962
    %v4041 = vunpack.c.h.b16 %v2962
    %v4042 = vunpack.c.l.b16 %v2963
    %v4043 = vunpack.c.h.b16 %v2963
    %v4044 = vunpack.c.l.b16 %v2964
    %v4045 = vunpack.c.h.b16 %v2964
    %v4046 = vunpack.c.l.b16 %v2965
    %v4047 = vunpack.c.h.b16 %v2965
    %v4048 = vunpack.c.l.b16 %v2966
    %v4049 = vunpack.c.h.b16 %v2966
    %v4050 = vunpack.c.l.b16 %v2967
    %v4051 = vunpack.c.h.b16 %v2967
    %v4052 = vunpack.c.l.b16 %v2968
    %v4053 = vunpack.c.h.b16 %v2968
    %v4054 = vunpack.c.l.b16 %v2969
    %v4055 = vunpack.c.h.b16 %v2969
    %v4056 = vunpack.c.l.b16 %v2970
    %v4057 = vunpack.c.h.b16 %v2970
    %v4058 = vunpack.c.l.b16 %v2971
    %v4059 = vunpack.c.h.b16 %v2971
    %v4060 = vunpack.c.l.b16 %v2972
    %v4061 = vunpack.c.h.b16 %v2972
    %v4062 = vunpack.c.l.b16 %v2973
    %v4063 = vunpack.c.h.b16 %v2973
    %v4064 = vunpack.c.l.b16 %v2974
    %v4065 = vunpack.c.h.b16 %v2974
    %v4066 = vunpack.c.l.b16 %v2975
    %v4067 = vunpack.c.h.b16 %v2975
    %v4068 = vunpack.c.l.b16 %v2976
    %v4069 = vunpack.c.h.b16 %v2976
    %v4070 = vunpack.c.l.b16 %v2977
    %v4071 = vunpack.c.h.b16 %v2977
    %v4072 = vunpack.c.l.b16 %v2978
    %v4073 = vunpack.c.h.b16 %v2978
    %v4074 = vunpack.c.l.b16 %v2979
    %v4075 = vunpack.c.h.b16 %v2979
    %v4076 = vunpack.c.l.b16 %v2980
    %v4077 = vunpack.c.h.b16 %v2980
    %v4078 = vunpack.c.l.b16 %v2981
    %v4079 = vunpack.c.h.b16 %v2981
    %v4080 = vunpack.c.l.b16 %v2982
    %v4081 = vunpack.c.h.b16 %v2982
    %v4082 = vunpack.c.l.b16 %v2983
    %v4083 = vunpack.c.h.b16 %v2983
    %v4084 = vunpack.c.l.b16 %v2984
    %v4085 = vunpack.c.h.b16 %v2984
    %v4086 = vunpack.c.l.b16 %v2985
    %v4087 = vunpack.c.h.b16 %v2985
    %v4088 = vunpack.c.l.b16 %v2986
    %v4089 = vunpack.c.h.b16 %v2986
    %v4090 = vunpack.c.l.b16 %v2987
    %v4091 = vunpack.c.h.b16 %v2987
    %v4092 = vunpack.c.l.b16 %v2988
    %v4093 = vunpack.c.h.b16 %v2988
    %v4094 = vunpack.c.l.b16 %v2989
    %v4095 = vunpack.c.h.b16 %v2989
    %v4096 = vunpack.c.l.b16 %v2990
    %v4097 = vunpack.c.h.b16 %v2990
    %v4098 = vunpack.c.l.b16 %v2991
    %v4099 = vunpack.c.h.b16 %v2991
    %v4100 = vunpack.c.l.b16 %v2992
    %v4101 = vunpack.c.h.b16 %v2992
    %v4102 = vunpack.c.l.b16 %v2993
    %v4103 = vunpack.c.h.b16 %v2993
    %v4104 = vunpack.c.l.b16 %v2994
    %v4105 = vunpack.c.h.b16 %v2994
    %v4106 = vunpack.c.l.b16 %v2995
    %v4107 = vunpack.c.h.b16 %v2995
    %v4108 = vunpack.c.l.b16 %v2996
    %v4109 = vunpack.c.h.b16 %v2996
    %v4110 = vunpack.c.l.b16 %v2997
    %v4111 = vunpack.c.h.b16 %v2997
    %v4112 = vunpack.c.l.b16 %v2998
    %v4113 = vunpack.c.h.b16 %v2998
    %v4114 = vunpack.c.l.b16 %v2999
    %v4115 = vunpack.c.h.b16 %v2999
    %v4116 = vunpack.c.l.b16 %v3000
    %v4117 = vunpack.c.h.b16 %v3000
    %v4118 = vunpack.c.l.b16 %v3001
    %v4119 = vunpack.c.h.b16 %v3001
    %v4120 = vunpack.c.l.b16 %v3002
    %v4121 = vunpack.c.h.b16 %v3002
    %v4122 = vunpack.c.l.b16 %v3003
    %v4123 = vunpack.c.h.b16 %v3003
    %v4124 = vunpack.c.l.b16 %v3004
    %v4125 = vunpack.c.h.b16 %v3004
    %v4126 = vunpack.c.l.b16 %v3005
    %v4127 = vunpack.c.h.b16 %v3005
    %v4128 = vunpack.c.l.b16 %v3006
    %v4129 = vunpack.c.h.b16 %v3006
    %v4130 = vunpack.c.l.b16 %v3007
    %v4131 = vunpack.c.h.b16 %v3007
    %v4132 = vunpack.c.l.b16 %v3008
    %v4133 = vunpack.c.h.b16 %v3008
    %v4134 = vunpack.c.l.b16 %v3009
    %v4135 = vunpack.c.h.b16 %v3009
    %v4136 = vunpack.c.l.b16 %v3010
    %v4137 = vunpack.c.h.b16 %v3010
    %v4138 = vunpack.c.l.b16 %v3011
    %v4139 = vunpack.c.h.b16 %v3011
    %v4140 = vunpack.c.l.b16 %v3012
    %v4141 = vunpack.c.h.b16 %v3012
    %v4142 = vunpack.c.l.b16 %v3013
    %v4143 = vunpack.c.h.b16 %v3013
    %v4144 = vunpack.c.l.b16 %v3014
    %v4145 = vunpack.c.h.b16 %v3014
    %v4146 = vunpack.c.l.b16 %v3015
    %v4147 = vunpack.c.h.b16 %v3015
    %v4148 = vunpack.c.l.b16 %v3016
    %v4149 = vunpack.c.h.b16 %v3016
    %v4150 = vunpack.c.l.b16 %v3017
    %v4151 = vunpack.c.h.b16 %v3017
    %v4152 = vunpack.c.l.b16 %v3018
    %v4153 = vunpack.c.h.b16 %v3018
    %v4154 = vunpack.c.l.b16 %v3019
    %v4155 = vunpack.c.h.b16 %v3019
    %v4156 = vunpack.c.l.b16 %v3020
    %v4157 = vunpack.c.h.b16 %v3020
    %v4158 = vunpack.c.l.b16 %v3021
    %v4159 = vunpack.c.h.b16 %v3021
    %v4160 = vunpack.c.l.b16 %v3022
    %v4161 = vunpack.c.h.b16 %v3022
    %v4162 = vunpack.c.l.b16 %v3023
    %v4163 = vunpack.c.h.b16 %v3023
    %v4164 = vunpack.c.l.b16 %v3024
    %v4165 = vunpack.c.h.b16 %v3024
    %v4166 = vunpack.c.l.b16 %v3025
    %v4167 = vunpack.c.h.b16 %v3025
    %v4168 = vunpack.c.l.b16 %v3026
    %v4169 = vunpack.c.h.b16 %v3026
    %v4170 = vunpack.c.l.b16 %v3027
    %v4171 = vunpack.c.h.b16 %v3027
    %v4172 = vunpack.c.l.b16 %v3028
    %v4173 = vunpack.c.h.b16 %v3028
    %v4174 = vunpack.c.l.b16 %v3029
    %v4175 = vunpack.c.h.b16 %v3029
    %v4176 = vunpack.c.l.b16 %v3030
    %v4177 = vunpack.c.h.b16 %v3030
    %v4178 = vunpack.c.l.b16 %v3031
    %v4179 = vunpack.c.h.b16 %v3031
    %v4180 = vunpack.c.l.b16 %v3032
    %v4181 = vunpack.c.h.b16 %v3032
    %v4182 = vunpack.c.l.b16 %v3033
    %v4183 = vunpack.c.h.b16 %v3033
    %v4184 = vunpack.c.l.b16 %v3034
    %v4185 = vunpack.c.h.b16 %v3034
    %v4186 = vunpack.c.l.b16 %v3035
    %v4187 = vunpack.c.h.b16 %v3035
    %v4188 = vpack.c.b16 %v3424, %v3420
    %v4189 = vpack.c.b16 %v3425, %v3421
    %v4190 = vpack.c.b16 %v3426, %v3422
    %v4191 = vpack.c.b16 %v3427, %v3423
    %v4192 = vpack.c.b16 %v3432, %v3428
    %v4193 = vpack.c.b16 %v3433, %v3429
    %v4194 = vpack.c.b16 %v3434, %v3430
    %v4195 = vpack.c.b16 %v3435, %v3431
    %v4196 = vpack.c.b16 %v3440, %v3436
    %v4197 = vpack.c.b16 %v3441, %v3437
    %v4198 = vpack.c.b16 %v3442, %v3438
    %v4199 = vpack.c.b16 %v3443, %v3439
    %v4200 = vpack.c.b16 %v3448, %v3444
    %v4201 = vpack.c.b16 %v3449, %v3445
    %v4202 = vpack.c.b16 %v3450, %v3446
    %v4203 = vpack.c.b16 %v3451, %v3447
    %v4204 = vpack.c.b16 %v3456, %v3452
    %v4205 = vpack.c.b16 %v3457, %v3453
    %v4206 = vpack.c.b16 %v3458, %v3454
    %v4207 = vpack.c.b16 %v3459, %v3455
    %v4208 = vpack.c.b16 %v3464, %v3460
    %v4209 = vpack.c.b16 %v3465, %v3461
    %v4210 = vpack.c.b16 %v3466, %v3462
    %v4211 = vpack.c.b16 %v3467, %v3463
    %v4212 = vpack.c.b16 %v3472, %v3468
    %v4213 = vpack.c.b16 %v3473, %v3469
    %v4214 = vpack.c.b16 %v3474, %v3470
    %v4215 = vpack.c.b16 %v3475, %v3471
    %v4216 = vpack.c.b16 %v3480, %v3476
    %v4217 = vpack.c.b16 %v3481, %v3477
    %v4218 = vpack.c.b16 %v3482, %v3478
    %v4219 = vpack.c.b16 %v3483, %v3479
    %v4220 = vpack.c.b16 %v3488, %v3484
    %v4221 = vpack.c.b16 %v3489, %v3485
    %v4222 = vpack.c.b16 %v3490, %v3486
    %v4223 = vpack.c.b16 %v3491, %v3487
    %v4224 = vpack.c.b16 %v3496, %v3492
    %v4225 = vpack.c.b16 %v3497, %v3493
    %v4226 = vpack.c.b16 %v3498, %v3494
    %v4227 = vpack.c.b16 %v3499, %v3495
    %v4228 = vpack.c.b16 %v3504, %v3500
    %v4229 = vpack.c.b16 %v3505, %v3501
    %v4230 = vpack.c.b16 %v3506, %v3502
    %v4231 = vpack.c.b16 %v3507, %v3503
    %v4232 = vpack.c.b16 %v3512, %v3508
    %v4233 = vpack.c.b16 %v3513, %v3509
    %v4234 = vpack.c.b16 %v3514, %v3510
    %v4235 = vpack.c.b16 %v3515, %v3511
    %v4236 = vpack.c.b16 %v3520, %v3516
    %v4237 = vpack.c.b16 %v3521, %v3517
    %v4238 = vpack.c.b16 %v3522, %v3518
    %v4239 = vpack.c.b16 %v3523, %v3519
    %v4240 = vpack.c.b16 %v3528, %v3524
    %v4241 = vpack.c.b16 %v3529, %v3525
    %v4242 = vpack.c.b16 %v3530, %v3526
    %v4243 = vpack.c.b16 %v3531, %v3527
    %v4244 = vpack.c.b16 %v3536, %v3532
    %v4245 = vpack.c.b16 %v3537, %v3533
    %v4246 = vpack.c.b16 %v3538, %v3534
    %v4247 = vpack.c.b16 %v3539, %v3535
    %v4248 = vpack.c.b16 %v3544, %v3540
    %v4249 = vpack.c.b16 %v3545, %v3541
    %v4250 = vpack.c.b16 %v3546, %v3542
    %v4251 = vpack.c.b16 %v3547, %v3543
    %v4252 = vpack.c.b16 %v3552, %v3548
    %v4253 = vpack.c.b16 %v3553, %v3549
    %v4254 = vpack.c.b16 %v3554, %v3550
    %v4255 = vpack.c.b16 %v3555, %v3551
    %v4256 = vpack.c.b16 %v3560, %v3556
    %v4257 = vpack.c.b16 %v3561, %v3557
    %v4258 = vpack.c.b16 %v3562, %v3558
    %v4259 = vpack.c.b16 %v3563, %v3559
    %v4260 = vpack.c.b16 %v3568, %v3564
    %v4261 = vpack.c.b16 %v3569, %v3565
    %v4262 = vpack.c.b16 %v3570, %v3566
    %v4263 = vpack.c.b16 %v3571, %v3567
    %v4264 = vpack.c.b16 %v3576, %v3572
    %v4265 = vpack.c.b16 %v3577, %v3573
    %v4266 = vpack.c.b16 %v3578, %v3574
    %v4267 = vpack.c.b16 %v3579, %v3575
    %v4268 = vpack.c.b16 %v3584, %v3580
    %v4269 = vpack.c.b16 %v3585, %v3581
    %v4270 = vpack.c.b16 %v3586, %v3582
    %v4271 = vpack.c.b16 %v3587, %v3583
    %v4272 = vpack.c.b16 %v3592, %v3588
    %v4273 = vpack.c.b16 %v3593, %v3589
    %v4274 = vpack.c.b16 %v3594, %v3590
    %v4275 = vpack.c.b16 %v3595, %v3591
    %v4276 = vpack.c.b16 %v3600, %v3596
    %v4277 = vpack.c.b16 %v3601, %v3597
    %v4278 = vpack.c.b16 %v3602, %v3598
    %v4279 = vpack.c.b16 %v3603, %v3599
    %v4280 = vpack.c.b16 %v3608, %v3604
    %v4281 = vpack.c.b16 %v3609, %v3605
    %v4282 = vpack.c.b16 %v3610, %v3606
    %v4283 = vpack.c.b16 %v3611, %v3607
    %v4284 = vpack.c.b16 %v3616, %v3612
    %v4285 = vpack.c.b16 %v3617, %v3613
    %v4286 = vpack.c.b16 %v3618, %v3614
    %v4287 = vpack.c.b16 %v3619, %v3615
    %v4288 = vpack.c.b16 %v3624, %v3620
    %v4289 = vpack.c.b16 %v3625, %v3621
    %v4290 = vpack.c.b16 %v3626, %v3622
    %v4291 = vpack.c.b16 %v3627, %v3623
    %v4292 = vpack.c.b16 %v3632, %v3628
    %v4293 = vpack.c.b16 %v3633, %v3629
    %v4294 = vpack.c.b16 %v3634, %v3630
    %v4295 = vpack.c.b16 %v3635, %v3631
    %v4296 = vpack.c.b16 %v3640, %v3636
    %v4297 = vpack.c.b16 %v3641, %v3637
    %v4298 = vpack.c.b16 %v3642, %v3638
    %v4299 = vpack.c.b16 %v3643, %v3639
    %v4300 = vpack.c.b16 %v3648, %v3644
    %v4301 = vpack.c.b16 %v3649, %v3645
    %v4302 = vpack.c.b16 %v3650, %v3646
    %v4303 = vpack.c.b16 %v3651, %v3647
    %v4304 = vpack.c.b16 %v3656, %v3652
    %v4305 = vpack.c.b16 %v3657, %v3653
    %v4306 = vpack.c.b16 %v3658, %v3654
    %v4307 = vpack.c.b16 %v3659, %v3655
    %v4308 = vpack.c.b16 %v3664, %v3660
    %v4309 = vpack.c.b16 %v3665, %v3661
    %v4310 = vpack.c.b16 %v3666, %v3662
    %v4311 = vpack.c.b16 %v3667, %v3663
    %v4312 = vpack.c.b16 %v3672, %v3668
    %v4313 = vpack.c.b16 %v3673, %v3669
    %v4314 = vpack.c.b16 %v3674, %v3670
    %v4315 = vpack.c.b16 %v3675, %v3671
    %v4316 = vpack.c.b16 %v3680, %v3676
    %v4317 = vpack.c.b16 %v3681, %v3677
    %v4318 = vpack.c.b16 %v3682, %v3678
    %v4319 = vpack.c.b16 %v3683, %v3679
    %v4320 = vpack.c.b16 %v3688, %v3684
    %v4321 = vpack.c.b16 %v3689, %v3685
    %v4322 = vpack.c.b16 %v3690, %v3686
    %v4323 = vpack.c.b16 %v3691, %v3687
    %v4324 = vpack.c.b16 %v3696, %v3692
    %v4325 = vpack.c.b16 %v3697, %v3693
    %v4326 = vpack.c.b16 %v3698, %v3694
    %v4327 = vpack.c.b16 %v3699, %v3695
    %v4328 = vpack.c.b16 %v3704, %v3700
    %v4329 = vpack.c.b16 %v3705, %v3701
    %v4330 = vpack.c.b16 %v3706, %v3702
    %v4331 = vpack.c.b16 %v3707, %v3703
    %v4332 = vpack.c.b16 %v3712, %v3708
    %v4333 = vpack.c.b16 %v3713, %v3709
    %v4334 = vpack.c.b16 %v3714, %v3710
    %v4335 = vpack.c.b16 %v3715, %v3711
    %v4336 = vpack.c.b16 %v3720, %v3716
    %v4337 = vpack.c.b16 %v3721, %v3717
    %v4338 = vpack.c.b16 %v3722, %v3718
    %v4339 = vpack.c.b16 %v3723, %v3719
    %v4340 = vpack.c.b16 %v3728, %v3724
    %v4341 = vpack.c.b16 %v3729, %v3725
    %v4342 = vpack.c.b16 %v3730, %v3726
    %v4343 = vpack.c.b16 %v3731, %v3727
    %v4344 = vpack.c.b16 %v3736, %v3732
    %v4345 = vpack.c.b16 %v3737, %v3733
    %v4346 = vpack.c.b16 %v3738, %v3734
    %v4347 = vpack.c.b16 %v3739, %v3735
    %v4348 = vpack.c.b16 %v3744, %v3740
    %v4349 = vpack.c.b16 %v3745, %v3741
    %v4350 = vpack.c.b16 %v3746, %v3742
    %v4351 = vpack.c.b16 %v3747, %v3743
    %v4352 = vpack.c.b16 %v3752, %v3748
    %v4353 = vpack.c.b16 %v3753, %v3749
    %v4354 = vpack.c.b16 %v3754, %v3750
    %v4355 = vpack.c.b16 %v3755, %v3751
    %v4356 = vpack.c.b16 %v3760, %v3756
    %v4357 = vpack.c.b16 %v3761, %v3757
    %v4358 = vpack.c.b16 %v3762, %v3758
    %v4359 = vpack.c.b16 %v3763, %v3759
    %v4360 = vpack.c.b16 %v3768, %v3764
    %v4361 = vpack.c.b16 %v3769, %v3765
    %v4362 = vpack.c.b16 %v3770, %v3766
    %v4363 = vpack.c.b16 %v3771, %v3767
    %v4364 = vpack.c.b16 %v3776, %v3772
    %v4365 = vpack.c.b16 %v3777, %v3773
    %v4366 = vpack.c.b16 %v3778, %v3774
    %v4367 = vpack.c.b16 %v3779, %v3775
    %v4368 = vpack.c.b16 %v3784, %v3780
    %v4369 = vpack.c.b16 %v3785, %v3781
    %v4370 = vpack.c.b16 %v3786, %v3782
    %v4371 = vpack.c.b16 %v3787, %v3783
    %v4372 = vpack.c.b16 %v3792, %v3788
    %v4373 = vpack.c.b16 %v3793, %v3789
    %v4374 = vpack.c.b16 %v3794, %v3790
    %v4375 = vpack.c.b16 %v3795, %v3791
    %v4376 = vpack.c.b16 %v3800, %v3796
    %v4377 = vpack.c.b16 %v3801, %v3797
    %v4378 = vpack.c.b16 %v3802, %v3798
    %v4379 = vpack.c.b16 %v3803, %v3799
    %v4380 = vpack.c.b16 %v3808, %v3804
    %v4381 = vpack.c.b16 %v3809, %v3805
    %v4382 = vpack.c.b16 %v3810, %v3806
    %v4383 = vpack.c.b16 %v3811, %v3807
    %v4384 = vpack.c.b16 %v3816, %v3812
    %v4385 = vpack.c.b16 %v3817, %v3813
    %v4386 = vpack.c.b16 %v3818, %v3814
    %v4387 = vpack.c.b16 %v3819, %v3815
    %v4388 = vpack.c.b16 %v3824, %v3820
    %v4389 = vpack.c.b16 %v3825, %v3821
    %v4390 = vpack.c.b16 %v3826, %v3822
    %v4391 = vpack.c.b16 %v3827, %v3823
    %v4392 = vpack.c.b16 %v3832, %v3828
    %v4393 = vpack.c.b16 %v3833, %v3829
    %v4394 = vpack.c.b16 %v3834, %v3830
    %v4395 = vpack.c.b16 %v3835, %v3831
    %v4396 = vpack.c.b16 %v3840, %v3836
    %v4397 = vpack.c.b16 %v3841, %v3837
    %v4398 = vpack.c.b16 %v3842, %v3838
    %v4399 = vpack.c.b16 %v3843, %v3839
    %v4400 = vpack.c.b16 %v3848, %v3844
    %v4401 = vpack.c.b16 %v3849, %v3845
    %v4402 = vpack.c.b16 %v3850, %v3846
    %v4403 = vpack.c.b16 %v3851, %v3847
    %v4404 = vpack.c.b16 %v3856, %v3852
    %v4405 = vpack.c.b16 %v3857, %v3853
    %v4406 = vpack.c.b16 %v3858, %v3854
    %v4407 = vpack.c.b16 %v3859, %v3855
    %v4408 = vpack.c.b16 %v3864, %v3860
    %v4409 = vpack.c.b16 %v3865, %v3861
    %v4410 = vpack.c.b16 %v3866, %v3862
    %v4411 = vpack.c.b16 %v3867, %v3863
    %v4412 = vpack.c.b16 %v3872, %v3868
    %v4413 = vpack.c.b16 %v3873, %v3869
    %v4414 = vpack.c.b16 %v3874, %v3870
    %v4415 = vpack.c.b16 %v3875, %v3871
    %v4416 = vpack.c.b16 %v3880, %v3876
    %v4417 = vpack.c.b16 %v3881, %v3877
    %v4418 = vpack.c.b16 %v3882, %v3878
    %v4419 = vpack.c.b16 %v3883, %v3879
    %v4420 = vpack.c.b16 %v3888, %v3884
    %v4421 = vpack.c.b16 %v3889, %v3885
    %v4422 = vpack.c.b16 %v3890, %v3886
    %v4423 = vpack.c.b16 %v3891, %v3887
    %v4424 = vpack.c.b16 %v3896, %v3892
    %v4425 = vpack.c.b16 %v3897, %v3893
    %v4426 = vpack.c.b16 %v3898, %v3894
    %v4427 = vpack.c.b16 %v3899, %v3895
    %v4428 = vpack.c.b16 %v3904, %v3900
    %v4429 = vpack.c.b16 %v3905, %v3901
    %v4430 = vpack.c.b16 %v3906, %v3902
    %v4431 = vpack.c.b16 %v3907, %v3903
    %v4432 = vpack.c.b16 %v3912, %v3908
    %v4433 = vpack.c.b16 %v3913, %v3909
    %v4434 = vpack.c.b16 %v3914, %v3910
    %v4435 = vpack.c.b16 %v3915, %v3911
    %v4436 = vpack.c.b16 %v3920, %v3916
    %v4437 = vpack.c.b16 %v3921, %v3917
    %v4438 = vpack.c.b16 %v3922, %v3918
    %v4439 = vpack.c.b16 %v3923, %v3919
    %v4440 = vpack.c.b16 %v3928, %v3924
    %v4441 = vpack.c.b16 %v3929, %v3925
    %v4442 = vpack.c.b16 %v3930, %v3926
    %v4443 = vpack.c.b16 %v3931, %v3927
    %v4444 = vpack.c.b16 %v3936, %v3932
    %v4445 = vpack.c.b16 %v3937, %v3933
    %v4446 = vpack.c.b16 %v3938, %v3934
    %v4447 = vpack.c.b16 %v3939, %v3935
    %v4448 = vpack.c.b16 %v3944, %v3940
    %v4449 = vpack.c.b16 %v3945, %v3941
    %v4450 = vpack.c.b16 %v3946, %v3942
    %v4451 = vpack.c.b16 %v3947, %v3943
    %v4452 = vpack.c.b16 %v3952, %v3948
    %v4453 = vpack.c.b16 %v3953, %v3949
    %v4454 = vpack.c.b16 %v3954, %v3950
    %v4455 = vpack.c.b16 %v3955, %v3951
    %v4456 = vpack.c.b16 %v3960, %v3956
    %v4457 = vpack.c.b16 %v3961, %v3957
    %v4458 = vpack.c.b16 %v3962, %v3958
    %v4459 = vpack.c.b16 %v3963, %v3959
    %v4460 = vpack.c.b16 %v3968, %v3964
    %v4461 = vpack.c.b16 %v3969, %v3965
    %v4462 = vpack.c.b16 %v3970, %v3966
    %v4463 = vpack.c.b16 %v3971, %v3967
    %v4464 = vpack.c.b16 %v3976, %v3972
    %v4465 = vpack.c.b16 %v3977, %v3973
    %v4466 = vpack.c.b16 %v3978, %v3974
    %v4467 = vpack.c.b16 %v3979, %v3975
    %v4468 = vpack.c.b16 %v3984, %v3980
    %v4469 = vpack.c.b16 %v3985, %v3981
    %v4470 = vpack.c.b16 %v3986, %v3982
    %v4471 = vpack.c.b16 %v3987, %v3983
    %v4472 = vpack.c.b16 %v3992, %v3988
    %v4473 = vpack.c.b16 %v3993, %v3989
    %v4474 = vpack.c.b16 %v3994, %v3990
    %v4475 = vpack.c.b16 %v3995, %v3991
    %v4476 = vpack.c.b16 %v4000, %v3996
    %v4477 = vpack.c.b16 %v4001, %v3997
    %v4478 = vpack.c.b16 %v4002, %v3998
    %v4479 = vpack.c.b16 %v4003, %v3999
    %v4480 = vpack.c.b16 %v4008, %v4004
    %v4481 = vpack.c.b16 %v4009, %v4005
    %v4482 = vpack.c.b16 %v4010, %v4006
    %v4483 = vpack.c.b16 %v4011, %v4007
    %v4484 = vpack.c.b16 %v4016, %v4012
    %v4485 = vpack.c.b16 %v4017, %v4013
    %v4486 = vpack.c.b16 %v4018, %v4014
    %v4487 = vpack.c.b16 %v4019, %v4015
    %v4488 = vpack.c.b16 %v4024, %v4020
    %v4489 = vpack.c.b16 %v4025, %v4021
    %v4490 = vpack.c.b16 %v4026, %v4022
    %v4491 = vpack.c.b16 %v4027, %v4023
    %v4492 = vpack.c.b16 %v4032, %v4028
    %v4493 = vpack.c.b16 %v4033, %v4029
    %v4494 = vpack.c.b16 %v4034, %v4030
    %v4495 = vpack.c.b16 %v4035, %v4031
    %v4496 = vpack.c.b16 %v4040, %v4036
    %v4497 = vpack.c.b16 %v4041, %v4037
    %v4498 = vpack.c.b16 %v4042, %v4038
    %v4499 = vpack.c.b16 %v4043, %v4039
    %v4500 = vpack.c.b16 %v4048, %v4044
    %v4501 = vpack.c.b16 %v4049, %v4045
    %v4502 = vpack.c.b16 %v4050, %v4046
    %v4503 = vpack.c.b16 %v4051, %v4047
    %v4504 = vpack.c.b16 %v4056, %v4052
    %v4505 = vpack.c.b16 %v4057, %v4053
    %v4506 = vpack.c.b16 %v4058, %v4054
    %v4507 = vpack.c.b16 %v4059, %v4055
    %v4508 = vpack.c.b16 %v4064, %v4060
    %v4509 = vpack.c.b16 %v4065, %v4061
    %v4510 = vpack.c.b16 %v4066, %v4062
    %v4511 = vpack.c.b16 %v4067, %v4063
    %v4512 = vpack.c.b16 %v4072, %v4068
    %v4513 = vpack.c.b16 %v4073, %v4069
    %v4514 = vpack.c.b16 %v4074, %v4070
    %v4515 = vpack.c.b16 %v4075, %v4071
    %v4516 = vpack.c.b16 %v4080, %v4076
    %v4517 = vpack.c.b16 %v4081, %v4077
    %v4518 = vpack.c.b16 %v4082, %v4078
    %v4519 = vpack.c.b16 %v4083, %v4079
    %v4520 = vpack.c.b16 %v4088, %v4084
    %v4521 = vpack.c.b16 %v4089, %v4085
    %v4522 = vpack.c.b16 %v4090, %v4086
    %v4523 = vpack.c.b16 %v4091, %v4087
    %v4524 = vpack.c.b16 %v4096, %v4092
    %v4525 = vpack.c.b16 %v4097, %v4093
    %v4526 = vpack.c.b16 %v4098, %v4094
    %v4527 = vpack.c.b16 %v4099, %v4095
    %v4528 = vpack.c.b16 %v4104, %v4100
    %v4529 = vpack.c.b16 %v4105, %v4101
    %v4530 = vpack.c.b16 %v4106, %v4102
    %v4531 = vpack.c.b16 %v4107, %v4103
    %v4532 = vpack.c.b16 %v4112, %v4108
    %v4533 = vpack.c.b16 %v4113, %v4109
    %v4534 = vpack.c.b16 %v4114, %v4110
    %v4535 = vpack.c.b16 %v4115, %v4111
    %v4536 = vpack.c.b16 %v4120, %v4116
    %v4537 = vpack.c.b16 %v4121, %v4117
    %v4538 = vpack.c.b16 %v4122, %v4118
    %v4539 = vpack.c.b16 %v4123, %v4119
    %v4540 = vpack.c.b16 %v4128, %v4124
    %v4541 = vpack.c.b16 %v4129, %v4125
    %v4542 = vpack.c.b16 %v4130, %v4126
    %v4543 = vpack.c.b16 %v4131, %v4127
    %v4544 = vpack.c.b16 %v4136, %v4132
    %v4545 = vpack.c.b16 %v4137, %v4133
    %v4546 = vpack.c.b16 %v4138, %v4134
    %v4547 = vpack.c.b16 %v4139, %v4135
    %v4548 = vpack.c.b16 %v4144, %v4140
    %v4549 = vpack.c.b16 %v4145, %v4141
    %v4550 = vpack.c.b16 %v4146, %v4142
    %v4551 = vpack.c.b16 %v4147, %v4143
    %v4552 = vpack.c.b16 %v4152, %v4148
    %v4553 = vpack.c.b16 %v4153, %v4149
    %v4554 = vpack.c.b16 %v4154, %v4150
    %v4555 = vpack.c.b16 %v4155, %v4151
    %v4556 = vpack.c.b16 %v4160, %v4156
    %v4557 = vpack.c.b16 %v4161, %v4157
    %v4558 = vpack.c.b16 %v4162, %v4158
    %v4559 = vpack.c.b16 %v4163, %v4159
    %v4560 = vpack.c.b16 %v4168, %v4164
    %v4561 = vpack.c.b16 %v4169, %v4165
    %v4562 = vpack.c.b16 %v4170, %v4166
    %v4563 = vpack.c.b16 %v4171, %v4167
    %v4564 = vpack.c.b16 %v4176, %v4172
    %v4565 = vpack.c.b16 %v4177, %v4173
    %v4566 = vpack.c.b16 %v4178, %v4174
    %v4567 = vpack.c.b16 %v4179, %v4175
    %v4568 = vpack.c.b16 %v4184, %v4180
    %v4569 = vpack.c.b16 %v4185, %v4181
    %v4570 = vpack.c.b16 %v4186, %v4182
    %v4571 = vpack.c.b16 %v4187, %v4183
    %4956 = vmatprep.subr.bf16.mxu0 %v4189
    %4957 = vmatpush1.bf16.msra.mxu0 %v4188
    %4958 = vmatprep.subr.bf16.mxu0 %v4193
    %4959 = vmatpush1.bf16.msra.mxu0 %v4192
    %4960 = vmatprep.subr.bf16.mxu0 %v4197
    %4961 = vmatpush1.bf16.msra.mxu0 %v4196
    %4962 = vmatprep.subr.bf16.mxu0 %v4201
    %4963 = vmatpush1.bf16.msra.mxu0 %v4200
    %4964 = vmatprep.subr.bf16.mxu0 %v4205
    %4965 = vmatpush1.bf16.msra.mxu0 %v4204
    %4966 = vmatprep.subr.bf16.mxu0 %v4209
    %4967 = vmatpush1.bf16.msra.mxu0 %v4208
    %4968 = vmatprep.subr.bf16.mxu0 %v4213
    %4969 = vmatpush1.bf16.msra.mxu0 %v4212
    %4970 = vmatprep.subr.bf16.mxu0 %v4217
    %4971 = vmatpush1.bf16.msra.mxu0 %v4216
    %4972 = vmatprep.subr.bf16.mxu0 %v4221
    %4973 = vmatpush1.bf16.msra.mxu0 %v4220
    %4974 = vmatprep.subr.bf16.mxu0 %v4225
    %4975 = vmatpush1.bf16.msra.mxu0 %v4224
    %4976 = vmatprep.subr.bf16.mxu0 %v4229
    %4977 = vmatpush1.bf16.msra.mxu0 %v4228
    %4978 = vmatprep.subr.bf16.mxu0 %v4233
    %4979 = vmatpush1.bf16.msra.mxu0 %v4232
    %4980 = vmatprep.subr.bf16.mxu0 %v4237
    %4981 = vmatpush1.bf16.msra.mxu0 %v4236
    %4982 = vmatprep.subr.bf16.mxu0 %v4241
    %4983 = vmatpush1.bf16.msra.mxu0 %v4240
    %4984 = vmatprep.subr.bf16.mxu0 %v4245
    %4985 = vmatpush1.bf16.msra.mxu0 %v4244
    %4986 = vmatprep.subr.bf16.mxu0 %v4249
    %4987 = vmatpush1.bf16.msra.mxu0 %v4248
    %4988 = vmatprep.mubr.bf16.mxu0 %v2641
    %4989 = vmatmul.mubr.bf16.gmra.mrb[0].mxu0 %v2640
    %v4990 = vpop.f32.mrb[0].mxu0
    %v4991 = vadd.f32 0.0, %v4990
    %v4992 = vpop.f32.mrb[0].mxu0
    %v4993 = vadd.f32 0.0, %v4992
    %v4994 = vpop.f32.mrb[0].mxu0
    %v4995 = vadd.f32 0.0, %v4994
    %v4996 = vpop.f32.mrb[0].mxu0
    %v4997 = vadd.f32 0.0, %v4996
    %4998 = vdwg.mxu0
    %4999 = vmatprep.subr.bf16.mxu0 %v4253
    %5000 = vmatpush1.bf16.msra.mxu0 %v4252
    %5001 = vmatprep.subr.bf16.mxu0 %v4257
    %5002 = vmatpush1.bf16.msra.mxu0 %v4256
    %5003 = vmatprep.subr.bf16.mxu0 %v4261
    %5004 = vmatpush1.bf16.msra.mxu0 %v4260
    %5005 = vmatprep.subr.bf16.mxu0 %v4265
    %5006 = vmatpush1.bf16.msra.mxu0 %v4264
    %5007 = vmatprep.subr.bf16.mxu0 %v4269
    %5008 = vmatpush1.bf16.msra.mxu0 %v4268
    %5009 = vmatprep.subr.bf16.mxu0 %v4273
    %5010 = vmatpush1.bf16.msra.mxu0 %v4272
    %5011 = vmatprep.subr.bf16.mxu0 %v4277
    %5012 = vmatpush1.bf16.msra.mxu0 %v4276
    %5013 = vmatprep.subr.bf16.mxu0 %v4281
    %5014 = vmatpush1.bf16.msra.mxu0 %v4280
    %5015 = vmatprep.subr.bf16.mxu0 %v4285
    %5016 = vmatpush1.bf16.msra.mxu0 %v4284
    %5017 = vmatprep.subr.bf16.mxu0 %v4289
    %5018 = vmatpush1.bf16.msra.mxu0 %v4288
    %5019 = vmatprep.subr.bf16.mxu0 %v4293
    %5020 = vmatpush1.bf16.msra.mxu0 %v4292
    %5021 = vmatprep.subr.bf16.mxu0 %v4297
    %5022 = vmatpush1.bf16.msra.mxu0 %v4296
    %5023 = vmatprep.subr.bf16.mxu0 %v4301
    %5024 = vmatpush1.bf16.msra.mxu0 %v4300
    %5025 = vmatprep.subr.bf16.mxu0 %v4305
    %5026 = vmatpush1.bf16.msra.mxu0 %v4304
    %5027 = vmatprep.subr.bf16.mxu0 %v4309
    %5028 = vmatpush1.bf16.msra.mxu0 %v4308
    %5029 = vmatprep.subr.bf16.mxu0 %v4313
    %5030 = vmatpush1.bf16.msra.mxu0 %v4312
    %5031 = vmatprep.mubr.bf16.mxu0 %v2643
    %5032 = vmatmul.mubr.bf16.gmra.mrb[0].mxu0 %v2642
    %v5033 = vpop.f32.mrb[0].mxu0
    %v5034 = vadd.f32 %v4991, %v5033
    %v5035 = vpop.f32.mrb[0].mxu0
    %v5036 = vadd.f32 %v4993, %v5035
    %v5037 = vpop.f32.mrb[0].mxu0
    %v5038 = vadd.f32 %v4995, %v5037
    %v5039 = vpop.f32.mrb[0].mxu0
    %v5040 = vadd.f32 %v4997, %v5039
    %5041 = vdwg.mxu0
    %5042 = vmatprep.subr.bf16.mxu0 %v4317
    %5043 = vmatpush1.bf16.msra.mxu0 %v4316
    %5044 = vmatprep.subr.bf16.mxu0 %v4321
    %5045 = vmatpush1.bf16.msra.mxu0 %v4320
    %5046 = vmatprep.subr.bf16.mxu0 %v4325
    %5047 = vmatpush1.bf16.msra.mxu0 %v4324
    %5048 = vmatprep.subr.bf16.mxu0 %v4329
    %5049 = vmatpush1.bf16.msra.mxu0 %v4328
    %5050 = vmatprep.subr.bf16.mxu0 %v4333
    %5051 = vmatpush1.bf16.msra.mxu0 %v4332
    %5052 = vmatprep.subr.bf16.mxu0 %v4337
    %5053 = vmatpush1.bf16.msra.mxu0 %v4336
    %5054 = vmatprep.subr.bf16.mxu0 %v4341
    %5055 = vmatpush1.bf16.msra.mxu0 %v4340
    %5056 = vmatprep.subr.bf16.mxu0 %v4345
    %5057 = vmatpush1.bf16.msra.mxu0 %v4344
    %5058 = vmatprep.subr.bf16.mxu0 %v4349
    %5059 = vmatpush1.bf16.msra.mxu0 %v4348
    %5060 = vmatprep.subr.bf16.mxu0 %v4353
    %5061 = vmatpush1.bf16.msra.mxu0 %v4352
    %5062 = vmatprep.subr.bf16.mxu0 %v4357
    %5063 = vmatpush1.bf16.msra.mxu0 %v4356
    %5064 = vmatprep.subr.bf16.mxu0 %v4361
    %5065 = vmatpush1.bf16.msra.mxu0 %v4360
    %5066 = vmatprep.subr.bf16.mxu0 %v4365
    %5067 = vmatpush1.bf16.msra.mxu0 %v4364
    %5068 = vmatprep.subr.bf16.mxu0 %v4369
    %5069 = vmatpush1.bf16.msra.mxu0 %v4368
    %5070 = vmatprep.subr.bf16.mxu0 %v4373
    %5071 = vmatpush1.bf16.msra.mxu0 %v4372
    %5072 = vmatprep.subr.bf16.mxu0 %v4377
    %5073 = vmatpush1.bf16.msra.mxu0 %v4376
    %5074 = vmatprep.mubr.bf16.mxu0 %v2645
    %5075 = vmatmul.mubr.bf16.gmra.mrb[0].mxu0 %v2644
    %v5076 = vpop.f32.mrb[0].mxu0
    %v5077 = vadd.f32 %v5034, %v5076
    %v5078 = vpop.f32.mrb[0].mxu0
    %v5079 = vadd.f32 %v5036, %v5078
    %v5080 = vpop.f32.mrb[0].mxu0
    %v5081 = vadd.f32 %v5038, %v5080
    %v5082 = vpop.f32.mrb[0].mxu0
    %v5083 = vadd.f32 %v5040, %v5082
    %5084 = vdwg.mxu0
    %5085 = vmatprep.subr.bf16.mxu0 %v4381
    %5086 = vmatpush1.bf16.msra.mxu0 %v4380
    %5087 = vmatprep.subr.bf16.mxu0 %v4385
    %5088 = vmatpush1.bf16.msra.mxu0 %v4384
    %5089 = vmatprep.subr.bf16.mxu0 %v4389
    %5090 = vmatpush1.bf16.msra.mxu0 %v4388
    %5091 = vmatprep.subr.bf16.mxu0 %v4393
    %5092 = vmatpush1.bf16.msra.mxu0 %v4392
    %5093 = vmatprep.subr.bf16.mxu0 %v4397
    %5094 = vmatpush1.bf16.msra.mxu0 %v4396
    %5095 = vmatprep.subr.bf16.mxu0 %v4401
    %5096 = vmatpush1.bf16.msra.mxu0 %v4400
    %5097 = vmatprep.subr.bf16.mxu0 %v4405
    %5098 = vmatpush1.bf16.msra.mxu0 %v4404
    %5099 = vmatprep.subr.bf16.mxu0 %v4409
    %5100 = vmatpush1.bf16.msra.mxu0 %v4408
    %5101 = vmatprep.subr.bf16.mxu0 %v4413
    %5102 = vmatpush1.bf16.msra.mxu0 %v4412
    %5103 = vmatprep.subr.bf16.mxu0 %v4417
    %5104 = vmatpush1.bf16.msra.mxu0 %v4416
    %5105 = vmatprep.subr.bf16.mxu0 %v4421
    %5106 = vmatpush1.bf16.msra.mxu0 %v4420
    %5107 = vmatprep.subr.bf16.mxu0 %v4425
    %5108 = vmatpush1.bf16.msra.mxu0 %v4424
    %5109 = vmatprep.subr.bf16.mxu0 %v4429
    %5110 = vmatpush1.bf16.msra.mxu0 %v4428
    %5111 = vmatprep.subr.bf16.mxu0 %v4433
    %5112 = vmatpush1.bf16.msra.mxu0 %v4432
    %5113 = vmatprep.subr.bf16.mxu0 %v4437
    %5114 = vmatpush1.bf16.msra.mxu0 %v4436
    %5115 = vmatprep.subr.bf16.mxu0 %v4441
    %5116 = vmatpush1.bf16.msra.mxu0 %v4440
    %5117 = vmatprep.mubr.bf16.mxu0 %v2647
    %5118 = vmatmul.mubr.bf16.gmra.mrb[0].mxu0 %v2646
    %v5119 = vpop.f32.mrb[0].mxu0
    %v5120 = vadd.f32 %v5077, %v5119
    %v5121 = vpop.f32.mrb[0].mxu0
    %v5122 = vadd.f32 %v5079, %v5121
    %v5123 = vpop.f32.mrb[0].mxu0
    %v5124 = vadd.f32 %v5081, %v5123
    %v5125 = vpop.f32.mrb[0].mxu0
    %v5126 = vadd.f32 %v5083, %v5125
    %5127 = vdwg.mxu0
    %5128 = vmatprep.subr.bf16.mxu0 %v4445
    %5129 = vmatpush1.bf16.msra.mxu0 %v4444
    %5130 = vmatprep.subr.bf16.mxu0 %v4449
    %5131 = vmatpush1.bf16.msra.mxu0 %v4448
    %5132 = vmatprep.subr.bf16.mxu0 %v4453
    %5133 = vmatpush1.bf16.msra.mxu0 %v4452
    %5134 = vmatprep.subr.bf16.mxu0 %v4457
    %5135 = vmatpush1.bf16.msra.mxu0 %v4456
    %5136 = vmatprep.subr.bf16.mxu0 %v4461
    %5137 = vmatpush1.bf16.msra.mxu0 %v4460
    %5138 = vmatprep.subr.bf16.mxu0 %v4465
    %5139 = vmatpush1.bf16.msra.mxu0 %v4464
    %5140 = vmatprep.subr.bf16.mxu0 %v4469
    %5141 = vmatpush1.bf16.msra.mxu0 %v4468
    %5142 = vmatprep.subr.bf16.mxu0 %v4473
    %5143 = vmatpush1.bf16.msra.mxu0 %v4472
    %5144 = vmatprep.subr.bf16.mxu0 %v4477
    %5145 = vmatpush1.bf16.msra.mxu0 %v4476
    %5146 = vmatprep.subr.bf16.mxu0 %v4481
    %5147 = vmatpush1.bf16.msra.mxu0 %v4480
    %5148 = vmatprep.subr.bf16.mxu0 %v4485
    %5149 = vmatpush1.bf16.msra.mxu0 %v4484
    %5150 = vmatprep.subr.bf16.mxu0 %v4489
    %5151 = vmatpush1.bf16.msra.mxu0 %v4488
    %5152 = vmatprep.subr.bf16.mxu0 %v4493
    %5153 = vmatpush1.bf16.msra.mxu0 %v4492
    %5154 = vmatprep.subr.bf16.mxu0 %v4497
    %5155 = vmatpush1.bf16.msra.mxu0 %v4496
    %5156 = vmatprep.subr.bf16.mxu0 %v4501
    %5157 = vmatpush1.bf16.msra.mxu0 %v4500
    %5158 = vmatprep.subr.bf16.mxu0 %v4505
    %5159 = vmatpush1.bf16.msra.mxu0 %v4504
    %5160 = vmatprep.mubr.bf16.mxu0 %v2649
    %5161 = vmatmul.mubr.bf16.gmra.mrb[0].mxu0 %v2648
    %v5162 = vpop.f32.mrb[0].mxu0
    %v5163 = vadd.f32 %v5120, %v5162
    %v5164 = vpop.f32.mrb[0].mxu0
    %v5165 = vadd.f32 %v5122, %v5164
    %v5166 = vpop.f32.mrb[0].mxu0
    %v5167 = vadd.f32 %v5124, %v5166
    %v5168 = vpop.f32.mrb[0].mxu0
    %v5169 = vadd.f32 %v5126, %v5168
    %5170 = vdwg.mxu0
    %5171 = vmatprep.subr.bf16.mxu0 %v4509
    %5172 = vmatpush1.bf16.msra.mxu0 %v4508
    %5173 = vmatprep.subr.bf16.mxu0 %v4513
    %5174 = vmatpush1.bf16.msra.mxu0 %v4512
    %5175 = vmatprep.subr.bf16.mxu0 %v4517
    %5176 = vmatpush1.bf16.msra.mxu0 %v4516
    %5177 = vmatprep.subr.bf16.mxu0 %v4521
    %5178 = vmatpush1.bf16.msra.mxu0 %v4520
    %5179 = vmatprep.subr.bf16.mxu0 %v4525
    %5180 = vmatpush1.bf16.msra.mxu0 %v4524
    %5181 = vmatprep.subr.bf16.mxu0 %v4529
    %5182 = vmatpush1.bf16.msra.mxu0 %v4528
    %5183 = vmatprep.subr.bf16.mxu0 %v4533
    %5184 = vmatpush1.bf16.msra.mxu0 %v4532
    %5185 = vmatprep.subr.bf16.mxu0 %v4537
    %5186 = vmatpush1.bf16.msra.mxu0 %v4536
    %5187 = vmatprep.subr.bf16.mxu0 %v4541
    %5188 = vmatpush1.bf16.msra.mxu0 %v4540
    %5189 = vmatprep.subr.bf16.mxu0 %v4545
    %5190 = vmatpush1.bf16.msra.mxu0 %v4544
    %5191 = vmatprep.subr.bf16.mxu0 %v4549
    %5192 = vmatpush1.bf16.msra.mxu0 %v4548
    %5193 = vmatprep.subr.bf16.mxu0 %v4553
    %5194 = vmatpush1.bf16.msra.mxu0 %v4552
    %5195 = vmatprep.subr.bf16.mxu0 %v4557
    %5196 = vmatpush1.bf16.msra.mxu0 %v4556
    %5197 = vmatprep.subr.bf16.mxu0 %v4561
    %5198 = vmatpush1.bf16.msra.mxu0 %v4560
    %5199 = vmatprep.subr.bf16.mxu0 %v4565
    %5200 = vmatpush1.bf16.msra.mxu0 %v4564
    %5201 = vmatprep.subr.bf16.mxu0 %v4569
    %5202 = vmatpush1.bf16.msra.mxu0 %v4568
    %5203 = vmatprep.mubr.bf16.mxu0 %v2651
    %5204 = vmatmul.mubr.bf16.gmra.mrb[0].mxu0 %v2650
    %v5205 = vpop.f32.mrb[0].mxu0
    %v5206 = vadd.f32 %v5163, %v5205
    %v5207 = vpop.f32.mrb[0].mxu0
    %v5208 = vadd.f32 %v5165, %v5207
    %v5209 = vpop.f32.mrb[0].mxu0
    %v5210 = vadd.f32 %v5167, %v5209
    %v5211 = vpop.f32.mrb[0].mxu0
    %v5212 = vadd.f32 %v5169, %v5211
    %5213 = vdwg.mxu0
    %5214 = vmatprep.subr.bf16.mxu0 %v4191
    %5215 = vmatpush1.bf16.msra.mxu0 %v4190
    %5216 = vmatprep.subr.bf16.mxu0 %v4195
    %5217 = vmatpush1.bf16.msra.mxu0 %v4194
    %5218 = vmatprep.subr.bf16.mxu0 %v4199
    %5219 = vmatpush1.bf16.msra.mxu0 %v4198
    %5220 = vmatprep.subr.bf16.mxu0 %v4203
    %5221 = vmatpush1.bf16.msra.mxu0 %v4202
    %5222 = vmatprep.subr.bf16.mxu0 %v4207
    %5223 = vmatpush1.bf16.msra.mxu0 %v4206
    %5224 = vmatprep.subr.bf16.mxu0 %v4211
    %5225 = vmatpush1.bf16.msra.mxu0 %v4210
    %5226 = vmatprep.subr.bf16.mxu0 %v4215
    %5227 = vmatpush1.bf16.msra.mxu0 %v4214
    %5228 = vmatprep.subr.bf16.mxu0 %v4219
    %5229 = vmatpush1.bf16.msra.mxu0 %v4218
    %5230 = vmatprep.subr.bf16.mxu0 %v4223
    %5231 = vmatpush1.bf16.msra.mxu0 %v4222
    %5232 = vmatprep.subr.bf16.mxu0 %v4227
    %5233 = vmatpush1.bf16.msra.mxu0 %v4226
    %5234 = vmatprep.subr.bf16.mxu0 %v4231
    %5235 = vmatpush1.bf16.msra.mxu0 %v4230
    %5236 = vmatprep.subr.bf16.mxu0 %v4235
    %5237 = vmatpush1.bf16.msra.mxu0 %v4234
    %5238 = vmatprep.subr.bf16.mxu0 %v4239
    %5239 = vmatpush1.bf16.msra.mxu0 %v4238
    %5240 = vmatprep.subr.bf16.mxu0 %v4243
    %5241 = vmatpush1.bf16.msra.mxu0 %v4242
    %5242 = vmatprep.subr.bf16.mxu0 %v4247
    %5243 = vmatpush1.bf16.msra.mxu0 %v4246
    %5244 = vmatprep.subr.bf16.mxu0 %v4251
    %5245 = vmatpush1.bf16.msra.mxu0 %v4250
    %5246 = vmatprep.mubr.bf16.mxu0 %v2641
    %5247 = vmatmul.mubr.bf16.gmra.mrb[0].mxu0 %v2640
    %v5248 = vpop.f32.mrb[0].mxu0
    %v5249 = vadd.f32 0.0, %v5248
    %v5250 = vpop.f32.mrb[0].mxu0
    %v5251 = vadd.f32 0.0, %v5250
    %v5252 = vpop.f32.mrb[0].mxu0
    %v5253 = vadd.f32 0.0, %v5252
    %v5254 = vpop.f32.mrb[0].mxu0
    %v5255 = vadd.f32 0.0, %v5254
    %5256 = vdwg.mxu0
    %5257 = vmatprep.subr.bf16.mxu0 %v4255
    %5258 = vmatpush1.bf16.msra.mxu0 %v4254
    %5259 = vmatprep.subr.bf16.mxu0 %v4259
    %5260 = vmatpush1.bf16.msra.mxu0 %v4258
    %5261 = vmatprep.subr.bf16.mxu0 %v4263
    %5262 = vmatpush1.bf16.msra.mxu0 %v4262
    %5263 = vmatprep.subr.bf16.mxu0 %v4267
    %5264 = vmatpush1.bf16.msra.mxu0 %v4266
    %5265 = vmatprep.subr.bf16.mxu0 %v4271
    %5266 = vmatpush1.bf16.msra.mxu0 %v4270
    %5267 = vmatprep.subr.bf16.mxu0 %v4275
    %5268 = vmatpush1.bf16.msra.mxu0 %v4274
    %5269 = vmatprep.subr.bf16.mxu0 %v4279
    %5270 = vmatpush1.bf16.msra.mxu0 %v4278
    %5271 = vmatprep.subr.bf16.mxu0 %v4283
    %5272 = vmatpush1.bf16.msra.mxu0 %v4282
    %5273 = vmatprep.subr.bf16.mxu0 %v4287
    %5274 = vmatpush1.bf16.msra.mxu0 %v4286
    %5275 = vmatprep.subr.bf16.mxu0 %v4291
    %5276 = vmatpush1.bf16.msra.mxu0 %v4290
    %5277 = vmatprep.subr.bf16.mxu0 %v4295
    %5278 = vmatpush1.bf16.msra.mxu0 %v4294
    %5279 = vmatprep.subr.bf16.mxu0 %v4299
    %5280 = vmatpush1.bf16.msra.mxu0 %v4298
    %5281 = vmatprep.subr.bf16.mxu0 %v4303
    %5282 = vmatpush1.bf16.msra.mxu0 %v4302
    %5283 = vmatprep.subr.bf16.mxu0 %v4307
    %5284 = vmatpush1.bf16.msra.mxu0 %v4306
    %5285 = vmatprep.subr.bf16.mxu0 %v4311
    %5286 = vmatpush1.bf16.msra.mxu0 %v4310
    %5287 = vmatprep.subr.bf16.mxu0 %v4315
    %5288 = vmatpush1.bf16.msra.mxu0 %v4314
    %5289 = vmatprep.mubr.bf16.mxu0 %v2643
    %5290 = vmatmul.mubr.bf16.gmra.mrb[0].mxu0 %v2642
    %v5291 = vpop.f32.mrb[0].mxu0
    %v5292 = vadd.f32 %v5249, %v5291
    %v5293 = vpop.f32.mrb[0].mxu0
    %v5294 = vadd.f32 %v5251, %v5293
    %v5295 = vpop.f32.mrb[0].mxu0
    %v5296 = vadd.f32 %v5253, %v5295
    %v5297 = vpop.f32.mrb[0].mxu0
    %v5298 = vadd.f32 %v5255, %v5297
    %5299 = vdwg.mxu0
    %5300 = vmatprep.subr.bf16.mxu0 %v4319
    %5301 = vmatpush1.bf16.msra.mxu0 %v4318
    %5302 = vmatprep.subr.bf16.mxu0 %v4323
    %5303 = vmatpush1.bf16.msra.mxu0 %v4322
    %5304 = vmatprep.subr.bf16.mxu0 %v4327
    %5305 = vmatpush1.bf16.msra.mxu0 %v4326
    %5306 = vmatprep.subr.bf16.mxu0 %v4331
    %5307 = vmatpush1.bf16.msra.mxu0 %v4330
    %5308 = vmatprep.subr.bf16.mxu0 %v4335
    %5309 = vmatpush1.bf16.msra.mxu0 %v4334
    %5310 = vmatprep.subr.bf16.mxu0 %v4339
    %5311 = vmatpush1.bf16.msra.mxu0 %v4338
    %5312 = vmatprep.subr.bf16.mxu0 %v4343
    %5313 = vmatpush1.bf16.msra.mxu0 %v4342
    %5314 = vmatprep.subr.bf16.mxu0 %v4347
    %5315 = vmatpush1.bf16.msra.mxu0 %v4346
    %5316 = vmatprep.subr.bf16.mxu0 %v4351
    %5317 = vmatpush1.bf16.msra.mxu0 %v4350
    %5318 = vmatprep.subr.bf16.mxu0 %v4355
    %5319 = vmatpush1.bf16.msra.mxu0 %v4354
    %5320 = vmatprep.subr.bf16.mxu0 %v4359
    %5321 = vmatpush1.bf16.msra.mxu0 %v4358
    %5322 = vmatprep.subr.bf16.mxu0 %v4363
    %5323 = vmatpush1.bf16.msra.mxu0 %v4362
    %5324 = vmatprep.subr.bf16.mxu0 %v4367
    %5325 = vmatpush1.bf16.msra.mxu0 %v4366
    %5326 = vmatprep.subr.bf16.mxu0 %v4371
    %5327 = vmatpush1.bf16.msra.mxu0 %v4370
    %5328 = vmatprep.subr.bf16.mxu0 %v4375
    %5329 = vmatpush1.bf16.msra.mxu0 %v4374
    %5330 = vmatprep.subr.bf16.mxu0 %v4379
    %5331 = vmatpush1.bf16.msra.mxu0 %v4378
    %5332 = vmatprep.mubr.bf16.mxu0 %v2645
    %5333 = vmatmul.mubr.bf16.gmra.mrb[0].mxu0 %v2644
    %v5334 = vpop.f32.mrb[0].mxu0
    %v5335 = vadd.f32 %v5292, %v5334
    %v5336 = vpop.f32.mrb[0].mxu0
    %v5337 = vadd.f32 %v5294, %v5336
    %v5338 = vpop.f32.mrb[0].mxu0
    %v5339 = vadd.f32 %v5296, %v5338
    %v5340 = vpop.f32.mrb[0].mxu0
    %v5341 = vadd.f32 %v5298, %v5340
    %5342 = vdwg.mxu0
    %5343 = vmatprep.subr.bf16.mxu0 %v4383
    %5344 = vmatpush1.bf16.msra.mxu0 %v4382
    %5345 = vmatprep.subr.bf16.mxu0 %v4387
    %5346 = vmatpush1.bf16.msra.mxu0 %v4386
    %5347 = vmatprep.subr.bf16.mxu0 %v4391
    %5348 = vmatpush1.bf16.msra.mxu0 %v4390
    %5349 = vmatprep.subr.bf16.mxu0 %v4395
    %5350 = vmatpush1.bf16.msra.mxu0 %v4394
    %5351 = vmatprep.subr.bf16.mxu0 %v4399
    %5352 = vmatpush1.bf16.msra.mxu0 %v4398
    %5353 = vmatprep.subr.bf16.mxu0 %v4403
    %5354 = vmatpush1.bf16.msra.mxu0 %v4402
    %5355 = vmatprep.subr.bf16.mxu0 %v4407
    %5356 = vmatpush1.bf16.msra.mxu0 %v4406
    %5357 = vmatprep.subr.bf16.mxu0 %v4411
    %5358 = vmatpush1.bf16.msra.mxu0 %v4410
    %5359 = vmatprep.subr.bf16.mxu0 %v4415
    %5360 = vmatpush1.bf16.msra.mxu0 %v4414
    %5361 = vmatprep.subr.bf16.mxu0 %v4419
    %5362 = vmatpush1.bf16.msra.mxu0 %v4418
    %5363 = vmatprep.subr.bf16.mxu0 %v4423
    %5364 = vmatpush1.bf16.msra.mxu0 %v4422
    %5365 = vmatprep.subr.bf16.mxu0 %v4427
    %5366 = vmatpush1.bf16.msra.mxu0 %v4426
    %5367 = vmatprep.subr.bf16.mxu0 %v4431
    %5368 = vmatpush1.bf16.msra.mxu0 %v4430
    %5369 = vmatprep.subr.bf16.mxu0 %v4435
    %5370 = vmatpush1.bf16.msra.mxu0 %v4434
    %5371 = vmatprep.subr.bf16.mxu0 %v4439
    %5372 = vmatpush1.bf16.msra.mxu0 %v4438
    %5373 = vmatprep.subr.bf16.mxu0 %v4443
    %5374 = vmatpush1.bf16.msra.mxu0 %v4442
    %5375 = vmatprep.mubr.bf16.mxu0 %v2647
    %5376 = vmatmul.mubr.bf16.gmra.mrb[0].mxu0 %v2646
    %v5377 = vpop.f32.mrb[0].mxu0
    %v5378 = vadd.f32 %v5335, %v5377
    %v5379 = vpop.f32.mrb[0].mxu0
    %v5380 = vadd.f32 %v5337, %v5379
    %v5381 = vpop.f32.mrb[0].mxu0
    %v5382 = vadd.f32 %v5339, %v5381
    %v5383 = vpop.f32.mrb[0].mxu0
    %v5384 = vadd.f32 %v5341, %v5383
    %5385 = vdwg.mxu0
    %5386 = vmatprep.subr.bf16.mxu0 %v4447
    %5387 = vmatpush1.bf16.msra.mxu0 %v4446
    %5388 = vmatprep.subr.bf16.mxu0 %v4451
    %5389 = vmatpush1.bf16.msra.mxu0 %v4450
    %5390 = vmatprep.subr.bf16.mxu0 %v4455
    %5391 = vmatpush1.bf16.msra.mxu0 %v4454
    %5392 = vmatprep.subr.bf16.mxu0 %v4459
    %5393 = vmatpush1.bf16.msra.mxu0 %v4458
    %5394 = vmatprep.subr.bf16.mxu0 %v4463
    %5395 = vmatpush1.bf16.msra.mxu0 %v4462
    %5396 = vmatprep.subr.bf16.mxu0 %v4467
    %5397 = vmatpush1.bf16.msra.mxu0 %v4466
    %5398 = vmatprep.subr.bf16.mxu0 %v4471
    %5399 = vmatpush1.bf16.msra.mxu0 %v4470
    %5400 = vmatprep.subr.bf16.mxu0 %v4475
    %5401 = vmatpush1.bf16.msra.mxu0 %v4474
    %5402 = vmatprep.subr.bf16.mxu0 %v4479
    %5403 = vmatpush1.bf16.msra.mxu0 %v4478
    %5404 = vmatprep.subr.bf16.mxu0 %v4483
    %5405 = vmatpush1.bf16.msra.mxu0 %v4482
    %5406 = vmatprep.subr.bf16.mxu0 %v4487
    %5407 = vmatpush1.bf16.msra.mxu0 %v4486
    %5408 = vmatprep.subr.bf16.mxu0 %v4491
    %5409 = vmatpush1.bf16.msra.mxu0 %v4490
    %5410 = vmatprep.subr.bf16.mxu0 %v4495
    %5411 = vmatpush1.bf16.msra.mxu0 %v4494
    %5412 = vmatprep.subr.bf16.mxu0 %v4499
    %5413 = vmatpush1.bf16.msra.mxu0 %v4498
    %5414 = vmatprep.subr.bf16.mxu0 %v4503
    %5415 = vmatpush1.bf16.msra.mxu0 %v4502
    %5416 = vmatprep.subr.bf16.mxu0 %v4507
    %5417 = vmatpush1.bf16.msra.mxu0 %v4506
    %5418 = vmatprep.mubr.bf16.mxu0 %v2649
    %5419 = vmatmul.mubr.bf16.gmra.mrb[0].mxu0 %v2648
    %v5420 = vpop.f32.mrb[0].mxu0
    %v5421 = vadd.f32 %v5378, %v5420
    %v5422 = vpop.f32.mrb[0].mxu0
    %v5423 = vadd.f32 %v5380, %v5422
    %v5424 = vpop.f32.mrb[0].mxu0
    %v5425 = vadd.f32 %v5382, %v5424
    %v5426 = vpop.f32.mrb[0].mxu0
    %v5427 = vadd.f32 %v5384, %v5426
    %5428 = vdwg.mxu0
    %5429 = vmatprep.subr.bf16.mxu0 %v4511
    %5430 = vmatpush1.bf16.msra.mxu0 %v4510
    %5431 = vmatprep.subr.bf16.mxu0 %v4515
    %5432 = vmatpush1.bf16.msra.mxu0 %v4514
    %5433 = vmatprep.subr.bf16.mxu0 %v4519
    %5434 = vmatpush1.bf16.msra.mxu0 %v4518
    %5435 = vmatprep.subr.bf16.mxu0 %v4523
    %5436 = vmatpush1.bf16.msra.mxu0 %v4522
    %5437 = vmatprep.subr.bf16.mxu0 %v4527
    %5438 = vmatpush1.bf16.msra.mxu0 %v4526
    %5439 = vmatprep.subr.bf16.mxu0 %v4531
    %5440 = vmatpush1.bf16.msra.mxu0 %v4530
    %5441 = vmatprep.subr.bf16.mxu0 %v4535
    %5442 = vmatpush1.bf16.msra.mxu0 %v4534
    %5443 = vmatprep.subr.bf16.mxu0 %v4539
    %5444 = vmatpush1.bf16.msra.mxu0 %v4538
    %5445 = vmatprep.subr.bf16.mxu0 %v4543
    %5446 = vmatpush1.bf16.msra.mxu0 %v4542
    %5447 = vmatprep.subr.bf16.mxu0 %v4547
    %5448 = vmatpush1.bf16.msra.mxu0 %v4546
    %5449 = vmatprep.subr.bf16.mxu0 %v4551
    %5450 = vmatpush1.bf16.msra.mxu0 %v4550
    %5451 = vmatprep.subr.bf16.mxu0 %v4555
    %5452 = vmatpush1.bf16.msra.mxu0 %v4554
    %5453 = vmatprep.subr.bf16.mxu0 %v4559
    %5454 = vmatpush1.bf16.msra.mxu0 %v4558
    %5455 = vmatprep.subr.bf16.mxu0 %v4563
    %5456 = vmatpush1.bf16.msra.mxu0 %v4562
    %5457 = vmatprep.subr.bf16.mxu0 %v4567
    %5458 = vmatpush1.bf16.msra.mxu0 %v4566
    %5459 = vmatprep.subr.bf16.mxu0 %v4571
    %5460 = vmatpush1.bf16.msra.mxu0 %v4570
    %5461 = vmatprep.mubr.bf16.mxu0 %v2651
    %5462 = vmatmul.mubr.bf16.gmra.mrb[0].mxu0 %v2650
    %v5463 = vpop.f32.mrb[0].mxu0
    %v5464 = vadd.f32 %v5421, %v5463
    %v5465 = vpop.f32.mrb[0].mxu0
    %v5466 = vadd.f32 %v5423, %v5465
    %v5467 = vpop.f32.mrb[0].mxu0
    %v5468 = vadd.f32 %v5425, %v5467
    %v5469 = vpop.f32.mrb[0].mxu0
    %v5470 = vadd.f32 %v5427, %v5469
    %5471 = vdwg.mxu0
    %5472 = vst [vmem:[#allocation6] sm:$0xff] %v5206
    %5473 = vst [vmem:[#allocation6 + $0x8] sm:$0xff] %v5208
    %5474 = vst [vmem:[#allocation6 + $0x10] sm:$0xff] %v5464
    %5475 = vst [vmem:[#allocation6 + $0x18] sm:$0xff] %v5466
    %5476 = vst [vmem:[#allocation6 + $0x20] sm:$0xff] %v5210
    %5477 = vst [vmem:[#allocation6 + $0x28] sm:$0xff] %v5212
    %5478 = vst [vmem:[#allocation6 + $0x30] sm:$0xff] %v5468
    %5479 = vst [vmem:[#allocation6 + $0x38] sm:$0xff] %v5470
    %v5480 = vld [vmem:[%s7] sm:$0xf]
    %v5481 = vld [vmem:[#allocation6] sm:$0x3]
    %v5482 = vld [vmem:[#allocation6 + $0x8] sm:$0x3]
    %v5483 = vld [vmem:[#allocation6 + $0x10] sm:$0x3]
    %v5484 = vld [vmem:[#allocation6 + $0x18] sm:$0x3]
    %v5486 = vlaneseq
    %v5487 = vshrl.u32 %v5486, 7
    %v5488 = vsub.s32 0, %v5487
    %v5489 = vrot.slane %v5480, %v5488
    %v5490 = vlaneseq
    %v5491 = vshrl.u32 %v5490, 7
    %v5492 = vsub.s32 1, %v5491
    %v5493 = vrot.slane %v5480, %v5492
    %v5494 = vlaneseq
    %v5495 = vshrl.u32 %v5494, 7
    %v5496 = vsub.s32 2, %v5495
    %v5497 = vrot.slane %v5480, %v5496
    %v5498 = vlaneseq
    %v5499 = vshrl.u32 %v5498, 7
    %v5500 = vsub.s32 3, %v5499
    %v5501 = vrot.slane %v5480, %v5500
    %v5506 = vadd.f32 %v5481, %v5489
    %v5507 = vadd.f32 %v5482, %v5493
    %v5508 = vadd.f32 %v5483, %v5497
    %v5509 = vadd.f32 %v5484, %v5501
    %v5510 = vmax.f32 %v5506, 0.0
    %v5511 = vmax.f32 %v5507, 0.0
    %v5512 = vmax.f32 %v5508, 0.0
    %v5513 = vmax.f32 %v5509, 0.0
    %v5514 = vpack.c.bf16 %v5510, %v5510
    %v5515 = vpack.c.bf16 %v5511, %v5511
    %v5516 = vpack.c.bf16 %v5512, %v5512
    %v5517 = vpack.c.bf16 %v5513, %v5513
    %v5518 = vld [vmem:[%s4] sm:$0xf]
    %v5519 = vld [vmem:[%s4 + $0x4] sm:$0xf]
    %v5520 = vld [vmem:[%s4 + $0x8] sm:$0xf]
    %v5521 = vld [vmem:[%s4 + $0xc] sm:$0xf]
    %v5522 = vld [vmem:[%s4 + $0x10] sm:$0xf]
    %v5523 = vld [vmem:[%s4 + $0x14] sm:$0xf]
    %v5524 = vld [vmem:[%s4 + $0x18] sm:$0xf]
    %v5525 = vld [vmem:[%s4 + $0x1c] sm:$0xf]
    %v5526 = vld [vmem:[%s4 + $0x20] sm:$0xf]
    %v5527 = vld [vmem:[%s4 + $0x24] sm:$0xf]
    %v5528 = vld [vmem:[%s4 + $0x28] sm:$0xf]
    %v5529 = vld [vmem:[%s4 + $0x2c] sm:$0xf]
    %v5530 = vld [vmem:[%s4 + $0x30] sm:$0xf]
    %v5531 = vld [vmem:[%s4 + $0x34] sm:$0xf]
    %v5532 = vld [vmem:[%s4 + $0x38] sm:$0xf]
    %v5533 = vld [vmem:[%s4 + $0x3c] sm:$0xf]
    %v5534 = vld [vmem:[%s4 + $0x40] sm:$0xf]
    %v5535 = vld [vmem:[%s4 + $0x44] sm:$0xf]
    %v5536 = vld [vmem:[%s4 + $0x48] sm:$0xf]
    %v5537 = vld [vmem:[%s4 + $0x4c] sm:$0xf]
    %v5538 = vld [vmem:[%s4 + $0x50] sm:$0xf]
    %v5539 = vld [vmem:[%s4 + $0x54] sm:$0xf]
    %v5540 = vld [vmem:[%s4 + $0x58] sm:$0xf]
    %v5541 = vld [vmem:[%s4 + $0x5c] sm:$0xf]
    %v5542 = vld [vmem:[%s4 + $0x60] sm:$0xf]
    %v5543 = vld [vmem:[%s4 + $0x64] sm:$0xf]
    %v5544 = vld [vmem:[%s4 + $0x68] sm:$0xf]
    %v5545 = vld [vmem:[%s4 + $0x6c] sm:$0xf]
    %v5546 = vld [vmem:[%s4 + $0x70] sm:$0xf]
    %v5547 = vld [vmem:[%s4 + $0x74] sm:$0xf]
    %v5548 = vld [vmem:[%s4 + $0x78] sm:$0xf]
    %v5549 = vld [vmem:[%s4 + $0x7c] sm:$0xf]
    %v5550 = vld [vmem:[%s4 + $0x80] sm:$0xf]
    %v5551 = vld [vmem:[%s4 + $0x84] sm:$0xf]
    %v5552 = vld [vmem:[%s4 + $0x88] sm:$0xf]
    %v5553 = vld [vmem:[%s4 + $0x8c] sm:$0xf]
    %v5554 = vld [vmem:[%s4 + $0x90] sm:$0xf]
    %v5555 = vld [vmem:[%s4 + $0x94] sm:$0xf]
    %v5556 = vld [vmem:[%s4 + $0x98] sm:$0xf]
    %v5557 = vld [vmem:[%s4 + $0x9c] sm:$0xf]
    %v5558 = vld [vmem:[%s4 + $0xa0] sm:$0xf]
    %v5559 = vld [vmem:[%s4 + $0xa4] sm:$0xf]
    %v5560 = vld [vmem:[%s4 + $0xa8] sm:$0xf]
    %v5561 = vld [vmem:[%s4 + $0xac] sm:$0xf]
    %v5562 = vld [vmem:[%s4 + $0xb0] sm:$0xf]
    %v5563 = vld [vmem:[%s4 + $0xb4] sm:$0xf]
    %v5564 = vld [vmem:[%s4 + $0xb8] sm:$0xf]
    %v5565 = vld [vmem:[%s4 + $0xbc] sm:$0xf]
    %v5566 = vld [vmem:[%s4 + $0xc0] sm:$0xf]
    %v5567 = vld [vmem:[%s4 + $0xc4] sm:$0xf]
    %v5568 = vld [vmem:[%s4 + $0xc8] sm:$0xf]
    %v5569 = vld [vmem:[%s4 + $0xcc] sm:$0xf]
    %v5570 = vld [vmem:[%s4 + $0xd0] sm:$0xf]
    %v5571 = vld [vmem:[%s4 + $0xd4] sm:$0xf]
    %v5572 = vld [vmem:[%s4 + $0xd8] sm:$0xf]
    %v5573 = vld [vmem:[%s4 + $0xdc] sm:$0xf]
    %v5574 = vld [vmem:[%s4 + $0xe0] sm:$0xf]
    %v5575 = vld [vmem:[%s4 + $0xe4] sm:$0xf]
    %v5576 = vld [vmem:[%s4 + $0xe8] sm:$0xf]
    %v5577 = vld [vmem:[%s4 + $0xec] sm:$0xf]
    %v5578 = vld [vmem:[%s4 + $0xf0] sm:$0xf]
    %v5579 = vld [vmem:[%s4 + $0xf4] sm:$0xf]
    %v5580 = vld [vmem:[%s4 + $0xf8] sm:$0xf]
    %v5581 = vld [vmem:[%s4 + $0xfc] sm:$0xf]
    %v5582 = vld [vmem:[#allocation6] sm:$0xc]
    %v5583 = vld [vmem:[#allocation6 + $0x8] sm:$0xc]
    %v5584 = vld [vmem:[#allocation6 + $0x10] sm:$0xc]
    %v5585 = vld [vmem:[#allocation6 + $0x18] sm:$0xc]
    %v5586 = vadd.f32 %v5582, %v5489
    %v5587 = vadd.f32 %v5583, %v5493
    %v5588 = vadd.f32 %v5584, %v5497
    %v5589 = vadd.f32 %v5585, %v5501
    %v5590 = vmax.f32 %v5586, 0.0
    %v5591 = vmax.f32 %v5587, 0.0
    %v5592 = vmax.f32 %v5588, 0.0
    %v5593 = vmax.f32 %v5589, 0.0
    %v5594 = vpack.c.bf16 %v5590, %v5590
    %v5595 = vpack.c.bf16 %v5591, %v5591
    %v5596 = vpack.c.bf16 %v5592, %v5592
    %v5597 = vpack.c.bf16 %v5593, %v5593
    %s5598 = scalar_lea.vmem %s4, 256
    %v5599 = vld [vmem:[%s5598] sm:$0xf]
    %v5600 = vld [vmem:[%s5598 + $0x4] sm:$0xf]
    %v5601 = vld [vmem:[%s5598 + $0x8] sm:$0xf]
    %v5602 = vld [vmem:[%s5598 + $0xc] sm:$0xf]
    %v5603 = vld [vmem:[%s5598 + $0x10] sm:$0xf]
    %v5604 = vld [vmem:[%s5598 + $0x14] sm:$0xf]
    %v5605 = vld [vmem:[%s5598 + $0x18] sm:$0xf]
    %v5606 = vld [vmem:[%s5598 + $0x1c] sm:$0xf]
    %v5607 = vld [vmem:[%s5598 + $0x20] sm:$0xf]
    %v5608 = vld [vmem:[%s5598 + $0x24] sm:$0xf]
    %v5609 = vld [vmem:[%s5598 + $0x28] sm:$0xf]
    %v5610 = vld [vmem:[%s5598 + $0x2c] sm:$0xf]
    %v5611 = vld [vmem:[%s5598 + $0x30] sm:$0xf]
    %v5612 = vld [vmem:[%s5598 + $0x34] sm:$0xf]
    %v5613 = vld [vmem:[%s5598 + $0x38] sm:$0xf]
    %v5614 = vld [vmem:[%s5598 + $0x3c] sm:$0xf]
    %v5615 = vld [vmem:[%s5598 + $0x40] sm:$0xf]
    %v5616 = vld [vmem:[%s5598 + $0x44] sm:$0xf]
    %v5617 = vld [vmem:[%s5598 + $0x48] sm:$0xf]
    %v5618 = vld [vmem:[%s5598 + $0x4c] sm:$0xf]
    %v5619 = vld [vmem:[%s5598 + $0x50] sm:$0xf]
    %v5620 = vld [vmem:[%s5598 + $0x54] sm:$0xf]
    %v5621 = vld [vmem:[%s5598 + $0x58] sm:$0xf]
    %v5622 = vld [vmem:[%s5598 + $0x5c] sm:$0xf]
    %v5623 = vld [vmem:[%s5598 + $0x60] sm:$0xf]
    %v5624 = vld [vmem:[%s5598 + $0x64] sm:$0xf]
    %v5625 = vld [vmem:[%s5598 + $0x68] sm:$0xf]
    %v5626 = vld [vmem:[%s5598 + $0x6c] sm:$0xf]
    %v5627 = vld [vmem:[%s5598 + $0x70] sm:$0xf]
    %v5628 = vld [vmem:[%s5598 + $0x74] sm:$0xf]
    %v5629 = vld [vmem:[%s5598 + $0x78] sm:$0xf]
    %v5630 = vld [vmem:[%s5598 + $0x7c] sm:$0xf]
    %v5631 = vld [vmem:[%s5598 + $0x80] sm:$0xf]
    %v5632 = vld [vmem:[%s5598 + $0x84] sm:$0xf]
    %v5633 = vld [vmem:[%s5598 + $0x88] sm:$0xf]
    %v5634 = vld [vmem:[%s5598 + $0x8c] sm:$0xf]
    %v5635 = vld [vmem:[%s5598 + $0x90] sm:$0xf]
    %v5636 = vld [vmem:[%s5598 + $0x94] sm:$0xf]
    %v5637 = vld [vmem:[%s5598 + $0x98] sm:$0xf]
    %v5638 = vld [vmem:[%s5598 + $0x9c] sm:$0xf]
    %v5639 = vld [vmem:[%s5598 + $0xa0] sm:$0xf]
    %v5640 = vld [vmem:[%s5598 + $0xa4] sm:$0xf]
    %v5641 = vld [vmem:[%s5598 + $0xa8] sm:$0xf]
    %v5642 = vld [vmem:[%s5598 + $0xac] sm:$0xf]
    %v5643 = vld [vmem:[%s5598 + $0xb0] sm:$0xf]
    %v5644 = vld [vmem:[%s5598 + $0xb4] sm:$0xf]
    %v5645 = vld [vmem:[%s5598 + $0xb8] sm:$0xf]
    %v5646 = vld [vmem:[%s5598 + $0xbc] sm:$0xf]
    %v5647 = vld [vmem:[%s5598 + $0xc0] sm:$0xf]
    %v5648 = vld [vmem:[%s5598 + $0xc4] sm:$0xf]
    %v5649 = vld [vmem:[%s5598 + $0xc8] sm:$0xf]
    %v5650 = vld [vmem:[%s5598 + $0xcc] sm:$0xf]
    %v5651 = vld [vmem:[%s5598 + $0xd0] sm:$0xf]
    %v5652 = vld [vmem:[%s5598 + $0xd4] sm:$0xf]
    %v5653 = vld [vmem:[%s5598 + $0xd8] sm:$0xf]
    %v5654 = vld [vmem:[%s5598 + $0xdc] sm:$0xf]
    %v5655 = vld [vmem:[%s5598 + $0xe0] sm:$0xf]
    %v5656 = vld [vmem:[%s5598 + $0xe4] sm:$0xf]
    %v5657 = vld [vmem:[%s5598 + $0xe8] sm:$0xf]
    %v5658 = vld [vmem:[%s5598 + $0xec] sm:$0xf]
    %v5659 = vld [vmem:[%s5598 + $0xf0] sm:$0xf]
    %v5660 = vld [vmem:[%s5598 + $0xf4] sm:$0xf]
    %v5661 = vld [vmem:[%s5598 + $0xf8] sm:$0xf]
    %v5662 = vld [vmem:[%s5598 + $0xfc] sm:$0xf]
    %v5667 = vrot.slane %v5594, 1
    %v5668 = vrot.slane %v5595, 1
    %v5669 = vrot.slane %v5596, 1
    %v5670 = vrot.slane %v5597, 1
    %v5739 = vunpack.c.l.b16 %v5599
    %v5740 = vunpack.c.l.b16 %v5600
    %v5741 = vunpack.c.l.b16 %v5601
    %v5742 = vunpack.c.l.b16 %v5602
    %v5743 = vunpack.c.l.b16 %v5603
    %v5744 = vunpack.c.l.b16 %v5604
    %v5745 = vunpack.c.l.b16 %v5605
    %v5746 = vunpack.c.l.b16 %v5606
    %v5747 = vunpack.c.l.b16 %v5607
    %v5748 = vunpack.c.l.b16 %v5608
    %v5749 = vunpack.c.l.b16 %v5609
    %v5750 = vunpack.c.l.b16 %v5610
    %v5751 = vunpack.c.l.b16 %v5611
    %v5752 = vunpack.c.l.b16 %v5612
    %v5753 = vunpack.c.l.b16 %v5613
    %v5754 = vunpack.c.l.b16 %v5614
    %v5755 = vunpack.c.l.b16 %v5615
    %v5756 = vunpack.c.l.b16 %v5616
    %v5757 = vunpack.c.l.b16 %v5617
    %v5758 = vunpack.c.l.b16 %v5618
    %v5759 = vunpack.c.l.b16 %v5619
    %v5760 = vunpack.c.l.b16 %v5620
    %v5761 = vunpack.c.l.b16 %v5621
    %v5762 = vunpack.c.l.b16 %v5622
    %v5763 = vunpack.c.l.b16 %v5623
    %v5764 = vunpack.c.l.b16 %v5624
    %v5765 = vunpack.c.l.b16 %v5625
    %v5766 = vunpack.c.l.b16 %v5626
    %v5767 = vunpack.c.l.b16 %v5627
    %v5768 = vunpack.c.l.b16 %v5628
    %v5769 = vunpack.c.l.b16 %v5629
    %v5770 = vunpack.c.l.b16 %v5630
    %v5771 = vunpack.c.l.b16 %v5631
    %v5772 = vunpack.c.l.b16 %v5632
    %v5773 = vunpack.c.l.b16 %v5633
    %v5774 = vunpack.c.l.b16 %v5634
    %v5775 = vunpack.c.l.b16 %v5635
    %v5776 = vunpack.c.l.b16 %v5636
    %v5777 = vunpack.c.l.b16 %v5637
    %v5778 = vunpack.c.l.b16 %v5638
    %v5779 = vunpack.c.l.b16 %v5639
    %v5780 = vunpack.c.l.b16 %v5640
    %v5781 = vunpack.c.l.b16 %v5641
    %v5782 = vunpack.c.l.b16 %v5642
    %v5783 = vunpack.c.l.b16 %v5643
    %v5784 = vunpack.c.l.b16 %v5644
    %v5785 = vunpack.c.l.b16 %v5645
    %v5786 = vunpack.c.l.b16 %v5646
    %v5787 = vunpack.c.l.b16 %v5647
    %v5788 = vunpack.c.l.b16 %v5648
    %v5789 = vunpack.c.l.b16 %v5649
    %v5790 = vunpack.c.l.b16 %v5650
    %v5791 = vunpack.c.l.b16 %v5651
    %v5792 = vunpack.c.l.b16 %v5652
    %v5793 = vunpack.c.l.b16 %v5653
    %v5794 = vunpack.c.l.b16 %v5654
    %v5795 = vunpack.c.l.b16 %v5655
    %v5796 = vunpack.c.l.b16 %v5656
    %v5797 = vunpack.c.l.b16 %v5657
    %v5798 = vunpack.c.l.b16 %v5658
    %v5799 = vunpack.c.l.b16 %v5659
    %v5800 = vunpack.c.l.b16 %v5660
    %v5801 = vunpack.c.l.b16 %v5661
    %v5802 = vunpack.c.l.b16 %v5662
    %v5803 = vpack.c.b16 %v5740, %v5739
    %v5804 = vpack.c.b16 %v5742, %v5741
    %v5805 = vpack.c.b16 %v5744, %v5743
    %v5806 = vpack.c.b16 %v5746, %v5745
    %v5807 = vpack.c.b16 %v5748, %v5747
    %v5808 = vpack.c.b16 %v5750, %v5749
    %v5809 = vpack.c.b16 %v5752, %v5751
    %v5810 = vpack.c.b16 %v5754, %v5753
    %v5811 = vpack.c.b16 %v5756, %v5755
    %v5812 = vpack.c.b16 %v5758, %v5757
    %v5813 = vpack.c.b16 %v5760, %v5759
    %v5814 = vpack.c.b16 %v5762, %v5761
    %v5815 = vpack.c.b16 %v5764, %v5763
    %v5816 = vpack.c.b16 %v5766, %v5765
    %v5817 = vpack.c.b16 %v5768, %v5767
    %v5818 = vpack.c.b16 %v5770, %v5769
    %v5819 = vpack.c.b16 %v5772, %v5771
    %v5820 = vpack.c.b16 %v5774, %v5773
    %v5821 = vpack.c.b16 %v5776, %v5775
    %v5822 = vpack.c.b16 %v5778, %v5777
    %v5823 = vpack.c.b16 %v5780, %v5779
    %v5824 = vpack.c.b16 %v5782, %v5781
    %v5825 = vpack.c.b16 %v5784, %v5783
    %v5826 = vpack.c.b16 %v5786, %v5785
    %v5827 = vpack.c.b16 %v5788, %v5787
    %v5828 = vpack.c.b16 %v5790, %v5789
    %v5829 = vpack.c.b16 %v5792, %v5791
    %v5830 = vpack.c.b16 %v5794, %v5793
    %v5831 = vpack.c.b16 %v5796, %v5795
    %v5832 = vpack.c.b16 %v5798, %v5797
    %v5833 = vpack.c.b16 %v5800, %v5799
    %v5834 = vpack.c.b16 %v5802, %v5801
    %5867 = vmatprep.subr.bf16.mxu0 0
    %5868 = vmatpush1.bf16.msra.mxu0 %v5803
    %5869 = vmatprep.subr.bf16.mxu0 0
    %5870 = vmatpush1.bf16.msra.mxu0 %v5804
    %5871 = vmatprep.subr.bf16.mxu0 0
    %5872 = vmatpush1.bf16.msra.mxu0 %v5805
    %5873 = vmatprep.subr.bf16.mxu0 0
    %5874 = vmatpush1.bf16.msra.mxu0 %v5806
    %5875 = vmatprep.subr.bf16.mxu0 0
    %5876 = vmatpush1.bf16.msra.mxu0 %v5807
    %5877 = vmatprep.subr.bf16.mxu0 0
    %5878 = vmatpush1.bf16.msra.mxu0 %v5808
    %5879 = vmatprep.subr.bf16.mxu0 0
    %5880 = vmatpush1.bf16.msra.mxu0 %v5809
    %5881 = vmatprep.subr.bf16.mxu0 0
    %5882 = vmatpush1.bf16.msra.mxu0 %v5810
    %5883 = vmatprep.subr.bf16.mxu0 0
    %5884 = vmatpush1.bf16.msra.mxu0 %v5811
    %5885 = vmatprep.subr.bf16.mxu0 0
    %5886 = vmatpush1.bf16.msra.mxu0 %v5812
    %5887 = vmatprep.subr.bf16.mxu0 0
    %5888 = vmatpush1.bf16.msra.mxu0 %v5813
    %5889 = vmatprep.subr.bf16.mxu0 0
    %5890 = vmatpush1.bf16.msra.mxu0 %v5814
    %5891 = vmatprep.subr.bf16.mxu0 0
    %5892 = vmatpush1.bf16.msra.mxu0 %v5815
    %5893 = vmatprep.subr.bf16.mxu0 0
    %5894 = vmatpush1.bf16.msra.mxu0 %v5816
    %5895 = vmatprep.subr.bf16.mxu0 0
    %5896 = vmatpush1.bf16.msra.mxu0 %v5817
    %5897 = vmatprep.subr.bf16.mxu0 0
    %5898 = vmatpush1.bf16.msra.mxu0 %v5818
    %5899 = vmatprep.mubr.bf16.mxu0 %v5668
    %5900 = vmatmul.mubr.bf16.gmra.mrb[0].mxu0 %v5667
    %v5901 = vpop.f32.mrb[0].mxu0
    %v5902 = vadd.f32 0.0, %v5901
    %v5903 = vpop.f32.mrb[0].mxu0
    %v5904 = vpop.f32.mrb[0].mxu0
    %v5905 = vpop.f32.mrb[0].mxu0
    %5906 = vdwg.mxu0
    %5907 = vmatprep.subr.bf16.mxu0 0
    %5908 = vmatpush1.bf16.msra.mxu0 %v5819
    %5909 = vmatprep.subr.bf16.mxu0 0
    %5910 = vmatpush1.bf16.msra.mxu0 %v5820
    %5911 = vmatprep.subr.bf16.mxu0 0
    %5912 = vmatpush1.bf16.msra.mxu0 %v5821
    %5913 = vmatprep.subr.bf16.mxu0 0
    %5914 = vmatpush1.bf16.msra.mxu0 %v5822
    %5915 = vmatprep.subr.bf16.mxu0 0
    %5916 = vmatpush1.bf16.msra.mxu0 %v5823
    %5917 = vmatprep.subr.bf16.mxu0 0
    %5918 = vmatpush1.bf16.msra.mxu0 %v5824
    %5919 = vmatprep.subr.bf16.mxu0 0
    %5920 = vmatpush1.bf16.msra.mxu0 %v5825
    %5921 = vmatprep.subr.bf16.mxu0 0
    %5922 = vmatpush1.bf16.msra.mxu0 %v5826
    %5923 = vmatprep.subr.bf16.mxu0 0
    %5924 = vmatpush1.bf16.msra.mxu0 %v5827
    %5925 = vmatprep.subr.bf16.mxu0 0
    %5926 = vmatpush1.bf16.msra.mxu0 %v5828
    %5927 = vmatprep.subr.bf16.mxu0 0
    %5928 = vmatpush1.bf16.msra.mxu0 %v5829
    %5929 = vmatprep.subr.bf16.mxu0 0
    %5930 = vmatpush1.bf16.msra.mxu0 %v5830
    %5931 = vmatprep.subr.bf16.mxu0 0
    %5932 = vmatpush1.bf16.msra.mxu0 %v5831
    %5933 = vmatprep.subr.bf16.mxu0 0
    %5934 = vmatpush1.bf16.msra.mxu0 %v5832
    %5935 = vmatprep.subr.bf16.mxu0 0
    %5936 = vmatpush1.bf16.msra.mxu0 %v5833
    %5937 = vmatprep.subr.bf16.mxu0 0
    %5938 = vmatpush1.bf16.msra.mxu0 %v5834
    %5939 = vmatprep.mubr.bf16.mxu0 %v5670
    %5940 = vmatmul.mubr.bf16.gmra.mrb[0].mxu0 %v5669
    %v5941 = vpop.f32.mrb[0].mxu0
    %v5942 = vadd.f32 %v5902, %v5941
    %v5943 = vpop.f32.mrb[0].mxu0
    %v5944 = vpop.f32.mrb[0].mxu0
    %v5945 = vpop.f32.mrb[0].mxu0
    %5946 = vdwg.mxu0
    %v6011 = vunpack.c.l.b16 %v5518
    %v6012 = vunpack.c.l.b16 %v5519
    %v6013 = vunpack.c.l.b16 %v5520
    %v6014 = vunpack.c.l.b16 %v5521
    %v6015 = vunpack.c.l.b16 %v5522
    %v6016 = vunpack.c.l.b16 %v5523
    %v6017 = vunpack.c.l.b16 %v5524
    %v6018 = vunpack.c.l.b16 %v5525
    %v6019 = vunpack.c.l.b16 %v5526
    %v6020 = vunpack.c.l.b16 %v5527
    %v6021 = vunpack.c.l.b16 %v5528
    %v6022 = vunpack.c.l.b16 %v5529
    %v6023 = vunpack.c.l.b16 %v5530
    %v6024 = vunpack.c.l.b16 %v5531
    %v6025 = vunpack.c.l.b16 %v5532
    %v6026 = vunpack.c.l.b16 %v5533
    %v6027 = vunpack.c.l.b16 %v5534
    %v6028 = vunpack.c.l.b16 %v5535
    %v6029 = vunpack.c.l.b16 %v5536
    %v6030 = vunpack.c.l.b16 %v5537
    %v6031 = vunpack.c.l.b16 %v5538
    %v6032 = vunpack.c.l.b16 %v5539
    %v6033 = vunpack.c.l.b16 %v5540
    %v6034 = vunpack.c.l.b16 %v5541
    %v6035 = vunpack.c.l.b16 %v5542
    %v6036 = vunpack.c.l.b16 %v5543
    %v6037 = vunpack.c.l.b16 %v5544
    %v6038 = vunpack.c.l.b16 %v5545
    %v6039 = vunpack.c.l.b16 %v5546
    %v6040 = vunpack.c.l.b16 %v5547
    %v6041 = vunpack.c.l.b16 %v5548
    %v6042 = vunpack.c.l.b16 %v5549
    %v6043 = vunpack.c.l.b16 %v5550
    %v6044 = vunpack.c.l.b16 %v5551
    %v6045 = vunpack.c.l.b16 %v5552
    %v6046 = vunpack.c.l.b16 %v5553
    %v6047 = vunpack.c.l.b16 %v5554
    %v6048 = vunpack.c.l.b16 %v5555
    %v6049 = vunpack.c.l.b16 %v5556
    %v6050 = vunpack.c.l.b16 %v5557
    %v6051 = vunpack.c.l.b16 %v5558
    %v6052 = vunpack.c.l.b16 %v5559
    %v6053 = vunpack.c.l.b16 %v5560
    %v6054 = vunpack.c.l.b16 %v5561
    %v6055 = vunpack.c.l.b16 %v5562
    %v6056 = vunpack.c.l.b16 %v5563
    %v6057 = vunpack.c.l.b16 %v5564
    %v6058 = vunpack.c.l.b16 %v5565
    %v6059 = vunpack.c.l.b16 %v5566
    %v6060 = vunpack.c.l.b16 %v5567
    %v6061 = vunpack.c.l.b16 %v5568
    %v6062 = vunpack.c.l.b16 %v5569
    %v6063 = vunpack.c.l.b16 %v5570
    %v6064 = vunpack.c.l.b16 %v5571
    %v6065 = vunpack.c.l.b16 %v5572
    %v6066 = vunpack.c.l.b16 %v5573
    %v6067 = vunpack.c.l.b16 %v5574
    %v6068 = vunpack.c.l.b16 %v5575
    %v6069 = vunpack.c.l.b16 %v5576
    %v6070 = vunpack.c.l.b16 %v5577
    %v6071 = vunpack.c.l.b16 %v5578
    %v6072 = vunpack.c.l.b16 %v5579
    %v6073 = vunpack.c.l.b16 %v5580
    %v6074 = vunpack.c.l.b16 %v5581
    %v6075 = vpack.c.b16 %v6012, %v6011
    %v6076 = vpack.c.b16 %v6014, %v6013
    %v6077 = vpack.c.b16 %v6016, %v6015
    %v6078 = vpack.c.b16 %v6018, %v6017
    %v6079 = vpack.c.b16 %v6020, %v6019
    %v6080 = vpack.c.b16 %v6022, %v6021
    %v6081 = vpack.c.b16 %v6024, %v6023
    %v6082 = vpack.c.b16 %v6026, %v6025
    %v6083 = vpack.c.b16 %v6028, %v6027
    %v6084 = vpack.c.b16 %v6030, %v6029
    %v6085 = vpack.c.b16 %v6032, %v6031
    %v6086 = vpack.c.b16 %v6034, %v6033
    %v6087 = vpack.c.b16 %v6036, %v6035
    %v6088 = vpack.c.b16 %v6038, %v6037
    %v6089 = vpack.c.b16 %v6040, %v6039
    %v6090 = vpack.c.b16 %v6042, %v6041
    %v6091 = vpack.c.b16 %v6044, %v6043
    %v6092 = vpack.c.b16 %v6046, %v6045
    %v6093 = vpack.c.b16 %v6048, %v6047
    %v6094 = vpack.c.b16 %v6050, %v6049
    %v6095 = vpack.c.b16 %v6052, %v6051
    %v6096 = vpack.c.b16 %v6054, %v6053
    %v6097 = vpack.c.b16 %v6056, %v6055
    %v6098 = vpack.c.b16 %v6058, %v6057
    %v6099 = vpack.c.b16 %v6060, %v6059
    %v6100 = vpack.c.b16 %v6062, %v6061
    %v6101 = vpack.c.b16 %v6064, %v6063
    %v6102 = vpack.c.b16 %v6066, %v6065
    %v6103 = vpack.c.b16 %v6068, %v6067
    %v6104 = vpack.c.b16 %v6070, %v6069
    %v6105 = vpack.c.b16 %v6072, %v6071
    %v6106 = vpack.c.b16 %v6074, %v6073
    %6139 = vmatprep.subr.bf16.mxu0 0
    %6140 = vmatpush1.bf16.msra.mxu0 %v6075
    %6141 = vmatprep.subr.bf16.mxu0 0
    %6142 = vmatpush1.bf16.msra.mxu0 %v6076
    %6143 = vmatprep.subr.bf16.mxu0 0
    %6144 = vmatpush1.bf16.msra.mxu0 %v6077
    %6145 = vmatprep.subr.bf16.mxu0 0
    %6146 = vmatpush1.bf16.msra.mxu0 %v6078
    %6147 = vmatprep.subr.bf16.mxu0 0
    %6148 = vmatpush1.bf16.msra.mxu0 %v6079
    %6149 = vmatprep.subr.bf16.mxu0 0
    %6150 = vmatpush1.bf16.msra.mxu0 %v6080
    %6151 = vmatprep.subr.bf16.mxu0 0
    %6152 = vmatpush1.bf16.msra.mxu0 %v6081
    %6153 = vmatprep.subr.bf16.mxu0 0
    %6154 = vmatpush1.bf16.msra.mxu0 %v6082
    %6155 = vmatprep.subr.bf16.mxu0 0
    %6156 = vmatpush1.bf16.msra.mxu0 %v6083
    %6157 = vmatprep.subr.bf16.mxu0 0
    %6158 = vmatpush1.bf16.msra.mxu0 %v6084
    %6159 = vmatprep.subr.bf16.mxu0 0
    %6160 = vmatpush1.bf16.msra.mxu0 %v6085
    %6161 = vmatprep.subr.bf16.mxu0 0
    %6162 = vmatpush1.bf16.msra.mxu0 %v6086
    %6163 = vmatprep.subr.bf16.mxu0 0
    %6164 = vmatpush1.bf16.msra.mxu0 %v6087
    %6165 = vmatprep.subr.bf16.mxu0 0
    %6166 = vmatpush1.bf16.msra.mxu0 %v6088
    %6167 = vmatprep.subr.bf16.mxu0 0
    %6168 = vmatpush1.bf16.msra.mxu0 %v6089
    %6169 = vmatprep.subr.bf16.mxu0 0
    %6170 = vmatpush1.bf16.msra.mxu0 %v6090
    %6171 = vmatprep.mubr.bf16.mxu0 %v5515
    %6172 = vmatmul.mubr.bf16.gmra.mrb[0].mxu0 %v5514
    %v6173 = vpop.f32.mrb[0].mxu0
    %v6174 = vadd.f32 %v5942, %v6173
    %v6175 = vpop.f32.mrb[0].mxu0
    %v6176 = vpop.f32.mrb[0].mxu0
    %v6177 = vpop.f32.mrb[0].mxu0
    %6178 = vdwg.mxu0
    %6179 = vmatprep.subr.bf16.mxu0 0
    %6180 = vmatpush1.bf16.msra.mxu0 %v6091
    %6181 = vmatprep.subr.bf16.mxu0 0
    %6182 = vmatpush1.bf16.msra.mxu0 %v6092
    %6183 = vmatprep.subr.bf16.mxu0 0
    %6184 = vmatpush1.bf16.msra.mxu0 %v6093
    %6185 = vmatprep.subr.bf16.mxu0 0
    %6186 = vmatpush1.bf16.msra.mxu0 %v6094
    %6187 = vmatprep.subr.bf16.mxu0 0
    %6188 = vmatpush1.bf16.msra.mxu0 %v6095
    %6189 = vmatprep.subr.bf16.mxu0 0
    %6190 = vmatpush1.bf16.msra.mxu0 %v6096
    %6191 = vmatprep.subr.bf16.mxu0 0
    %6192 = vmatpush1.bf16.msra.mxu0 %v6097
    %6193 = vmatprep.subr.bf16.mxu0 0
    %6194 = vmatpush1.bf16.msra.mxu0 %v6098
    %6195 = vmatprep.subr.bf16.mxu0 0
    %6196 = vmatpush1.bf16.msra.mxu0 %v6099
    %6197 = vmatprep.subr.bf16.mxu0 0
    %6198 = vmatpush1.bf16.msra.mxu0 %v6100
    %6199 = vmatprep.subr.bf16.mxu0 0
    %6200 = vmatpush1.bf16.msra.mxu0 %v6101
    %6201 = vmatprep.subr.bf16.mxu0 0
    %6202 = vmatpush1.bf16.msra.mxu0 %v6102
    %6203 = vmatprep.subr.bf16.mxu0 0
    %6204 = vmatpush1.bf16.msra.mxu0 %v6103
    %6205 = vmatprep.subr.bf16.mxu0 0
    %6206 = vmatpush1.bf16.msra.mxu0 %v6104
    %6207 = vmatprep.subr.bf16.mxu0 0
    %6208 = vmatpush1.bf16.msra.mxu0 %v6105
    %6209 = vmatprep.subr.bf16.mxu0 0
    %6210 = vmatpush1.bf16.msra.mxu0 %v6106
    %6211 = vmatprep.mubr.bf16.mxu0 %v5517
    %6212 = vmatmul.mubr.bf16.gmra.mrb[0].mxu0 %v5516
    %v6213 = vpop.f32.mrb[0].mxu0
    %v6214 = vadd.f32 %v6174, %v6213
    %v6215 = vpop.f32.mrb[0].mxu0
    %v6216 = vpop.f32.mrb[0].mxu0
    %v6217 = vpop.f32.mrb[0].mxu0
    %6218 = vdwg.mxu0
    %v6219 = vld [vmem:[#allocation6] sm:$0x30]
    %v6220 = vld [vmem:[#allocation6 + $0x8] sm:$0x30]
    %v6221 = vld [vmem:[#allocation6 + $0x10] sm:$0x30]
    %v6222 = vld [vmem:[#allocation6 + $0x18] sm:$0x30]
    %v6223 = vadd.f32 %v6219, %v5489
    %v6224 = vadd.f32 %v6220, %v5493
    %v6225 = vadd.f32 %v6221, %v5497
    %v6226 = vadd.f32 %v6222, %v5501
    %v6227 = vmax.f32 %v6223, 0.0
    %v6228 = vmax.f32 %v6224, 0.0
    %v6229 = vmax.f32 %v6225, 0.0
    %v6230 = vmax.f32 %v6226, 0.0
    %v6231 = vpack.c.bf16 %v6227, %v6227
    %v6232 = vpack.c.bf16 %v6228, %v6228
    %v6233 = vpack.c.bf16 %v6229, %v6229
    %v6234 = vpack.c.bf16 %v6230, %v6230
    %s6235 = scalar_lea.vmem %s4, 512
    %v6236 = vld [vmem:[%s6235] sm:$0xf]
    %v6237 = vld [vmem:[%s6235 + $0x4] sm:$0xf]
    %v6238 = vld [vmem:[%s6235 + $0x8] sm:$0xf]
    %v6239 = vld [vmem:[%s6235 + $0xc] sm:$0xf]
    %v6240 = vld [vmem:[%s6235 + $0x10] sm:$0xf]
    %v6241 = vld [vmem:[%s6235 + $0x14] sm:$0xf]
    %v6242 = vld [vmem:[%s6235 + $0x18] sm:$0xf]
    %v6243 = vld [vmem:[%s6235 + $0x1c] sm:$0xf]
    %v6244 = vld [vmem:[%s6235 + $0x20] sm:$0xf]
    %v6245 = vld [vmem:[%s6235 + $0x24] sm:$0xf]
    %v6246 = vld [vmem:[%s6235 + $0x28] sm:$0xf]
    %v6247 = vld [vmem:[%s6235 + $0x2c] sm:$0xf]
    %v6248 = vld [vmem:[%s6235 + $0x30] sm:$0xf]
    %v6249 = vld [vmem:[%s6235 + $0x34] sm:$0xf]
    %v6250 = vld [vmem:[%s6235 + $0x38] sm:$0xf]
    %v6251 = vld [vmem:[%s6235 + $0x3c] sm:$0xf]
    %v6252 = vld [vmem:[%s6235 + $0x40] sm:$0xf]
    %v6253 = vld [vmem:[%s6235 + $0x44] sm:$0xf]
    %v6254 = vld [vmem:[%s6235 + $0x48] sm:$0xf]
    %v6255 = vld [vmem:[%s6235 + $0x4c] sm:$0xf]
    %v6256 = vld [vmem:[%s6235 + $0x50] sm:$0xf]
    %v6257 = vld [vmem:[%s6235 + $0x54] sm:$0xf]
    %v6258 = vld [vmem:[%s6235 + $0x58] sm:$0xf]
    %v6259 = vld [vmem:[%s6235 + $0x5c] sm:$0xf]
    %v6260 = vld [vmem:[%s6235 + $0x60] sm:$0xf]
    %v6261 = vld [vmem:[%s6235 + $0x64] sm:$0xf]
    %v6262 = vld [vmem:[%s6235 + $0x68] sm:$0xf]
    %v6263 = vld [vmem:[%s6235 + $0x6c] sm:$0xf]
    %v6264 = vld [vmem:[%s6235 + $0x70] sm:$0xf]
    %v6265 = vld [vmem:[%s6235 + $0x74] sm:$0xf]
    %v6266 = vld [vmem:[%s6235 + $0x78] sm:$0xf]
    %v6267 = vld [vmem:[%s6235 + $0x7c] sm:$0xf]
    %v6268 = vld [vmem:[%s6235 + $0x80] sm:$0xf]
    %v6269 = vld [vmem:[%s6235 + $0x84] sm:$0xf]
    %v6270 = vld [vmem:[%s6235 + $0x88] sm:$0xf]
    %v6271 = vld [vmem:[%s6235 + $0x8c] sm:$0xf]
    %v6272 = vld [vmem:[%s6235 + $0x90] sm:$0xf]
    %v6273 = vld [vmem:[%s6235 + $0x94] sm:$0xf]
    %v6274 = vld [vmem:[%s6235 + $0x98] sm:$0xf]
    %v6275 = vld [vmem:[%s6235 + $0x9c] sm:$0xf]
    %v6276 = vld [vmem:[%s6235 + $0xa0] sm:$0xf]
    %v6277 = vld [vmem:[%s6235 + $0xa4] sm:$0xf]
    %v6278 = vld [vmem:[%s6235 + $0xa8] sm:$0xf]
    %v6279 = vld [vmem:[%s6235 + $0xac] sm:$0xf]
    %v6280 = vld [vmem:[%s6235 + $0xb0] sm:$0xf]
    %v6281 = vld [vmem:[%s6235 + $0xb4] sm:$0xf]
    %v6282 = vld [vmem:[%s6235 + $0xb8] sm:$0xf]
    %v6283 = vld [vmem:[%s6235 + $0xbc] sm:$0xf]
    %v6284 = vld [vmem:[%s6235 + $0xc0] sm:$0xf]
    %v6285 = vld [vmem:[%s6235 + $0xc4] sm:$0xf]
    %v6286 = vld [vmem:[%s6235 + $0xc8] sm:$0xf]
    %v6287 = vld [vmem:[%s6235 + $0xcc] sm:$0xf]
    %v6288 = vld [vmem:[%s6235 + $0xd0] sm:$0xf]
    %v6289 = vld [vmem:[%s6235 + $0xd4] sm:$0xf]
    %v6290 = vld [vmem:[%s6235 + $0xd8] sm:$0xf]
    %v6291 = vld [vmem:[%s6235 + $0xdc] sm:$0xf]
    %v6292 = vld [vmem:[%s6235 + $0xe0] sm:$0xf]
    %v6293 = vld [vmem:[%s6235 + $0xe4] sm:$0xf]
    %v6294 = vld [vmem:[%s6235 + $0xe8] sm:$0xf]
    %v6295 = vld [vmem:[%s6235 + $0xec] sm:$0xf]
    %v6296 = vld [vmem:[%s6235 + $0xf0] sm:$0xf]
    %v6297 = vld [vmem:[%s6235 + $0xf4] sm:$0xf]
    %v6298 = vld [vmem:[%s6235 + $0xf8] sm:$0xf]
    %v6299 = vld [vmem:[%s6235 + $0xfc] sm:$0xf]
    %v6304 = vrot.slane %v6231, 2
    %v6305 = vrot.slane %v6232, 2
    %v6306 = vrot.slane %v6233, 2
    %v6307 = vrot.slane %v6234, 2
    %v6376 = vunpack.c.l.b16 %v6236
    %v6377 = vunpack.c.l.b16 %v6237
    %v6378 = vunpack.c.l.b16 %v6238
    %v6379 = vunpack.c.l.b16 %v6239
    %v6380 = vunpack.c.l.b16 %v6240
    %v6381 = vunpack.c.l.b16 %v6241
    %v6382 = vunpack.c.l.b16 %v6242
    %v6383 = vunpack.c.l.b16 %v6243
    %v6384 = vunpack.c.l.b16 %v6244
    %v6385 = vunpack.c.l.b16 %v6245
    %v6386 = vunpack.c.l.b16 %v6246
    %v6387 = vunpack.c.l.b16 %v6247
    %v6388 = vunpack.c.l.b16 %v6248
    %v6389 = vunpack.c.l.b16 %v6249
    %v6390 = vunpack.c.l.b16 %v6250
    %v6391 = vunpack.c.l.b16 %v6251
    %v6392 = vunpack.c.l.b16 %v6252
    %v6393 = vunpack.c.l.b16 %v6253
    %v6394 = vunpack.c.l.b16 %v6254
    %v6395 = vunpack.c.l.b16 %v6255
    %v6396 = vunpack.c.l.b16 %v6256
    %v6397 = vunpack.c.l.b16 %v6257
    %v6398 = vunpack.c.l.b16 %v6258
    %v6399 = vunpack.c.l.b16 %v6259
    %v6400 = vunpack.c.l.b16 %v6260
    %v6401 = vunpack.c.l.b16 %v6261
    %v6402 = vunpack.c.l.b16 %v6262
    %v6403 = vunpack.c.l.b16 %v6263
    %v6404 = vunpack.c.l.b16 %v6264
    %v6405 = vunpack.c.l.b16 %v6265
    %v6406 = vunpack.c.l.b16 %v6266
    %v6407 = vunpack.c.l.b16 %v6267
    %v6408 = vunpack.c.l.b16 %v6268
    %v6409 = vunpack.c.l.b16 %v6269
    %v6410 = vunpack.c.l.b16 %v6270
    %v6411 = vunpack.c.l.b16 %v6271
    %v6412 = vunpack.c.l.b16 %v6272
    %v6413 = vunpack.c.l.b16 %v6273
    %v6414 = vunpack.c.l.b16 %v6274
    %v6415 = vunpack.c.l.b16 %v6275
    %v6416 = vunpack.c.l.b16 %v6276
    %v6417 = vunpack.c.l.b16 %v6277
    %v6418 = vunpack.c.l.b16 %v6278
    %v6419 = vunpack.c.l.b16 %v6279
    %v6420 = vunpack.c.l.b16 %v6280
    %v6421 = vunpack.c.l.b16 %v6281
    %v6422 = vunpack.c.l.b16 %v6282
    %v6423 = vunpack.c.l.b16 %v6283
    %v6424 = vunpack.c.l.b16 %v6284
    %v6425 = vunpack.c.l.b16 %v6285
    %v6426 = vunpack.c.l.b16 %v6286
    %v6427 = vunpack.c.l.b16 %v6287
    %v6428 = vunpack.c.l.b16 %v6288
    %v6429 = vunpack.c.l.b16 %v6289
    %v6430 = vunpack.c.l.b16 %v6290
    %v6431 = vunpack.c.l.b16 %v6291
    %v6432 = vunpack.c.l.b16 %v6292
    %v6433 = vunpack.c.l.b16 %v6293
    %v6434 = vunpack.c.l.b16 %v6294
    %v6435 = vunpack.c.l.b16 %v6295
    %v6436 = vunpack.c.l.b16 %v6296
    %v6437 = vunpack.c.l.b16 %v6297
    %v6438 = vunpack.c.l.b16 %v6298
    %v6439 = vunpack.c.l.b16 %v6299
    %v6440 = vpack.c.b16 %v6377, %v6376
    %v6441 = vpack.c.b16 %v6379, %v6378
    %v6442 = vpack.c.b16 %v6381, %v6380
    %v6443 = vpack.c.b16 %v6383, %v6382
    %v6444 = vpack.c.b16 %v6385, %v6384
    %v6445 = vpack.c.b16 %v6387, %v6386
    %v6446 = vpack.c.b16 %v6389, %v6388
    %v6447 = vpack.c.b16 %v6391, %v6390
    %v6448 = vpack.c.b16 %v6393, %v6392
    %v6449 = vpack.c.b16 %v6395, %v6394
    %v6450 = vpack.c.b16 %v6397, %v6396
    %v6451 = vpack.c.b16 %v6399, %v6398
    %v6452 = vpack.c.b16 %v6401, %v6400
    %v6453 = vpack.c.b16 %v6403, %v6402
    %v6454 = vpack.c.b16 %v6405, %v6404
    %v6455 = vpack.c.b16 %v6407, %v6406
    %v6456 = vpack.c.b16 %v6409, %v6408
    %v6457 = vpack.c.b16 %v6411, %v6410
    %v6458 = vpack.c.b16 %v6413, %v6412
    %v6459 = vpack.c.b16 %v6415, %v6414
    %v6460 = vpack.c.b16 %v6417, %v6416
    %v6461 = vpack.c.b16 %v6419, %v6418
    %v6462 = vpack.c.b16 %v6421, %v6420
    %v6463 = vpack.c.b16 %v6423, %v6422
    %v6464 = vpack.c.b16 %v6425, %v6424
    %v6465 = vpack.c.b16 %v6427, %v6426
    %v6466 = vpack.c.b16 %v6429, %v6428
    %v6467 = vpack.c.b16 %v6431, %v6430
    %v6468 = vpack.c.b16 %v6433, %v6432
    %v6469 = vpack.c.b16 %v6435, %v6434
    %v6470 = vpack.c.b16 %v6437, %v6436
    %v6471 = vpack.c.b16 %v6439, %v6438
    %6504 = vmatprep.subr.bf16.mxu0 0
    %6505 = vmatpush1.bf16.msra.mxu0 %v6440
    %6506 = vmatprep.subr.bf16.mxu0 0
    %6507 = vmatpush1.bf16.msra.mxu0 %v6441
    %6508 = vmatprep.subr.bf16.mxu0 0
    %6509 = vmatpush1.bf16.msra.mxu0 %v6442
    %6510 = vmatprep.subr.bf16.mxu0 0
    %6511 = vmatpush1.bf16.msra.mxu0 %v6443
    %6512 = vmatprep.subr.bf16.mxu0 0
    %6513 = vmatpush1.bf16.msra.mxu0 %v6444
    %6514 = vmatprep.subr.bf16.mxu0 0
    %6515 = vmatpush1.bf16.msra.mxu0 %v6445
    %6516 = vmatprep.subr.bf16.mxu0 0
    %6517 = vmatpush1.bf16.msra.mxu0 %v6446
    %6518 = vmatprep.subr.bf16.mxu0 0
    %6519 = vmatpush1.bf16.msra.mxu0 %v6447
    %6520 = vmatprep.subr.bf16.mxu0 0
    %6521 = vmatpush1.bf16.msra.mxu0 %v6448
    %6522 = vmatprep.subr.bf16.mxu0 0
    %6523 = vmatpush1.bf16.msra.mxu0 %v6449
    %6524 = vmatprep.subr.bf16.mxu0 0
    %6525 = vmatpush1.bf16.msra.mxu0 %v6450
    %6526 = vmatprep.subr.bf16.mxu0 0
    %6527 = vmatpush1.bf16.msra.mxu0 %v6451
    %6528 = vmatprep.subr.bf16.mxu0 0
    %6529 = vmatpush1.bf16.msra.mxu0 %v6452
    %6530 = vmatprep.subr.bf16.mxu0 0
    %6531 = vmatpush1.bf16.msra.mxu0 %v6453
    %6532 = vmatprep.subr.bf16.mxu0 0
    %6533 = vmatpush1.bf16.msra.mxu0 %v6454
    %6534 = vmatprep.subr.bf16.mxu0 0
    %6535 = vmatpush1.bf16.msra.mxu0 %v6455
    %6536 = vmatprep.mubr.bf16.mxu0 %v6305
    %6537 = vmatmul.mubr.bf16.gmra.mrb[0].mxu0 %v6304
    %v6538 = vpop.f32.mrb[0].mxu0
    %v6539 = vadd.f32 0.0, %v6538
    %v6540 = vpop.f32.mrb[0].mxu0
    %v6541 = vpop.f32.mrb[0].mxu0
    %v6542 = vpop.f32.mrb[0].mxu0
    %6543 = vdwg.mxu0
    %6544 = vmatprep.subr.bf16.mxu0 0
    %6545 = vmatpush1.bf16.msra.mxu0 %v6456
    %6546 = vmatprep.subr.bf16.mxu0 0
    %6547 = vmatpush1.bf16.msra.mxu0 %v6457
    %6548 = vmatprep.subr.bf16.mxu0 0
    %6549 = vmatpush1.bf16.msra.mxu0 %v6458
    %6550 = vmatprep.subr.bf16.mxu0 0
    %6551 = vmatpush1.bf16.msra.mxu0 %v6459
    %6552 = vmatprep.subr.bf16.mxu0 0
    %6553 = vmatpush1.bf16.msra.mxu0 %v6460
    %6554 = vmatprep.subr.bf16.mxu0 0
    %6555 = vmatpush1.bf16.msra.mxu0 %v6461
    %6556 = vmatprep.subr.bf16.mxu0 0
    %6557 = vmatpush1.bf16.msra.mxu0 %v6462
    %6558 = vmatprep.subr.bf16.mxu0 0
    %6559 = vmatpush1.bf16.msra.mxu0 %v6463
    %6560 = vmatprep.subr.bf16.mxu0 0
    %6561 = vmatpush1.bf16.msra.mxu0 %v6464
    %6562 = vmatprep.subr.bf16.mxu0 0
    %6563 = vmatpush1.bf16.msra.mxu0 %v6465
    %6564 = vmatprep.subr.bf16.mxu0 0
    %6565 = vmatpush1.bf16.msra.mxu0 %v6466
    %6566 = vmatprep.subr.bf16.mxu0 0
    %6567 = vmatpush1.bf16.msra.mxu0 %v6467
    %6568 = vmatprep.subr.bf16.mxu0 0
    %6569 = vmatpush1.bf16.msra.mxu0 %v6468
    %6570 = vmatprep.subr.bf16.mxu0 0
    %6571 = vmatpush1.bf16.msra.mxu0 %v6469
    %6572 = vmatprep.subr.bf16.mxu0 0
    %6573 = vmatpush1.bf16.msra.mxu0 %v6470
    %6574 = vmatprep.subr.bf16.mxu0 0
    %6575 = vmatpush1.bf16.msra.mxu0 %v6471
    %6576 = vmatprep.mubr.bf16.mxu0 %v6307
    %6577 = vmatmul.mubr.bf16.gmra.mrb[0].mxu0 %v6306
    %v6578 = vpop.f32.mrb[0].mxu0
    %v6579 = vadd.f32 %v6539, %v6578
    %v6580 = vpop.f32.mrb[0].mxu0
    %v6581 = vpop.f32.mrb[0].mxu0
    %v6582 = vpop.f32.mrb[0].mxu0
    %6583 = vdwg.mxu0
    %v6584 = vadd.f32 %v6214, %v6579
    %v6585 = vld [vmem:[#allocation6] sm:$0xc0]
    %v6586 = vld [vmem:[#allocation6 + $0x8] sm:$0xc0]
    %v6587 = vld [vmem:[#allocation6 + $0x10] sm:$0xc0]
    %v6588 = vld [vmem:[#allocation6 + $0x18] sm:$0xc0]
    %v6589 = vadd.f32 %v6585, %v5489
    %v6590 = vadd.f32 %v6586, %v5493
    %v6591 = vadd.f32 %v6587, %v5497
    %v6592 = vadd.f32 %v6588, %v5501
    %v6593 = vmax.f32 %v6589, 0.0
    %v6594 = vmax.f32 %v6590, 0.0
    %v6595 = vmax.f32 %v6591, 0.0
    %v6596 = vmax.f32 %v6592, 0.0
    %v6597 = vpack.c.bf16 %v6593, %v6593
    %v6598 = vpack.c.bf16 %v6594, %v6594
    %v6599 = vpack.c.bf16 %v6595, %v6595
    %v6600 = vpack.c.bf16 %v6596, %v6596
    %s6601 = scalar_lea.vmem %s4, 768
    %v6602 = vld [vmem:[%s6601] sm:$0xf]
    %v6603 = vld [vmem:[%s6601 + $0x4] sm:$0xf]
    %v6604 = vld [vmem:[%s6601 + $0x8] sm:$0xf]
    %v6605 = vld [vmem:[%s6601 + $0xc] sm:$0xf]
    %v6606 = vld [vmem:[%s6601 + $0x10] sm:$0xf]
    %v6607 = vld [vmem:[%s6601 + $0x14] sm:$0xf]
    %v6608 = vld [vmem:[%s6601 + $0x18] sm:$0xf]
    %v6609 = vld [vmem:[%s6601 + $0x1c] sm:$0xf]
    %v6610 = vld [vmem:[%s6601 + $0x20] sm:$0xf]
    %v6611 = vld [vmem:[%s6601 + $0x24] sm:$0xf]
    %v6612 = vld [vmem:[%s6601 + $0x28] sm:$0xf]
    %v6613 = vld [vmem:[%s6601 + $0x2c] sm:$0xf]
    %v6614 = vld [vmem:[%s6601 + $0x30] sm:$0xf]
    %v6615 = vld [vmem:[%s6601 + $0x34] sm:$0xf]
    %v6616 = vld [vmem:[%s6601 + $0x38] sm:$0xf]
    %v6617 = vld [vmem:[%s6601 + $0x3c] sm:$0xf]
    %v6618 = vld [vmem:[%s6601 + $0x40] sm:$0xf]
    %v6619 = vld [vmem:[%s6601 + $0x44] sm:$0xf]
    %v6620 = vld [vmem:[%s6601 + $0x48] sm:$0xf]
    %v6621 = vld [vmem:[%s6601 + $0x4c] sm:$0xf]
    %v6622 = vld [vmem:[%s6601 + $0x50] sm:$0xf]
    %v6623 = vld [vmem:[%s6601 + $0x54] sm:$0xf]
    %v6624 = vld [vmem:[%s6601 + $0x58] sm:$0xf]
    %v6625 = vld [vmem:[%s6601 + $0x5c] sm:$0xf]
    %v6626 = vld [vmem:[%s6601 + $0x60] sm:$0xf]
    %v6627 = vld [vmem:[%s6601 + $0x64] sm:$0xf]
    %v6628 = vld [vmem:[%s6601 + $0x68] sm:$0xf]
    %v6629 = vld [vmem:[%s6601 + $0x6c] sm:$0xf]
    %v6630 = vld [vmem:[%s6601 + $0x70] sm:$0xf]
    %v6631 = vld [vmem:[%s6601 + $0x74] sm:$0xf]
    %v6632 = vld [vmem:[%s6601 + $0x78] sm:$0xf]
    %v6633 = vld [vmem:[%s6601 + $0x7c] sm:$0xf]
    %v6634 = vld [vmem:[%s6601 + $0x80] sm:$0xf]
    %v6635 = vld [vmem:[%s6601 + $0x84] sm:$0xf]
    %v6636 = vld [vmem:[%s6601 + $0x88] sm:$0xf]
    %v6637 = vld [vmem:[%s6601 + $0x8c] sm:$0xf]
    %v6638 = vld [vmem:[%s6601 + $0x90] sm:$0xf]
    %v6639 = vld [vmem:[%s6601 + $0x94] sm:$0xf]
    %v6640 = vld [vmem:[%s6601 + $0x98] sm:$0xf]
    %v6641 = vld [vmem:[%s6601 + $0x9c] sm:$0xf]
    %v6642 = vld [vmem:[%s6601 + $0xa0] sm:$0xf]
    %v6643 = vld [vmem:[%s6601 + $0xa4] sm:$0xf]
    %v6644 = vld [vmem:[%s6601 + $0xa8] sm:$0xf]
    %v6645 = vld [vmem:[%s6601 + $0xac] sm:$0xf]
    %v6646 = vld [vmem:[%s6601 + $0xb0] sm:$0xf]
    %v6647 = vld [vmem:[%s6601 + $0xb4] sm:$0xf]
    %v6648 = vld [vmem:[%s6601 + $0xb8] sm:$0xf]
    %v6649 = vld [vmem:[%s6601 + $0xbc] sm:$0xf]
    %v6650 = vld [vmem:[%s6601 + $0xc0] sm:$0xf]
    %v6651 = vld [vmem:[%s6601 + $0xc4] sm:$0xf]
    %v6652 = vld [vmem:[%s6601 + $0xc8] sm:$0xf]
    %v6653 = vld [vmem:[%s6601 + $0xcc] sm:$0xf]
    %v6654 = vld [vmem:[%s6601 + $0xd0] sm:$0xf]
    %v6655 = vld [vmem:[%s6601 + $0xd4] sm:$0xf]
    %v6656 = vld [vmem:[%s6601 + $0xd8] sm:$0xf]
    %v6657 = vld [vmem:[%s6601 + $0xdc] sm:$0xf]
    %v6658 = vld [vmem:[%s6601 + $0xe0] sm:$0xf]
    %v6659 = vld [vmem:[%s6601 + $0xe4] sm:$0xf]
    %v6660 = vld [vmem:[%s6601 + $0xe8] sm:$0xf]
    %v6661 = vld [vmem:[%s6601 + $0xec] sm:$0xf]
    %v6662 = vld [vmem:[%s6601 + $0xf0] sm:$0xf]
    %v6663 = vld [vmem:[%s6601 + $0xf4] sm:$0xf]
    %v6664 = vld [vmem:[%s6601 + $0xf8] sm:$0xf]
    %v6665 = vld [vmem:[%s6601 + $0xfc] sm:$0xf]
    %v6670 = vrot.slane %v6597, 3
    %v6671 = vrot.slane %v6598, 3
    %v6672 = vrot.slane %v6599, 3
    %v6673 = vrot.slane %v6600, 3
    %v6742 = vunpack.c.l.b16 %v6602
    %v6743 = vunpack.c.l.b16 %v6603
    %v6744 = vunpack.c.l.b16 %v6604
    %v6745 = vunpack.c.l.b16 %v6605
    %v6746 = vunpack.c.l.b16 %v6606
    %v6747 = vunpack.c.l.b16 %v6607
    %v6748 = vunpack.c.l.b16 %v6608
    %v6749 = vunpack.c.l.b16 %v6609
    %v6750 = vunpack.c.l.b16 %v6610
    %v6751 = vunpack.c.l.b16 %v6611
    %v6752 = vunpack.c.l.b16 %v6612
    %v6753 = vunpack.c.l.b16 %v6613
    %v6754 = vunpack.c.l.b16 %v6614
    %v6755 = vunpack.c.l.b16 %v6615
    %v6756 = vunpack.c.l.b16 %v6616
    %v6757 = vunpack.c.l.b16 %v6617
    %v6758 = vunpack.c.l.b16 %v6618
    %v6759 = vunpack.c.l.b16 %v6619
    %v6760 = vunpack.c.l.b16 %v6620
    %v6761 = vunpack.c.l.b16 %v6621
    %v6762 = vunpack.c.l.b16 %v6622
    %v6763 = vunpack.c.l.b16 %v6623
    %v6764 = vunpack.c.l.b16 %v6624
    %v6765 = vunpack.c.l.b16 %v6625
    %v6766 = vunpack.c.l.b16 %v6626
    %v6767 = vunpack.c.l.b16 %v6627
    %v6768 = vunpack.c.l.b16 %v6628
    %v6769 = vunpack.c.l.b16 %v6629
    %v6770 = vunpack.c.l.b16 %v6630
    %v6771 = vunpack.c.l.b16 %v6631
    %v6772 = vunpack.c.l.b16 %v6632
    %v6773 = vunpack.c.l.b16 %v6633
    %v6774 = vunpack.c.l.b16 %v6634
    %v6775 = vunpack.c.l.b16 %v6635
    %v6776 = vunpack.c.l.b16 %v6636
    %v6777 = vunpack.c.l.b16 %v6637
    %v6778 = vunpack.c.l.b16 %v6638
    %v6779 = vunpack.c.l.b16 %v6639
    %v6780 = vunpack.c.l.b16 %v6640
    %v6781 = vunpack.c.l.b16 %v6641
    %v6782 = vunpack.c.l.b16 %v6642
    %v6783 = vunpack.c.l.b16 %v6643
    %v6784 = vunpack.c.l.b16 %v6644
    %v6785 = vunpack.c.l.b16 %v6645
    %v6786 = vunpack.c.l.b16 %v6646
    %v6787 = vunpack.c.l.b16 %v6647
    %v6788 = vunpack.c.l.b16 %v6648
    %v6789 = vunpack.c.l.b16 %v6649
    %v6790 = vunpack.c.l.b16 %v6650
    %v6791 = vunpack.c.l.b16 %v6651
    %v6792 = vunpack.c.l.b16 %v6652
    %v6793 = vunpack.c.l.b16 %v6653
    %v6794 = vunpack.c.l.b16 %v6654
    %v6795 = vunpack.c.l.b16 %v6655
    %v6796 = vunpack.c.l.b16 %v6656
    %v6797 = vunpack.c.l.b16 %v6657
    %v6798 = vunpack.c.l.b16 %v6658
    %v6799 = vunpack.c.l.b16 %v6659
    %v6800 = vunpack.c.l.b16 %v6660
    %v6801 = vunpack.c.l.b16 %v6661
    %v6802 = vunpack.c.l.b16 %v6662
    %v6803 = vunpack.c.l.b16 %v6663
    %v6804 = vunpack.c.l.b16 %v6664
    %v6805 = vunpack.c.l.b16 %v6665
    %v6806 = vpack.c.b16 %v6743, %v6742
    %v6807 = vpack.c.b16 %v6745, %v6744
    %v6808 = vpack.c.b16 %v6747, %v6746
    %v6809 = vpack.c.b16 %v6749, %v6748
    %v6810 = vpack.c.b16 %v6751, %v6750
    %v6811 = vpack.c.b16 %v6753, %v6752
    %v6812 = vpack.c.b16 %v6755, %v6754
    %v6813 = vpack.c.b16 %v6757, %v6756
    %v6814 = vpack.c.b16 %v6759, %v6758
    %v6815 = vpack.c.b16 %v6761, %v6760
    %v6816 = vpack.c.b16 %v6763, %v6762
    %v6817 = vpack.c.b16 %v6765, %v6764
    %v6818 = vpack.c.b16 %v6767, %v6766
    %v6819 = vpack.c.b16 %v6769, %v6768
    %v6820 = vpack.c.b16 %v6771, %v6770
    %v6821 = vpack.c.b16 %v6773, %v6772
    %v6822 = vpack.c.b16 %v6775, %v6774
    %v6823 = vpack.c.b16 %v6777, %v6776
    %v6824 = vpack.c.b16 %v6779, %v6778
    %v6825 = vpack.c.b16 %v6781, %v6780
    %v6826 = vpack.c.b16 %v6783, %v6782
    %v6827 = vpack.c.b16 %v6785, %v6784
    %v6828 = vpack.c.b16 %v6787, %v6786
    %v6829 = vpack.c.b16 %v6789, %v6788
    %v6830 = vpack.c.b16 %v6791, %v6790
    %v6831 = vpack.c.b16 %v6793, %v6792
    %v6832 = vpack.c.b16 %v6795, %v6794
    %v6833 = vpack.c.b16 %v6797, %v6796
    %v6834 = vpack.c.b16 %v6799, %v6798
    %v6835 = vpack.c.b16 %v6801, %v6800
    %v6836 = vpack.c.b16 %v6803, %v6802
    %v6837 = vpack.c.b16 %v6805, %v6804
    %6870 = vmatprep.subr.bf16.mxu0 0
    %6871 = vmatpush1.bf16.msra.mxu0 %v6806
    %6872 = vmatprep.subr.bf16.mxu0 0
    %6873 = vmatpush1.bf16.msra.mxu0 %v6807
    %6874 = vmatprep.subr.bf16.mxu0 0
    %6875 = vmatpush1.bf16.msra.mxu0 %v6808
    %6876 = vmatprep.subr.bf16.mxu0 0
    %6877 = vmatpush1.bf16.msra.mxu0 %v6809
    %6878 = vmatprep.subr.bf16.mxu0 0
    %6879 = vmatpush1.bf16.msra.mxu0 %v6810
    %6880 = vmatprep.subr.bf16.mxu0 0
    %6881 = vmatpush1.bf16.msra.mxu0 %v6811
    %6882 = vmatprep.subr.bf16.mxu0 0
    %6883 = vmatpush1.bf16.msra.mxu0 %v6812
    %6884 = vmatprep.subr.bf16.mxu0 0
    %6885 = vmatpush1.bf16.msra.mxu0 %v6813
    %6886 = vmatprep.subr.bf16.mxu0 0
    %6887 = vmatpush1.bf16.msra.mxu0 %v6814
    %6888 = vmatprep.subr.bf16.mxu0 0
    %6889 = vmatpush1.bf16.msra.mxu0 %v6815
    %6890 = vmatprep.subr.bf16.mxu0 0
    %6891 = vmatpush1.bf16.msra.mxu0 %v6816
    %6892 = vmatprep.subr.bf16.mxu0 0
    %6893 = vmatpush1.bf16.msra.mxu0 %v6817
    %6894 = vmatprep.subr.bf16.mxu0 0
    %6895 = vmatpush1.bf16.msra.mxu0 %v6818
    %6896 = vmatprep.subr.bf16.mxu0 0
    %6897 = vmatpush1.bf16.msra.mxu0 %v6819
    %6898 = vmatprep.subr.bf16.mxu0 0
    %6899 = vmatpush1.bf16.msra.mxu0 %v6820
    %6900 = vmatprep.subr.bf16.mxu0 0
    %6901 = vmatpush1.bf16.msra.mxu0 %v6821
    %6902 = vmatprep.mubr.bf16.mxu0 %v6671
    %6903 = vmatmul.mubr.bf16.gmra.mrb[0].mxu0 %v6670
    %v6904 = vpop.f32.mrb[0].mxu0
    %v6905 = vadd.f32 0.0, %v6904
    %v6906 = vpop.f32.mrb[0].mxu0
    %v6907 = vpop.f32.mrb[0].mxu0
    %v6908 = vpop.f32.mrb[0].mxu0
    %6909 = vdwg.mxu0
    %6910 = vmatprep.subr.bf16.mxu0 0
    %6911 = vmatpush1.bf16.msra.mxu0 %v6822
    %6912 = vmatprep.subr.bf16.mxu0 0
    %6913 = vmatpush1.bf16.msra.mxu0 %v6823
    %6914 = vmatprep.subr.bf16.mxu0 0
    %6915 = vmatpush1.bf16.msra.mxu0 %v6824
    %6916 = vmatprep.subr.bf16.mxu0 0
    %6917 = vmatpush1.bf16.msra.mxu0 %v6825
    %6918 = vmatprep.subr.bf16.mxu0 0
    %6919 = vmatpush1.bf16.msra.mxu0 %v6826
    %6920 = vmatprep.subr.bf16.mxu0 0
    %6921 = vmatpush1.bf16.msra.mxu0 %v6827
    %6922 = vmatprep.subr.bf16.mxu0 0
    %6923 = vmatpush1.bf16.msra.mxu0 %v6828
    %6924 = vmatprep.subr.bf16.mxu0 0
    %6925 = vmatpush1.bf16.msra.mxu0 %v6829
    %6926 = vmatprep.subr.bf16.mxu0 0
    %6927 = vmatpush1.bf16.msra.mxu0 %v6830
    %6928 = vmatprep.subr.bf16.mxu0 0
    %6929 = vmatpush1.bf16.msra.mxu0 %v6831
    %6930 = vmatprep.subr.bf16.mxu0 0
    %6931 = vmatpush1.bf16.msra.mxu0 %v6832
    %6932 = vmatprep.subr.bf16.mxu0 0
    %6933 = vmatpush1.bf16.msra.mxu0 %v6833
    %6934 = vmatprep.subr.bf16.mxu0 0
    %6935 = vmatpush1.bf16.msra.mxu0 %v6834
    %6936 = vmatprep.subr.bf16.mxu0 0
    %6937 = vmatpush1.bf16.msra.mxu0 %v6835
    %6938 = vmatprep.subr.bf16.mxu0 0
    %6939 = vmatpush1.bf16.msra.mxu0 %v6836
    %6940 = vmatprep.subr.bf16.mxu0 0
    %6941 = vmatpush1.bf16.msra.mxu0 %v6837
    %6942 = vmatprep.mubr.bf16.mxu0 %v6673
    %6943 = vmatmul.mubr.bf16.gmra.mrb[0].mxu0 %v6672
    %v6944 = vpop.f32.mrb[0].mxu0
    %v6945 = vadd.f32 %v6905, %v6944
    %v6946 = vpop.f32.mrb[0].mxu0
    %v6947 = vpop.f32.mrb[0].mxu0
    %v6948 = vpop.f32.mrb[0].mxu0
    %6949 = vdwg.mxu0
    %v6950 = vadd.f32 %v6584, %v6945
    %v6951 = vld [vmem:[#allocation6 + $0x20] sm:$0x3]
    %v6952 = vld [vmem:[#allocation6 + $0x28] sm:$0x3]
    %v6953 = vld [vmem:[#allocation6 + $0x30] sm:$0x3]
    %v6954 = vld [vmem:[#allocation6 + $0x38] sm:$0x3]
    %v6955 = vadd.f32 %v6951, %v5489
    %v6956 = vadd.f32 %v6952, %v5493
    %v6957 = vadd.f32 %v6953, %v5497
    %v6958 = vadd.f32 %v6954, %v5501
    %v6959 = vmax.f32 %v6955, 0.0
    %v6960 = vmax.f32 %v6956, 0.0
    %v6961 = vmax.f32 %v6957, 0.0
    %v6962 = vmax.f32 %v6958, 0.0
    %v6963 = vpack.c.bf16 %v6959, %v6959
    %v6964 = vpack.c.bf16 %v6960, %v6960
    %v6965 = vpack.c.bf16 %v6961, %v6961
    %v6966 = vpack.c.bf16 %v6962, %v6962
    %s6967 = scalar_lea.vmem %s4, 1024
    %v6968 = vld [vmem:[%s6967] sm:$0xf]
    %v6969 = vld [vmem:[%s6967 + $0x4] sm:$0xf]
    %v6970 = vld [vmem:[%s6967 + $0x8] sm:$0xf]
    %v6971 = vld [vmem:[%s6967 + $0xc] sm:$0xf]
    %v6972 = vld [vmem:[%s6967 + $0x10] sm:$0xf]
    %v6973 = vld [vmem:[%s6967 + $0x14] sm:$0xf]
    %v6974 = vld [vmem:[%s6967 + $0x18] sm:$0xf]
    %v6975 = vld [vmem:[%s6967 + $0x1c] sm:$0xf]
    %v6976 = vld [vmem:[%s6967 + $0x20] sm:$0xf]
    %v6977 = vld [vmem:[%s6967 + $0x24] sm:$0xf]
    %v6978 = vld [vmem:[%s6967 + $0x28] sm:$0xf]
    %v6979 = vld [vmem:[%s6967 + $0x2c] sm:$0xf]
    %v6980 = vld [vmem:[%s6967 + $0x30] sm:$0xf]
    %v6981 = vld [vmem:[%s6967 + $0x34] sm:$0xf]
    %v6982 = vld [vmem:[%s6967 + $0x38] sm:$0xf]
    %v6983 = vld [vmem:[%s6967 + $0x3c] sm:$0xf]
    %v6984 = vld [vmem:[%s6967 + $0x40] sm:$0xf]
    %v6985 = vld [vmem:[%s6967 + $0x44] sm:$0xf]
    %v6986 = vld [vmem:[%s6967 + $0x48] sm:$0xf]
    %v6987 = vld [vmem:[%s6967 + $0x4c] sm:$0xf]
    %v6988 = vld [vmem:[%s6967 + $0x50] sm:$0xf]
    %v6989 = vld [vmem:[%s6967 + $0x54] sm:$0xf]
    %v6990 = vld [vmem:[%s6967 + $0x58] sm:$0xf]
    %v6991 = vld [vmem:[%s6967 + $0x5c] sm:$0xf]
    %v6992 = vld [vmem:[%s6967 + $0x60] sm:$0xf]
    %v6993 = vld [vmem:[%s6967 + $0x64] sm:$0xf]
    %v6994 = vld [vmem:[%s6967 + $0x68] sm:$0xf]
    %v6995 = vld [vmem:[%s6967 + $0x6c] sm:$0xf]
    %v6996 = vld [vmem:[%s6967 + $0x70] sm:$0xf]
    %v6997 = vld [vmem:[%s6967 + $0x74] sm:$0xf]
    %v6998 = vld [vmem:[%s6967 + $0x78] sm:$0xf]
    %v6999 = vld [vmem:[%s6967 + $0x7c] sm:$0xf]
    %v7000 = vld [vmem:[%s6967 + $0x80] sm:$0xf]
    %v7001 = vld [vmem:[%s6967 + $0x84] sm:$0xf]
    %v7002 = vld [vmem:[%s6967 + $0x88] sm:$0xf]
    %v7003 = vld [vmem:[%s6967 + $0x8c] sm:$0xf]
    %v7004 = vld [vmem:[%s6967 + $0x90] sm:$0xf]
    %v7005 = vld [vmem:[%s6967 + $0x94] sm:$0xf]
    %v7006 = vld [vmem:[%s6967 + $0x98] sm:$0xf]
    %v7007 = vld [vmem:[%s6967 + $0x9c] sm:$0xf]
    %v7008 = vld [vmem:[%s6967 + $0xa0] sm:$0xf]
    %v7009 = vld [vmem:[%s6967 + $0xa4] sm:$0xf]
    %v7010 = vld [vmem:[%s6967 + $0xa8] sm:$0xf]
    %v7011 = vld [vmem:[%s6967 + $0xac] sm:$0xf]
    %v7012 = vld [vmem:[%s6967 + $0xb0] sm:$0xf]
    %v7013 = vld [vmem:[%s6967 + $0xb4] sm:$0xf]
    %v7014 = vld [vmem:[%s6967 + $0xb8] sm:$0xf]
    %v7015 = vld [vmem:[%s6967 + $0xbc] sm:$0xf]
    %v7016 = vld [vmem:[%s6967 + $0xc0] sm:$0xf]
    %v7017 = vld [vmem:[%s6967 + $0xc4] sm:$0xf]
    %v7018 = vld [vmem:[%s6967 + $0xc8] sm:$0xf]
    %v7019 = vld [vmem:[%s6967 + $0xcc] sm:$0xf]
    %v7020 = vld [vmem:[%s6967 + $0xd0] sm:$0xf]
    %v7021 = vld [vmem:[%s6967 + $0xd4] sm:$0xf]
    %v7022 = vld [vmem:[%s6967 + $0xd8] sm:$0xf]
    %v7023 = vld [vmem:[%s6967 + $0xdc] sm:$0xf]
    %v7024 = vld [vmem:[%s6967 + $0xe0] sm:$0xf]
    %v7025 = vld [vmem:[%s6967 + $0xe4] sm:$0xf]
    %v7026 = vld [vmem:[%s6967 + $0xe8] sm:$0xf]
    %v7027 = vld [vmem:[%s6967 + $0xec] sm:$0xf]
    %v7028 = vld [vmem:[%s6967 + $0xf0] sm:$0xf]
    %v7029 = vld [vmem:[%s6967 + $0xf4] sm:$0xf]
    %v7030 = vld [vmem:[%s6967 + $0xf8] sm:$0xf]
    %v7031 = vld [vmem:[%s6967 + $0xfc] sm:$0xf]
    %v7096 = vunpack.c.l.b16 %v6968
    %v7097 = vunpack.c.l.b16 %v6969
    %v7098 = vunpack.c.l.b16 %v6970
    %v7099 = vunpack.c.l.b16 %v6971
    %v7100 = vunpack.c.l.b16 %v6972
    %v7101 = vunpack.c.l.b16 %v6973
    %v7102 = vunpack.c.l.b16 %v6974
    %v7103 = vunpack.c.l.b16 %v6975
    %v7104 = vunpack.c.l.b16 %v6976
    %v7105 = vunpack.c.l.b16 %v6977
    %v7106 = vunpack.c.l.b16 %v6978
    %v7107 = vunpack.c.l.b16 %v6979
    %v7108 = vunpack.c.l.b16 %v6980
    %v7109 = vunpack.c.l.b16 %v6981
    %v7110 = vunpack.c.l.b16 %v6982
    %v7111 = vunpack.c.l.b16 %v6983
    %v7112 = vunpack.c.l.b16 %v6984
    %v7113 = vunpack.c.l.b16 %v6985
    %v7114 = vunpack.c.l.b16 %v6986
    %v7115 = vunpack.c.l.b16 %v6987
    %v7116 = vunpack.c.l.b16 %v6988
    %v7117 = vunpack.c.l.b16 %v6989
    %v7118 = vunpack.c.l.b16 %v6990
    %v7119 = vunpack.c.l.b16 %v6991
    %v7120 = vunpack.c.l.b16 %v6992
    %v7121 = vunpack.c.l.b16 %v6993
    %v7122 = vunpack.c.l.b16 %v6994
    %v7123 = vunpack.c.l.b16 %v6995
    %v7124 = vunpack.c.l.b16 %v6996
    %v7125 = vunpack.c.l.b16 %v6997
    %v7126 = vunpack.c.l.b16 %v6998
    %v7127 = vunpack.c.l.b16 %v6999
    %v7128 = vunpack.c.l.b16 %v7000
    %v7129 = vunpack.c.l.b16 %v7001
    %v7130 = vunpack.c.l.b16 %v7002
    %v7131 = vunpack.c.l.b16 %v7003
    %v7132 = vunpack.c.l.b16 %v7004
    %v7133 = vunpack.c.l.b16 %v7005
    %v7134 = vunpack.c.l.b16 %v7006
    %v7135 = vunpack.c.l.b16 %v7007
    %v7136 = vunpack.c.l.b16 %v7008
    %v7137 = vunpack.c.l.b16 %v7009
    %v7138 = vunpack.c.l.b16 %v7010
    %v7139 = vunpack.c.l.b16 %v7011
    %v7140 = vunpack.c.l.b16 %v7012
    %v7141 = vunpack.c.l.b16 %v7013
    %v7142 = vunpack.c.l.b16 %v7014
    %v7143 = vunpack.c.l.b16 %v7015
    %v7144 = vunpack.c.l.b16 %v7016
    %v7145 = vunpack.c.l.b16 %v7017
    %v7146 = vunpack.c.l.b16 %v7018
    %v7147 = vunpack.c.l.b16 %v7019
    %v7148 = vunpack.c.l.b16 %v7020
    %v7149 = vunpack.c.l.b16 %v7021
    %v7150 = vunpack.c.l.b16 %v7022
    %v7151 = vunpack.c.l.b16 %v7023
    %v7152 = vunpack.c.l.b16 %v7024
    %v7153 = vunpack.c.l.b16 %v7025
    %v7154 = vunpack.c.l.b16 %v7026
    %v7155 = vunpack.c.l.b16 %v7027
    %v7156 = vunpack.c.l.b16 %v7028
    %v7157 = vunpack.c.l.b16 %v7029
    %v7158 = vunpack.c.l.b16 %v7030
    %v7159 = vunpack.c.l.b16 %v7031
    %v7160 = vpack.c.b16 %v7097, %v7096
    %v7161 = vpack.c.b16 %v7099, %v7098
    %v7162 = vpack.c.b16 %v7101, %v7100
    %v7163 = vpack.c.b16 %v7103, %v7102
    %v7164 = vpack.c.b16 %v7105, %v7104
    %v7165 = vpack.c.b16 %v7107, %v7106
    %v7166 = vpack.c.b16 %v7109, %v7108
    %v7167 = vpack.c.b16 %v7111, %v7110
    %v7168 = vpack.c.b16 %v7113, %v7112
    %v7169 = vpack.c.b16 %v7115, %v7114
    %v7170 = vpack.c.b16 %v7117, %v7116
    %v7171 = vpack.c.b16 %v7119, %v7118
    %v7172 = vpack.c.b16 %v7121, %v7120
    %v7173 = vpack.c.b16 %v7123, %v7122
    %v7174 = vpack.c.b16 %v7125, %v7124
    %v7175 = vpack.c.b16 %v7127, %v7126
    %v7176 = vpack.c.b16 %v7129, %v7128
    %v7177 = vpack.c.b16 %v7131, %v7130
    %v7178 = vpack.c.b16 %v7133, %v7132
    %v7179 = vpack.c.b16 %v7135, %v7134
    %v7180 = vpack.c.b16 %v7137, %v7136
    %v7181 = vpack.c.b16 %v7139, %v7138
    %v7182 = vpack.c.b16 %v7141, %v7140
    %v7183 = vpack.c.b16 %v7143, %v7142
    %v7184 = vpack.c.b16 %v7145, %v7144
    %v7185 = vpack.c.b16 %v7147, %v7146
    %v7186 = vpack.c.b16 %v7149, %v7148
    %v7187 = vpack.c.b16 %v7151, %v7150
    %v7188 = vpack.c.b16 %v7153, %v7152
    %v7189 = vpack.c.b16 %v7155, %v7154
    %v7190 = vpack.c.b16 %v7157, %v7156
    %v7191 = vpack.c.b16 %v7159, %v7158
    %7224 = vmatprep.subr.bf16.mxu0 0
    %7225 = vmatpush1.bf16.msra.mxu0 %v7160
    %7226 = vmatprep.subr.bf16.mxu0 0
    %7227 = vmatpush1.bf16.msra.mxu0 %v7161
    %7228 = vmatprep.subr.bf16.mxu0 0
    %7229 = vmatpush1.bf16.msra.mxu0 %v7162
    %7230 = vmatprep.subr.bf16.mxu0 0
    %7231 = vmatpush1.bf16.msra.mxu0 %v7163
    %7232 = vmatprep.subr.bf16.mxu0 0
    %7233 = vmatpush1.bf16.msra.mxu0 %v7164
    %7234 = vmatprep.subr.bf16.mxu0 0
    %7235 = vmatpush1.bf16.msra.mxu0 %v7165
    %7236 = vmatprep.subr.bf16.mxu0 0
    %7237 = vmatpush1.bf16.msra.mxu0 %v7166
    %7238 = vmatprep.subr.bf16.mxu0 0
    %7239 = vmatpush1.bf16.msra.mxu0 %v7167
    %7240 = vmatprep.subr.bf16.mxu0 0
    %7241 = vmatpush1.bf16.msra.mxu0 %v7168
    %7242 = vmatprep.subr.bf16.mxu0 0
    %7243 = vmatpush1.bf16.msra.mxu0 %v7169
    %7244 = vmatprep.subr.bf16.mxu0 0
    %7245 = vmatpush1.bf16.msra.mxu0 %v7170
    %7246 = vmatprep.subr.bf16.mxu0 0
    %7247 = vmatpush1.bf16.msra.mxu0 %v7171
    %7248 = vmatprep.subr.bf16.mxu0 0
    %7249 = vmatpush1.bf16.msra.mxu0 %v7172
    %7250 = vmatprep.subr.bf16.mxu0 0
    %7251 = vmatpush1.bf16.msra.mxu0 %v7173
    %7252 = vmatprep.subr.bf16.mxu0 0
    %7253 = vmatpush1.bf16.msra.mxu0 %v7174
    %7254 = vmatprep.subr.bf16.mxu0 0
    %7255 = vmatpush1.bf16.msra.mxu0 %v7175
    %7256 = vmatprep.mubr.bf16.mxu0 %v6964
    %7257 = vmatmul.mubr.bf16.gmra.mrb[0].mxu0 %v6963
    %v7258 = vpop.f32.mrb[0].mxu0
    %v7259 = vadd.f32 0.0, %v7258
    %v7260 = vpop.f32.mrb[0].mxu0
    %v7261 = vpop.f32.mrb[0].mxu0
    %v7262 = vpop.f32.mrb[0].mxu0
    %7263 = vdwg.mxu0
    %7264 = vmatprep.subr.bf16.mxu0 0
    %7265 = vmatpush1.bf16.msra.mxu0 %v7176
    %7266 = vmatprep.subr.bf16.mxu0 0
    %7267 = vmatpush1.bf16.msra.mxu0 %v7177
    %7268 = vmatprep.subr.bf16.mxu0 0
    %7269 = vmatpush1.bf16.msra.mxu0 %v7178
    %7270 = vmatprep.subr.bf16.mxu0 0
    %7271 = vmatpush1.bf16.msra.mxu0 %v7179
    %7272 = vmatprep.subr.bf16.mxu0 0
    %7273 = vmatpush1.bf16.msra.mxu0 %v7180
    %7274 = vmatprep.subr.bf16.mxu0 0
    %7275 = vmatpush1.bf16.msra.mxu0 %v7181
    %7276 = vmatprep.subr.bf16.mxu0 0
    %7277 = vmatpush1.bf16.msra.mxu0 %v7182
    %7278 = vmatprep.subr.bf16.mxu0 0
    %7279 = vmatpush1.bf16.msra.mxu0 %v7183
    %7280 = vmatprep.subr.bf16.mxu0 0
    %7281 = vmatpush1.bf16.msra.mxu0 %v7184
    %7282 = vmatprep.subr.bf16.mxu0 0
    %7283 = vmatpush1.bf16.msra.mxu0 %v7185
    %7284 = vmatprep.subr.bf16.mxu0 0
    %7285 = vmatpush1.bf16.msra.mxu0 %v7186
    %7286 = vmatprep.subr.bf16.mxu0 0
    %7287 = vmatpush1.bf16.msra.mxu0 %v7187
    %7288 = vmatprep.subr.bf16.mxu0 0
    %7289 = vmatpush1.bf16.msra.mxu0 %v7188
    %7290 = vmatprep.subr.bf16.mxu0 0
    %7291 = vmatpush1.bf16.msra.mxu0 %v7189
    %7292 = vmatprep.subr.bf16.mxu0 0
    %7293 = vmatpush1.bf16.msra.mxu0 %v7190
    %7294 = vmatprep.subr.bf16.mxu0 0
    %7295 = vmatpush1.bf16.msra.mxu0 %v7191
    %7296 = vmatprep.mubr.bf16.mxu0 %v6966
    %7297 = vmatmul.mubr.bf16.gmra.mrb[0].mxu0 %v6965
    %v7298 = vpop.f32.mrb[0].mxu0
    %v7299 = vadd.f32 %v7259, %v7298
    %v7300 = vpop.f32.mrb[0].mxu0
    %v7301 = vpop.f32.mrb[0].mxu0
    %v7302 = vpop.f32.mrb[0].mxu0
    %7303 = vdwg.mxu0
    %v7304 = vadd.f32 %v6950, %v7299
    %v7305 = vld [vmem:[#allocation6 + $0x20] sm:$0xc]
    %v7306 = vld [vmem:[#allocation6 + $0x28] sm:$0xc]
    %v7307 = vld [vmem:[#allocation6 + $0x30] sm:$0xc]
    %v7308 = vld [vmem:[#allocation6 + $0x38] sm:$0xc]
    %v7309 = vadd.f32 %v7305, %v5489
    %v7310 = vadd.f32 %v7306, %v5493
    %v7311 = vadd.f32 %v7307, %v5497
    %v7312 = vadd.f32 %v7308, %v5501
    %v7313 = vmax.f32 %v7309, 0.0
    %v7314 = vmax.f32 %v7310, 0.0
    %v7315 = vmax.f32 %v7311, 0.0
    %v7316 = vmax.f32 %v7312, 0.0
    %v7317 = vpack.c.bf16 %v7313, %v7313
    %v7318 = vpack.c.bf16 %v7314, %v7314
    %v7319 = vpack.c.bf16 %v7315, %v7315
    %v7320 = vpack.c.bf16 %v7316, %v7316
    %s7321 = scalar_lea.vmem %s4, 1280
    %v7322 = vld [vmem:[%s7321] sm:$0xf]
    %v7323 = vld [vmem:[%s7321 + $0x4] sm:$0xf]
    %v7324 = vld [vmem:[%s7321 + $0x8] sm:$0xf]
    %v7325 = vld [vmem:[%s7321 + $0xc] sm:$0xf]
    %v7326 = vld [vmem:[%s7321 + $0x10] sm:$0xf]
    %v7327 = vld [vmem:[%s7321 + $0x14] sm:$0xf]
    %v7328 = vld [vmem:[%s7321 + $0x18] sm:$0xf]
    %v7329 = vld [vmem:[%s7321 + $0x1c] sm:$0xf]
    %v7330 = vld [vmem:[%s7321 + $0x20] sm:$0xf]
    %v7331 = vld [vmem:[%s7321 + $0x24] sm:$0xf]
    %v7332 = vld [vmem:[%s7321 + $0x28] sm:$0xf]
    %v7333 = vld [vmem:[%s7321 + $0x2c] sm:$0xf]
    %v7334 = vld [vmem:[%s7321 + $0x30] sm:$0xf]
    %v7335 = vld [vmem:[%s7321 + $0x34] sm:$0xf]
    %v7336 = vld [vmem:[%s7321 + $0x38] sm:$0xf]
    %v7337 = vld [vmem:[%s7321 + $0x3c] sm:$0xf]
    %v7338 = vld [vmem:[%s7321 + $0x40] sm:$0xf]
    %v7339 = vld [vmem:[%s7321 + $0x44] sm:$0xf]
    %v7340 = vld [vmem:[%s7321 + $0x48] sm:$0xf]
    %v7341 = vld [vmem:[%s7321 + $0x4c] sm:$0xf]
    %v7342 = vld [vmem:[%s7321 + $0x50] sm:$0xf]
    %v7343 = vld [vmem:[%s7321 + $0x54] sm:$0xf]
    %v7344 = vld [vmem:[%s7321 + $0x58] sm:$0xf]
    %v7345 = vld [vmem:[%s7321 + $0x5c] sm:$0xf]
    %v7346 = vld [vmem:[%s7321 + $0x60] sm:$0xf]
    %v7347 = vld [vmem:[%s7321 + $0x64] sm:$0xf]
    %v7348 = vld [vmem:[%s7321 + $0x68] sm:$0xf]
    %v7349 = vld [vmem:[%s7321 + $0x6c] sm:$0xf]
    %v7350 = vld [vmem:[%s7321 + $0x70] sm:$0xf]
    %v7351 = vld [vmem:[%s7321 + $0x74] sm:$0xf]
    %v7352 = vld [vmem:[%s7321 + $0x78] sm:$0xf]
    %v7353 = vld [vmem:[%s7321 + $0x7c] sm:$0xf]
    %v7354 = vld [vmem:[%s7321 + $0x80] sm:$0xf]
    %v7355 = vld [vmem:[%s7321 + $0x84] sm:$0xf]
    %v7356 = vld [vmem:[%s7321 + $0x88] sm:$0xf]
    %v7357 = vld [vmem:[%s7321 + $0x8c] sm:$0xf]
    %v7358 = vld [vmem:[%s7321 + $0x90] sm:$0xf]
    %v7359 = vld [vmem:[%s7321 + $0x94] sm:$0xf]
    %v7360 = vld [vmem:[%s7321 + $0x98] sm:$0xf]
    %v7361 = vld [vmem:[%s7321 + $0x9c] sm:$0xf]
    %v7362 = vld [vmem:[%s7321 + $0xa0] sm:$0xf]
    %v7363 = vld [vmem:[%s7321 + $0xa4] sm:$0xf]
    %v7364 = vld [vmem:[%s7321 + $0xa8] sm:$0xf]
    %v7365 = vld [vmem:[%s7321 + $0xac] sm:$0xf]
    %v7366 = vld [vmem:[%s7321 + $0xb0] sm:$0xf]
    %v7367 = vld [vmem:[%s7321 + $0xb4] sm:$0xf]
    %v7368 = vld [vmem:[%s7321 + $0xb8] sm:$0xf]
    %v7369 = vld [vmem:[%s7321 + $0xbc] sm:$0xf]
    %v7370 = vld [vmem:[%s7321 + $0xc0] sm:$0xf]
    %v7371 = vld [vmem:[%s7321 + $0xc4] sm:$0xf]
    %v7372 = vld [vmem:[%s7321 + $0xc8] sm:$0xf]
    %v7373 = vld [vmem:[%s7321 + $0xcc] sm:$0xf]
    %v7374 = vld [vmem:[%s7321 + $0xd0] sm:$0xf]
    %v7375 = vld [vmem:[%s7321 + $0xd4] sm:$0xf]
    %v7376 = vld [vmem:[%s7321 + $0xd8] sm:$0xf]
    %v7377 = vld [vmem:[%s7321 + $0xdc] sm:$0xf]
    %v7378 = vld [vmem:[%s7321 + $0xe0] sm:$0xf]
    %v7379 = vld [vmem:[%s7321 + $0xe4] sm:$0xf]
    %v7380 = vld [vmem:[%s7321 + $0xe8] sm:$0xf]
    %v7381 = vld [vmem:[%s7321 + $0xec] sm:$0xf]
    %v7382 = vld [vmem:[%s7321 + $0xf0] sm:$0xf]
    %v7383 = vld [vmem:[%s7321 + $0xf4] sm:$0xf]
    %v7384 = vld [vmem:[%s7321 + $0xf8] sm:$0xf]
    %v7385 = vld [vmem:[%s7321 + $0xfc] sm:$0xf]
    %v7390 = vrot.slane %v7317, 1
    %v7391 = vrot.slane %v7318, 1
    %v7392 = vrot.slane %v7319, 1
    %v7393 = vrot.slane %v7320, 1
    %v7462 = vunpack.c.l.b16 %v7322
    %v7463 = vunpack.c.l.b16 %v7323
    %v7464 = vunpack.c.l.b16 %v7324
    %v7465 = vunpack.c.l.b16 %v7325
    %v7466 = vunpack.c.l.b16 %v7326
    %v7467 = vunpack.c.l.b16 %v7327
    %v7468 = vunpack.c.l.b16 %v7328
    %v7469 = vunpack.c.l.b16 %v7329
    %v7470 = vunpack.c.l.b16 %v7330
    %v7471 = vunpack.c.l.b16 %v7331
    %v7472 = vunpack.c.l.b16 %v7332
    %v7473 = vunpack.c.l.b16 %v7333
    %v7474 = vunpack.c.l.b16 %v7334
    %v7475 = vunpack.c.l.b16 %v7335
    %v7476 = vunpack.c.l.b16 %v7336
    %v7477 = vunpack.c.l.b16 %v7337
    %v7478 = vunpack.c.l.b16 %v7338
    %v7479 = vunpack.c.l.b16 %v7339
    %v7480 = vunpack.c.l.b16 %v7340
    %v7481 = vunpack.c.l.b16 %v7341
    %v7482 = vunpack.c.l.b16 %v7342
    %v7483 = vunpack.c.l.b16 %v7343
    %v7484 = vunpack.c.l.b16 %v7344
    %v7485 = vunpack.c.l.b16 %v7345
    %v7486 = vunpack.c.l.b16 %v7346
    %v7487 = vunpack.c.l.b16 %v7347
    %v7488 = vunpack.c.l.b16 %v7348
    %v7489 = vunpack.c.l.b16 %v7349
    %v7490 = vunpack.c.l.b16 %v7350
    %v7491 = vunpack.c.l.b16 %v7351
    %v7492 = vunpack.c.l.b16 %v7352
    %v7493 = vunpack.c.l.b16 %v7353
    %v7494 = vunpack.c.l.b16 %v7354
    %v7495 = vunpack.c.l.b16 %v7355
    %v7496 = vunpack.c.l.b16 %v7356
    %v7497 = vunpack.c.l.b16 %v7357
    %v7498 = vunpack.c.l.b16 %v7358
    %v7499 = vunpack.c.l.b16 %v7359
    %v7500 = vunpack.c.l.b16 %v7360
    %v7501 = vunpack.c.l.b16 %v7361
    %v7502 = vunpack.c.l.b16 %v7362
    %v7503 = vunpack.c.l.b16 %v7363
    %v7504 = vunpack.c.l.b16 %v7364
    %v7505 = vunpack.c.l.b16 %v7365
    %v7506 = vunpack.c.l.b16 %v7366
    %v7507 = vunpack.c.l.b16 %v7367
    %v7508 = vunpack.c.l.b16 %v7368
    %v7509 = vunpack.c.l.b16 %v7369
    %v7510 = vunpack.c.l.b16 %v7370
    %v7511 = vunpack.c.l.b16 %v7371
    %v7512 = vunpack.c.l.b16 %v7372
    %v7513 = vunpack.c.l.b16 %v7373
    %v7514 = vunpack.c.l.b16 %v7374
    %v7515 = vunpack.c.l.b16 %v7375
    %v7516 = vunpack.c.l.b16 %v7376
    %v7517 = vunpack.c.l.b16 %v7377
    %v7518 = vunpack.c.l.b16 %v7378
    %v7519 = vunpack.c.l.b16 %v7379
    %v7520 = vunpack.c.l.b16 %v7380
    %v7521 = vunpack.c.l.b16 %v7381
    %v7522 = vunpack.c.l.b16 %v7382
    %v7523 = vunpack.c.l.b16 %v7383
    %v7524 = vunpack.c.l.b16 %v7384
    %v7525 = vunpack.c.l.b16 %v7385
    %v7526 = vpack.c.b16 %v7463, %v7462
    %v7527 = vpack.c.b16 %v7465, %v7464
    %v7528 = vpack.c.b16 %v7467, %v7466
    %v7529 = vpack.c.b16 %v7469, %v7468
    %v7530 = vpack.c.b16 %v7471, %v7470
    %v7531 = vpack.c.b16 %v7473, %v7472
    %v7532 = vpack.c.b16 %v7475, %v7474
    %v7533 = vpack.c.b16 %v7477, %v7476
    %v7534 = vpack.c.b16 %v7479, %v7478
    %v7535 = vpack.c.b16 %v7481, %v7480
    %v7536 = vpack.c.b16 %v7483, %v7482
    %v7537 = vpack.c.b16 %v7485, %v7484
    %v7538 = vpack.c.b16 %v7487, %v7486
    %v7539 = vpack.c.b16 %v7489, %v7488
    %v7540 = vpack.c.b16 %v7491, %v7490
    %v7541 = vpack.c.b16 %v7493, %v7492
    %v7542 = vpack.c.b16 %v7495, %v7494
    %v7543 = vpack.c.b16 %v7497, %v7496
    %v7544 = vpack.c.b16 %v7499, %v7498
    %v7545 = vpack.c.b16 %v7501, %v7500
    %v7546 = vpack.c.b16 %v7503, %v7502
    %v7547 = vpack.c.b16 %v7505, %v7504
    %v7548 = vpack.c.b16 %v7507, %v7506
    %v7549 = vpack.c.b16 %v7509, %v7508
    %v7550 = vpack.c.b16 %v7511, %v7510
    %v7551 = vpack.c.b16 %v7513, %v7512
    %v7552 = vpack.c.b16 %v7515, %v7514
    %v7553 = vpack.c.b16 %v7517, %v7516
    %v7554 = vpack.c.b16 %v7519, %v7518
    %v7555 = vpack.c.b16 %v7521, %v7520
    %v7556 = vpack.c.b16 %v7523, %v7522
    %v7557 = vpack.c.b16 %v7525, %v7524
    %7590 = vmatprep.subr.bf16.mxu0 0
    %7591 = vmatpush1.bf16.msra.mxu0 %v7526
    %7592 = vmatprep.subr.bf16.mxu0 0
    %7593 = vmatpush1.bf16.msra.mxu0 %v7527
    %7594 = vmatprep.subr.bf16.mxu0 0
    %7595 = vmatpush1.bf16.msra.mxu0 %v7528
    %7596 = vmatprep.subr.bf16.mxu0 0
    %7597 = vmatpush1.bf16.msra.mxu0 %v7529
    %7598 = vmatprep.subr.bf16.mxu0 0
    %7599 = vmatpush1.bf16.msra.mxu0 %v7530
    %7600 = vmatprep.subr.bf16.mxu0 0
    %7601 = vmatpush1.bf16.msra.mxu0 %v7531
    %7602 = vmatprep.subr.bf16.mxu0 0
    %7603 = vmatpush1.bf16.msra.mxu0 %v7532
    %7604 = vmatprep.subr.bf16.mxu0 0
    %7605 = vmatpush1.bf16.msra.mxu0 %v7533
    %7606 = vmatprep.subr.bf16.mxu0 0
    %7607 = vmatpush1.bf16.msra.mxu0 %v7534
    %7608 = vmatprep.subr.bf16.mxu0 0
    %7609 = vmatpush1.bf16.msra.mxu0 %v7535
    %7610 = vmatprep.subr.bf16.mxu0 0
    %7611 = vmatpush1.bf16.msra.mxu0 %v7536
    %7612 = vmatprep.subr.bf16.mxu0 0
    %7613 = vmatpush1.bf16.msra.mxu0 %v7537
    %7614 = vmatprep.subr.bf16.mxu0 0
    %7615 = vmatpush1.bf16.msra.mxu0 %v7538
    %7616 = vmatprep.subr.bf16.mxu0 0
    %7617 = vmatpush1.bf16.msra.mxu0 %v7539
    %7618 = vmatprep.subr.bf16.mxu0 0
    %7619 = vmatpush1.bf16.msra.mxu0 %v7540
    %7620 = vmatprep.subr.bf16.mxu0 0
    %7621 = vmatpush1.bf16.msra.mxu0 %v7541
    %7622 = vmatprep.mubr.bf16.mxu0 %v7391
    %7623 = vmatmul.mubr.bf16.gmra.mrb[0].mxu0 %v7390
    %v7624 = vpop.f32.mrb[0].mxu0
    %v7625 = vadd.f32 0.0, %v7624
    %v7626 = vpop.f32.mrb[0].mxu0
    %v7627 = vpop.f32.mrb[0].mxu0
    %v7628 = vpop.f32.mrb[0].mxu0
    %7629 = vdwg.mxu0
    %7630 = vmatprep.subr.bf16.mxu0 0
    %7631 = vmatpush1.bf16.msra.mxu0 %v7542
    %7632 = vmatprep.subr.bf16.mxu0 0
    %7633 = vmatpush1.bf16.msra.mxu0 %v7543
    %7634 = vmatprep.subr.bf16.mxu0 0
    %7635 = vmatpush1.bf16.msra.mxu0 %v7544
    %7636 = vmatprep.subr.bf16.mxu0 0
    %7637 = vmatpush1.bf16.msra.mxu0 %v7545
    %7638 = vmatprep.subr.bf16.mxu0 0
    %7639 = vmatpush1.bf16.msra.mxu0 %v7546
    %7640 = vmatprep.subr.bf16.mxu0 0
    %7641 = vmatpush1.bf16.msra.mxu0 %v7547
    %7642 = vmatprep.subr.bf16.mxu0 0
    %7643 = vmatpush1.bf16.msra.mxu0 %v7548
    %7644 = vmatprep.subr.bf16.mxu0 0
    %7645 = vmatpush1.bf16.msra.mxu0 %v7549
    %7646 = vmatprep.subr.bf16.mxu0 0
    %7647 = vmatpush1.bf16.msra.mxu0 %v7550
    %7648 = vmatprep.subr.bf16.mxu0 0
    %7649 = vmatpush1.bf16.msra.mxu0 %v7551
    %7650 = vmatprep.subr.bf16.mxu0 0
    %7651 = vmatpush1.bf16.msra.mxu0 %v7552
    %7652 = vmatprep.subr.bf16.mxu0 0
    %7653 = vmatpush1.bf16.msra.mxu0 %v7553
    %7654 = vmatprep.subr.bf16.mxu0 0
    %7655 = vmatpush1.bf16.msra.mxu0 %v7554
    %7656 = vmatprep.subr.bf16.mxu0 0
    %7657 = vmatpush1.bf16.msra.mxu0 %v7555
    %7658 = vmatprep.subr.bf16.mxu0 0
    %7659 = vmatpush1.bf16.msra.mxu0 %v7556
    %7660 = vmatprep.subr.bf16.mxu0 0
    %7661 = vmatpush1.bf16.msra.mxu0 %v7557
    %7662 = vmatprep.mubr.bf16.mxu0 %v7393
    %7663 = vmatmul.mubr.bf16.gmra.mrb[0].mxu0 %v7392
    %v7664 = vpop.f32.mrb[0].mxu0
    %v7665 = vadd.f32 %v7625, %v7664
    %v7666 = vpop.f32.mrb[0].mxu0
    %v7667 = vpop.f32.mrb[0].mxu0
    %v7668 = vpop.f32.mrb[0].mxu0
    %7669 = vdwg.mxu0
    %v7670 = vadd.f32 %v7304, %v7665
    %v7671 = vld [vmem:[#allocation6 + $0x20] sm:$0x30]
    %v7672 = vld [vmem:[#allocation6 + $0x28] sm:$0x30]
    %v7673 = vld [vmem:[#allocation6 + $0x30] sm:$0x30]
    %v7674 = vld [vmem:[#allocation6 + $0x38] sm:$0x30]
    %v7675 = vadd.f32 %v7671, %v5489
    %v7676 = vadd.f32 %v7672, %v5493
    %v7677 = vadd.f32 %v7673, %v5497
    %v7678 = vadd.f32 %v7674, %v5501
    %v7679 = vmax.f32 %v7675, 0.0
    %v7680 = vmax.f32 %v7676, 0.0
    %v7681 = vmax.f32 %v7677, 0.0
    %v7682 = vmax.f32 %v7678, 0.0
    %v7683 = vpack.c.bf16 %v7679, %v7679
    %v7684 = vpack.c.bf16 %v7680, %v7680
    %v7685 = vpack.c.bf16 %v7681, %v7681
    %v7686 = vpack.c.bf16 %v7682, %v7682
    %s7687 = scalar_lea.vmem %s4, 1536
    %v7688 = vld [vmem:[%s7687] sm:$0xf]
    %v7689 = vld [vmem:[%s7687 + $0x4] sm:$0xf]
    %v7690 = vld [vmem:[%s7687 + $0x8] sm:$0xf]
    %v7691 = vld [vmem:[%s7687 + $0xc] sm:$0xf]
    %v7692 = vld [vmem:[%s7687 + $0x10] sm:$0xf]
    %v7693 = vld [vmem:[%s7687 + $0x14] sm:$0xf]
    %v7694 = vld [vmem:[%s7687 + $0x18] sm:$0xf]
    %v7695 = vld [vmem:[%s7687 + $0x1c] sm:$0xf]
    %v7696 = vld [vmem:[%s7687 + $0x20] sm:$0xf]
    %v7697 = vld [vmem:[%s7687 + $0x24] sm:$0xf]
    %v7698 = vld [vmem:[%s7687 + $0x28] sm:$0xf]
    %v7699 = vld [vmem:[%s7687 + $0x2c] sm:$0xf]
    %v7700 = vld [vmem:[%s7687 + $0x30] sm:$0xf]
    %v7701 = vld [vmem:[%s7687 + $0x34] sm:$0xf]
    %v7702 = vld [vmem:[%s7687 + $0x38] sm:$0xf]
    %v7703 = vld [vmem:[%s7687 + $0x3c] sm:$0xf]
    %v7704 = vld [vmem:[%s7687 + $0x40] sm:$0xf]
    %v7705 = vld [vmem:[%s7687 + $0x44] sm:$0xf]
    %v7706 = vld [vmem:[%s7687 + $0x48] sm:$0xf]
    %v7707 = vld [vmem:[%s7687 + $0x4c] sm:$0xf]
    %v7708 = vld [vmem:[%s7687 + $0x50] sm:$0xf]
    %v7709 = vld [vmem:[%s7687 + $0x54] sm:$0xf]
    %v7710 = vld [vmem:[%s7687 + $0x58] sm:$0xf]
    %v7711 = vld [vmem:[%s7687 + $0x5c] sm:$0xf]
    %v7712 = vld [vmem:[%s7687 + $0x60] sm:$0xf]
    %v7713 = vld [vmem:[%s7687 + $0x64] sm:$0xf]
    %v7714 = vld [vmem:[%s7687 + $0x68] sm:$0xf]
    %v7715 = vld [vmem:[%s7687 + $0x6c] sm:$0xf]
    %v7716 = vld [vmem:[%s7687 + $0x70] sm:$0xf]
    %v7717 = vld [vmem:[%s7687 + $0x74] sm:$0xf]
    %v7718 = vld [vmem:[%s7687 + $0x78] sm:$0xf]
    %v7719 = vld [vmem:[%s7687 + $0x7c] sm:$0xf]
    %v7720 = vld [vmem:[%s7687 + $0x80] sm:$0xf]
    %v7721 = vld [vmem:[%s7687 + $0x84] sm:$0xf]
    %v7722 = vld [vmem:[%s7687 + $0x88] sm:$0xf]
    %v7723 = vld [vmem:[%s7687 + $0x8c] sm:$0xf]
    %v7724 = vld [vmem:[%s7687 + $0x90] sm:$0xf]
    %v7725 = vld [vmem:[%s7687 + $0x94] sm:$0xf]
    %v7726 = vld [vmem:[%s7687 + $0x98] sm:$0xf]
    %v7727 = vld [vmem:[%s7687 + $0x9c] sm:$0xf]
    %v7728 = vld [vmem:[%s7687 + $0xa0] sm:$0xf]
    %v7729 = vld [vmem:[%s7687 + $0xa4] sm:$0xf]
    %v7730 = vld [vmem:[%s7687 + $0xa8] sm:$0xf]
    %v7731 = vld [vmem:[%s7687 + $0xac] sm:$0xf]
    %v7732 = vld [vmem:[%s7687 + $0xb0] sm:$0xf]
    %v7733 = vld [vmem:[%s7687 + $0xb4] sm:$0xf]
    %v7734 = vld [vmem:[%s7687 + $0xb8] sm:$0xf]
    %v7735 = vld [vmem:[%s7687 + $0xbc] sm:$0xf]
    %v7736 = vld [vmem:[%s7687 + $0xc0] sm:$0xf]
    %v7737 = vld [vmem:[%s7687 + $0xc4] sm:$0xf]
    %v7738 = vld [vmem:[%s7687 + $0xc8] sm:$0xf]
    %v7739 = vld [vmem:[%s7687 + $0xcc] sm:$0xf]
    %v7740 = vld [vmem:[%s7687 + $0xd0] sm:$0xf]
    %v7741 = vld [vmem:[%s7687 + $0xd4] sm:$0xf]
    %v7742 = vld [vmem:[%s7687 + $0xd8] sm:$0xf]
    %v7743 = vld [vmem:[%s7687 + $0xdc] sm:$0xf]
    %v7744 = vld [vmem:[%s7687 + $0xe0] sm:$0xf]
    %v7745 = vld [vmem:[%s7687 + $0xe4] sm:$0xf]
    %v7746 = vld [vmem:[%s7687 + $0xe8] sm:$0xf]
    %v7747 = vld [vmem:[%s7687 + $0xec] sm:$0xf]
    %v7748 = vld [vmem:[%s7687 + $0xf0] sm:$0xf]
    %v7749 = vld [vmem:[%s7687 + $0xf4] sm:$0xf]
    %v7750 = vld [vmem:[%s7687 + $0xf8] sm:$0xf]
    %v7751 = vld [vmem:[%s7687 + $0xfc] sm:$0xf]
    %v7756 = vrot.slane %v7683, 2
    %v7757 = vrot.slane %v7684, 2
    %v7758 = vrot.slane %v7685, 2
    %v7759 = vrot.slane %v7686, 2
    %v7828 = vunpack.c.l.b16 %v7688
    %v7829 = vunpack.c.l.b16 %v7689
    %v7830 = vunpack.c.l.b16 %v7690
    %v7831 = vunpack.c.l.b16 %v7691
    %v7832 = vunpack.c.l.b16 %v7692
    %v7833 = vunpack.c.l.b16 %v7693
    %v7834 = vunpack.c.l.b16 %v7694
    %v7835 = vunpack.c.l.b16 %v7695
    %v7836 = vunpack.c.l.b16 %v7696
    %v7837 = vunpack.c.l.b16 %v7697
    %v7838 = vunpack.c.l.b16 %v7698
    %v7839 = vunpack.c.l.b16 %v7699
    %v7840 = vunpack.c.l.b16 %v7700
    %v7841 = vunpack.c.l.b16 %v7701
    %v7842 = vunpack.c.l.b16 %v7702
    %v7843 = vunpack.c.l.b16 %v7703
    %v7844 = vunpack.c.l.b16 %v7704
    %v7845 = vunpack.c.l.b16 %v7705
    %v7846 = vunpack.c.l.b16 %v7706
    %v7847 = vunpack.c.l.b16 %v7707
    %v7848 = vunpack.c.l.b16 %v7708
    %v7849 = vunpack.c.l.b16 %v7709
    %v7850 = vunpack.c.l.b16 %v7710
    %v7851 = vunpack.c.l.b16 %v7711
    %v7852 = vunpack.c.l.b16 %v7712
    %v7853 = vunpack.c.l.b16 %v7713
    %v7854 = vunpack.c.l.b16 %v7714
    %v7855 = vunpack.c.l.b16 %v7715
    %v7856 = vunpack.c.l.b16 %v7716
    %v7857 = vunpack.c.l.b16 %v7717
    %v7858 = vunpack.c.l.b16 %v7718
    %v7859 = vunpack.c.l.b16 %v7719
    %v7860 = vunpack.c.l.b16 %v7720
    %v7861 = vunpack.c.l.b16 %v7721
    %v7862 = vunpack.c.l.b16 %v7722
    %v7863 = vunpack.c.l.b16 %v7723
    %v7864 = vunpack.c.l.b16 %v7724
    %v7865 = vunpack.c.l.b16 %v7725
    %v7866 = vunpack.c.l.b16 %v7726
    %v7867 = vunpack.c.l.b16 %v7727
    %v7868 = vunpack.c.l.b16 %v7728
    %v7869 = vunpack.c.l.b16 %v7729
    %v7870 = vunpack.c.l.b16 %v7730
    %v7871 = vunpack.c.l.b16 %v7731
    %v7872 = vunpack.c.l.b16 %v7732
    %v7873 = vunpack.c.l.b16 %v7733
    %v7874 = vunpack.c.l.b16 %v7734
    %v7875 = vunpack.c.l.b16 %v7735
    %v7876 = vunpack.c.l.b16 %v7736
    %v7877 = vunpack.c.l.b16 %v7737
    %v7878 = vunpack.c.l.b16 %v7738
    %v7879 = vunpack.c.l.b16 %v7739
    %v7880 = vunpack.c.l.b16 %v7740
    %v7881 = vunpack.c.l.b16 %v7741
    %v7882 = vunpack.c.l.b16 %v7742
    %v7883 = vunpack.c.l.b16 %v7743
    %v7884 = vunpack.c.l.b16 %v7744
    %v7885 = vunpack.c.l.b16 %v7745
    %v7886 = vunpack.c.l.b16 %v7746
    %v7887 = vunpack.c.l.b16 %v7747
    %v7888 = vunpack.c.l.b16 %v7748
    %v7889 = vunpack.c.l.b16 %v7749
    %v7890 = vunpack.c.l.b16 %v7750
    %v7891 = vunpack.c.l.b16 %v7751
    %v7892 = vpack.c.b16 %v7829, %v7828
    %v7893 = vpack.c.b16 %v7831, %v7830
    %v7894 = vpack.c.b16 %v7833, %v7832
    %v7895 = vpack.c.b16 %v7835, %v7834
    %v7896 = vpack.c.b16 %v7837, %v7836
    %v7897 = vpack.c.b16 %v7839, %v7838
    %v7898 = vpack.c.b16 %v7841, %v7840
    %v7899 = vpack.c.b16 %v7843, %v7842
    %v7900 = vpack.c.b16 %v7845, %v7844
    %v7901 = vpack.c.b16 %v7847, %v7846
    %v7902 = vpack.c.b16 %v7849, %v7848
    %v7903 = vpack.c.b16 %v7851, %v7850
    %v7904 = vpack.c.b16 %v7853, %v7852
    %v7905 = vpack.c.b16 %v7855, %v7854
    %v7906 = vpack.c.b16 %v7857, %v7856
    %v7907 = vpack.c.b16 %v7859, %v7858
    %v7908 = vpack.c.b16 %v7861, %v7860
    %v7909 = vpack.c.b16 %v7863, %v7862
    %v7910 = vpack.c.b16 %v7865, %v7864
    %v7911 = vpack.c.b16 %v7867, %v7866
    %v7912 = vpack.c.b16 %v7869, %v7868
    %v7913 = vpack.c.b16 %v7871, %v7870
    %v7914 = vpack.c.b16 %v7873, %v7872
    %v7915 = vpack.c.b16 %v7875, %v7874
    %v7916 = vpack.c.b16 %v7877, %v7876
    %v7917 = vpack.c.b16 %v7879, %v7878
    %v7918 = vpack.c.b16 %v7881, %v7880
    %v7919 = vpack.c.b16 %v7883, %v7882
    %v7920 = vpack.c.b16 %v7885, %v7884
    %v7921 = vpack.c.b16 %v7887, %v7886
    %v7922 = vpack.c.b16 %v7889, %v7888
    %v7923 = vpack.c.b16 %v7891, %v7890
    %7956 = vmatprep.subr.bf16.mxu0 0
    %7957 = vmatpush1.bf16.msra.mxu0 %v7892
    %7958 = vmatprep.subr.bf16.mxu0 0
    %7959 = vmatpush1.bf16.msra.mxu0 %v7893
    %7960 = vmatprep.subr.bf16.mxu0 0
    %7961 = vmatpush1.bf16.msra.mxu0 %v7894
    %7962 = vmatprep.subr.bf16.mxu0 0
    %7963 = vmatpush1.bf16.msra.mxu0 %v7895
    %7964 = vmatprep.subr.bf16.mxu0 0
    %7965 = vmatpush1.bf16.msra.mxu0 %v7896
    %7966 = vmatprep.subr.bf16.mxu0 0
    %7967 = vmatpush1.bf16.msra.mxu0 %v7897
    %7968 = vmatprep.subr.bf16.mxu0 0
    %7969 = vmatpush1.bf16.msra.mxu0 %v7898
    %7970 = vmatprep.subr.bf16.mxu0 0
    %7971 = vmatpush1.bf16.msra.mxu0 %v7899
    %7972 = vmatprep.subr.bf16.mxu0 0
    %7973 = vmatpush1.bf16.msra.mxu0 %v7900
    %7974 = vmatprep.subr.bf16.mxu0 0
    %7975 = vmatpush1.bf16.msra.mxu0 %v7901
    %7976 = vmatprep.subr.bf16.mxu0 0
    %7977 = vmatpush1.bf16.msra.mxu0 %v7902
    %7978 = vmatprep.subr.bf16.mxu0 0
    %7979 = vmatpush1.bf16.msra.mxu0 %v7903
    %7980 = vmatprep.subr.bf16.mxu0 0
    %7981 = vmatpush1.bf16.msra.mxu0 %v7904
    %7982 = vmatprep.subr.bf16.mxu0 0
    %7983 = vmatpush1.bf16.msra.mxu0 %v7905
    %7984 = vmatprep.subr.bf16.mxu0 0
    %7985 = vmatpush1.bf16.msra.mxu0 %v7906
    %7986 = vmatprep.subr.bf16.mxu0 0
    %7987 = vmatpush1.bf16.msra.mxu0 %v7907
    %7988 = vmatprep.mubr.bf16.mxu0 %v7757
    %7989 = vmatmul.mubr.bf16.gmra.mrb[0].mxu0 %v7756
    %v7990 = vpop.f32.mrb[0].mxu0
    %v7991 = vadd.f32 0.0, %v7990
    %v7992 = vpop.f32.mrb[0].mxu0
    %v7993 = vpop.f32.mrb[0].mxu0
    %v7994 = vpop.f32.mrb[0].mxu0
    %7995 = vdwg.mxu0
    %7996 = vmatprep.subr.bf16.mxu0 0
    %7997 = vmatpush1.bf16.msra.mxu0 %v7908
    %7998 = vmatprep.subr.bf16.mxu0 0
    %7999 = vmatpush1.bf16.msra.mxu0 %v7909
    %8000 = vmatprep.subr.bf16.mxu0 0
    %8001 = vmatpush1.bf16.msra.mxu0 %v7910
    %8002 = vmatprep.subr.bf16.mxu0 0
    %8003 = vmatpush1.bf16.msra.mxu0 %v7911
    %8004 = vmatprep.subr.bf16.mxu0 0
    %8005 = vmatpush1.bf16.msra.mxu0 %v7912
    %8006 = vmatprep.subr.bf16.mxu0 0
    %8007 = vmatpush1.bf16.msra.mxu0 %v7913
    %8008 = vmatprep.subr.bf16.mxu0 0
    %8009 = vmatpush1.bf16.msra.mxu0 %v7914
    %8010 = vmatprep.subr.bf16.mxu0 0
    %8011 = vmatpush1.bf16.msra.mxu0 %v7915
    %8012 = vmatprep.subr.bf16.mxu0 0
    %8013 = vmatpush1.bf16.msra.mxu0 %v7916
    %8014 = vmatprep.subr.bf16.mxu0 0
    %8015 = vmatpush1.bf16.msra.mxu0 %v7917
    %8016 = vmatprep.subr.bf16.mxu0 0
    %8017 = vmatpush1.bf16.msra.mxu0 %v7918
    %8018 = vmatprep.subr.bf16.mxu0 0
    %8019 = vmatpush1.bf16.msra.mxu0 %v7919
    %8020 = vmatprep.subr.bf16.mxu0 0
    %8021 = vmatpush1.bf16.msra.mxu0 %v7920
    %8022 = vmatprep.subr.bf16.mxu0 0
    %8023 = vmatpush1.bf16.msra.mxu0 %v7921
    %8024 = vmatprep.subr.bf16.mxu0 0
    %8025 = vmatpush1.bf16.msra.mxu0 %v7922
    %8026 = vmatprep.subr.bf16.mxu0 0
    %8027 = vmatpush1.bf16.msra.mxu0 %v7923
    %8028 = vmatprep.mubr.bf16.mxu0 %v7759
    %8029 = vmatmul.mubr.bf16.gmra.mrb[0].mxu0 %v7758
    %v8030 = vpop.f32.mrb[0].mxu0
    %v8031 = vadd.f32 %v7991, %v8030
    %v8032 = vpop.f32.mrb[0].mxu0
    %v8033 = vpop.f32.mrb[0].mxu0
    %v8034 = vpop.f32.mrb[0].mxu0
    %8035 = vdwg.mxu0
    %v8036 = vadd.f32 %v7670, %v8031
    %v8037 = vld [vmem:[#allocation6 + $0x20] sm:$0xc0]
    %v8038 = vld [vmem:[#allocation6 + $0x28] sm:$0xc0]
    %v8039 = vld [vmem:[#allocation6 + $0x30] sm:$0xc0]
    %v8040 = vld [vmem:[#allocation6 + $0x38] sm:$0xc0]
    %v8041 = vadd.f32 %v8037, %v5489
    %v8042 = vadd.f32 %v8038, %v5493
    %v8043 = vadd.f32 %v8039, %v5497
    %v8044 = vadd.f32 %v8040, %v5501
    %v8045 = vmax.f32 %v8041, 0.0
    %v8046 = vmax.f32 %v8042, 0.0
    %v8047 = vmax.f32 %v8043, 0.0
    %v8048 = vmax.f32 %v8044, 0.0
    %v8049 = vpack.c.bf16 %v8045, %v8045
    %v8050 = vpack.c.bf16 %v8046, %v8046
    %v8051 = vpack.c.bf16 %v8047, %v8047
    %v8052 = vpack.c.bf16 %v8048, %v8048
    %s8053 = scalar_lea.vmem %s4, 1792
    %v8054 = vld [vmem:[%s8053] sm:$0xf]
    %v8055 = vld [vmem:[%s8053 + $0x4] sm:$0xf]
    %v8056 = vld [vmem:[%s8053 + $0x8] sm:$0xf]
    %v8057 = vld [vmem:[%s8053 + $0xc] sm:$0xf]
    %v8058 = vld [vmem:[%s8053 + $0x10] sm:$0xf]
    %v8059 = vld [vmem:[%s8053 + $0x14] sm:$0xf]
    %v8060 = vld [vmem:[%s8053 + $0x18] sm:$0xf]
    %v8061 = vld [vmem:[%s8053 + $0x1c] sm:$0xf]
    %v8062 = vld [vmem:[%s8053 + $0x20] sm:$0xf]
    %v8063 = vld [vmem:[%s8053 + $0x24] sm:$0xf]
    %v8064 = vld [vmem:[%s8053 + $0x28] sm:$0xf]
    %v8065 = vld [vmem:[%s8053 + $0x2c] sm:$0xf]
    %v8066 = vld [vmem:[%s8053 + $0x30] sm:$0xf]
    %v8067 = vld [vmem:[%s8053 + $0x34] sm:$0xf]
    %v8068 = vld [vmem:[%s8053 + $0x38] sm:$0xf]
    %v8069 = vld [vmem:[%s8053 + $0x3c] sm:$0xf]
    %v8070 = vld [vmem:[%s8053 + $0x40] sm:$0xf]
    %v8071 = vld [vmem:[%s8053 + $0x44] sm:$0xf]
    %v8072 = vld [vmem:[%s8053 + $0x48] sm:$0xf]
    %v8073 = vld [vmem:[%s8053 + $0x4c] sm:$0xf]
    %v8074 = vld [vmem:[%s8053 + $0x50] sm:$0xf]
    %v8075 = vld [vmem:[%s8053 + $0x54] sm:$0xf]
    %v8076 = vld [vmem:[%s8053 + $0x58] sm:$0xf]
    %v8077 = vld [vmem:[%s8053 + $0x5c] sm:$0xf]
    %v8078 = vld [vmem:[%s8053 + $0x60] sm:$0xf]
    %v8079 = vld [vmem:[%s8053 + $0x64] sm:$0xf]
    %v8080 = vld [vmem:[%s8053 + $0x68] sm:$0xf]
    %v8081 = vld [vmem:[%s8053 + $0x6c] sm:$0xf]
    %v8082 = vld [vmem:[%s8053 + $0x70] sm:$0xf]
    %v8083 = vld [vmem:[%s8053 + $0x74] sm:$0xf]
    %v8084 = vld [vmem:[%s8053 + $0x78] sm:$0xf]
    %v8085 = vld [vmem:[%s8053 + $0x7c] sm:$0xf]
    %v8086 = vld [vmem:[%s8053 + $0x80] sm:$0xf]
    %v8087 = vld [vmem:[%s8053 + $0x84] sm:$0xf]
    %v8088 = vld [vmem:[%s8053 + $0x88] sm:$0xf]
    %v8089 = vld [vmem:[%s8053 + $0x8c] sm:$0xf]
    %v8090 = vld [vmem:[%s8053 + $0x90] sm:$0xf]
    %v8091 = vld [vmem:[%s8053 + $0x94] sm:$0xf]
    %v8092 = vld [vmem:[%s8053 + $0x98] sm:$0xf]
    %v8093 = vld [vmem:[%s8053 + $0x9c] sm:$0xf]
    %v8094 = vld [vmem:[%s8053 + $0xa0] sm:$0xf]
    %v8095 = vld [vmem:[%s8053 + $0xa4] sm:$0xf]
    %v8096 = vld [vmem:[%s8053 + $0xa8] sm:$0xf]
    %v8097 = vld [vmem:[%s8053 + $0xac] sm:$0xf]
    %v8098 = vld [vmem:[%s8053 + $0xb0] sm:$0xf]
    %v8099 = vld [vmem:[%s8053 + $0xb4] sm:$0xf]
    %v8100 = vld [vmem:[%s8053 + $0xb8] sm:$0xf]
    %v8101 = vld [vmem:[%s8053 + $0xbc] sm:$0xf]
    %v8102 = vld [vmem:[%s8053 + $0xc0] sm:$0xf]
    %v8103 = vld [vmem:[%s8053 + $0xc4] sm:$0xf]
    %v8104 = vld [vmem:[%s8053 + $0xc8] sm:$0xf]
    %v8105 = vld [vmem:[%s8053 + $0xcc] sm:$0xf]
    %v8106 = vld [vmem:[%s8053 + $0xd0] sm:$0xf]
    %v8107 = vld [vmem:[%s8053 + $0xd4] sm:$0xf]
    %v8108 = vld [vmem:[%s8053 + $0xd8] sm:$0xf]
    %v8109 = vld [vmem:[%s8053 + $0xdc] sm:$0xf]
    %v8110 = vld [vmem:[%s8053 + $0xe0] sm:$0xf]
    %v8111 = vld [vmem:[%s8053 + $0xe4] sm:$0xf]
    %v8112 = vld [vmem:[%s8053 + $0xe8] sm:$0xf]
    %v8113 = vld [vmem:[%s8053 + $0xec] sm:$0xf]
    %v8114 = vld [vmem:[%s8053 + $0xf0] sm:$0xf]
    %v8115 = vld [vmem:[%s8053 + $0xf4] sm:$0xf]
    %v8116 = vld [vmem:[%s8053 + $0xf8] sm:$0xf]
    %v8117 = vld [vmem:[%s8053 + $0xfc] sm:$0xf]
    %v8122 = vrot.slane %v8049, 3
    %v8123 = vrot.slane %v8050, 3
    %v8124 = vrot.slane %v8051, 3
    %v8125 = vrot.slane %v8052, 3
    %v8194 = vunpack.c.l.b16 %v8054
    %v8195 = vunpack.c.l.b16 %v8055
    %v8196 = vunpack.c.l.b16 %v8056
    %v8197 = vunpack.c.l.b16 %v8057
    %v8198 = vunpack.c.l.b16 %v8058
    %v8199 = vunpack.c.l.b16 %v8059
    %v8200 = vunpack.c.l.b16 %v8060
    %v8201 = vunpack.c.l.b16 %v8061
    %v8202 = vunpack.c.l.b16 %v8062
    %v8203 = vunpack.c.l.b16 %v8063
    %v8204 = vunpack.c.l.b16 %v8064
    %v8205 = vunpack.c.l.b16 %v8065
    %v8206 = vunpack.c.l.b16 %v8066
    %v8207 = vunpack.c.l.b16 %v8067
    %v8208 = vunpack.c.l.b16 %v8068
    %v8209 = vunpack.c.l.b16 %v8069
    %v8210 = vunpack.c.l.b16 %v8070
    %v8211 = vunpack.c.l.b16 %v8071
    %v8212 = vunpack.c.l.b16 %v8072
    %v8213 = vunpack.c.l.b16 %v8073
    %v8214 = vunpack.c.l.b16 %v8074
    %v8215 = vunpack.c.l.b16 %v8075
    %v8216 = vunpack.c.l.b16 %v8076
    %v8217 = vunpack.c.l.b16 %v8077
    %v8218 = vunpack.c.l.b16 %v8078
    %v8219 = vunpack.c.l.b16 %v8079
    %v8220 = vunpack.c.l.b16 %v8080
    %v8221 = vunpack.c.l.b16 %v8081
    %v8222 = vunpack.c.l.b16 %v8082
    %v8223 = vunpack.c.l.b16 %v8083
    %v8224 = vunpack.c.l.b16 %v8084
    %v8225 = vunpack.c.l.b16 %v8085
    %v8226 = vunpack.c.l.b16 %v8086
    %v8227 = vunpack.c.l.b16 %v8087
    %v8228 = vunpack.c.l.b16 %v8088
    %v8229 = vunpack.c.l.b16 %v8089
    %v8230 = vunpack.c.l.b16 %v8090
    %v8231 = vunpack.c.l.b16 %v8091
    %v8232 = vunpack.c.l.b16 %v8092
    %v8233 = vunpack.c.l.b16 %v8093
    %v8234 = vunpack.c.l.b16 %v8094
    %v8235 = vunpack.c.l.b16 %v8095
    %v8236 = vunpack.c.l.b16 %v8096
    %v8237 = vunpack.c.l.b16 %v8097
    %v8238 = vunpack.c.l.b16 %v8098
    %v8239 = vunpack.c.l.b16 %v8099
    %v8240 = vunpack.c.l.b16 %v8100
    %v8241 = vunpack.c.l.b16 %v8101
    %v8242 = vunpack.c.l.b16 %v8102
    %v8243 = vunpack.c.l.b16 %v8103
    %v8244 = vunpack.c.l.b16 %v8104
    %v8245 = vunpack.c.l.b16 %v8105
    %v8246 = vunpack.c.l.b16 %v8106
    %v8247 = vunpack.c.l.b16 %v8107
    %v8248 = vunpack.c.l.b16 %v8108
    %v8249 = vunpack.c.l.b16 %v8109
    %v8250 = vunpack.c.l.b16 %v8110
    %v8251 = vunpack.c.l.b16 %v8111
    %v8252 = vunpack.c.l.b16 %v8112
    %v8253 = vunpack.c.l.b16 %v8113
    %v8254 = vunpack.c.l.b16 %v8114
    %v8255 = vunpack.c.l.b16 %v8115
    %v8256 = vunpack.c.l.b16 %v8116
    %v8257 = vunpack.c.l.b16 %v8117
    %v8258 = vpack.c.b16 %v8195, %v8194
    %v8259 = vpack.c.b16 %v8197, %v8196
    %v8260 = vpack.c.b16 %v8199, %v8198
    %v8261 = vpack.c.b16 %v8201, %v8200
    %v8262 = vpack.c.b16 %v8203, %v8202
    %v8263 = vpack.c.b16 %v8205, %v8204
    %v8264 = vpack.c.b16 %v8207, %v8206
    %v8265 = vpack.c.b16 %v8209, %v8208
    %v8266 = vpack.c.b16 %v8211, %v8210
    %v8267 = vpack.c.b16 %v8213, %v8212
    %v8268 = vpack.c.b16 %v8215, %v8214
    %v8269 = vpack.c.b16 %v8217, %v8216
    %v8270 = vpack.c.b16 %v8219, %v8218
    %v8271 = vpack.c.b16 %v8221, %v8220
    %v8272 = vpack.c.b16 %v8223, %v8222
    %v8273 = vpack.c.b16 %v8225, %v8224
    %v8274 = vpack.c.b16 %v8227, %v8226
    %v8275 = vpack.c.b16 %v8229, %v8228
    %v8276 = vpack.c.b16 %v8231, %v8230
    %v8277 = vpack.c.b16 %v8233, %v8232
    %v8278 = vpack.c.b16 %v8235, %v8234
    %v8279 = vpack.c.b16 %v8237, %v8236
    %v8280 = vpack.c.b16 %v8239, %v8238
    %v8281 = vpack.c.b16 %v8241, %v8240
    %v8282 = vpack.c.b16 %v8243, %v8242
    %v8283 = vpack.c.b16 %v8245, %v8244
    %v8284 = vpack.c.b16 %v8247, %v8246
    %v8285 = vpack.c.b16 %v8249, %v8248
    %v8286 = vpack.c.b16 %v8251, %v8250
    %v8287 = vpack.c.b16 %v8253, %v8252
    %v8288 = vpack.c.b16 %v8255, %v8254
    %v8289 = vpack.c.b16 %v8257, %v8256
    %8322 = vmatprep.subr.bf16.mxu0 0
    %8323 = vmatpush1.bf16.msra.mxu0 %v8258
    %8324 = vmatprep.subr.bf16.mxu0 0
    %8325 = vmatpush1.bf16.msra.mxu0 %v8259
    %8326 = vmatprep.subr.bf16.mxu0 0
    %8327 = vmatpush1.bf16.msra.mxu0 %v8260
    %8328 = vmatprep.subr.bf16.mxu0 0
    %8329 = vmatpush1.bf16.msra.mxu0 %v8261
    %8330 = vmatprep.subr.bf16.mxu0 0
    %8331 = vmatpush1.bf16.msra.mxu0 %v8262
    %8332 = vmatprep.subr.bf16.mxu0 0
    %8333 = vmatpush1.bf16.msra.mxu0 %v8263
    %8334 = vmatprep.subr.bf16.mxu0 0
    %8335 = vmatpush1.bf16.msra.mxu0 %v8264
    %8336 = vmatprep.subr.bf16.mxu0 0
    %8337 = vmatpush1.bf16.msra.mxu0 %v8265
    %8338 = vmatprep.subr.bf16.mxu0 0
    %8339 = vmatpush1.bf16.msra.mxu0 %v8266
    %8340 = vmatprep.subr.bf16.mxu0 0
    %8341 = vmatpush1.bf16.msra.mxu0 %v8267
    %8342 = vmatprep.subr.bf16.mxu0 0
    %8343 = vmatpush1.bf16.msra.mxu0 %v8268
    %8344 = vmatprep.subr.bf16.mxu0 0
    %8345 = vmatpush1.bf16.msra.mxu0 %v8269
    %8346 = vmatprep.subr.bf16.mxu0 0
    %8347 = vmatpush1.bf16.msra.mxu0 %v8270
    %8348 = vmatprep.subr.bf16.mxu0 0
    %8349 = vmatpush1.bf16.msra.mxu0 %v8271
    %8350 = vmatprep.subr.bf16.mxu0 0
    %8351 = vmatpush1.bf16.msra.mxu0 %v8272
    %8352 = vmatprep.subr.bf16.mxu0 0
    %8353 = vmatpush1.bf16.msra.mxu0 %v8273
    %8354 = vmatprep.mubr.bf16.mxu0 %v8123
    %8355 = vmatmul.mubr.bf16.gmra.mrb[0].mxu0 %v8122
    %v8356 = vpop.f32.mrb[0].mxu0
    %v8357 = vadd.f32 0.0, %v8356
    %v8358 = vpop.f32.mrb[0].mxu0
    %v8359 = vpop.f32.mrb[0].mxu0
    %v8360 = vpop.f32.mrb[0].mxu0
    %8361 = vdwg.mxu0
    %8362 = vmatprep.subr.bf16.mxu0 0
    %8363 = vmatpush1.bf16.msra.mxu0 %v8274
    %8364 = vmatprep.subr.bf16.mxu0 0
    %8365 = vmatpush1.bf16.msra.mxu0 %v8275
    %8366 = vmatprep.subr.bf16.mxu0 0
    %8367 = vmatpush1.bf16.msra.mxu0 %v8276
    %8368 = vmatprep.subr.bf16.mxu0 0
    %8369 = vmatpush1.bf16.msra.mxu0 %v8277
    %8370 = vmatprep.subr.bf16.mxu0 0
    %8371 = vmatpush1.bf16.msra.mxu0 %v8278
    %8372 = vmatprep.subr.bf16.mxu0 0
    %8373 = vmatpush1.bf16.msra.mxu0 %v8279
    %8374 = vmatprep.subr.bf16.mxu0 0
    %8375 = vmatpush1.bf16.msra.mxu0 %v8280
    %8376 = vmatprep.subr.bf16.mxu0 0
    %8377 = vmatpush1.bf16.msra.mxu0 %v8281
    %8378 = vmatprep.subr.bf16.mxu0 0
    %8379 = vmatpush1.bf16.msra.mxu0 %v8282
    %8380 = vmatprep.subr.bf16.mxu0 0
    %8381 = vmatpush1.bf16.msra.mxu0 %v8283
    %8382 = vmatprep.subr.bf16.mxu0 0
    %8383 = vmatpush1.bf16.msra.mxu0 %v8284
    %8384 = vmatprep.subr.bf16.mxu0 0
    %8385 = vmatpush1.bf16.msra.mxu0 %v8285
    %8386 = vmatprep.subr.bf16.mxu0 0
    %8387 = vmatpush1.bf16.msra.mxu0 %v8286
    %8388 = vmatprep.subr.bf16.mxu0 0
    %8389 = vmatpush1.bf16.msra.mxu0 %v8287
    %8390 = vmatprep.subr.bf16.mxu0 0
    %8391 = vmatpush1.bf16.msra.mxu0 %v8288
    %8392 = vmatprep.subr.bf16.mxu0 0
    %8393 = vmatpush1.bf16.msra.mxu0 %v8289
    %8394 = vmatprep.mubr.bf16.mxu0 %v8125
    %8395 = vmatmul.mubr.bf16.gmra.mrb[0].mxu0 %v8124
    %v8396 = vpop.f32.mrb[0].mxu0
    %v8397 = vadd.f32 %v8357, %v8396
    %v8398 = vpop.f32.mrb[0].mxu0
    %v8399 = vpop.f32.mrb[0].mxu0
    %v8400 = vpop.f32.mrb[0].mxu0
    %8401 = vdwg.mxu0
    %v8402 = vadd.f32 %v8036, %v8397
    %v8403 = vld [vmem:[%s8] sm:$0x1]
    %v8405 = vlaneseq
    %v8406 = vshrl.u32 %v8405, 7
    %v8407 = vsub.s32 0, %v8406
    %v8408 = vrot.slane %v8403, %v8407
    %v8410 = vadd.f32 %v8402, %v8408
    %v8411 = vmax.f32 %v8410, 0.0
    %v8412 = vld [vmem:[%s9] sm:$0xff]
    %v8413 = vld [vmem:[%s9 + $0x8] sm:$0xff]
    %v8414 = vld [vmem:[%s9 + $0x10] sm:$0xff]
    %v8415 = vld [vmem:[%s9 + $0x18] sm:$0xff]
    %v8416 = vld [vmem:[%s9 + $0x20] sm:$0xff]
    %v8417 = vld [vmem:[%s9 + $0x28] sm:$0xff]
    %v8418 = vld [vmem:[%s9 + $0x30] sm:$0xff]
    %v8419 = vld [vmem:[%s9 + $0x38] sm:$0xff]
    %v8420 = vld [vmem:[%s10] sm:$0x1]
    %v8422 = vlaneseq
    %v8423 = vshrl.u32 %v8422, 7
    %v8424 = vsub.s32 0, %v8423
    %v8425 = vrot.slane %v8420, %v8424
    %vm8427 = vcmask 523264
    %v8429 = vsel %vm8427, %v8411, 0
    %8431 = vmatprep.subr.mxu0 0.0
    %8432 = vmatpush1.msra.mxu0 %v8412
    %8433 = vmatprep.subr.mxu0 0.0
    %8434 = vmatpush1.msra.mxu0 %v8413
    %8435 = vmatprep.subr.mxu0 0.0
    %8436 = vmatpush1.msra.mxu0 %v8414
    %8437 = vmatprep.subr.mxu0 0.0
    %8438 = vmatpush1.msra.mxu0 %v8415
    %8439 = vmatprep.subr.mxu0 0.0
    %8440 = vmatpush1.msra.mxu0 %v8416
    %8441 = vmatprep.subr.mxu0 0.0
    %8442 = vmatpush1.msra.mxu0 %v8417
    %8443 = vmatprep.subr.mxu0 0.0
    %8444 = vmatpush1.msra.mxu0 %v8418
    %8445 = vmatprep.subr.mxu0 0.0
    %8446 = vmatpush1.msra.mxu0 %v8419
    %8447 = vmatprep.subr.mxu0 0.0
    %8448 = vmatpush1.msra.mxu0 0.0
    %8449 = vmatprep.subr.mxu0 0.0
    %8450 = vmatpush1.msra.mxu0 0.0
    %8451 = vmatprep.subr.mxu0 0.0
    %8452 = vmatpush1.msra.mxu0 0.0
    %8453 = vmatprep.subr.mxu0 0.0
    %8454 = vmatpush1.msra.mxu0 0.0
    %8455 = vmatprep.subr.mxu0 0.0
    %8456 = vmatpush1.msra.mxu0 0.0
    %8457 = vmatprep.subr.mxu0 0.0
    %8458 = vmatpush1.msra.mxu0 0.0
    %8459 = vmatprep.subr.mxu0 0.0
    %8460 = vmatpush1.msra.mxu0 0.0
    %8461 = vmatprep.subr.mxu0 0.0
    %8462 = vmatpush1.msra.mxu0 0.0
    %8463 = vmatprep.subr.mxu0 0.0
    %8464 = vmatpush1.msra.mxu0 0.0
    %8465 = vmatprep.subr.mxu0 0.0
    %8466 = vmatpush1.msra.mxu0 0.0
    %8467 = vmatprep.subr.mxu0 0.0
    %8468 = vmatpush1.msra.mxu0 0.0
    %8469 = vmatprep.subr.mxu0 0.0
    %8470 = vmatpush1.msra.mxu0 0.0
    %8471 = vmatprep.subr.mxu0 0.0
    %8472 = vmatpush1.msra.mxu0 0.0
    %8473 = vmatprep.subr.mxu0 0.0
    %8474 = vmatpush1.msra.mxu0 0.0
    %8475 = vmatprep.subr.mxu0 0.0
    %8476 = vmatpush1.msra.mxu0 0.0
    %8477 = vmatprep.subr.mxu0 0.0
    %8478 = vmatpush1.msra.mxu0 0.0
    %8479 = vmatprep.subr.mxu0 0.0
    %8480 = vmatpush1.msra.mxu0 0.0
    %8481 = vmatprep.subr.mxu0 0.0
    %8482 = vmatpush1.msra.mxu0 0.0
    %8483 = vmatprep.subr.mxu0 0.0
    %8484 = vmatpush1.msra.mxu0 0.0
    %8485 = vmatprep.subr.mxu0 0.0
    %8486 = vmatpush1.msra.mxu0 0.0
    %8487 = vmatprep.subr.mxu0 0.0
    %8488 = vmatpush1.msra.mxu0 0.0
    %8489 = vmatprep.subr.mxu0 0.0
    %8490 = vmatpush1.msra.mxu0 0.0
    %8491 = vmatprep.subr.mxu0 0.0
    %8492 = vmatpush1.msra.mxu0 0.0
    %8493 = vmatprep.subr.mxu0 0.0
    %8494 = vmatpush1.msra.mxu0 0.0
    %8495 = vmatprep.mubr.f32.mxu0 0.0
    %8496 = vmatmul.mubr.f32.gmra.mrb[0].mxu0 %v8429
    %v8497 = vpop.f32.mrb[0].mxu0
    %v8498 = vadd.f32 %v8425, %v8497
    %v8499 = vpop.f32.mrb[0].mxu0
    %8500 = vdwg.mxu0
    %v8501 = vmax.f32 %v8498, 0.0
    %v8502 = vld [vmem:[%s11] sm:$0xff]
    %v8503 = vld [vmem:[%s11 + $0x8] sm:$0xff]
    %v8504 = vld [vmem:[%s11 + $0x10] sm:$0xff]
    %v8505 = vld [vmem:[%s11 + $0x18] sm:$0xff]
    %v8506 = vld [vmem:[%s12] sm:$0x1]
    %v8508 = vlaneseq
    %v8509 = vshrl.u32 %v8508, 7
    %v8510 = vsub.s32 0, %v8509
    %v8511 = vrot.slane %v8506, %v8510
    %vm8513 = vcmask 261120
    %v8515 = vsel %vm8513, %v8501, 0
    %8517 = vmatprep.subr.mxu0 0.0
    %8518 = vmatpush1.msra.mxu0 %v8502
    %8519 = vmatprep.subr.mxu0 0.0
    %8520 = vmatpush1.msra.mxu0 %v8503
    %8521 = vmatprep.subr.mxu0 0.0
    %8522 = vmatpush1.msra.mxu0 %v8504
    %8523 = vmatprep.subr.mxu0 0.0
    %8524 = vmatpush1.msra.mxu0 %v8505
    %8525 = vmatprep.subr.mxu0 0.0
    %8526 = vmatpush1.msra.mxu0 0.0
    %8527 = vmatprep.subr.mxu0 0.0
    %8528 = vmatpush1.msra.mxu0 0.0
    %8529 = vmatprep.subr.mxu0 0.0
    %8530 = vmatpush1.msra.mxu0 0.0
    %8531 = vmatprep.subr.mxu0 0.0
    %8532 = vmatpush1.msra.mxu0 0.0
    %8533 = vmatprep.subr.mxu0 0.0
    %8534 = vmatpush1.msra.mxu0 0.0
    %8535 = vmatprep.subr.mxu0 0.0
    %8536 = vmatpush1.msra.mxu0 0.0
    %8537 = vmatprep.subr.mxu0 0.0
    %8538 = vmatpush1.msra.mxu0 0.0
    %8539 = vmatprep.subr.mxu0 0.0
    %8540 = vmatpush1.msra.mxu0 0.0
    %8541 = vmatprep.subr.mxu0 0.0
    %8542 = vmatpush1.msra.mxu0 0.0
    %8543 = vmatprep.subr.mxu0 0.0
    %8544 = vmatpush1.msra.mxu0 0.0
    %8545 = vmatprep.subr.mxu0 0.0
    %8546 = vmatpush1.msra.mxu0 0.0
    %8547 = vmatprep.subr.mxu0 0.0
    %8548 = vmatpush1.msra.mxu0 0.0
    %8549 = vmatprep.subr.mxu0 0.0
    %8550 = vmatpush1.msra.mxu0 0.0
    %8551 = vmatprep.subr.mxu0 0.0
    %8552 = vmatpush1.msra.mxu0 0.0
    %8553 = vmatprep.subr.mxu0 0.0
    %8554 = vmatpush1.msra.mxu0 0.0
    %8555 = vmatprep.subr.mxu0 0.0
    %8556 = vmatpush1.msra.mxu0 0.0
    %8557 = vmatprep.subr.mxu0 0.0
    %8558 = vmatpush1.msra.mxu0 0.0
    %8559 = vmatprep.subr.mxu0 0.0
    %8560 = vmatpush1.msra.mxu0 0.0
    %8561 = vmatprep.subr.mxu0 0.0
    %8562 = vmatpush1.msra.mxu0 0.0
    %8563 = vmatprep.subr.mxu0 0.0
    %8564 = vmatpush1.msra.mxu0 0.0
    %8565 = vmatprep.subr.mxu0 0.0
    %8566 = vmatpush1.msra.mxu0 0.0
    %8567 = vmatprep.subr.mxu0 0.0
    %8568 = vmatpush1.msra.mxu0 0.0
    %8569 = vmatprep.subr.mxu0 0.0
    %8570 = vmatpush1.msra.mxu0 0.0
    %8571 = vmatprep.subr.mxu0 0.0
    %8572 = vmatpush1.msra.mxu0 0.0
    %8573 = vmatprep.subr.mxu0 0.0
    %8574 = vmatpush1.msra.mxu0 0.0
    %8575 = vmatprep.subr.mxu0 0.0
    %8576 = vmatpush1.msra.mxu0 0.0
    %8577 = vmatprep.subr.mxu0 0.0
    %8578 = vmatpush1.msra.mxu0 0.0
    %8579 = vmatprep.subr.mxu0 0.0
    %8580 = vmatpush1.msra.mxu0 0.0
    %8581 = vmatprep.mubr.f32.mxu0 0.0
    %8582 = vmatmul.mubr.f32.gmra.mrb[0].mxu0 %v8515
    %v8583 = vpop.f32.mrb[0].mxu0
    %v8584 = vadd.f32 %v8511, %v8583
    %v8585 = vpop.f32.mrb[0].mxu0
    %8586 = vdwg.mxu0
    %v8587 = vmax.f32 %v8584, 0.0
    %v8588 = vld [vmem:[%s13] sm:$0x1]
    %v8590 = vlaneseq
    %v8591 = vshrl.u32 %v8590, 7
    %v8592 = vsub.s32 0, %v8591
    %v8593 = vrot.slane %v8588, %v8592
    %v8595 = vmul.f32 %v8587, %v8593
    %vm8596 = vcmask 123904
    %v8597 = vsel %vm8596, %v8595, 0.0
    %8598 = vadd.xlane.f32.xlu0 %v8597
    %v8599 = vpop.xlane.xlu0 %8598
    %v8600 = vld [vmem:[#allocation7] sm:$0x1]
    %v8602 = vlaneseq
    %v8603 = vshrl.u32 %v8602, 7
    %v8604 = vsub.s32 0, %v8603
    %v8605 = vrot.slane %v8600, %v8604
    %v8607 = vadd.f32 %v8599, %v8605
    %vm8608 = vcmask 1024
    %8609 = vst.msk [vmem:[%s15] sm:$0x3] %vm8608, %v8607
    // Predicated region
    $region66: #{age_prediction_cnn_forward.1} parent=1 // pred_check
      _
    $region67: #{age_prediction_cnn_forward.1} parent=1 // pred_check_branch
      %8611 = sbr.rel (0) target = $region69
    $region68: #{age_prediction_cnn_forward.1} parent=1 // pred_region
      _
    $region69: #{age_prediction_cnn_forward.1} parent=1 // pred_fallthru
      _
    // Predicated region
    $region70: #{age_prediction_cnn_forward.1} parent=1 // pred_check
      _
    $region71: #{age_prediction_cnn_forward.1} parent=1 // pred_check_branch
      %8613 = sbr.rel (0) target = $region73
    $region72: #{age_prediction_cnn_forward.1} parent=1 // pred_region
      _
    $region73: #{age_prediction_cnn_forward.1} parent=1 // pred_fallthru
      _
    %8614 = vsyncpa [#allocation9], 1

</llo_original>
